<compile_context>
chip_gen: v6e
topology: v6e:2x2x1
jax: 0.10.0
libtpu: 0.0.40
codegen_flags: <defaults>
</compile_context>

<pallas_src>
import jax
import jax.numpy as jnp
import numpy as np
from jax.experimental import pallas as pl
from jax.experimental.pallas import tpu as pltpu

NUM_CH_IN = 4
NUM_CH_OUT = 5
SEQ_LEN = 64  # 5 blocks of (conv k=2 -> pool 2/2): 64 -> 31 -> 15 -> 7 -> 3 -> 1


def _round8(r):
    return ((r + 7) // 8) * 8


# -----------------------------------------------------------------------------
# Packed-parameter slab layout: every tensor occupies an 8-row-aligned band
# of a single (R, 128) f32 array (weights at lanes [0:cols), biases stored as
# a column so they broadcast over the lane/batch axis without a transpose).
# -----------------------------------------------------------------------------
def _param_layout(num_ch_in, num_ch_out):
    conv_dims = [(num_ch_in, 16), (16, 16), (16, 8), (8, 8), (8, 8)]
    layout = {}
    off = 0

    def add(name, shape):
        nonlocal off
        layout[name] = (off, shape)
        off += _round8(shape[0])

    for i, (ci, co) in enumerate(conv_dims):
        add(f"w{i}a", (co, ci))   # tap at t
        add(f"w{i}b", (co, ci))   # tap at t+1
        add(f"b{i}", (co, 1))     # bias as a column
    add("fc0_w", (8, 8)); add("fc0_b", (8, 1))
    add("fc1_w", (8, 8)); add("fc1_b", (8, 1))
    add("fc2_w", (num_ch_out, 8)); add("fc2_b", (num_ch_out, 1))
    return layout, off, conv_dims


def _fold_pool_scale(params, num_conv_layers):
    """Fold each AvgPool's 0.5 into the weights of the *following* linear op.

    pooled = 0.5*(u + v); next_conv(pooled) = (0.5*w) @ (u + v)  (exact in f32)
    so the kernel's pool becomes a bare add. The last pool's 0.5 goes into fc0.
    """
    folded = dict(params)
    for i in range(1, num_conv_layers):
        folded[f"w{i}a"] = params[f"w{i}a"] * 0.5
        folded[f"w{i}b"] = params[f"w{i}b"] * 0.5
    folded["fc0_w"] = params["fc0_w"] * 0.5
    return folded


def _pack_params(params, layout, total_rows):
    slab = jnp.zeros((total_rows, 128), jnp.float32)
    for name, (off, (r, c)) in layout.items():
        slab = slab.at[off:off + r, :c].set(params[name].astype(jnp.float32))
    return slab


# -----------------------------------------------------------------------------
# Kernel factory
# -----------------------------------------------------------------------------
def _make_kernel(layout, num_conv_layers, seq_len, B):
    def kernel(x_ref, p_ref, out_ref):
        def get(name):
            off, (r, c) = layout[name]
            return p_ref[off:off + r, :c]      # static, 8-row / lane-0 aligned

        h = x_ref[0]                           # (C_in, L*B), lane index l*B+b
        L = seq_len
        for i in range(num_conv_layers):
            wa, wb, b = get(f"w{i}a"), get(f"w{i}b"), get(f"b{i}")
            Lm = L - 1
            # Conv1d(k=2): two lane-tile-aligned time shifts, two MXU matmuls.
            y = (jnp.dot(wa, h[:, :Lm * B], preferred_element_type=jnp.float32)
                 + jnp.dot(wb, h[:, B:(Lm + 1) * B],
                           preferred_element_type=jnp.float32)
                 + b)
            y = jnp.maximum(y, 0.0)
            # AvgPool1d(2, stride=2): even/odd 128-aligned lane blocks.
            # The 0.5 scale was folded into downstream weights -> bare VPU add.
            Lp = Lm // 2
            pieces = [
                y[:, (2 * p) * B:(2 * p + 1) * B]
                + y[:, (2 * p + 1) * B:(2 * p + 2) * B]
                for p in range(Lp)
            ]
            h = pieces[0] if Lp == 1 else jnp.concatenate(pieces, axis=1)
            L = Lp

        # Final temporal length is 1 -> Flatten is a no-op: h is (8, B).
        h = jnp.maximum(
            jnp.dot(get("fc0_w"), h, preferred_element_type=jnp.float32)
            + get("fc0_b"), 0.0)
        h = jnp.maximum(
            jnp.dot(get("fc1_w"), h, preferred_element_type=jnp.float32)
            + get("fc1_b"), 0.0)
        out_ref[...] = (
            jnp.dot(get("fc2_w"), h, preferred_element_type=jnp.float32)
            + get("fc2_b"))                    # (num_out, B), lane-dense store

    return kernel


# -----------------------------------------------------------------------------
# Wrapper
# -----------------------------------------------------------------------------
def tinynet_forward(x, params, *, block_b=256):
    """x: (N, C, L) float32 -> (N, num_out) float32."""
    N, C, L = x.shape
    num_out = params["fc2_w"].shape[0]

    # Batch-block size: multiple of 128 lanes (256 matches v6e/v7x MXU width).
    if N >= block_b:
        B = block_b
    else:
        B = max(128, ((N + 127) // 128) * 128)
    N_pad = ((N + B - 1) // B) * B
    nb = N_pad // B

    # Host-side layout plumbing: (N, C, L) -> (nb, C, L*B), lane index l*B+b.
    xp = jnp.pad(x.astype(jnp.float32), ((0, N_pad - N), (0, 0), (0, 0)))
    x2 = xp.reshape(nb, B, C, L).transpose(0, 2, 3, 1).reshape(nb, C, L * B)

    layout, total_rows, conv_dims = _param_layout(C, num_out)
    slab = _pack_params(_fold_pool_scale(params, len(conv_dims)),
                        layout, total_rows)

    kernel = _make_kernel(layout, len(conv_dims), L, B)

    out = pl.pallas_call(
        kernel,
        out_shape=jax.ShapeDtypeStruct((num_out, N_pad), jnp.float32),
        grid_spec=pltpu.PrefetchScalarGridSpec(
            num_scalar_prefetch=0,
            grid=(nb,),
            in_specs=[
                pl.BlockSpec((1, C, L * B), lambda n: (n, 0, 0)),
                pl.BlockSpec((total_rows, 128), lambda n: (0, 0)),  # resident
            ],
            out_specs=pl.BlockSpec((num_out, B), lambda n: (0, n)),
        ),
        compiler_params=pltpu.CompilerParams(
            dimension_semantics=("parallel",)),
    )(x2, slab)

    return out[:, :N].T                        # (N, num_out)


# -----------------------------------------------------------------------------
# Deterministic parameter init (PyTorch-style uniform bounds)
# -----------------------------------------------------------------------------
def init_params(key, num_ch_in, num_ch_out):
    conv_dims = [(num_ch_in, 16), (16, 16), (16, 8), (8, 8), (8, 8)]
    params = {}
    keys = jax.random.split(key, 16)
    ki = 0
    for i, (ci, co) in enumerate(conv_dims):
        bound = 1.0 / (ci * 2) ** 0.5
        w = jax.random.uniform(keys[ki], (co, ci, 2), jnp.float32, -bound, bound); ki += 1
        b = jax.random.uniform(keys[ki], (co, 1), jnp.float32, -bound, bound); ki += 1
        params[f"w{i}a"] = w[:, :, 0]
        params[f"w{i}b"] = w[:, :, 1]
        params[f"b{i}"] = b
    for j, (fin, fout) in enumerate([(8, 8), (8, 8), (8, num_ch_out)]):
        bound = 1.0 / fin ** 0.5
        params[f"fc{j}_w"] = jax.random.uniform(keys[ki], (fout, fin), jnp.float32, -bound, bound); ki += 1
        params[f"fc{j}_b"] = jax.random.uniform(keys[ki], (fout, 1), jnp.float32, -bound, bound); ki += 1
    return params


# -----------------------------------------------------------------------------
# Pure-JAX reference for verification (unfolded / literal semantics)
# -----------------------------------------------------------------------------
def tinynet_reference(x, params):
    def conv_relu_pool(h, wa, wb, b):
        L = h.shape[2]
        y = (jnp.einsum("oc,ncl->nol", wa, h[:, :, : L - 1])
             + jnp.einsum("oc,ncl->nol", wb, h[:, :, 1:])
             + b[None, :, :])
        y = jnp.maximum(y, 0.0)
        Lp = (L - 1) // 2
        return y[:, :, : 2 * Lp].reshape(y.shape[0], y.shape[1], Lp, 2).mean(-1)

    h = x
    for i in range(5):
        h = conv_relu_pool(h, params[f"w{i}a"], params[f"w{i}b"], params[f"b{i}"])
    feat = h[:, :, 0]                                         # (N, 8)
    h = jnp.maximum(feat @ params["fc0_w"].T + params["fc0_b"][:, 0], 0.0)
    h = jnp.maximum(h @ params["fc1_w"].T + params["fc1_b"][:, 0], 0.0)
    return h @ params["fc2_w"].T + params["fc2_b"][:, 0]


if __name__ == "__main__":
    key = jax.random.PRNGKey(0)
    pkey, xkey = jax.random.split(key)
    params = init_params(pkey, NUM_CH_IN, NUM_CH_OUT)
    x = jax.random.normal(xkey, (2, NUM_CH_IN, SEQ_LEN), jnp.float32)

    y = tinynet_forward(x, params)
    jax.block_until_ready(y)

    y_ref = tinynet_reference(x, params)
    assert y.shape == (2, NUM_CH_OUT), y.shape
    np.testing.assert_allclose(np.asarray(y), np.asarray(y_ref), rtol=2e-2, atol=2e-2)
    print("KERNEL_OK")
</pallas_src>

<mosaic_0001>
module attributes {stable_mosaic.version = 11 : i64} {
  func.func @kernel(%arg0: i32, %arg1: memref<1x4x8192xf32, #tpu.memory_space<vmem>>, %arg2: memref<216x128xf32, #tpu.memory_space<vmem>>, %arg3: memref<5x128xf32, #tpu.memory_space<vmem>>) attributes {dimension_semantics = [#tpu.dimension_semantics<parallel>], iteration_bounds = array<i64: 1>, scalar_prefetch = 0 : i64, scratch_operands = 0 : i64, tpu.core_type = #tpu.core_type<tc>, window_params = [{transform_indices = @transform_0, window_bounds = array<i64: 1, 4, 8192>}, {pipeline_mode = #tpu.pipeline_mode<synchronous>, transform_indices = @transform_1, window_bounds = array<i64: 216, 128>}, {transform_indices = @transform_2, window_bounds = array<i64: 5, 128>}]} {
    %c0 = arith.constant 0 : index
    %c0_0 = arith.constant 0 : index
    %c0_1 = arith.constant 0 : index
    %0 = vector.load %arg1[%c0, %c0_0, %c0_1] : memref<1x4x8192xf32, #tpu.memory_space<vmem>>, vector<1x4x8192xf32>
    %1 = vector.shape_cast %0 : vector<1x4x8192xf32> to vector<4x8192xf32>
    %c0_2 = arith.constant 0 : index
    %c0_3 = arith.constant 0 : index
    %2 = vector.load %arg2[%c0_2, %c0_3] : memref<216x128xf32, #tpu.memory_space<vmem>>, vector<16x4xf32>
    %c16 = arith.constant 16 : index
    %c0_4 = arith.constant 0 : index
    %3 = vector.load %arg2[%c16, %c0_4] : memref<216x128xf32, #tpu.memory_space<vmem>>, vector<16x4xf32>
    %c32 = arith.constant 32 : index
    %c0_5 = arith.constant 0 : index
    %4 = vector.load %arg2[%c32, %c0_5] : memref<216x128xf32, #tpu.memory_space<vmem>>, vector<16x1xf32>
    %5 = vector.extract_strided_slice %1 {offsets = [0, 0], sizes = [4, 8064], strides = [1, 1]} : vector<4x8192xf32> to vector<4x8064xf32>
    %cst = arith.constant dense<0.000000e+00> : vector<16x8064xf32>
    %6 = tpu.matmul %2, %5, %cst {dimension_numbers = #tpu.dot_dimension_numbers<[1], [0], [0], [1], [0, 0, 1, 1], [], []>} : vector<16x4xf32>, vector<4x8064xf32>, vector<16x8064xf32> -> vector<16x8064xf32>
    %7 = vector.extract_strided_slice %1 {offsets = [0, 128], sizes = [4, 8064], strides = [1, 1]} : vector<4x8192xf32> to vector<4x8064xf32>
    %cst_6 = arith.constant dense<0.000000e+00> : vector<16x8064xf32>
    %8 = tpu.matmul %3, %7, %cst_6 {dimension_numbers = #tpu.dot_dimension_numbers<[1], [0], [0], [1], [0, 0, 1, 1], [], []>} : vector<16x4xf32>, vector<4x8064xf32>, vector<16x8064xf32> -> vector<16x8064xf32>
    %9 = arith.addf %6, %8 : vector<16x8064xf32>
    %10 = vector.broadcast %4 : vector<16x1xf32> to vector<16x8064xf32>
    %11 = arith.addf %9, %10 : vector<16x8064xf32>
    %cst_7 = arith.constant 0.000000e+00 : f32
    %12 = vector.broadcast %cst_7 : f32 to vector<16x8064xf32>
    %13 = arith.maximumf %11, %12 : vector<16x8064xf32>
    %14 = vector.extract_strided_slice %13 {offsets = [0, 0], sizes = [16, 128], strides = [1, 1]} : vector<16x8064xf32> to vector<16x128xf32>
    %15 = vector.extract_strided_slice %13 {offsets = [0, 128], sizes = [16, 128], strides = [1, 1]} : vector<16x8064xf32> to vector<16x128xf32>
    %16 = arith.addf %14, %15 : vector<16x128xf32>
    %17 = vector.extract_strided_slice %13 {offsets = [0, 256], sizes = [16, 128], strides = [1, 1]} : vector<16x8064xf32> to vector<16x128xf32>
    %18 = vector.extract_strided_slice %13 {offsets = [0, 384], sizes = [16, 128], strides = [1, 1]} : vector<16x8064xf32> to vector<16x128xf32>
    %19 = arith.addf %17, %18 : vector<16x128xf32>
    %20 = vector.extract_strided_slice %13 {offsets = [0, 512], sizes = [16, 128], strides = [1, 1]} : vector<16x8064xf32> to vector<16x128xf32>
    %21 = vector.extract_strided_slice %13 {offsets = [0, 640], sizes = [16, 128], strides = [1, 1]} : vector<16x8064xf32> to vector<16x128xf32>
    %22 = arith.addf %20, %21 : vector<16x128xf32>
    %23 = vector.extract_strided_slice %13 {offsets = [0, 768], sizes = [16, 128], strides = [1, 1]} : vector<16x8064xf32> to vector<16x128xf32>
    %24 = vector.extract_strided_slice %13 {offsets = [0, 896], sizes = [16, 128], strides = [1, 1]} : vector<16x8064xf32> to vector<16x128xf32>
    %25 = arith.addf %23, %24 : vector<16x128xf32>
    %26 = vector.extract_strided_slice %13 {offsets = [0, 1024], sizes = [16, 128], strides = [1, 1]} : vector<16x8064xf32> to vector<16x128xf32>
    %27 = vector.extract_strided_slice %13 {offsets = [0, 1152], sizes = [16, 128], strides = [1, 1]} : vector<16x8064xf32> to vector<16x128xf32>
    %28 = arith.addf %26, %27 : vector<16x128xf32>
    %29 = vector.extract_strided_slice %13 {offsets = [0, 1280], sizes = [16, 128], strides = [1, 1]} : vector<16x8064xf32> to vector<16x128xf32>
    %30 = vector.extract_strided_slice %13 {offsets = [0, 1408], sizes = [16, 128], strides = [1, 1]} : vector<16x8064xf32> to vector<16x128xf32>
    %31 = arith.addf %29, %30 : vector<16x128xf32>
    %32 = vector.extract_strided_slice %13 {offsets = [0, 1536], sizes = [16, 128], strides = [1, 1]} : vector<16x8064xf32> to vector<16x128xf32>
    %33 = vector.extract_strided_slice %13 {offsets = [0, 1664], sizes = [16, 128], strides = [1, 1]} : vector<16x8064xf32> to vector<16x128xf32>
    %34 = arith.addf %32, %33 : vector<16x128xf32>
    %35 = vector.extract_strided_slice %13 {offsets = [0, 1792], sizes = [16, 128], strides = [1, 1]} : vector<16x8064xf32> to vector<16x128xf32>
    %36 = vector.extract_strided_slice %13 {offsets = [0, 1920], sizes = [16, 128], strides = [1, 1]} : vector<16x8064xf32> to vector<16x128xf32>
    %37 = arith.addf %35, %36 : vector<16x128xf32>
    %38 = vector.extract_strided_slice %13 {offsets = [0, 2048], sizes = [16, 128], strides = [1, 1]} : vector<16x8064xf32> to vector<16x128xf32>
    %39 = vector.extract_strided_slice %13 {offsets = [0, 2176], sizes = [16, 128], strides = [1, 1]} : vector<16x8064xf32> to vector<16x128xf32>
    %40 = arith.addf %38, %39 : vector<16x128xf32>
    %41 = vector.extract_strided_slice %13 {offsets = [0, 2304], sizes = [16, 128], strides = [1, 1]} : vector<16x8064xf32> to vector<16x128xf32>
    %42 = vector.extract_strided_slice %13 {offsets = [0, 2432], sizes = [16, 128], strides = [1, 1]} : vector<16x8064xf32> to vector<16x128xf32>
    %43 = arith.addf %41, %42 : vector<16x128xf32>
    %44 = vector.extract_strided_slice %13 {offsets = [0, 2560], sizes = [16, 128], strides = [1, 1]} : vector<16x8064xf32> to vector<16x128xf32>
    %45 = vector.extract_strided_slice %13 {offsets = [0, 2688], sizes = [16, 128], strides = [1, 1]} : vector<16x8064xf32> to vector<16x128xf32>
    %46 = arith.addf %44, %45 : vector<16x128xf32>
    %47 = vector.extract_strided_slice %13 {offsets = [0, 2816], sizes = [16, 128], strides = [1, 1]} : vector<16x8064xf32> to vector<16x128xf32>
    %48 = vector.extract_strided_slice %13 {offsets = [0, 2944], sizes = [16, 128], strides = [1, 1]} : vector<16x8064xf32> to vector<16x128xf32>
    %49 = arith.addf %47, %48 : vector<16x128xf32>
    %50 = vector.extract_strided_slice %13 {offsets = [0, 3072], sizes = [16, 128], strides = [1, 1]} : vector<16x8064xf32> to vector<16x128xf32>
    %51 = vector.extract_strided_slice %13 {offsets = [0, 3200], sizes = [16, 128], strides = [1, 1]} : vector<16x8064xf32> to vector<16x128xf32>
    %52 = arith.addf %50, %51 : vector<16x128xf32>
    %53 = vector.extract_strided_slice %13 {offsets = [0, 3328], sizes = [16, 128], strides = [1, 1]} : vector<16x8064xf32> to vector<16x128xf32>
    %54 = vector.extract_strided_slice %13 {offsets = [0, 3456], sizes = [16, 128], strides = [1, 1]} : vector<16x8064xf32> to vector<16x128xf32>
    %55 = arith.addf %53, %54 : vector<16x128xf32>
    %56 = vector.extract_strided_slice %13 {offsets = [0, 3584], sizes = [16, 128], strides = [1, 1]} : vector<16x8064xf32> to vector<16x128xf32>
    %57 = vector.extract_strided_slice %13 {offsets = [0, 3712], sizes = [16, 128], strides = [1, 1]} : vector<16x8064xf32> to vector<16x128xf32>
    %58 = arith.addf %56, %57 : vector<16x128xf32>
    %59 = vector.extract_strided_slice %13 {offsets = [0, 3840], sizes = [16, 128], strides = [1, 1]} : vector<16x8064xf32> to vector<16x128xf32>
    %60 = vector.extract_strided_slice %13 {offsets = [0, 3968], sizes = [16, 128], strides = [1, 1]} : vector<16x8064xf32> to vector<16x128xf32>
    %61 = arith.addf %59, %60 : vector<16x128xf32>
    %62 = vector.extract_strided_slice %13 {offsets = [0, 4096], sizes = [16, 128], strides = [1, 1]} : vector<16x8064xf32> to vector<16x128xf32>
    %63 = vector.extract_strided_slice %13 {offsets = [0, 4224], sizes = [16, 128], strides = [1, 1]} : vector<16x8064xf32> to vector<16x128xf32>
    %64 = arith.addf %62, %63 : vector<16x128xf32>
    %65 = vector.extract_strided_slice %13 {offsets = [0, 4352], sizes = [16, 128], strides = [1, 1]} : vector<16x8064xf32> to vector<16x128xf32>
    %66 = vector.extract_strided_slice %13 {offsets = [0, 4480], sizes = [16, 128], strides = [1, 1]} : vector<16x8064xf32> to vector<16x128xf32>
    %67 = arith.addf %65, %66 : vector<16x128xf32>
    %68 = vector.extract_strided_slice %13 {offsets = [0, 4608], sizes = [16, 128], strides = [1, 1]} : vector<16x8064xf32> to vector<16x128xf32>
    %69 = vector.extract_strided_slice %13 {offsets = [0, 4736], sizes = [16, 128], strides = [1, 1]} : vector<16x8064xf32> to vector<16x128xf32>
    %70 = arith.addf %68, %69 : vector<16x128xf32>
    %71 = vector.extract_strided_slice %13 {offsets = [0, 4864], sizes = [16, 128], strides = [1, 1]} : vector<16x8064xf32> to vector<16x128xf32>
    %72 = vector.extract_strided_slice %13 {offsets = [0, 4992], sizes = [16, 128], strides = [1, 1]} : vector<16x8064xf32> to vector<16x128xf32>
    %73 = arith.addf %71, %72 : vector<16x128xf32>
    %74 = vector.extract_strided_slice %13 {offsets = [0, 5120], sizes = [16, 128], strides = [1, 1]} : vector<16x8064xf32> to vector<16x128xf32>
    %75 = vector.extract_strided_slice %13 {offsets = [0, 5248], sizes = [16, 128], strides = [1, 1]} : vector<16x8064xf32> to vector<16x128xf32>
    %76 = arith.addf %74, %75 : vector<16x128xf32>
    %77 = vector.extract_strided_slice %13 {offsets = [0, 5376], sizes = [16, 128], strides = [1, 1]} : vector<16x8064xf32> to vector<16x128xf32>
    %78 = vector.extract_strided_slice %13 {offsets = [0, 5504], sizes = [16, 128], strides = [1, 1]} : vector<16x8064xf32> to vector<16x128xf32>
    %79 = arith.addf %77, %78 : vector<16x128xf32>
    %80 = vector.extract_strided_slice %13 {offsets = [0, 5632], sizes = [16, 128], strides = [1, 1]} : vector<16x8064xf32> to vector<16x128xf32>
    %81 = vector.extract_strided_slice %13 {offsets = [0, 5760], sizes = [16, 128], strides = [1, 1]} : vector<16x8064xf32> to vector<16x128xf32>
    %82 = arith.addf %80, %81 : vector<16x128xf32>
    %83 = vector.extract_strided_slice %13 {offsets = [0, 5888], sizes = [16, 128], strides = [1, 1]} : vector<16x8064xf32> to vector<16x128xf32>
    %84 = vector.extract_strided_slice %13 {offsets = [0, 6016], sizes = [16, 128], strides = [1, 1]} : vector<16x8064xf32> to vector<16x128xf32>
    %85 = arith.addf %83, %84 : vector<16x128xf32>
    %86 = vector.extract_strided_slice %13 {offsets = [0, 6144], sizes = [16, 128], strides = [1, 1]} : vector<16x8064xf32> to vector<16x128xf32>
    %87 = vector.extract_strided_slice %13 {offsets = [0, 6272], sizes = [16, 128], strides = [1, 1]} : vector<16x8064xf32> to vector<16x128xf32>
    %88 = arith.addf %86, %87 : vector<16x128xf32>
    %89 = vector.extract_strided_slice %13 {offsets = [0, 6400], sizes = [16, 128], strides = [1, 1]} : vector<16x8064xf32> to vector<16x128xf32>
    %90 = vector.extract_strided_slice %13 {offsets = [0, 6528], sizes = [16, 128], strides = [1, 1]} : vector<16x8064xf32> to vector<16x128xf32>
    %91 = arith.addf %89, %90 : vector<16x128xf32>
    %92 = vector.extract_strided_slice %13 {offsets = [0, 6656], sizes = [16, 128], strides = [1, 1]} : vector<16x8064xf32> to vector<16x128xf32>
    %93 = vector.extract_strided_slice %13 {offsets = [0, 6784], sizes = [16, 128], strides = [1, 1]} : vector<16x8064xf32> to vector<16x128xf32>
    %94 = arith.addf %92, %93 : vector<16x128xf32>
    %95 = vector.extract_strided_slice %13 {offsets = [0, 6912], sizes = [16, 128], strides = [1, 1]} : vector<16x8064xf32> to vector<16x128xf32>
    %96 = vector.extract_strided_slice %13 {offsets = [0, 7040], sizes = [16, 128], strides = [1, 1]} : vector<16x8064xf32> to vector<16x128xf32>
    %97 = arith.addf %95, %96 : vector<16x128xf32>
    %98 = vector.extract_strided_slice %13 {offsets = [0, 7168], sizes = [16, 128], strides = [1, 1]} : vector<16x8064xf32> to vector<16x128xf32>
    %99 = vector.extract_strided_slice %13 {offsets = [0, 7296], sizes = [16, 128], strides = [1, 1]} : vector<16x8064xf32> to vector<16x128xf32>
    %100 = arith.addf %98, %99 : vector<16x128xf32>
    %101 = vector.extract_strided_slice %13 {offsets = [0, 7424], sizes = [16, 128], strides = [1, 1]} : vector<16x8064xf32> to vector<16x128xf32>
    %102 = vector.extract_strided_slice %13 {offsets = [0, 7552], sizes = [16, 128], strides = [1, 1]} : vector<16x8064xf32> to vector<16x128xf32>
    %103 = arith.addf %101, %102 : vector<16x128xf32>
    %104 = vector.extract_strided_slice %13 {offsets = [0, 7680], sizes = [16, 128], strides = [1, 1]} : vector<16x8064xf32> to vector<16x128xf32>
    %105 = vector.extract_strided_slice %13 {offsets = [0, 7808], sizes = [16, 128], strides = [1, 1]} : vector<16x8064xf32> to vector<16x128xf32>
    %106 = arith.addf %104, %105 : vector<16x128xf32>
    %107 = tpu.concatenate %16, %19, %22, %25, %28, %31, %34, %37, %40, %43, %46, %49, %52, %55, %58, %61 in 1 : vector<16x128xf32>, vector<16x128xf32>, vector<16x128xf32>, vector<16x128xf32>, vector<16x128xf32>, vector<16x128xf32>, vector<16x128xf32>, vector<16x128xf32>, vector<16x128xf32>, vector<16x128xf32>, vector<16x128xf32>, vector<16x128xf32>, vector<16x128xf32>, vector<16x128xf32>, vector<16x128xf32>, vector<16x128xf32> -> vector<16x2048xf32>
    %108 = tpu.concatenate %64, %67, %70, %73, %76, %79, %82, %85, %88, %91, %94, %97, %100, %103, %106 in 1 : vector<16x128xf32>, vector<16x128xf32>, vector<16x128xf32>, vector<16x128xf32>, vector<16x128xf32>, vector<16x128xf32>, vector<16x128xf32>, vector<16x128xf32>, vector<16x128xf32>, vector<16x128xf32>, vector<16x128xf32>, vector<16x128xf32>, vector<16x128xf32>, vector<16x128xf32>, vector<16x128xf32> -> vector<16x1920xf32>
    %109 = tpu.concatenate %107, %108 in 1 : vector<16x2048xf32>, vector<16x1920xf32> -> vector<16x3968xf32>
    %c48 = arith.constant 48 : index
    %c0_8 = arith.constant 0 : index
    %110 = vector.load %arg2[%c48, %c0_8] : memref<216x128xf32, #tpu.memory_space<vmem>>, vector<16x16xf32>
    %c64 = arith.constant 64 : index
    %c0_9 = arith.constant 0 : index
    %111 = vector.load %arg2[%c64, %c0_9] : memref<216x128xf32, #tpu.memory_space<vmem>>, vector<16x16xf32>
    %c80 = arith.constant 80 : index
    %c0_10 = arith.constant 0 : index
    %112 = vector.load %arg2[%c80, %c0_10] : memref<216x128xf32, #tpu.memory_space<vmem>>, vector<16x1xf32>
    %113 = vector.extract_strided_slice %109 {offsets = [0, 0], sizes = [16, 3840], strides = [1, 1]} : vector<16x3968xf32> to vector<16x3840xf32>
    %cst_11 = arith.constant dense<0.000000e+00> : vector<16x3840xf32>
    %114 = tpu.matmul %110, %113, %cst_11 {dimension_numbers = #tpu.dot_dimension_numbers<[1], [0], [0], [1], [0, 0, 1, 1], [], []>} : vector<16x16xf32>, vector<16x3840xf32>, vector<16x3840xf32> -> vector<16x3840xf32>
    %115 = vector.extract_strided_slice %109 {offsets = [0, 128], sizes = [16, 3840], strides = [1, 1]} : vector<16x3968xf32> to vector<16x3840xf32>
    %cst_12 = arith.constant dense<0.000000e+00> : vector<16x3840xf32>
    %116 = tpu.matmul %111, %115, %cst_12 {dimension_numbers = #tpu.dot_dimension_numbers<[1], [0], [0], [1], [0, 0, 1, 1], [], []>} : vector<16x16xf32>, vector<16x3840xf32>, vector<16x3840xf32> -> vector<16x3840xf32>
    %117 = arith.addf %114, %116 : vector<16x3840xf32>
    %118 = vector.broadcast %112 : vector<16x1xf32> to vector<16x3840xf32>
    %119 = arith.addf %117, %118 : vector<16x3840xf32>
    %cst_13 = arith.constant 0.000000e+00 : f32
    %120 = vector.broadcast %cst_13 : f32 to vector<16x3840xf32>
    %121 = arith.maximumf %119, %120 : vector<16x3840xf32>
    %122 = vector.extract_strided_slice %121 {offsets = [0, 0], sizes = [16, 128], strides = [1, 1]} : vector<16x3840xf32> to vector<16x128xf32>
    %123 = vector.extract_strided_slice %121 {offsets = [0, 128], sizes = [16, 128], strides = [1, 1]} : vector<16x3840xf32> to vector<16x128xf32>
    %124 = arith.addf %122, %123 : vector<16x128xf32>
    %125 = vector.extract_strided_slice %121 {offsets = [0, 256], sizes = [16, 128], strides = [1, 1]} : vector<16x3840xf32> to vector<16x128xf32>
    %126 = vector.extract_strided_slice %121 {offsets = [0, 384], sizes = [16, 128], strides = [1, 1]} : vector<16x3840xf32> to vector<16x128xf32>
    %127 = arith.addf %125, %126 : vector<16x128xf32>
    %128 = vector.extract_strided_slice %121 {offsets = [0, 512], sizes = [16, 128], strides = [1, 1]} : vector<16x3840xf32> to vector<16x128xf32>
    %129 = vector.extract_strided_slice %121 {offsets = [0, 640], sizes = [16, 128], strides = [1, 1]} : vector<16x3840xf32> to vector<16x128xf32>
    %130 = arith.addf %128, %129 : vector<16x128xf32>
    %131 = vector.extract_strided_slice %121 {offsets = [0, 768], sizes = [16, 128], strides = [1, 1]} : vector<16x3840xf32> to vector<16x128xf32>
    %132 = vector.extract_strided_slice %121 {offsets = [0, 896], sizes = [16, 128], strides = [1, 1]} : vector<16x3840xf32> to vector<16x128xf32>
    %133 = arith.addf %131, %132 : vector<16x128xf32>
    %134 = vector.extract_strided_slice %121 {offsets = [0, 1024], sizes = [16, 128], strides = [1, 1]} : vector<16x3840xf32> to vector<16x128xf32>
    %135 = vector.extract_strided_slice %121 {offsets = [0, 1152], sizes = [16, 128], strides = [1, 1]} : vector<16x3840xf32> to vector<16x128xf32>
    %136 = arith.addf %134, %135 : vector<16x128xf32>
    %137 = vector.extract_strided_slice %121 {offsets = [0, 1280], sizes = [16, 128], strides = [1, 1]} : vector<16x3840xf32> to vector<16x128xf32>
    %138 = vector.extract_strided_slice %121 {offsets = [0, 1408], sizes = [16, 128], strides = [1, 1]} : vector<16x3840xf32> to vector<16x128xf32>
    %139 = arith.addf %137, %138 : vector<16x128xf32>
    %140 = vector.extract_strided_slice %121 {offsets = [0, 1536], sizes = [16, 128], strides = [1, 1]} : vector<16x3840xf32> to vector<16x128xf32>
    %141 = vector.extract_strided_slice %121 {offsets = [0, 1664], sizes = [16, 128], strides = [1, 1]} : vector<16x3840xf32> to vector<16x128xf32>
    %142 = arith.addf %140, %141 : vector<16x128xf32>
    %143 = vector.extract_strided_slice %121 {offsets = [0, 1792], sizes = [16, 128], strides = [1, 1]} : vector<16x3840xf32> to vector<16x128xf32>
    %144 = vector.extract_strided_slice %121 {offsets = [0, 1920], sizes = [16, 128], strides = [1, 1]} : vector<16x3840xf32> to vector<16x128xf32>
    %145 = arith.addf %143, %144 : vector<16x128xf32>
    %146 = vector.extract_strided_slice %121 {offsets = [0, 2048], sizes = [16, 128], strides = [1, 1]} : vector<16x3840xf32> to vector<16x128xf32>
    %147 = vector.extract_strided_slice %121 {offsets = [0, 2176], sizes = [16, 128], strides = [1, 1]} : vector<16x3840xf32> to vector<16x128xf32>
    %148 = arith.addf %146, %147 : vector<16x128xf32>
    %149 = vector.extract_strided_slice %121 {offsets = [0, 2304], sizes = [16, 128], strides = [1, 1]} : vector<16x3840xf32> to vector<16x128xf32>
    %150 = vector.extract_strided_slice %121 {offsets = [0, 2432], sizes = [16, 128], strides = [1, 1]} : vector<16x3840xf32> to vector<16x128xf32>
    %151 = arith.addf %149, %150 : vector<16x128xf32>
    %152 = vector.extract_strided_slice %121 {offsets = [0, 2560], sizes = [16, 128], strides = [1, 1]} : vector<16x3840xf32> to vector<16x128xf32>
    %153 = vector.extract_strided_slice %121 {offsets = [0, 2688], sizes = [16, 128], strides = [1, 1]} : vector<16x3840xf32> to vector<16x128xf32>
    %154 = arith.addf %152, %153 : vector<16x128xf32>
    %155 = vector.extract_strided_slice %121 {offsets = [0, 2816], sizes = [16, 128], strides = [1, 1]} : vector<16x3840xf32> to vector<16x128xf32>
    %156 = vector.extract_strided_slice %121 {offsets = [0, 2944], sizes = [16, 128], strides = [1, 1]} : vector<16x3840xf32> to vector<16x128xf32>
    %157 = arith.addf %155, %156 : vector<16x128xf32>
    %158 = vector.extract_strided_slice %121 {offsets = [0, 3072], sizes = [16, 128], strides = [1, 1]} : vector<16x3840xf32> to vector<16x128xf32>
    %159 = vector.extract_strided_slice %121 {offsets = [0, 3200], sizes = [16, 128], strides = [1, 1]} : vector<16x3840xf32> to vector<16x128xf32>
    %160 = arith.addf %158, %159 : vector<16x128xf32>
    %161 = vector.extract_strided_slice %121 {offsets = [0, 3328], sizes = [16, 128], strides = [1, 1]} : vector<16x3840xf32> to vector<16x128xf32>
    %162 = vector.extract_strided_slice %121 {offsets = [0, 3456], sizes = [16, 128], strides = [1, 1]} : vector<16x3840xf32> to vector<16x128xf32>
    %163 = arith.addf %161, %162 : vector<16x128xf32>
    %164 = vector.extract_strided_slice %121 {offsets = [0, 3584], sizes = [16, 128], strides = [1, 1]} : vector<16x3840xf32> to vector<16x128xf32>
    %165 = vector.extract_strided_slice %121 {offsets = [0, 3712], sizes = [16, 128], strides = [1, 1]} : vector<16x3840xf32> to vector<16x128xf32>
    %166 = arith.addf %164, %165 : vector<16x128xf32>
    %167 = tpu.concatenate %124, %127, %130, %133, %136, %139, %142, %145, %148, %151, %154, %157, %160, %163, %166 in 1 : vector<16x128xf32>, vector<16x128xf32>, vector<16x128xf32>, vector<16x128xf32>, vector<16x128xf32>, vector<16x128xf32>, vector<16x128xf32>, vector<16x128xf32>, vector<16x128xf32>, vector<16x128xf32>, vector<16x128xf32>, vector<16x128xf32>, vector<16x128xf32>, vector<16x128xf32>, vector<16x128xf32> -> vector<16x1920xf32>
    %c96 = arith.constant 96 : index
    %c0_14 = arith.constant 0 : index
    %168 = vector.load %arg2[%c96, %c0_14] : memref<216x128xf32, #tpu.memory_space<vmem>>, vector<8x16xf32>
    %c104 = arith.constant 104 : index
    %c0_15 = arith.constant 0 : index
    %169 = vector.load %arg2[%c104, %c0_15] : memref<216x128xf32, #tpu.memory_space<vmem>>, vector<8x16xf32>
    %c112 = arith.constant 112 : index
    %c0_16 = arith.constant 0 : index
    %170 = vector.load %arg2[%c112, %c0_16] : memref<216x128xf32, #tpu.memory_space<vmem>>, vector<8x1xf32>
    %171 = vector.extract_strided_slice %167 {offsets = [0, 0], sizes = [16, 1792], strides = [1, 1]} : vector<16x1920xf32> to vector<16x1792xf32>
    %cst_17 = arith.constant dense<0.000000e+00> : vector<8x1792xf32>
    %172 = tpu.matmul %168, %171, %cst_17 {dimension_numbers = #tpu.dot_dimension_numbers<[1], [0], [0], [1], [0, 0, 1, 1], [], []>} : vector<8x16xf32>, vector<16x1792xf32>, vector<8x1792xf32> -> vector<8x1792xf32>
    %173 = vector.extract_strided_slice %167 {offsets = [0, 128], sizes = [16, 1792], strides = [1, 1]} : vector<16x1920xf32> to vector<16x1792xf32>
    %cst_18 = arith.constant dense<0.000000e+00> : vector<8x1792xf32>
    %174 = tpu.matmul %169, %173, %cst_18 {dimension_numbers = #tpu.dot_dimension_numbers<[1], [0], [0], [1], [0, 0, 1, 1], [], []>} : vector<8x16xf32>, vector<16x1792xf32>, vector<8x1792xf32> -> vector<8x1792xf32>
    %175 = arith.addf %172, %174 : vector<8x1792xf32>
    %176 = vector.broadcast %170 : vector<8x1xf32> to vector<8x1792xf32>
    %177 = arith.addf %175, %176 : vector<8x1792xf32>
    %cst_19 = arith.constant 0.000000e+00 : f32
    %178 = vector.broadcast %cst_19 : f32 to vector<8x1792xf32>
    %179 = arith.maximumf %177, %178 : vector<8x1792xf32>
    %180 = vector.extract_strided_slice %179 {offsets = [0, 0], sizes = [8, 128], strides = [1, 1]} : vector<8x1792xf32> to vector<8x128xf32>
    %181 = vector.extract_strided_slice %179 {offsets = [0, 128], sizes = [8, 128], strides = [1, 1]} : vector<8x1792xf32> to vector<8x128xf32>
    %182 = arith.addf %180, %181 : vector<8x128xf32>
    %183 = vector.extract_strided_slice %179 {offsets = [0, 256], sizes = [8, 128], strides = [1, 1]} : vector<8x1792xf32> to vector<8x128xf32>
    %184 = vector.extract_strided_slice %179 {offsets = [0, 384], sizes = [8, 128], strides = [1, 1]} : vector<8x1792xf32> to vector<8x128xf32>
    %185 = arith.addf %183, %184 : vector<8x128xf32>
    %186 = vector.extract_strided_slice %179 {offsets = [0, 512], sizes = [8, 128], strides = [1, 1]} : vector<8x1792xf32> to vector<8x128xf32>
    %187 = vector.extract_strided_slice %179 {offsets = [0, 640], sizes = [8, 128], strides = [1, 1]} : vector<8x1792xf32> to vector<8x128xf32>
    %188 = arith.addf %186, %187 : vector<8x128xf32>
    %189 = vector.extract_strided_slice %179 {offsets = [0, 768], sizes = [8, 128], strides = [1, 1]} : vector<8x1792xf32> to vector<8x128xf32>
    %190 = vector.extract_strided_slice %179 {offsets = [0, 896], sizes = [8, 128], strides = [1, 1]} : vector<8x1792xf32> to vector<8x128xf32>
    %191 = arith.addf %189, %190 : vector<8x128xf32>
    %192 = vector.extract_strided_slice %179 {offsets = [0, 1024], sizes = [8, 128], strides = [1, 1]} : vector<8x1792xf32> to vector<8x128xf32>
    %193 = vector.extract_strided_slice %179 {offsets = [0, 1152], sizes = [8, 128], strides = [1, 1]} : vector<8x1792xf32> to vector<8x128xf32>
    %194 = arith.addf %192, %193 : vector<8x128xf32>
    %195 = vector.extract_strided_slice %179 {offsets = [0, 1280], sizes = [8, 128], strides = [1, 1]} : vector<8x1792xf32> to vector<8x128xf32>
    %196 = vector.extract_strided_slice %179 {offsets = [0, 1408], sizes = [8, 128], strides = [1, 1]} : vector<8x1792xf32> to vector<8x128xf32>
    %197 = arith.addf %195, %196 : vector<8x128xf32>
    %198 = vector.extract_strided_slice %179 {offsets = [0, 1536], sizes = [8, 128], strides = [1, 1]} : vector<8x1792xf32> to vector<8x128xf32>
    %199 = vector.extract_strided_slice %179 {offsets = [0, 1664], sizes = [8, 128], strides = [1, 1]} : vector<8x1792xf32> to vector<8x128xf32>
    %200 = arith.addf %198, %199 : vector<8x128xf32>
    %201 = tpu.concatenate %182, %185, %188, %191, %194, %197, %200 in 1 : vector<8x128xf32>, vector<8x128xf32>, vector<8x128xf32>, vector<8x128xf32>, vector<8x128xf32>, vector<8x128xf32>, vector<8x128xf32> -> vector<8x896xf32>
    %c120 = arith.constant 120 : index
    %c0_20 = arith.constant 0 : index
    %202 = vector.load %arg2[%c120, %c0_20] : memref<216x128xf32, #tpu.memory_space<vmem>>, vector<8x8xf32>
    %c128 = arith.constant 128 : index
    %c0_21 = arith.constant 0 : index
    %203 = vector.load %arg2[%c128, %c0_21] : memref<216x128xf32, #tpu.memory_space<vmem>>, vector<8x8xf32>
    %c136 = arith.constant 136 : index
    %c0_22 = arith.constant 0 : index
    %204 = vector.load %arg2[%c136, %c0_22] : memref<216x128xf32, #tpu.memory_space<vmem>>, vector<8x1xf32>
    %205 = vector.extract_strided_slice %201 {offsets = [0, 0], sizes = [8, 768], strides = [1, 1]} : vector<8x896xf32> to vector<8x768xf32>
    %cst_23 = arith.constant dense<0.000000e+00> : vector<8x768xf32>
    %206 = tpu.matmul %202, %205, %cst_23 {dimension_numbers = #tpu.dot_dimension_numbers<[1], [0], [0], [1], [0, 0, 1, 1], [], []>} : vector<8x8xf32>, vector<8x768xf32>, vector<8x768xf32> -> vector<8x768xf32>
    %207 = vector.extract_strided_slice %201 {offsets = [0, 128], sizes = [8, 768], strides = [1, 1]} : vector<8x896xf32> to vector<8x768xf32>
    %cst_24 = arith.constant dense<0.000000e+00> : vector<8x768xf32>
    %208 = tpu.matmul %203, %207, %cst_24 {dimension_numbers = #tpu.dot_dimension_numbers<[1], [0], [0], [1], [0, 0, 1, 1], [], []>} : vector<8x8xf32>, vector<8x768xf32>, vector<8x768xf32> -> vector<8x768xf32>
    %209 = arith.addf %206, %208 : vector<8x768xf32>
    %210 = vector.broadcast %204 : vector<8x1xf32> to vector<8x768xf32>
    %211 = arith.addf %209, %210 : vector<8x768xf32>
    %cst_25 = arith.constant 0.000000e+00 : f32
    %212 = vector.broadcast %cst_25 : f32 to vector<8x768xf32>
    %213 = arith.maximumf %211, %212 : vector<8x768xf32>
    %214 = vector.extract_strided_slice %213 {offsets = [0, 0], sizes = [8, 128], strides = [1, 1]} : vector<8x768xf32> to vector<8x128xf32>
    %215 = vector.extract_strided_slice %213 {offsets = [0, 128], sizes = [8, 128], strides = [1, 1]} : vector<8x768xf32> to vector<8x128xf32>
    %216 = arith.addf %214, %215 : vector<8x128xf32>
    %217 = vector.extract_strided_slice %213 {offsets = [0, 256], sizes = [8, 128], strides = [1, 1]} : vector<8x768xf32> to vector<8x128xf32>
    %218 = vector.extract_strided_slice %213 {offsets = [0, 384], sizes = [8, 128], strides = [1, 1]} : vector<8x768xf32> to vector<8x128xf32>
    %219 = arith.addf %217, %218 : vector<8x128xf32>
    %220 = vector.extract_strided_slice %213 {offsets = [0, 512], sizes = [8, 128], strides = [1, 1]} : vector<8x768xf32> to vector<8x128xf32>
    %221 = vector.extract_strided_slice %213 {offsets = [0, 640], sizes = [8, 128], strides = [1, 1]} : vector<8x768xf32> to vector<8x128xf32>
    %222 = arith.addf %220, %221 : vector<8x128xf32>
    %223 = tpu.concatenate %216, %219, %222 in 1 : vector<8x128xf32>, vector<8x128xf32>, vector<8x128xf32> -> vector<8x384xf32>
    %c144 = arith.constant 144 : index
    %c0_26 = arith.constant 0 : index
    %224 = vector.load %arg2[%c144, %c0_26] : memref<216x128xf32, #tpu.memory_space<vmem>>, vector<8x8xf32>
    %c152 = arith.constant 152 : index
    %c0_27 = arith.constant 0 : index
    %225 = vector.load %arg2[%c152, %c0_27] : memref<216x128xf32, #tpu.memory_space<vmem>>, vector<8x8xf32>
    %c160 = arith.constant 160 : index
    %c0_28 = arith.constant 0 : index
    %226 = vector.load %arg2[%c160, %c0_28] : memref<216x128xf32, #tpu.memory_space<vmem>>, vector<8x1xf32>
    %227 = vector.extract_strided_slice %223 {offsets = [0, 0], sizes = [8, 256], strides = [1, 1]} : vector<8x384xf32> to vector<8x256xf32>
    %cst_29 = arith.constant dense<0.000000e+00> : vector<8x256xf32>
    %228 = tpu.matmul %224, %227, %cst_29 {dimension_numbers = #tpu.dot_dimension_numbers<[1], [0], [0], [1], [0, 0, 1, 1], [], []>} : vector<8x8xf32>, vector<8x256xf32>, vector<8x256xf32> -> vector<8x256xf32>
    %229 = vector.extract_strided_slice %223 {offsets = [0, 128], sizes = [8, 256], strides = [1, 1]} : vector<8x384xf32> to vector<8x256xf32>
    %cst_30 = arith.constant dense<0.000000e+00> : vector<8x256xf32>
    %230 = tpu.matmul %225, %229, %cst_30 {dimension_numbers = #tpu.dot_dimension_numbers<[1], [0], [0], [1], [0, 0, 1, 1], [], []>} : vector<8x8xf32>, vector<8x256xf32>, vector<8x256xf32> -> vector<8x256xf32>
    %231 = arith.addf %228, %230 : vector<8x256xf32>
    %232 = vector.broadcast %226 : vector<8x1xf32> to vector<8x256xf32>
    %233 = arith.addf %231, %232 : vector<8x256xf32>
    %cst_31 = arith.constant 0.000000e+00 : f32
    %234 = vector.broadcast %cst_31 : f32 to vector<8x256xf32>
    %235 = arith.maximumf %233, %234 : vector<8x256xf32>
    %236 = vector.extract_strided_slice %235 {offsets = [0, 0], sizes = [8, 128], strides = [1, 1]} : vector<8x256xf32> to vector<8x128xf32>
    %237 = vector.extract_strided_slice %235 {offsets = [0, 128], sizes = [8, 128], strides = [1, 1]} : vector<8x256xf32> to vector<8x128xf32>
    %238 = arith.addf %236, %237 : vector<8x128xf32>
    %c168 = arith.constant 168 : index
    %c0_32 = arith.constant 0 : index
    %239 = vector.load %arg2[%c168, %c0_32] : memref<216x128xf32, #tpu.memory_space<vmem>>, vector<8x8xf32>
    %cst_33 = arith.constant dense<0.000000e+00> : vector<8x128xf32>
    %240 = tpu.matmul %239, %238, %cst_33 {dimension_numbers = #tpu.dot_dimension_numbers<[1], [0], [0], [1], [0, 0, 1, 1], [], []>} : vector<8x8xf32>, vector<8x128xf32>, vector<8x128xf32> -> vector<8x128xf32>
    %c176 = arith.constant 176 : index
    %c0_34 = arith.constant 0 : index
    %241 = vector.load %arg2[%c176, %c0_34] : memref<216x128xf32, #tpu.memory_space<vmem>>, vector<8x1xf32>
    %242 = vector.broadcast %241 : vector<8x1xf32> to vector<8x128xf32>
    %243 = arith.addf %240, %242 : vector<8x128xf32>
    %cst_35 = arith.constant 0.000000e+00 : f32
    %244 = vector.broadcast %cst_35 : f32 to vector<8x128xf32>
    %245 = arith.maximumf %243, %244 : vector<8x128xf32>
    %c184 = arith.constant 184 : index
    %c0_36 = arith.constant 0 : index
    %246 = vector.load %arg2[%c184, %c0_36] : memref<216x128xf32, #tpu.memory_space<vmem>>, vector<8x8xf32>
    %cst_37 = arith.constant dense<0.000000e+00> : vector<8x128xf32>
    %247 = tpu.matmul %246, %245, %cst_37 {dimension_numbers = #tpu.dot_dimension_numbers<[1], [0], [0], [1], [0, 0, 1, 1], [], []>} : vector<8x8xf32>, vector<8x128xf32>, vector<8x128xf32> -> vector<8x128xf32>
    %c192 = arith.constant 192 : index
    %c0_38 = arith.constant 0 : index
    %248 = vector.load %arg2[%c192, %c0_38] : memref<216x128xf32, #tpu.memory_space<vmem>>, vector<8x1xf32>
    %249 = vector.broadcast %248 : vector<8x1xf32> to vector<8x128xf32>
    %250 = arith.addf %247, %249 : vector<8x128xf32>
    %cst_39 = arith.constant 0.000000e+00 : f32
    %251 = vector.broadcast %cst_39 : f32 to vector<8x128xf32>
    %252 = arith.maximumf %250, %251 : vector<8x128xf32>
    %c200 = arith.constant 200 : index
    %c0_40 = arith.constant 0 : index
    %253 = vector.load %arg2[%c200, %c0_40] : memref<216x128xf32, #tpu.memory_space<vmem>>, vector<5x8xf32>
    %cst_41 = arith.constant dense<0.000000e+00> : vector<5x128xf32>
    %254 = tpu.matmul %253, %252, %cst_41 {dimension_numbers = #tpu.dot_dimension_numbers<[1], [0], [0], [1], [0, 0, 1, 1], [], []>} : vector<5x8xf32>, vector<8x128xf32>, vector<5x128xf32> -> vector<5x128xf32>
    %c208 = arith.constant 208 : index
    %c0_42 = arith.constant 0 : index
    %255 = vector.load %arg2[%c208, %c0_42] : memref<216x128xf32, #tpu.memory_space<vmem>>, vector<5x1xf32>
    %256 = vector.broadcast %255 : vector<5x1xf32> to vector<5x128xf32>
    %257 = arith.addf %254, %256 : vector<5x128xf32>
    %c0_43 = arith.constant 0 : index
    %c0_44 = arith.constant 0 : index
    %258 = vector.load %arg3[%c0_43, %c0_44] : memref<5x128xf32, #tpu.memory_space<vmem>>, vector<5x128xf32>
    tpu.vector_store %arg3[%c0_43, %c0_44], %257 {strides = array<i32>} : memref<5x128xf32, #tpu.memory_space<vmem>>, vector<5x128xf32>,
    return
  }
  func.func @transform_0(%arg0: i32) -> (i32, i32, i32) {
    %c0_i32 = arith.constant 0 : i32
    %c0_i32_0 = arith.constant 0 : i32
    %c0_i32_1 = arith.constant 0 : i32
    return %arg0, %c0_i32, %c0_i32_0 : i32, i32, i32
  }
  func.func @transform_1(%arg0: i32) -> (i32, i32) {
    %c0_i32 = arith.constant 0 : i32
    %c0_i32_0 = arith.constant 0 : i32
    %c0_i32_1 = arith.constant 0 : i32
    return %c0_i32, %c0_i32_0 : i32, i32
  }
  func.func @transform_2(%arg0: i32) -> (i32, i32) {
    %c0_i32 = arith.constant 0 : i32
    %c0_i32_0 = arith.constant 0 : i32
    return %c0_i32, %arg0 : i32, i32
  }
}

</mosaic_0001>

<llo_original>
// kernel: tpu_custom_call.1
$region0: #{tpu_custom_call.1}
  #allocation0 [shape = 'u32[]', space=smem, size = 0x4, offset = 0x4, fixed_abs, tag = 'smem constant byte address 0x4 - core index']
  #allocation1 [shape = 'u32[144,128]{1,0:T(1,128)}', space=vmem, size = 0x12000, scoped, tag = 'internal scratch']
  %s0 = inlined_call_operand.hbm [shape: f32[1,4,8192], index: 0, kind: input, shape index: {}]
  %s1 = inlined_call_operand.hbm [shape: f32[216,128], index: 1, kind: input, shape index: {}]
  %s2 = inlined_call_operand.hbm [shape: f32[5,128], index: 2, kind: output, shape index: {}]
  %s3 = sld [smem:[#allocation0]]
  $region26: #{tpu_custom_call.1} parent=0
    _
  %s5 = ssub.s32 1, %s3
  %s6 = scalar_select 0, %s5, %s3
  $region1: #{tpu_custom_call.1} parent=0
    #allocation2 [shape = 'u8[131072]{0}', space=vmem, size = 0x20000, scoped, tag = 'input window, operand 0, single buffered']
    #allocation3 [shape = 's32[1]{0}', space=sflag, size = 0x4, scoped, tag = 'scoped memory for tpu_custom_call.1']
    #allocation4 [shape = 's32[1]{0}', space=sflag, size = 0x4, scoped, tag = 'scoped memory for tpu_custom_call.1']
    #allocation5 [shape = 'u8[110592]{0}', space=vmem, size = 0x1b000, scoped, tag = 'input window, operand 1, single buffered']
    #allocation6 [shape = 's32[1]{0}', space=sflag, size = 0x4, scoped, tag = 'scoped memory for tpu_custom_call.1']
    #allocation7 [shape = 'u8[4096]{0}', space=vmem, size = 0x1000, scoped, tag = 'output window, operand 0, single buffered']
    %7 = vsyncpa [#allocation3], 0
    %8 = vsyncpa [#allocation6], 0
    %9 = vsyncpa [#allocation4], 0
    // Predicated region
    $region2: #{tpu_custom_call.1} parent=1 // pred_check
      _
    $region3: #{tpu_custom_call.1} parent=1 // pred_check_branch
      %11 = sbr.rel (0) target = $region5
    $region4: #{tpu_custom_call.1} parent=1 // pred_region
      %s13 = ssub.s32 4096, 4096
      %14 = vsyncadd [#allocation3], %s13
      %s16 = sshll.u32 [#allocation2], 4
      %s17 = int_to_ptr.vmem [resolvable:$true] %s16
      %19 = dma.hbm_to_vmem [thread:$0]  %s0, 4096, %s17, [#allocation3]
    $region5: #{tpu_custom_call.1} parent=1 // pred_fallthru
      _
    // Predicated region
    $region6: #{tpu_custom_call.1} parent=1 // pred_check
      _
    $region7: #{tpu_custom_call.1} parent=1 // pred_check_branch
      %21 = sbr.rel (0) target = $region9
    $region8: #{tpu_custom_call.1} parent=1 // pred_region
      %s23 = ssub.s32 3456, 3456
      %24 = vsyncadd [#allocation6], %s23
      %s25 = sshll.u32 [#allocation5], 4
      %s26 = int_to_ptr.vmem [resolvable:$true] %s25
      %31 = dma.hbm_to_vmem [thread:$0]  %s1, 3456, %s26, [#allocation6], 128, 128, 8
    $region9: #{tpu_custom_call.1} parent=1 // pred_fallthru
      _
    // Predicated region
    $region10: #{tpu_custom_call.1} parent=1 // pred_check
      _
    $region11: #{tpu_custom_call.1} parent=1 // pred_check_branch
      %33 = sbr.rel (0) target = $region13
    $region12: #{tpu_custom_call.1} parent=1 // pred_region
      %34 = dma.done [#allocation3], 4096
    $region13: #{tpu_custom_call.1} parent=1 // pred_fallthru
      _
    // Predicated region
    $region14: #{tpu_custom_call.1} parent=1 // pred_check
      _
    $region15: #{tpu_custom_call.1} parent=1 // pred_check_branch
      %36 = sbr.rel (0) target = $region17
    $region16: #{tpu_custom_call.1} parent=1 // pred_region
      %37 = dma.done [#allocation6], 3456
    $region17: #{tpu_custom_call.1} parent=1 // pred_fallthru
      _
    %v38 = vld [vmem:[#allocation2] sm:$0xff]
    %v39 = vld [vmem:[#allocation2 + $0x8] sm:$0xff]
    %v40 = vld [vmem:[#allocation2 + $0x10] sm:$0xff]
    %v41 = vld [vmem:[#allocation2 + $0x18] sm:$0xff]
    %v42 = vld [vmem:[#allocation2 + $0x20] sm:$0xff]
    %v43 = vld [vmem:[#allocation2 + $0x28] sm:$0xff]
    %v44 = vld [vmem:[#allocation2 + $0x30] sm:$0xff]
    %v45 = vld [vmem:[#allocation2 + $0x38] sm:$0xff]
    %v46 = vld [vmem:[#allocation2 + $0x40] sm:$0xff]
    %v47 = vld [vmem:[#allocation2 + $0x48] sm:$0xff]
    %v48 = vld [vmem:[#allocation2 + $0x50] sm:$0xff]
    %v49 = vld [vmem:[#allocation2 + $0x58] sm:$0xff]
    %v50 = vld [vmem:[#allocation2 + $0x60] sm:$0xff]
    %v51 = vld [vmem:[#allocation2 + $0x68] sm:$0xff]
    %v52 = vld [vmem:[#allocation2 + $0x70] sm:$0xff]
    %v53 = vld [vmem:[#allocation2 + $0x78] sm:$0xff]
    %v54 = vld [vmem:[#allocation2 + $0x80] sm:$0xff]
    %v55 = vld [vmem:[#allocation2 + $0x88] sm:$0xff]
    %v56 = vld [vmem:[#allocation2 + $0x90] sm:$0xff]
    %v57 = vld [vmem:[#allocation2 + $0x98] sm:$0xff]
    %v58 = vld [vmem:[#allocation2 + $0xa0] sm:$0xff]
    %v59 = vld [vmem:[#allocation2 + $0xa8] sm:$0xff]
    %v60 = vld [vmem:[#allocation2 + $0xb0] sm:$0xff]
    %v61 = vld [vmem:[#allocation2 + $0xb8] sm:$0xff]
    %v62 = vld [vmem:[#allocation2 + $0xc0] sm:$0xff]
    %v63 = vld [vmem:[#allocation2 + $0xc8] sm:$0xff]
    %v64 = vld [vmem:[#allocation2 + $0xd0] sm:$0xff]
    %v65 = vld [vmem:[#allocation2 + $0xd8] sm:$0xff]
    %v66 = vld [vmem:[#allocation2 + $0xe0] sm:$0xff]
    %v67 = vld [vmem:[#allocation2 + $0xe8] sm:$0xff]
    %v68 = vld [vmem:[#allocation2 + $0xf0] sm:$0xff]
    %v69 = vld [vmem:[#allocation2 + $0xf8] sm:$0xff]
    %v70 = vld [vmem:[#allocation5] sm:$0xff]
    %v71 = vld [vmem:[#allocation5 + $0x8] sm:$0xff]
    %v72 = vld [vmem:[#allocation5 + $0x10] sm:$0xff]
    %v73 = vld [vmem:[#allocation5 + $0x18] sm:$0xff]
    %v74 = vld [vmem:[#allocation5 + $0x20] sm:$0xff]
    %v75 = vld [vmem:[#allocation5 + $0x28] sm:$0xff]
    %v108 = vcombine.high %v38, %v38
    %v109 = vcombine.high %v39, %v39
    %v110 = vcombine.high %v40, %v40
    %v111 = vcombine.high %v41, %v41
    %v112 = vcombine.high %v42, %v42
    %v113 = vcombine.high %v43, %v43
    %v114 = vcombine.high %v44, %v44
    %v115 = vcombine.high %v45, %v45
    %v116 = vcombine.high %v46, %v46
    %v117 = vcombine.high %v47, %v47
    %v118 = vcombine.high %v48, %v48
    %v119 = vcombine.high %v49, %v49
    %v120 = vcombine.high %v50, %v50
    %v121 = vcombine.high %v51, %v51
    %v122 = vcombine.high %v52, %v52
    %v123 = vcombine.high %v53, %v53
    %v124 = vcombine.high %v54, %v54
    %v125 = vcombine.high %v55, %v55
    %v126 = vcombine.high %v56, %v56
    %v127 = vcombine.high %v57, %v57
    %v128 = vcombine.high %v58, %v58
    %v129 = vcombine.high %v59, %v59
    %v130 = vcombine.high %v60, %v60
    %v131 = vcombine.high %v61, %v61
    %v132 = vcombine.high %v62, %v62
    %v133 = vcombine.high %v63, %v63
    %v134 = vcombine.high %v64, %v64
    %v135 = vcombine.high %v65, %v65
    %v136 = vcombine.high %v66, %v66
    %v137 = vcombine.high %v67, %v67
    %v138 = vcombine.high %v68, %v68
    %vm139 = vcmask 31744
    %v141 = vsel %vm139, %v72, 0
    %v144 = vsel %vm139, %v73, 0
    %vm146 = vcmask 1043456
    %v147 = vsel %vm146, %v108, 0
    %v149 = vsel %vm146, %v39, 0
    %v151 = vsel %vm146, %v109, 0
    %v153 = vsel %vm146, %v40, 0
    %v155 = vsel %vm146, %v110, 0
    %v157 = vsel %vm146, %v41, 0
    %v159 = vsel %vm146, %v111, 0
    %v161 = vsel %vm146, %v42, 0
    %v163 = vsel %vm146, %v112, 0
    %v165 = vsel %vm146, %v43, 0
    %v167 = vsel %vm146, %v113, 0
    %v169 = vsel %vm146, %v44, 0
    %v171 = vsel %vm146, %v114, 0
    %v173 = vsel %vm146, %v45, 0
    %v175 = vsel %vm146, %v115, 0
    %v177 = vsel %vm146, %v46, 0
    %v179 = vsel %vm146, %v116, 0
    %v181 = vsel %vm146, %v47, 0
    %v183 = vsel %vm146, %v117, 0
    %v185 = vsel %vm146, %v48, 0
    %v187 = vsel %vm146, %v118, 0
    %v189 = vsel %vm146, %v49, 0
    %v191 = vsel %vm146, %v119, 0
    %v193 = vsel %vm146, %v50, 0
    %v195 = vsel %vm146, %v120, 0
    %v197 = vsel %vm146, %v51, 0
    %v199 = vsel %vm146, %v121, 0
    %v201 = vsel %vm146, %v52, 0
    %v203 = vsel %vm146, %v122, 0
    %v205 = vsel %vm146, %v53, 0
    %v207 = vsel %vm146, %v123, 0
    %v209 = vsel %vm146, %v54, 0
    %v211 = vsel %vm146, %v124, 0
    %v213 = vsel %vm146, %v55, 0
    %v215 = vsel %vm146, %v125, 0
    %v217 = vsel %vm146, %v56, 0
    %v219 = vsel %vm146, %v126, 0
    %v221 = vsel %vm146, %v57, 0
    %v223 = vsel %vm146, %v127, 0
    %v225 = vsel %vm146, %v58, 0
    %v227 = vsel %vm146, %v128, 0
    %v229 = vsel %vm146, %v59, 0
    %v231 = vsel %vm146, %v129, 0
    %v233 = vsel %vm146, %v60, 0
    %v235 = vsel %vm146, %v130, 0
    %v237 = vsel %vm146, %v61, 0
    %v239 = vsel %vm146, %v131, 0
    %v241 = vsel %vm146, %v62, 0
    %v243 = vsel %vm146, %v132, 0
    %v245 = vsel %vm146, %v63, 0
    %v247 = vsel %vm146, %v133, 0
    %v249 = vsel %vm146, %v64, 0
    %v251 = vsel %vm146, %v134, 0
    %v253 = vsel %vm146, %v65, 0
    %v255 = vsel %vm146, %v135, 0
    %v257 = vsel %vm146, %v66, 0
    %v259 = vsel %vm146, %v136, 0
    %v261 = vsel %vm146, %v67, 0
    %v263 = vsel %vm146, %v137, 0
    %v265 = vsel %vm146, %v68, 0
    %v267 = vsel %vm146, %v138, 0
    %v269 = vsel %vm146, %v69, 0
    %271 = vmatprep.subr.mxu0 0.0
    %272 = vmatpush1.msra.mxu0 0.0
    %273 = vmatprep.subr.mxu0 0.0
    %274 = vmatpush1.msra.mxu0 0.0
    %275 = vmatprep.subr.mxu0 0.0
    %276 = vmatpush1.msra.mxu0 0.0
    %277 = vmatprep.subr.mxu0 0.0
    %278 = vmatpush1.msra.mxu0 0.0
    %279 = vmatprep.subr.mxu0 0.0
    %280 = vmatpush1.msra.mxu0 0.0
    %281 = vmatprep.subr.mxu0 0.0
    %282 = vmatpush1.msra.mxu0 0.0
    %283 = vmatprep.subr.mxu0 0.0
    %284 = vmatpush1.msra.mxu0 0.0
    %285 = vmatprep.subr.mxu0 0.0
    %286 = vmatpush1.msra.mxu0 0.0
    %287 = vmatprep.subr.mxu0 0.0
    %288 = vmatpush1.msra.mxu0 0.0
    %289 = vmatprep.subr.mxu0 0.0
    %290 = vmatpush1.msra.mxu0 0.0
    %291 = vmatprep.subr.mxu0 0.0
    %292 = vmatpush1.msra.mxu0 0.0
    %293 = vmatprep.subr.mxu0 0.0
    %294 = vmatpush1.msra.mxu0 0.0
    %295 = vmatprep.subr.mxu0 0.0
    %296 = vmatpush1.msra.mxu0 0.0
    %297 = vmatprep.subr.mxu0 0.0
    %298 = vmatpush1.msra.mxu0 0.0
    %299 = vmatprep.subr.mxu0 0.0
    %300 = vmatpush1.msra.mxu0 0.0
    %301 = vmatprep.subr.mxu0 %v149
    %302 = vmatpush1.msra.mxu0 %v147
    %303 = vmatprep.subr.mxu0 0.0
    %304 = vmatpush2.msra.mxu0 0.0
    %305 = vmatprep.subr.mxu0 0.0
    %306 = vmatpush2.msra.mxu0 0.0
    %307 = vmatprep.subr.mxu0 0.0
    %308 = vmatpush2.msra.mxu0 0.0
    %309 = vmatprep.subr.mxu0 0.0
    %310 = vmatpush2.msra.mxu0 0.0
    %311 = vmatprep.subr.mxu0 0.0
    %312 = vmatpush2.msra.mxu0 0.0
    %313 = vmatprep.subr.mxu0 0.0
    %314 = vmatpush2.msra.mxu0 0.0
    %315 = vmatprep.subr.mxu0 0.0
    %316 = vmatpush2.msra.mxu0 0.0
    %317 = vmatprep.subr.mxu0 0.0
    %318 = vmatpush2.msra.mxu0 0.0
    %319 = vmatprep.subr.mxu0 0.0
    %320 = vmatpush2.msra.mxu0 0.0
    %321 = vmatprep.subr.mxu0 0.0
    %322 = vmatpush2.msra.mxu0 0.0
    %323 = vmatprep.subr.mxu0 0.0
    %324 = vmatpush2.msra.mxu0 0.0
    %325 = vmatprep.subr.mxu0 0.0
    %326 = vmatpush2.msra.mxu0 0.0
    %327 = vmatprep.subr.mxu0 0.0
    %328 = vmatpush2.msra.mxu0 0.0
    %329 = vmatprep.subr.mxu0 0.0
    %330 = vmatpush2.msra.mxu0 0.0
    %331 = vmatprep.subr.mxu0 0.0
    %332 = vmatpush2.msra.mxu0 0.0
    %333 = vmatprep.subr.mxu0 0.0
    %334 = vmatpush2.msra.mxu0 0.0
    %335 = vmatprep.mubr.f32.mxu0 0.0
    %336 = vmatmul.mubr.f32.gmra.mxu0 %v141
    %v337 = vpop.f32.mrf.mxu0
    %v338 = vadd.f32 0.0, %v337
    %v339 = vpop.f32.mrf.mxu0
    %v340 = vadd.f32 0.0, %v339
    %341 = vmatprep.mubr.f32.mxu0 0.0
    %342 = vmatmul.mubr.f32.gmra.mxu0 %v144
    %v343 = vpop.f32.mrf.mxu0
    %v344 = vadd.f32 0.0, %v343
    %v345 = vpop.f32.mrf.mxu0
    %v346 = vadd.f32 0.0, %v345
    %347 = vdwg.mxu0
    %348 = vmatprep.subr.mxu0 0.0
    %349 = vmatpush1.msra.mxu0 0.0
    %350 = vmatprep.subr.mxu0 0.0
    %351 = vmatpush1.msra.mxu0 0.0
    %352 = vmatprep.subr.mxu0 0.0
    %353 = vmatpush1.msra.mxu0 0.0
    %354 = vmatprep.subr.mxu0 0.0
    %355 = vmatpush1.msra.mxu0 0.0
    %356 = vmatprep.subr.mxu0 0.0
    %357 = vmatpush1.msra.mxu0 0.0
    %358 = vmatprep.subr.mxu0 0.0
    %359 = vmatpush1.msra.mxu0 0.0
    %360 = vmatprep.subr.mxu0 0.0
    %361 = vmatpush1.msra.mxu0 0.0
    %362 = vmatprep.subr.mxu0 0.0
    %363 = vmatpush1.msra.mxu0 0.0
    %364 = vmatprep.subr.mxu0 0.0
    %365 = vmatpush1.msra.mxu0 0.0
    %366 = vmatprep.subr.mxu0 0.0
    %367 = vmatpush1.msra.mxu0 0.0
    %368 = vmatprep.subr.mxu0 0.0
    %369 = vmatpush1.msra.mxu0 0.0
    %370 = vmatprep.subr.mxu0 0.0
    %371 = vmatpush1.msra.mxu0 0.0
    %372 = vmatprep.subr.mxu0 0.0
    %373 = vmatpush1.msra.mxu0 0.0
    %374 = vmatprep.subr.mxu0 0.0
    %375 = vmatpush1.msra.mxu0 0.0
    %376 = vmatprep.subr.mxu0 0.0
    %377 = vmatpush1.msra.mxu0 0.0
    %378 = vmatprep.subr.mxu0 %v153
    %379 = vmatpush1.msra.mxu0 %v151
    %380 = vmatprep.subr.mxu0 0.0
    %381 = vmatpush2.msra.mxu0 0.0
    %382 = vmatprep.subr.mxu0 0.0
    %383 = vmatpush2.msra.mxu0 0.0
    %384 = vmatprep.subr.mxu0 0.0
    %385 = vmatpush2.msra.mxu0 0.0
    %386 = vmatprep.subr.mxu0 0.0
    %387 = vmatpush2.msra.mxu0 0.0
    %388 = vmatprep.subr.mxu0 0.0
    %389 = vmatpush2.msra.mxu0 0.0
    %390 = vmatprep.subr.mxu0 0.0
    %391 = vmatpush2.msra.mxu0 0.0
    %392 = vmatprep.subr.mxu0 0.0
    %393 = vmatpush2.msra.mxu0 0.0
    %394 = vmatprep.subr.mxu0 0.0
    %395 = vmatpush2.msra.mxu0 0.0
    %396 = vmatprep.subr.mxu0 0.0
    %397 = vmatpush2.msra.mxu0 0.0
    %398 = vmatprep.subr.mxu0 0.0
    %399 = vmatpush2.msra.mxu0 0.0
    %400 = vmatprep.subr.mxu0 0.0
    %401 = vmatpush2.msra.mxu0 0.0
    %402 = vmatprep.subr.mxu0 0.0
    %403 = vmatpush2.msra.mxu0 0.0
    %404 = vmatprep.subr.mxu0 0.0
    %405 = vmatpush2.msra.mxu0 0.0
    %406 = vmatprep.subr.mxu0 0.0
    %407 = vmatpush2.msra.mxu0 0.0
    %408 = vmatprep.subr.mxu0 0.0
    %409 = vmatpush2.msra.mxu0 0.0
    %410 = vmatprep.subr.mxu0 0.0
    %411 = vmatpush2.msra.mxu0 0.0
    %412 = vmatprep.mubr.f32.mxu0 0.0
    %413 = vmatmul.mubr.f32.gmra.mxu0 %v141
    %v414 = vpop.f32.mrf.mxu0
    %v415 = vadd.f32 0.0, %v414
    %v416 = vpop.f32.mrf.mxu0
    %v417 = vadd.f32 0.0, %v416
    %418 = vmatprep.mubr.f32.mxu0 0.0
    %419 = vmatmul.mubr.f32.gmra.mxu0 %v144
    %v420 = vpop.f32.mrf.mxu0
    %v421 = vadd.f32 0.0, %v420
    %v422 = vpop.f32.mrf.mxu0
    %v423 = vadd.f32 0.0, %v422
    %424 = vdwg.mxu0
    %425 = vmatprep.subr.mxu0 0.0
    %426 = vmatpush1.msra.mxu0 0.0
    %427 = vmatprep.subr.mxu0 0.0
    %428 = vmatpush1.msra.mxu0 0.0
    %429 = vmatprep.subr.mxu0 0.0
    %430 = vmatpush1.msra.mxu0 0.0
    %431 = vmatprep.subr.mxu0 0.0
    %432 = vmatpush1.msra.mxu0 0.0
    %433 = vmatprep.subr.mxu0 0.0
    %434 = vmatpush1.msra.mxu0 0.0
    %435 = vmatprep.subr.mxu0 0.0
    %436 = vmatpush1.msra.mxu0 0.0
    %437 = vmatprep.subr.mxu0 0.0
    %438 = vmatpush1.msra.mxu0 0.0
    %439 = vmatprep.subr.mxu0 0.0
    %440 = vmatpush1.msra.mxu0 0.0
    %441 = vmatprep.subr.mxu0 0.0
    %442 = vmatpush1.msra.mxu0 0.0
    %443 = vmatprep.subr.mxu0 0.0
    %444 = vmatpush1.msra.mxu0 0.0
    %445 = vmatprep.subr.mxu0 0.0
    %446 = vmatpush1.msra.mxu0 0.0
    %447 = vmatprep.subr.mxu0 0.0
    %448 = vmatpush1.msra.mxu0 0.0
    %449 = vmatprep.subr.mxu0 0.0
    %450 = vmatpush1.msra.mxu0 0.0
    %451 = vmatprep.subr.mxu0 0.0
    %452 = vmatpush1.msra.mxu0 0.0
    %453 = vmatprep.subr.mxu0 0.0
    %454 = vmatpush1.msra.mxu0 0.0
    %455 = vmatprep.subr.mxu0 %v157
    %456 = vmatpush1.msra.mxu0 %v155
    %457 = vmatprep.subr.mxu0 0.0
    %458 = vmatpush2.msra.mxu0 0.0
    %459 = vmatprep.subr.mxu0 0.0
    %460 = vmatpush2.msra.mxu0 0.0
    %461 = vmatprep.subr.mxu0 0.0
    %462 = vmatpush2.msra.mxu0 0.0
    %463 = vmatprep.subr.mxu0 0.0
    %464 = vmatpush2.msra.mxu0 0.0
    %465 = vmatprep.subr.mxu0 0.0
    %466 = vmatpush2.msra.mxu0 0.0
    %467 = vmatprep.subr.mxu0 0.0
    %468 = vmatpush2.msra.mxu0 0.0
    %469 = vmatprep.subr.mxu0 0.0
    %470 = vmatpush2.msra.mxu0 0.0
    %471 = vmatprep.subr.mxu0 0.0
    %472 = vmatpush2.msra.mxu0 0.0
    %473 = vmatprep.subr.mxu0 0.0
    %474 = vmatpush2.msra.mxu0 0.0
    %475 = vmatprep.subr.mxu0 0.0
    %476 = vmatpush2.msra.mxu0 0.0
    %477 = vmatprep.subr.mxu0 0.0
    %478 = vmatpush2.msra.mxu0 0.0
    %479 = vmatprep.subr.mxu0 0.0
    %480 = vmatpush2.msra.mxu0 0.0
    %481 = vmatprep.subr.mxu0 0.0
    %482 = vmatpush2.msra.mxu0 0.0
    %483 = vmatprep.subr.mxu0 0.0
    %484 = vmatpush2.msra.mxu0 0.0
    %485 = vmatprep.subr.mxu0 0.0
    %486 = vmatpush2.msra.mxu0 0.0
    %487 = vmatprep.subr.mxu0 0.0
    %488 = vmatpush2.msra.mxu0 0.0
    %489 = vmatprep.mubr.f32.mxu0 0.0
    %490 = vmatmul.mubr.f32.gmra.mxu0 %v141
    %v491 = vpop.f32.mrf.mxu0
    %v492 = vadd.f32 0.0, %v491
    %v493 = vpop.f32.mrf.mxu0
    %v494 = vadd.f32 0.0, %v493
    %495 = vmatprep.mubr.f32.mxu0 0.0
    %496 = vmatmul.mubr.f32.gmra.mxu0 %v144
    %v497 = vpop.f32.mrf.mxu0
    %v498 = vadd.f32 0.0, %v497
    %v499 = vpop.f32.mrf.mxu0
    %v500 = vadd.f32 0.0, %v499
    %501 = vdwg.mxu0
    %502 = vmatprep.subr.mxu0 0.0
    %503 = vmatpush1.msra.mxu0 0.0
    %504 = vmatprep.subr.mxu0 0.0
    %505 = vmatpush1.msra.mxu0 0.0
    %506 = vmatprep.subr.mxu0 0.0
    %507 = vmatpush1.msra.mxu0 0.0
    %508 = vmatprep.subr.mxu0 0.0
    %509 = vmatpush1.msra.mxu0 0.0
    %510 = vmatprep.subr.mxu0 0.0
    %511 = vmatpush1.msra.mxu0 0.0
    %512 = vmatprep.subr.mxu0 0.0
    %513 = vmatpush1.msra.mxu0 0.0
    %514 = vmatprep.subr.mxu0 0.0
    %515 = vmatpush1.msra.mxu0 0.0
    %516 = vmatprep.subr.mxu0 0.0
    %517 = vmatpush1.msra.mxu0 0.0
    %518 = vmatprep.subr.mxu0 0.0
    %519 = vmatpush1.msra.mxu0 0.0
    %520 = vmatprep.subr.mxu0 0.0
    %521 = vmatpush1.msra.mxu0 0.0
    %522 = vmatprep.subr.mxu0 0.0
    %523 = vmatpush1.msra.mxu0 0.0
    %524 = vmatprep.subr.mxu0 0.0
    %525 = vmatpush1.msra.mxu0 0.0
    %526 = vmatprep.subr.mxu0 0.0
    %527 = vmatpush1.msra.mxu0 0.0
    %528 = vmatprep.subr.mxu0 0.0
    %529 = vmatpush1.msra.mxu0 0.0
    %530 = vmatprep.subr.mxu0 0.0
    %531 = vmatpush1.msra.mxu0 0.0
    %532 = vmatprep.subr.mxu0 %v161
    %533 = vmatpush1.msra.mxu0 %v159
    %534 = vmatprep.subr.mxu0 0.0
    %535 = vmatpush2.msra.mxu0 0.0
    %536 = vmatprep.subr.mxu0 0.0
    %537 = vmatpush2.msra.mxu0 0.0
    %538 = vmatprep.subr.mxu0 0.0
    %539 = vmatpush2.msra.mxu0 0.0
    %540 = vmatprep.subr.mxu0 0.0
    %541 = vmatpush2.msra.mxu0 0.0
    %542 = vmatprep.subr.mxu0 0.0
    %543 = vmatpush2.msra.mxu0 0.0
    %544 = vmatprep.subr.mxu0 0.0
    %545 = vmatpush2.msra.mxu0 0.0
    %546 = vmatprep.subr.mxu0 0.0
    %547 = vmatpush2.msra.mxu0 0.0
    %548 = vmatprep.subr.mxu0 0.0
    %549 = vmatpush2.msra.mxu0 0.0
    %550 = vmatprep.subr.mxu0 0.0
    %551 = vmatpush2.msra.mxu0 0.0
    %552 = vmatprep.subr.mxu0 0.0
    %553 = vmatpush2.msra.mxu0 0.0
    %554 = vmatprep.subr.mxu0 0.0
    %555 = vmatpush2.msra.mxu0 0.0
    %556 = vmatprep.subr.mxu0 0.0
    %557 = vmatpush2.msra.mxu0 0.0
    %558 = vmatprep.subr.mxu0 0.0
    %559 = vmatpush2.msra.mxu0 0.0
    %560 = vmatprep.subr.mxu0 0.0
    %561 = vmatpush2.msra.mxu0 0.0
    %562 = vmatprep.subr.mxu0 0.0
    %563 = vmatpush2.msra.mxu0 0.0
    %564 = vmatprep.subr.mxu0 0.0
    %565 = vmatpush2.msra.mxu0 0.0
    %566 = vmatprep.mubr.f32.mxu0 0.0
    %567 = vmatmul.mubr.f32.gmra.mxu0 %v141
    %v568 = vpop.f32.mrf.mxu0
    %v569 = vadd.f32 0.0, %v568
    %v570 = vpop.f32.mrf.mxu0
    %v571 = vadd.f32 0.0, %v570
    %572 = vmatprep.mubr.f32.mxu0 0.0
    %573 = vmatmul.mubr.f32.gmra.mxu0 %v144
    %v574 = vpop.f32.mrf.mxu0
    %v575 = vadd.f32 0.0, %v574
    %v576 = vpop.f32.mrf.mxu0
    %v577 = vadd.f32 0.0, %v576
    %578 = vdwg.mxu0
    %579 = vmatprep.subr.mxu0 0.0
    %580 = vmatpush1.msra.mxu0 0.0
    %581 = vmatprep.subr.mxu0 0.0
    %582 = vmatpush1.msra.mxu0 0.0
    %583 = vmatprep.subr.mxu0 0.0
    %584 = vmatpush1.msra.mxu0 0.0
    %585 = vmatprep.subr.mxu0 0.0
    %586 = vmatpush1.msra.mxu0 0.0
    %587 = vmatprep.subr.mxu0 0.0
    %588 = vmatpush1.msra.mxu0 0.0
    %589 = vmatprep.subr.mxu0 0.0
    %590 = vmatpush1.msra.mxu0 0.0
    %591 = vmatprep.subr.mxu0 0.0
    %592 = vmatpush1.msra.mxu0 0.0
    %593 = vmatprep.subr.mxu0 0.0
    %594 = vmatpush1.msra.mxu0 0.0
    %595 = vmatprep.subr.mxu0 0.0
    %596 = vmatpush1.msra.mxu0 0.0
    %597 = vmatprep.subr.mxu0 0.0
    %598 = vmatpush1.msra.mxu0 0.0
    %599 = vmatprep.subr.mxu0 0.0
    %600 = vmatpush1.msra.mxu0 0.0
    %601 = vmatprep.subr.mxu0 0.0
    %602 = vmatpush1.msra.mxu0 0.0
    %603 = vmatprep.subr.mxu0 0.0
    %604 = vmatpush1.msra.mxu0 0.0
    %605 = vmatprep.subr.mxu0 0.0
    %606 = vmatpush1.msra.mxu0 0.0
    %607 = vmatprep.subr.mxu0 0.0
    %608 = vmatpush1.msra.mxu0 0.0
    %609 = vmatprep.subr.mxu0 %v165
    %610 = vmatpush1.msra.mxu0 %v163
    %611 = vmatprep.subr.mxu0 0.0
    %612 = vmatpush2.msra.mxu0 0.0
    %613 = vmatprep.subr.mxu0 0.0
    %614 = vmatpush2.msra.mxu0 0.0
    %615 = vmatprep.subr.mxu0 0.0
    %616 = vmatpush2.msra.mxu0 0.0
    %617 = vmatprep.subr.mxu0 0.0
    %618 = vmatpush2.msra.mxu0 0.0
    %619 = vmatprep.subr.mxu0 0.0
    %620 = vmatpush2.msra.mxu0 0.0
    %621 = vmatprep.subr.mxu0 0.0
    %622 = vmatpush2.msra.mxu0 0.0
    %623 = vmatprep.subr.mxu0 0.0
    %624 = vmatpush2.msra.mxu0 0.0
    %625 = vmatprep.subr.mxu0 0.0
    %626 = vmatpush2.msra.mxu0 0.0
    %627 = vmatprep.subr.mxu0 0.0
    %628 = vmatpush2.msra.mxu0 0.0
    %629 = vmatprep.subr.mxu0 0.0
    %630 = vmatpush2.msra.mxu0 0.0
    %631 = vmatprep.subr.mxu0 0.0
    %632 = vmatpush2.msra.mxu0 0.0
    %633 = vmatprep.subr.mxu0 0.0
    %634 = vmatpush2.msra.mxu0 0.0
    %635 = vmatprep.subr.mxu0 0.0
    %636 = vmatpush2.msra.mxu0 0.0
    %637 = vmatprep.subr.mxu0 0.0
    %638 = vmatpush2.msra.mxu0 0.0
    %639 = vmatprep.subr.mxu0 0.0
    %640 = vmatpush2.msra.mxu0 0.0
    %641 = vmatprep.subr.mxu0 0.0
    %642 = vmatpush2.msra.mxu0 0.0
    %643 = vmatprep.mubr.f32.mxu0 0.0
    %644 = vmatmul.mubr.f32.gmra.mxu0 %v141
    %v645 = vpop.f32.mrf.mxu0
    %v646 = vadd.f32 0.0, %v645
    %v647 = vpop.f32.mrf.mxu0
    %v648 = vadd.f32 0.0, %v647
    %649 = vmatprep.mubr.f32.mxu0 0.0
    %650 = vmatmul.mubr.f32.gmra.mxu0 %v144
    %v651 = vpop.f32.mrf.mxu0
    %v652 = vadd.f32 0.0, %v651
    %v653 = vpop.f32.mrf.mxu0
    %v654 = vadd.f32 0.0, %v653
    %655 = vdwg.mxu0
    %656 = vmatprep.subr.mxu0 0.0
    %657 = vmatpush1.msra.mxu0 0.0
    %658 = vmatprep.subr.mxu0 0.0
    %659 = vmatpush1.msra.mxu0 0.0
    %660 = vmatprep.subr.mxu0 0.0
    %661 = vmatpush1.msra.mxu0 0.0
    %662 = vmatprep.subr.mxu0 0.0
    %663 = vmatpush1.msra.mxu0 0.0
    %664 = vmatprep.subr.mxu0 0.0
    %665 = vmatpush1.msra.mxu0 0.0
    %666 = vmatprep.subr.mxu0 0.0
    %667 = vmatpush1.msra.mxu0 0.0
    %668 = vmatprep.subr.mxu0 0.0
    %669 = vmatpush1.msra.mxu0 0.0
    %670 = vmatprep.subr.mxu0 0.0
    %671 = vmatpush1.msra.mxu0 0.0
    %672 = vmatprep.subr.mxu0 0.0
    %673 = vmatpush1.msra.mxu0 0.0
    %674 = vmatprep.subr.mxu0 0.0
    %675 = vmatpush1.msra.mxu0 0.0
    %676 = vmatprep.subr.mxu0 0.0
    %677 = vmatpush1.msra.mxu0 0.0
    %678 = vmatprep.subr.mxu0 0.0
    %679 = vmatpush1.msra.mxu0 0.0
    %680 = vmatprep.subr.mxu0 0.0
    %681 = vmatpush1.msra.mxu0 0.0
    %682 = vmatprep.subr.mxu0 0.0
    %683 = vmatpush1.msra.mxu0 0.0
    %684 = vmatprep.subr.mxu0 0.0
    %685 = vmatpush1.msra.mxu0 0.0
    %686 = vmatprep.subr.mxu0 %v169
    %687 = vmatpush1.msra.mxu0 %v167
    %688 = vmatprep.subr.mxu0 0.0
    %689 = vmatpush2.msra.mxu0 0.0
    %690 = vmatprep.subr.mxu0 0.0
    %691 = vmatpush2.msra.mxu0 0.0
    %692 = vmatprep.subr.mxu0 0.0
    %693 = vmatpush2.msra.mxu0 0.0
    %694 = vmatprep.subr.mxu0 0.0
    %695 = vmatpush2.msra.mxu0 0.0
    %696 = vmatprep.subr.mxu0 0.0
    %697 = vmatpush2.msra.mxu0 0.0
    %698 = vmatprep.subr.mxu0 0.0
    %699 = vmatpush2.msra.mxu0 0.0
    %700 = vmatprep.subr.mxu0 0.0
    %701 = vmatpush2.msra.mxu0 0.0
    %702 = vmatprep.subr.mxu0 0.0
    %703 = vmatpush2.msra.mxu0 0.0
    %704 = vmatprep.subr.mxu0 0.0
    %705 = vmatpush2.msra.mxu0 0.0
    %706 = vmatprep.subr.mxu0 0.0
    %707 = vmatpush2.msra.mxu0 0.0
    %708 = vmatprep.subr.mxu0 0.0
    %709 = vmatpush2.msra.mxu0 0.0
    %710 = vmatprep.subr.mxu0 0.0
    %711 = vmatpush2.msra.mxu0 0.0
    %712 = vmatprep.subr.mxu0 0.0
    %713 = vmatpush2.msra.mxu0 0.0
    %714 = vmatprep.subr.mxu0 0.0
    %715 = vmatpush2.msra.mxu0 0.0
    %716 = vmatprep.subr.mxu0 0.0
    %717 = vmatpush2.msra.mxu0 0.0
    %718 = vmatprep.subr.mxu0 0.0
    %719 = vmatpush2.msra.mxu0 0.0
    %720 = vmatprep.mubr.f32.mxu0 0.0
    %721 = vmatmul.mubr.f32.gmra.mxu0 %v141
    %v722 = vpop.f32.mrf.mxu0
    %v723 = vadd.f32 0.0, %v722
    %v724 = vpop.f32.mrf.mxu0
    %v725 = vadd.f32 0.0, %v724
    %726 = vmatprep.mubr.f32.mxu0 0.0
    %727 = vmatmul.mubr.f32.gmra.mxu0 %v144
    %v728 = vpop.f32.mrf.mxu0
    %v729 = vadd.f32 0.0, %v728
    %v730 = vpop.f32.mrf.mxu0
    %v731 = vadd.f32 0.0, %v730
    %732 = vdwg.mxu0
    %733 = vmatprep.subr.mxu0 0.0
    %734 = vmatpush1.msra.mxu0 0.0
    %735 = vmatprep.subr.mxu0 0.0
    %736 = vmatpush1.msra.mxu0 0.0
    %737 = vmatprep.subr.mxu0 0.0
    %738 = vmatpush1.msra.mxu0 0.0
    %739 = vmatprep.subr.mxu0 0.0
    %740 = vmatpush1.msra.mxu0 0.0
    %741 = vmatprep.subr.mxu0 0.0
    %742 = vmatpush1.msra.mxu0 0.0
    %743 = vmatprep.subr.mxu0 0.0
    %744 = vmatpush1.msra.mxu0 0.0
    %745 = vmatprep.subr.mxu0 0.0
    %746 = vmatpush1.msra.mxu0 0.0
    %747 = vmatprep.subr.mxu0 0.0
    %748 = vmatpush1.msra.mxu0 0.0
    %749 = vmatprep.subr.mxu0 0.0
    %750 = vmatpush1.msra.mxu0 0.0
    %751 = vmatprep.subr.mxu0 0.0
    %752 = vmatpush1.msra.mxu0 0.0
    %753 = vmatprep.subr.mxu0 0.0
    %754 = vmatpush1.msra.mxu0 0.0
    %755 = vmatprep.subr.mxu0 0.0
    %756 = vmatpush1.msra.mxu0 0.0
    %757 = vmatprep.subr.mxu0 0.0
    %758 = vmatpush1.msra.mxu0 0.0
    %759 = vmatprep.subr.mxu0 0.0
    %760 = vmatpush1.msra.mxu0 0.0
    %761 = vmatprep.subr.mxu0 0.0
    %762 = vmatpush1.msra.mxu0 0.0
    %763 = vmatprep.subr.mxu0 %v173
    %764 = vmatpush1.msra.mxu0 %v171
    %765 = vmatprep.subr.mxu0 0.0
    %766 = vmatpush2.msra.mxu0 0.0
    %767 = vmatprep.subr.mxu0 0.0
    %768 = vmatpush2.msra.mxu0 0.0
    %769 = vmatprep.subr.mxu0 0.0
    %770 = vmatpush2.msra.mxu0 0.0
    %771 = vmatprep.subr.mxu0 0.0
    %772 = vmatpush2.msra.mxu0 0.0
    %773 = vmatprep.subr.mxu0 0.0
    %774 = vmatpush2.msra.mxu0 0.0
    %775 = vmatprep.subr.mxu0 0.0
    %776 = vmatpush2.msra.mxu0 0.0
    %777 = vmatprep.subr.mxu0 0.0
    %778 = vmatpush2.msra.mxu0 0.0
    %779 = vmatprep.subr.mxu0 0.0
    %780 = vmatpush2.msra.mxu0 0.0
    %781 = vmatprep.subr.mxu0 0.0
    %782 = vmatpush2.msra.mxu0 0.0
    %783 = vmatprep.subr.mxu0 0.0
    %784 = vmatpush2.msra.mxu0 0.0
    %785 = vmatprep.subr.mxu0 0.0
    %786 = vmatpush2.msra.mxu0 0.0
    %787 = vmatprep.subr.mxu0 0.0
    %788 = vmatpush2.msra.mxu0 0.0
    %789 = vmatprep.subr.mxu0 0.0
    %790 = vmatpush2.msra.mxu0 0.0
    %791 = vmatprep.subr.mxu0 0.0
    %792 = vmatpush2.msra.mxu0 0.0
    %793 = vmatprep.subr.mxu0 0.0
    %794 = vmatpush2.msra.mxu0 0.0
    %795 = vmatprep.subr.mxu0 0.0
    %796 = vmatpush2.msra.mxu0 0.0
    %797 = vmatprep.mubr.f32.mxu0 0.0
    %798 = vmatmul.mubr.f32.gmra.mxu0 %v141
    %v799 = vpop.f32.mrf.mxu0
    %v800 = vadd.f32 0.0, %v799
    %v801 = vpop.f32.mrf.mxu0
    %v802 = vadd.f32 0.0, %v801
    %803 = vmatprep.mubr.f32.mxu0 0.0
    %804 = vmatmul.mubr.f32.gmra.mxu0 %v144
    %v805 = vpop.f32.mrf.mxu0
    %v806 = vadd.f32 0.0, %v805
    %v807 = vpop.f32.mrf.mxu0
    %v808 = vadd.f32 0.0, %v807
    %809 = vdwg.mxu0
    %810 = vmatprep.subr.mxu0 0.0
    %811 = vmatpush1.msra.mxu0 0.0
    %812 = vmatprep.subr.mxu0 0.0
    %813 = vmatpush1.msra.mxu0 0.0
    %814 = vmatprep.subr.mxu0 0.0
    %815 = vmatpush1.msra.mxu0 0.0
    %816 = vmatprep.subr.mxu0 0.0
    %817 = vmatpush1.msra.mxu0 0.0
    %818 = vmatprep.subr.mxu0 0.0
    %819 = vmatpush1.msra.mxu0 0.0
    %820 = vmatprep.subr.mxu0 0.0
    %821 = vmatpush1.msra.mxu0 0.0
    %822 = vmatprep.subr.mxu0 0.0
    %823 = vmatpush1.msra.mxu0 0.0
    %824 = vmatprep.subr.mxu0 0.0
    %825 = vmatpush1.msra.mxu0 0.0
    %826 = vmatprep.subr.mxu0 0.0
    %827 = vmatpush1.msra.mxu0 0.0
    %828 = vmatprep.subr.mxu0 0.0
    %829 = vmatpush1.msra.mxu0 0.0
    %830 = vmatprep.subr.mxu0 0.0
    %831 = vmatpush1.msra.mxu0 0.0
    %832 = vmatprep.subr.mxu0 0.0
    %833 = vmatpush1.msra.mxu0 0.0
    %834 = vmatprep.subr.mxu0 0.0
    %835 = vmatpush1.msra.mxu0 0.0
    %836 = vmatprep.subr.mxu0 0.0
    %837 = vmatpush1.msra.mxu0 0.0
    %838 = vmatprep.subr.mxu0 0.0
    %839 = vmatpush1.msra.mxu0 0.0
    %840 = vmatprep.subr.mxu0 %v177
    %841 = vmatpush1.msra.mxu0 %v175
    %842 = vmatprep.subr.mxu0 0.0
    %843 = vmatpush2.msra.mxu0 0.0
    %844 = vmatprep.subr.mxu0 0.0
    %845 = vmatpush2.msra.mxu0 0.0
    %846 = vmatprep.subr.mxu0 0.0
    %847 = vmatpush2.msra.mxu0 0.0
    %848 = vmatprep.subr.mxu0 0.0
    %849 = vmatpush2.msra.mxu0 0.0
    %850 = vmatprep.subr.mxu0 0.0
    %851 = vmatpush2.msra.mxu0 0.0
    %852 = vmatprep.subr.mxu0 0.0
    %853 = vmatpush2.msra.mxu0 0.0
    %854 = vmatprep.subr.mxu0 0.0
    %855 = vmatpush2.msra.mxu0 0.0
    %856 = vmatprep.subr.mxu0 0.0
    %857 = vmatpush2.msra.mxu0 0.0
    %858 = vmatprep.subr.mxu0 0.0
    %859 = vmatpush2.msra.mxu0 0.0
    %860 = vmatprep.subr.mxu0 0.0
    %861 = vmatpush2.msra.mxu0 0.0
    %862 = vmatprep.subr.mxu0 0.0
    %863 = vmatpush2.msra.mxu0 0.0
    %864 = vmatprep.subr.mxu0 0.0
    %865 = vmatpush2.msra.mxu0 0.0
    %866 = vmatprep.subr.mxu0 0.0
    %867 = vmatpush2.msra.mxu0 0.0
    %868 = vmatprep.subr.mxu0 0.0
    %869 = vmatpush2.msra.mxu0 0.0
    %870 = vmatprep.subr.mxu0 0.0
    %871 = vmatpush2.msra.mxu0 0.0
    %872 = vmatprep.subr.mxu0 0.0
    %873 = vmatpush2.msra.mxu0 0.0
    %874 = vmatprep.mubr.f32.mxu0 0.0
    %875 = vmatmul.mubr.f32.gmra.mxu0 %v141
    %v876 = vpop.f32.mrf.mxu0
    %v877 = vadd.f32 0.0, %v876
    %v878 = vpop.f32.mrf.mxu0
    %v879 = vadd.f32 0.0, %v878
    %880 = vmatprep.mubr.f32.mxu0 0.0
    %881 = vmatmul.mubr.f32.gmra.mxu0 %v144
    %v882 = vpop.f32.mrf.mxu0
    %v883 = vadd.f32 0.0, %v882
    %v884 = vpop.f32.mrf.mxu0
    %v885 = vadd.f32 0.0, %v884
    %886 = vdwg.mxu0
    %887 = vmatprep.subr.mxu0 0.0
    %888 = vmatpush1.msra.mxu0 0.0
    %889 = vmatprep.subr.mxu0 0.0
    %890 = vmatpush1.msra.mxu0 0.0
    %891 = vmatprep.subr.mxu0 0.0
    %892 = vmatpush1.msra.mxu0 0.0
    %893 = vmatprep.subr.mxu0 0.0
    %894 = vmatpush1.msra.mxu0 0.0
    %895 = vmatprep.subr.mxu0 0.0
    %896 = vmatpush1.msra.mxu0 0.0
    %897 = vmatprep.subr.mxu0 0.0
    %898 = vmatpush1.msra.mxu0 0.0
    %899 = vmatprep.subr.mxu0 0.0
    %900 = vmatpush1.msra.mxu0 0.0
    %901 = vmatprep.subr.mxu0 0.0
    %902 = vmatpush1.msra.mxu0 0.0
    %903 = vmatprep.subr.mxu0 0.0
    %904 = vmatpush1.msra.mxu0 0.0
    %905 = vmatprep.subr.mxu0 0.0
    %906 = vmatpush1.msra.mxu0 0.0
    %907 = vmatprep.subr.mxu0 0.0
    %908 = vmatpush1.msra.mxu0 0.0
    %909 = vmatprep.subr.mxu0 0.0
    %910 = vmatpush1.msra.mxu0 0.0
    %911 = vmatprep.subr.mxu0 0.0
    %912 = vmatpush1.msra.mxu0 0.0
    %913 = vmatprep.subr.mxu0 0.0
    %914 = vmatpush1.msra.mxu0 0.0
    %915 = vmatprep.subr.mxu0 0.0
    %916 = vmatpush1.msra.mxu0 0.0
    %917 = vmatprep.subr.mxu0 %v181
    %918 = vmatpush1.msra.mxu0 %v179
    %919 = vmatprep.subr.mxu0 0.0
    %920 = vmatpush2.msra.mxu0 0.0
    %921 = vmatprep.subr.mxu0 0.0
    %922 = vmatpush2.msra.mxu0 0.0
    %923 = vmatprep.subr.mxu0 0.0
    %924 = vmatpush2.msra.mxu0 0.0
    %925 = vmatprep.subr.mxu0 0.0
    %926 = vmatpush2.msra.mxu0 0.0
    %927 = vmatprep.subr.mxu0 0.0
    %928 = vmatpush2.msra.mxu0 0.0
    %929 = vmatprep.subr.mxu0 0.0
    %930 = vmatpush2.msra.mxu0 0.0
    %931 = vmatprep.subr.mxu0 0.0
    %932 = vmatpush2.msra.mxu0 0.0
    %933 = vmatprep.subr.mxu0 0.0
    %934 = vmatpush2.msra.mxu0 0.0
    %935 = vmatprep.subr.mxu0 0.0
    %936 = vmatpush2.msra.mxu0 0.0
    %937 = vmatprep.subr.mxu0 0.0
    %938 = vmatpush2.msra.mxu0 0.0
    %939 = vmatprep.subr.mxu0 0.0
    %940 = vmatpush2.msra.mxu0 0.0
    %941 = vmatprep.subr.mxu0 0.0
    %942 = vmatpush2.msra.mxu0 0.0
    %943 = vmatprep.subr.mxu0 0.0
    %944 = vmatpush2.msra.mxu0 0.0
    %945 = vmatprep.subr.mxu0 0.0
    %946 = vmatpush2.msra.mxu0 0.0
    %947 = vmatprep.subr.mxu0 0.0
    %948 = vmatpush2.msra.mxu0 0.0
    %949 = vmatprep.subr.mxu0 0.0
    %950 = vmatpush2.msra.mxu0 0.0
    %951 = vmatprep.mubr.f32.mxu0 0.0
    %952 = vmatmul.mubr.f32.gmra.mxu0 %v141
    %v953 = vpop.f32.mrf.mxu0
    %v954 = vadd.f32 0.0, %v953
    %v955 = vpop.f32.mrf.mxu0
    %v956 = vadd.f32 0.0, %v955
    %957 = vmatprep.mubr.f32.mxu0 0.0
    %958 = vmatmul.mubr.f32.gmra.mxu0 %v144
    %v959 = vpop.f32.mrf.mxu0
    %v960 = vadd.f32 0.0, %v959
    %v961 = vpop.f32.mrf.mxu0
    %v962 = vadd.f32 0.0, %v961
    %963 = vdwg.mxu0
    %964 = vmatprep.subr.mxu0 0.0
    %965 = vmatpush1.msra.mxu0 0.0
    %966 = vmatprep.subr.mxu0 0.0
    %967 = vmatpush1.msra.mxu0 0.0
    %968 = vmatprep.subr.mxu0 0.0
    %969 = vmatpush1.msra.mxu0 0.0
    %970 = vmatprep.subr.mxu0 0.0
    %971 = vmatpush1.msra.mxu0 0.0
    %972 = vmatprep.subr.mxu0 0.0
    %973 = vmatpush1.msra.mxu0 0.0
    %974 = vmatprep.subr.mxu0 0.0
    %975 = vmatpush1.msra.mxu0 0.0
    %976 = vmatprep.subr.mxu0 0.0
    %977 = vmatpush1.msra.mxu0 0.0
    %978 = vmatprep.subr.mxu0 0.0
    %979 = vmatpush1.msra.mxu0 0.0
    %980 = vmatprep.subr.mxu0 0.0
    %981 = vmatpush1.msra.mxu0 0.0
    %982 = vmatprep.subr.mxu0 0.0
    %983 = vmatpush1.msra.mxu0 0.0
    %984 = vmatprep.subr.mxu0 0.0
    %985 = vmatpush1.msra.mxu0 0.0
    %986 = vmatprep.subr.mxu0 0.0
    %987 = vmatpush1.msra.mxu0 0.0
    %988 = vmatprep.subr.mxu0 0.0
    %989 = vmatpush1.msra.mxu0 0.0
    %990 = vmatprep.subr.mxu0 0.0
    %991 = vmatpush1.msra.mxu0 0.0
    %992 = vmatprep.subr.mxu0 0.0
    %993 = vmatpush1.msra.mxu0 0.0
    %994 = vmatprep.subr.mxu0 %v185
    %995 = vmatpush1.msra.mxu0 %v183
    %996 = vmatprep.subr.mxu0 0.0
    %997 = vmatpush2.msra.mxu0 0.0
    %998 = vmatprep.subr.mxu0 0.0
    %999 = vmatpush2.msra.mxu0 0.0
    %1000 = vmatprep.subr.mxu0 0.0
    %1001 = vmatpush2.msra.mxu0 0.0
    %1002 = vmatprep.subr.mxu0 0.0
    %1003 = vmatpush2.msra.mxu0 0.0
    %1004 = vmatprep.subr.mxu0 0.0
    %1005 = vmatpush2.msra.mxu0 0.0
    %1006 = vmatprep.subr.mxu0 0.0
    %1007 = vmatpush2.msra.mxu0 0.0
    %1008 = vmatprep.subr.mxu0 0.0
    %1009 = vmatpush2.msra.mxu0 0.0
    %1010 = vmatprep.subr.mxu0 0.0
    %1011 = vmatpush2.msra.mxu0 0.0
    %1012 = vmatprep.subr.mxu0 0.0
    %1013 = vmatpush2.msra.mxu0 0.0
    %1014 = vmatprep.subr.mxu0 0.0
    %1015 = vmatpush2.msra.mxu0 0.0
    %1016 = vmatprep.subr.mxu0 0.0
    %1017 = vmatpush2.msra.mxu0 0.0
    %1018 = vmatprep.subr.mxu0 0.0
    %1019 = vmatpush2.msra.mxu0 0.0
    %1020 = vmatprep.subr.mxu0 0.0
    %1021 = vmatpush2.msra.mxu0 0.0
    %1022 = vmatprep.subr.mxu0 0.0
    %1023 = vmatpush2.msra.mxu0 0.0
    %1024 = vmatprep.subr.mxu0 0.0
    %1025 = vmatpush2.msra.mxu0 0.0
    %1026 = vmatprep.subr.mxu0 0.0
    %1027 = vmatpush2.msra.mxu0 0.0
    %1028 = vmatprep.mubr.f32.mxu0 0.0
    %1029 = vmatmul.mubr.f32.gmra.mxu0 %v141
    %v1030 = vpop.f32.mrf.mxu0
    %v1031 = vadd.f32 0.0, %v1030
    %v1032 = vpop.f32.mrf.mxu0
    %v1033 = vadd.f32 0.0, %v1032
    %1034 = vmatprep.mubr.f32.mxu0 0.0
    %1035 = vmatmul.mubr.f32.gmra.mxu0 %v144
    %v1036 = vpop.f32.mrf.mxu0
    %v1037 = vadd.f32 0.0, %v1036
    %v1038 = vpop.f32.mrf.mxu0
    %v1039 = vadd.f32 0.0, %v1038
    %1040 = vdwg.mxu0
    %1041 = vmatprep.subr.mxu0 0.0
    %1042 = vmatpush1.msra.mxu0 0.0
    %1043 = vmatprep.subr.mxu0 0.0
    %1044 = vmatpush1.msra.mxu0 0.0
    %1045 = vmatprep.subr.mxu0 0.0
    %1046 = vmatpush1.msra.mxu0 0.0
    %1047 = vmatprep.subr.mxu0 0.0
    %1048 = vmatpush1.msra.mxu0 0.0
    %1049 = vmatprep.subr.mxu0 0.0
    %1050 = vmatpush1.msra.mxu0 0.0
    %1051 = vmatprep.subr.mxu0 0.0
    %1052 = vmatpush1.msra.mxu0 0.0
    %1053 = vmatprep.subr.mxu0 0.0
    %1054 = vmatpush1.msra.mxu0 0.0
    %1055 = vmatprep.subr.mxu0 0.0
    %1056 = vmatpush1.msra.mxu0 0.0
    %1057 = vmatprep.subr.mxu0 0.0
    %1058 = vmatpush1.msra.mxu0 0.0
    %1059 = vmatprep.subr.mxu0 0.0
    %1060 = vmatpush1.msra.mxu0 0.0
    %1061 = vmatprep.subr.mxu0 0.0
    %1062 = vmatpush1.msra.mxu0 0.0
    %1063 = vmatprep.subr.mxu0 0.0
    %1064 = vmatpush1.msra.mxu0 0.0
    %1065 = vmatprep.subr.mxu0 0.0
    %1066 = vmatpush1.msra.mxu0 0.0
    %1067 = vmatprep.subr.mxu0 0.0
    %1068 = vmatpush1.msra.mxu0 0.0
    %1069 = vmatprep.subr.mxu0 0.0
    %1070 = vmatpush1.msra.mxu0 0.0
    %1071 = vmatprep.subr.mxu0 %v189
    %1072 = vmatpush1.msra.mxu0 %v187
    %1073 = vmatprep.subr.mxu0 0.0
    %1074 = vmatpush2.msra.mxu0 0.0
    %1075 = vmatprep.subr.mxu0 0.0
    %1076 = vmatpush2.msra.mxu0 0.0
    %1077 = vmatprep.subr.mxu0 0.0
    %1078 = vmatpush2.msra.mxu0 0.0
    %1079 = vmatprep.subr.mxu0 0.0
    %1080 = vmatpush2.msra.mxu0 0.0
    %1081 = vmatprep.subr.mxu0 0.0
    %1082 = vmatpush2.msra.mxu0 0.0
    %1083 = vmatprep.subr.mxu0 0.0
    %1084 = vmatpush2.msra.mxu0 0.0
    %1085 = vmatprep.subr.mxu0 0.0
    %1086 = vmatpush2.msra.mxu0 0.0
    %1087 = vmatprep.subr.mxu0 0.0
    %1088 = vmatpush2.msra.mxu0 0.0
    %1089 = vmatprep.subr.mxu0 0.0
    %1090 = vmatpush2.msra.mxu0 0.0
    %1091 = vmatprep.subr.mxu0 0.0
    %1092 = vmatpush2.msra.mxu0 0.0
    %1093 = vmatprep.subr.mxu0 0.0
    %1094 = vmatpush2.msra.mxu0 0.0
    %1095 = vmatprep.subr.mxu0 0.0
    %1096 = vmatpush2.msra.mxu0 0.0
    %1097 = vmatprep.subr.mxu0 0.0
    %1098 = vmatpush2.msra.mxu0 0.0
    %1099 = vmatprep.subr.mxu0 0.0
    %1100 = vmatpush2.msra.mxu0 0.0
    %1101 = vmatprep.subr.mxu0 0.0
    %1102 = vmatpush2.msra.mxu0 0.0
    %1103 = vmatprep.subr.mxu0 0.0
    %1104 = vmatpush2.msra.mxu0 0.0
    %1105 = vmatprep.mubr.f32.mxu0 0.0
    %1106 = vmatmul.mubr.f32.gmra.mxu0 %v141
    %v1107 = vpop.f32.mrf.mxu0
    %v1108 = vadd.f32 0.0, %v1107
    %v1109 = vpop.f32.mrf.mxu0
    %v1110 = vadd.f32 0.0, %v1109
    %1111 = vmatprep.mubr.f32.mxu0 0.0
    %1112 = vmatmul.mubr.f32.gmra.mxu0 %v144
    %v1113 = vpop.f32.mrf.mxu0
    %v1114 = vadd.f32 0.0, %v1113
    %v1115 = vpop.f32.mrf.mxu0
    %v1116 = vadd.f32 0.0, %v1115
    %1117 = vdwg.mxu0
    %1118 = vmatprep.subr.mxu0 0.0
    %1119 = vmatpush1.msra.mxu0 0.0
    %1120 = vmatprep.subr.mxu0 0.0
    %1121 = vmatpush1.msra.mxu0 0.0
    %1122 = vmatprep.subr.mxu0 0.0
    %1123 = vmatpush1.msra.mxu0 0.0
    %1124 = vmatprep.subr.mxu0 0.0
    %1125 = vmatpush1.msra.mxu0 0.0
    %1126 = vmatprep.subr.mxu0 0.0
    %1127 = vmatpush1.msra.mxu0 0.0
    %1128 = vmatprep.subr.mxu0 0.0
    %1129 = vmatpush1.msra.mxu0 0.0
    %1130 = vmatprep.subr.mxu0 0.0
    %1131 = vmatpush1.msra.mxu0 0.0
    %1132 = vmatprep.subr.mxu0 0.0
    %1133 = vmatpush1.msra.mxu0 0.0
    %1134 = vmatprep.subr.mxu0 0.0
    %1135 = vmatpush1.msra.mxu0 0.0
    %1136 = vmatprep.subr.mxu0 0.0
    %1137 = vmatpush1.msra.mxu0 0.0
    %1138 = vmatprep.subr.mxu0 0.0
    %1139 = vmatpush1.msra.mxu0 0.0
    %1140 = vmatprep.subr.mxu0 0.0
    %1141 = vmatpush1.msra.mxu0 0.0
    %1142 = vmatprep.subr.mxu0 0.0
    %1143 = vmatpush1.msra.mxu0 0.0
    %1144 = vmatprep.subr.mxu0 0.0
    %1145 = vmatpush1.msra.mxu0 0.0
    %1146 = vmatprep.subr.mxu0 0.0
    %1147 = vmatpush1.msra.mxu0 0.0
    %1148 = vmatprep.subr.mxu0 %v193
    %1149 = vmatpush1.msra.mxu0 %v191
    %1150 = vmatprep.subr.mxu0 0.0
    %1151 = vmatpush2.msra.mxu0 0.0
    %1152 = vmatprep.subr.mxu0 0.0
    %1153 = vmatpush2.msra.mxu0 0.0
    %1154 = vmatprep.subr.mxu0 0.0
    %1155 = vmatpush2.msra.mxu0 0.0
    %1156 = vmatprep.subr.mxu0 0.0
    %1157 = vmatpush2.msra.mxu0 0.0
    %1158 = vmatprep.subr.mxu0 0.0
    %1159 = vmatpush2.msra.mxu0 0.0
    %1160 = vmatprep.subr.mxu0 0.0
    %1161 = vmatpush2.msra.mxu0 0.0
    %1162 = vmatprep.subr.mxu0 0.0
    %1163 = vmatpush2.msra.mxu0 0.0
    %1164 = vmatprep.subr.mxu0 0.0
    %1165 = vmatpush2.msra.mxu0 0.0
    %1166 = vmatprep.subr.mxu0 0.0
    %1167 = vmatpush2.msra.mxu0 0.0
    %1168 = vmatprep.subr.mxu0 0.0
    %1169 = vmatpush2.msra.mxu0 0.0
    %1170 = vmatprep.subr.mxu0 0.0
    %1171 = vmatpush2.msra.mxu0 0.0
    %1172 = vmatprep.subr.mxu0 0.0
    %1173 = vmatpush2.msra.mxu0 0.0
    %1174 = vmatprep.subr.mxu0 0.0
    %1175 = vmatpush2.msra.mxu0 0.0
    %1176 = vmatprep.subr.mxu0 0.0
    %1177 = vmatpush2.msra.mxu0 0.0
    %1178 = vmatprep.subr.mxu0 0.0
    %1179 = vmatpush2.msra.mxu0 0.0
    %1180 = vmatprep.subr.mxu0 0.0
    %1181 = vmatpush2.msra.mxu0 0.0
    %1182 = vmatprep.mubr.f32.mxu0 0.0
    %1183 = vmatmul.mubr.f32.gmra.mxu0 %v141
    %v1184 = vpop.f32.mrf.mxu0
    %v1185 = vadd.f32 0.0, %v1184
    %v1186 = vpop.f32.mrf.mxu0
    %v1187 = vadd.f32 0.0, %v1186
    %1188 = vmatprep.mubr.f32.mxu0 0.0
    %1189 = vmatmul.mubr.f32.gmra.mxu0 %v144
    %v1190 = vpop.f32.mrf.mxu0
    %v1191 = vadd.f32 0.0, %v1190
    %v1192 = vpop.f32.mrf.mxu0
    %v1193 = vadd.f32 0.0, %v1192
    %1194 = vdwg.mxu0
    %1195 = vmatprep.subr.mxu0 0.0
    %1196 = vmatpush1.msra.mxu0 0.0
    %1197 = vmatprep.subr.mxu0 0.0
    %1198 = vmatpush1.msra.mxu0 0.0
    %1199 = vmatprep.subr.mxu0 0.0
    %1200 = vmatpush1.msra.mxu0 0.0
    %1201 = vmatprep.subr.mxu0 0.0
    %1202 = vmatpush1.msra.mxu0 0.0
    %1203 = vmatprep.subr.mxu0 0.0
    %1204 = vmatpush1.msra.mxu0 0.0
    %1205 = vmatprep.subr.mxu0 0.0
    %1206 = vmatpush1.msra.mxu0 0.0
    %1207 = vmatprep.subr.mxu0 0.0
    %1208 = vmatpush1.msra.mxu0 0.0
    %1209 = vmatprep.subr.mxu0 0.0
    %1210 = vmatpush1.msra.mxu0 0.0
    %1211 = vmatprep.subr.mxu0 0.0
    %1212 = vmatpush1.msra.mxu0 0.0
    %1213 = vmatprep.subr.mxu0 0.0
    %1214 = vmatpush1.msra.mxu0 0.0
    %1215 = vmatprep.subr.mxu0 0.0
    %1216 = vmatpush1.msra.mxu0 0.0
    %1217 = vmatprep.subr.mxu0 0.0
    %1218 = vmatpush1.msra.mxu0 0.0
    %1219 = vmatprep.subr.mxu0 0.0
    %1220 = vmatpush1.msra.mxu0 0.0
    %1221 = vmatprep.subr.mxu0 0.0
    %1222 = vmatpush1.msra.mxu0 0.0
    %1223 = vmatprep.subr.mxu0 0.0
    %1224 = vmatpush1.msra.mxu0 0.0
    %1225 = vmatprep.subr.mxu0 %v197
    %1226 = vmatpush1.msra.mxu0 %v195
    %1227 = vmatprep.subr.mxu0 0.0
    %1228 = vmatpush2.msra.mxu0 0.0
    %1229 = vmatprep.subr.mxu0 0.0
    %1230 = vmatpush2.msra.mxu0 0.0
    %1231 = vmatprep.subr.mxu0 0.0
    %1232 = vmatpush2.msra.mxu0 0.0
    %1233 = vmatprep.subr.mxu0 0.0
    %1234 = vmatpush2.msra.mxu0 0.0
    %1235 = vmatprep.subr.mxu0 0.0
    %1236 = vmatpush2.msra.mxu0 0.0
    %1237 = vmatprep.subr.mxu0 0.0
    %1238 = vmatpush2.msra.mxu0 0.0
    %1239 = vmatprep.subr.mxu0 0.0
    %1240 = vmatpush2.msra.mxu0 0.0
    %1241 = vmatprep.subr.mxu0 0.0
    %1242 = vmatpush2.msra.mxu0 0.0
    %1243 = vmatprep.subr.mxu0 0.0
    %1244 = vmatpush2.msra.mxu0 0.0
    %1245 = vmatprep.subr.mxu0 0.0
    %1246 = vmatpush2.msra.mxu0 0.0
    %1247 = vmatprep.subr.mxu0 0.0
    %1248 = vmatpush2.msra.mxu0 0.0
    %1249 = vmatprep.subr.mxu0 0.0
    %1250 = vmatpush2.msra.mxu0 0.0
    %1251 = vmatprep.subr.mxu0 0.0
    %1252 = vmatpush2.msra.mxu0 0.0
    %1253 = vmatprep.subr.mxu0 0.0
    %1254 = vmatpush2.msra.mxu0 0.0
    %1255 = vmatprep.subr.mxu0 0.0
    %1256 = vmatpush2.msra.mxu0 0.0
    %1257 = vmatprep.subr.mxu0 0.0
    %1258 = vmatpush2.msra.mxu0 0.0
    %1259 = vmatprep.mubr.f32.mxu0 0.0
    %1260 = vmatmul.mubr.f32.gmra.mxu0 %v141
    %v1261 = vpop.f32.mrf.mxu0
    %v1262 = vadd.f32 0.0, %v1261
    %v1263 = vpop.f32.mrf.mxu0
    %v1264 = vadd.f32 0.0, %v1263
    %1265 = vmatprep.mubr.f32.mxu0 0.0
    %1266 = vmatmul.mubr.f32.gmra.mxu0 %v144
    %v1267 = vpop.f32.mrf.mxu0
    %v1268 = vadd.f32 0.0, %v1267
    %v1269 = vpop.f32.mrf.mxu0
    %v1270 = vadd.f32 0.0, %v1269
    %1271 = vdwg.mxu0
    %1272 = vmatprep.subr.mxu0 0.0
    %1273 = vmatpush1.msra.mxu0 0.0
    %1274 = vmatprep.subr.mxu0 0.0
    %1275 = vmatpush1.msra.mxu0 0.0
    %1276 = vmatprep.subr.mxu0 0.0
    %1277 = vmatpush1.msra.mxu0 0.0
    %1278 = vmatprep.subr.mxu0 0.0
    %1279 = vmatpush1.msra.mxu0 0.0
    %1280 = vmatprep.subr.mxu0 0.0
    %1281 = vmatpush1.msra.mxu0 0.0
    %1282 = vmatprep.subr.mxu0 0.0
    %1283 = vmatpush1.msra.mxu0 0.0
    %1284 = vmatprep.subr.mxu0 0.0
    %1285 = vmatpush1.msra.mxu0 0.0
    %1286 = vmatprep.subr.mxu0 0.0
    %1287 = vmatpush1.msra.mxu0 0.0
    %1288 = vmatprep.subr.mxu0 0.0
    %1289 = vmatpush1.msra.mxu0 0.0
    %1290 = vmatprep.subr.mxu0 0.0
    %1291 = vmatpush1.msra.mxu0 0.0
    %1292 = vmatprep.subr.mxu0 0.0
    %1293 = vmatpush1.msra.mxu0 0.0
    %1294 = vmatprep.subr.mxu0 0.0
    %1295 = vmatpush1.msra.mxu0 0.0
    %1296 = vmatprep.subr.mxu0 0.0
    %1297 = vmatpush1.msra.mxu0 0.0
    %1298 = vmatprep.subr.mxu0 0.0
    %1299 = vmatpush1.msra.mxu0 0.0
    %1300 = vmatprep.subr.mxu0 0.0
    %1301 = vmatpush1.msra.mxu0 0.0
    %1302 = vmatprep.subr.mxu0 %v201
    %1303 = vmatpush1.msra.mxu0 %v199
    %1304 = vmatprep.subr.mxu0 0.0
    %1305 = vmatpush2.msra.mxu0 0.0
    %1306 = vmatprep.subr.mxu0 0.0
    %1307 = vmatpush2.msra.mxu0 0.0
    %1308 = vmatprep.subr.mxu0 0.0
    %1309 = vmatpush2.msra.mxu0 0.0
    %1310 = vmatprep.subr.mxu0 0.0
    %1311 = vmatpush2.msra.mxu0 0.0
    %1312 = vmatprep.subr.mxu0 0.0
    %1313 = vmatpush2.msra.mxu0 0.0
    %1314 = vmatprep.subr.mxu0 0.0
    %1315 = vmatpush2.msra.mxu0 0.0
    %1316 = vmatprep.subr.mxu0 0.0
    %1317 = vmatpush2.msra.mxu0 0.0
    %1318 = vmatprep.subr.mxu0 0.0
    %1319 = vmatpush2.msra.mxu0 0.0
    %1320 = vmatprep.subr.mxu0 0.0
    %1321 = vmatpush2.msra.mxu0 0.0
    %1322 = vmatprep.subr.mxu0 0.0
    %1323 = vmatpush2.msra.mxu0 0.0
    %1324 = vmatprep.subr.mxu0 0.0
    %1325 = vmatpush2.msra.mxu0 0.0
    %1326 = vmatprep.subr.mxu0 0.0
    %1327 = vmatpush2.msra.mxu0 0.0
    %1328 = vmatprep.subr.mxu0 0.0
    %1329 = vmatpush2.msra.mxu0 0.0
    %1330 = vmatprep.subr.mxu0 0.0
    %1331 = vmatpush2.msra.mxu0 0.0
    %1332 = vmatprep.subr.mxu0 0.0
    %1333 = vmatpush2.msra.mxu0 0.0
    %1334 = vmatprep.subr.mxu0 0.0
    %1335 = vmatpush2.msra.mxu0 0.0
    %1336 = vmatprep.mubr.f32.mxu0 0.0
    %1337 = vmatmul.mubr.f32.gmra.mxu0 %v141
    %v1338 = vpop.f32.mrf.mxu0
    %v1339 = vadd.f32 0.0, %v1338
    %v1340 = vpop.f32.mrf.mxu0
    %v1341 = vadd.f32 0.0, %v1340
    %1342 = vmatprep.mubr.f32.mxu0 0.0
    %1343 = vmatmul.mubr.f32.gmra.mxu0 %v144
    %v1344 = vpop.f32.mrf.mxu0
    %v1345 = vadd.f32 0.0, %v1344
    %v1346 = vpop.f32.mrf.mxu0
    %v1347 = vadd.f32 0.0, %v1346
    %1348 = vdwg.mxu0
    %1349 = vmatprep.subr.mxu0 0.0
    %1350 = vmatpush1.msra.mxu0 0.0
    %1351 = vmatprep.subr.mxu0 0.0
    %1352 = vmatpush1.msra.mxu0 0.0
    %1353 = vmatprep.subr.mxu0 0.0
    %1354 = vmatpush1.msra.mxu0 0.0
    %1355 = vmatprep.subr.mxu0 0.0
    %1356 = vmatpush1.msra.mxu0 0.0
    %1357 = vmatprep.subr.mxu0 0.0
    %1358 = vmatpush1.msra.mxu0 0.0
    %1359 = vmatprep.subr.mxu0 0.0
    %1360 = vmatpush1.msra.mxu0 0.0
    %1361 = vmatprep.subr.mxu0 0.0
    %1362 = vmatpush1.msra.mxu0 0.0
    %1363 = vmatprep.subr.mxu0 0.0
    %1364 = vmatpush1.msra.mxu0 0.0
    %1365 = vmatprep.subr.mxu0 0.0
    %1366 = vmatpush1.msra.mxu0 0.0
    %1367 = vmatprep.subr.mxu0 0.0
    %1368 = vmatpush1.msra.mxu0 0.0
    %1369 = vmatprep.subr.mxu0 0.0
    %1370 = vmatpush1.msra.mxu0 0.0
    %1371 = vmatprep.subr.mxu0 0.0
    %1372 = vmatpush1.msra.mxu0 0.0
    %1373 = vmatprep.subr.mxu0 0.0
    %1374 = vmatpush1.msra.mxu0 0.0
    %1375 = vmatprep.subr.mxu0 0.0
    %1376 = vmatpush1.msra.mxu0 0.0
    %1377 = vmatprep.subr.mxu0 0.0
    %1378 = vmatpush1.msra.mxu0 0.0
    %1379 = vmatprep.subr.mxu0 %v205
    %1380 = vmatpush1.msra.mxu0 %v203
    %1381 = vmatprep.subr.mxu0 0.0
    %1382 = vmatpush2.msra.mxu0 0.0
    %1383 = vmatprep.subr.mxu0 0.0
    %1384 = vmatpush2.msra.mxu0 0.0
    %1385 = vmatprep.subr.mxu0 0.0
    %1386 = vmatpush2.msra.mxu0 0.0
    %1387 = vmatprep.subr.mxu0 0.0
    %1388 = vmatpush2.msra.mxu0 0.0
    %1389 = vmatprep.subr.mxu0 0.0
    %1390 = vmatpush2.msra.mxu0 0.0
    %1391 = vmatprep.subr.mxu0 0.0
    %1392 = vmatpush2.msra.mxu0 0.0
    %1393 = vmatprep.subr.mxu0 0.0
    %1394 = vmatpush2.msra.mxu0 0.0
    %1395 = vmatprep.subr.mxu0 0.0
    %1396 = vmatpush2.msra.mxu0 0.0
    %1397 = vmatprep.subr.mxu0 0.0
    %1398 = vmatpush2.msra.mxu0 0.0
    %1399 = vmatprep.subr.mxu0 0.0
    %1400 = vmatpush2.msra.mxu0 0.0
    %1401 = vmatprep.subr.mxu0 0.0
    %1402 = vmatpush2.msra.mxu0 0.0
    %1403 = vmatprep.subr.mxu0 0.0
    %1404 = vmatpush2.msra.mxu0 0.0
    %1405 = vmatprep.subr.mxu0 0.0
    %1406 = vmatpush2.msra.mxu0 0.0
    %1407 = vmatprep.subr.mxu0 0.0
    %1408 = vmatpush2.msra.mxu0 0.0
    %1409 = vmatprep.subr.mxu0 0.0
    %1410 = vmatpush2.msra.mxu0 0.0
    %1411 = vmatprep.subr.mxu0 0.0
    %1412 = vmatpush2.msra.mxu0 0.0
    %1413 = vmatprep.mubr.f32.mxu0 0.0
    %1414 = vmatmul.mubr.f32.gmra.mxu0 %v141
    %v1415 = vpop.f32.mrf.mxu0
    %v1416 = vadd.f32 0.0, %v1415
    %v1417 = vpop.f32.mrf.mxu0
    %v1418 = vadd.f32 0.0, %v1417
    %1419 = vmatprep.mubr.f32.mxu0 0.0
    %1420 = vmatmul.mubr.f32.gmra.mxu0 %v144
    %v1421 = vpop.f32.mrf.mxu0
    %v1422 = vadd.f32 0.0, %v1421
    %v1423 = vpop.f32.mrf.mxu0
    %v1424 = vadd.f32 0.0, %v1423
    %1425 = vdwg.mxu0
    %1426 = vmatprep.subr.mxu0 0.0
    %1427 = vmatpush1.msra.mxu0 0.0
    %1428 = vmatprep.subr.mxu0 0.0
    %1429 = vmatpush1.msra.mxu0 0.0
    %1430 = vmatprep.subr.mxu0 0.0
    %1431 = vmatpush1.msra.mxu0 0.0
    %1432 = vmatprep.subr.mxu0 0.0
    %1433 = vmatpush1.msra.mxu0 0.0
    %1434 = vmatprep.subr.mxu0 0.0
    %1435 = vmatpush1.msra.mxu0 0.0
    %1436 = vmatprep.subr.mxu0 0.0
    %1437 = vmatpush1.msra.mxu0 0.0
    %1438 = vmatprep.subr.mxu0 0.0
    %1439 = vmatpush1.msra.mxu0 0.0
    %1440 = vmatprep.subr.mxu0 0.0
    %1441 = vmatpush1.msra.mxu0 0.0
    %1442 = vmatprep.subr.mxu0 0.0
    %1443 = vmatpush1.msra.mxu0 0.0
    %1444 = vmatprep.subr.mxu0 0.0
    %1445 = vmatpush1.msra.mxu0 0.0
    %1446 = vmatprep.subr.mxu0 0.0
    %1447 = vmatpush1.msra.mxu0 0.0
    %1448 = vmatprep.subr.mxu0 0.0
    %1449 = vmatpush1.msra.mxu0 0.0
    %1450 = vmatprep.subr.mxu0 0.0
    %1451 = vmatpush1.msra.mxu0 0.0
    %1452 = vmatprep.subr.mxu0 0.0
    %1453 = vmatpush1.msra.mxu0 0.0
    %1454 = vmatprep.subr.mxu0 0.0
    %1455 = vmatpush1.msra.mxu0 0.0
    %1456 = vmatprep.subr.mxu0 %v209
    %1457 = vmatpush1.msra.mxu0 %v207
    %1458 = vmatprep.subr.mxu0 0.0
    %1459 = vmatpush2.msra.mxu0 0.0
    %1460 = vmatprep.subr.mxu0 0.0
    %1461 = vmatpush2.msra.mxu0 0.0
    %1462 = vmatprep.subr.mxu0 0.0
    %1463 = vmatpush2.msra.mxu0 0.0
    %1464 = vmatprep.subr.mxu0 0.0
    %1465 = vmatpush2.msra.mxu0 0.0
    %1466 = vmatprep.subr.mxu0 0.0
    %1467 = vmatpush2.msra.mxu0 0.0
    %1468 = vmatprep.subr.mxu0 0.0
    %1469 = vmatpush2.msra.mxu0 0.0
    %1470 = vmatprep.subr.mxu0 0.0
    %1471 = vmatpush2.msra.mxu0 0.0
    %1472 = vmatprep.subr.mxu0 0.0
    %1473 = vmatpush2.msra.mxu0 0.0
    %1474 = vmatprep.subr.mxu0 0.0
    %1475 = vmatpush2.msra.mxu0 0.0
    %1476 = vmatprep.subr.mxu0 0.0
    %1477 = vmatpush2.msra.mxu0 0.0
    %1478 = vmatprep.subr.mxu0 0.0
    %1479 = vmatpush2.msra.mxu0 0.0
    %1480 = vmatprep.subr.mxu0 0.0
    %1481 = vmatpush2.msra.mxu0 0.0
    %1482 = vmatprep.subr.mxu0 0.0
    %1483 = vmatpush2.msra.mxu0 0.0
    %1484 = vmatprep.subr.mxu0 0.0
    %1485 = vmatpush2.msra.mxu0 0.0
    %1486 = vmatprep.subr.mxu0 0.0
    %1487 = vmatpush2.msra.mxu0 0.0
    %1488 = vmatprep.subr.mxu0 0.0
    %1489 = vmatpush2.msra.mxu0 0.0
    %1490 = vmatprep.mubr.f32.mxu0 0.0
    %1491 = vmatmul.mubr.f32.gmra.mxu0 %v141
    %v1492 = vpop.f32.mrf.mxu0
    %v1493 = vadd.f32 0.0, %v1492
    %v1494 = vpop.f32.mrf.mxu0
    %v1495 = vadd.f32 0.0, %v1494
    %1496 = vmatprep.mubr.f32.mxu0 0.0
    %1497 = vmatmul.mubr.f32.gmra.mxu0 %v144
    %v1498 = vpop.f32.mrf.mxu0
    %v1499 = vadd.f32 0.0, %v1498
    %v1500 = vpop.f32.mrf.mxu0
    %v1501 = vadd.f32 0.0, %v1500
    %1502 = vdwg.mxu0
    %1503 = vmatprep.subr.mxu0 0.0
    %1504 = vmatpush1.msra.mxu0 0.0
    %1505 = vmatprep.subr.mxu0 0.0
    %1506 = vmatpush1.msra.mxu0 0.0
    %1507 = vmatprep.subr.mxu0 0.0
    %1508 = vmatpush1.msra.mxu0 0.0
    %1509 = vmatprep.subr.mxu0 0.0
    %1510 = vmatpush1.msra.mxu0 0.0
    %1511 = vmatprep.subr.mxu0 0.0
    %1512 = vmatpush1.msra.mxu0 0.0
    %1513 = vmatprep.subr.mxu0 0.0
    %1514 = vmatpush1.msra.mxu0 0.0
    %1515 = vmatprep.subr.mxu0 0.0
    %1516 = vmatpush1.msra.mxu0 0.0
    %1517 = vmatprep.subr.mxu0 0.0
    %1518 = vmatpush1.msra.mxu0 0.0
    %1519 = vmatprep.subr.mxu0 0.0
    %1520 = vmatpush1.msra.mxu0 0.0
    %1521 = vmatprep.subr.mxu0 0.0
    %1522 = vmatpush1.msra.mxu0 0.0
    %1523 = vmatprep.subr.mxu0 0.0
    %1524 = vmatpush1.msra.mxu0 0.0
    %1525 = vmatprep.subr.mxu0 0.0
    %1526 = vmatpush1.msra.mxu0 0.0
    %1527 = vmatprep.subr.mxu0 0.0
    %1528 = vmatpush1.msra.mxu0 0.0
    %1529 = vmatprep.subr.mxu0 0.0
    %1530 = vmatpush1.msra.mxu0 0.0
    %1531 = vmatprep.subr.mxu0 0.0
    %1532 = vmatpush1.msra.mxu0 0.0
    %1533 = vmatprep.subr.mxu0 %v213
    %1534 = vmatpush1.msra.mxu0 %v211
    %1535 = vmatprep.subr.mxu0 0.0
    %1536 = vmatpush2.msra.mxu0 0.0
    %1537 = vmatprep.subr.mxu0 0.0
    %1538 = vmatpush2.msra.mxu0 0.0
    %1539 = vmatprep.subr.mxu0 0.0
    %1540 = vmatpush2.msra.mxu0 0.0
    %1541 = vmatprep.subr.mxu0 0.0
    %1542 = vmatpush2.msra.mxu0 0.0
    %1543 = vmatprep.subr.mxu0 0.0
    %1544 = vmatpush2.msra.mxu0 0.0
    %1545 = vmatprep.subr.mxu0 0.0
    %1546 = vmatpush2.msra.mxu0 0.0
    %1547 = vmatprep.subr.mxu0 0.0
    %1548 = vmatpush2.msra.mxu0 0.0
    %1549 = vmatprep.subr.mxu0 0.0
    %1550 = vmatpush2.msra.mxu0 0.0
    %1551 = vmatprep.subr.mxu0 0.0
    %1552 = vmatpush2.msra.mxu0 0.0
    %1553 = vmatprep.subr.mxu0 0.0
    %1554 = vmatpush2.msra.mxu0 0.0
    %1555 = vmatprep.subr.mxu0 0.0
    %1556 = vmatpush2.msra.mxu0 0.0
    %1557 = vmatprep.subr.mxu0 0.0
    %1558 = vmatpush2.msra.mxu0 0.0
    %1559 = vmatprep.subr.mxu0 0.0
    %1560 = vmatpush2.msra.mxu0 0.0
    %1561 = vmatprep.subr.mxu0 0.0
    %1562 = vmatpush2.msra.mxu0 0.0
    %1563 = vmatprep.subr.mxu0 0.0
    %1564 = vmatpush2.msra.mxu0 0.0
    %1565 = vmatprep.subr.mxu0 0.0
    %1566 = vmatpush2.msra.mxu0 0.0
    %1567 = vmatprep.mubr.f32.mxu0 0.0
    %1568 = vmatmul.mubr.f32.gmra.mxu0 %v141
    %v1569 = vpop.f32.mrf.mxu0
    %v1570 = vadd.f32 0.0, %v1569
    %v1571 = vpop.f32.mrf.mxu0
    %v1572 = vadd.f32 0.0, %v1571
    %1573 = vmatprep.mubr.f32.mxu0 0.0
    %1574 = vmatmul.mubr.f32.gmra.mxu0 %v144
    %v1575 = vpop.f32.mrf.mxu0
    %v1576 = vadd.f32 0.0, %v1575
    %v1577 = vpop.f32.mrf.mxu0
    %v1578 = vadd.f32 0.0, %v1577
    %1579 = vdwg.mxu0
    %1580 = vmatprep.subr.mxu0 0.0
    %1581 = vmatpush1.msra.mxu0 0.0
    %1582 = vmatprep.subr.mxu0 0.0
    %1583 = vmatpush1.msra.mxu0 0.0
    %1584 = vmatprep.subr.mxu0 0.0
    %1585 = vmatpush1.msra.mxu0 0.0
    %1586 = vmatprep.subr.mxu0 0.0
    %1587 = vmatpush1.msra.mxu0 0.0
    %1588 = vmatprep.subr.mxu0 0.0
    %1589 = vmatpush1.msra.mxu0 0.0
    %1590 = vmatprep.subr.mxu0 0.0
    %1591 = vmatpush1.msra.mxu0 0.0
    %1592 = vmatprep.subr.mxu0 0.0
    %1593 = vmatpush1.msra.mxu0 0.0
    %1594 = vmatprep.subr.mxu0 0.0
    %1595 = vmatpush1.msra.mxu0 0.0
    %1596 = vmatprep.subr.mxu0 0.0
    %1597 = vmatpush1.msra.mxu0 0.0
    %1598 = vmatprep.subr.mxu0 0.0
    %1599 = vmatpush1.msra.mxu0 0.0
    %1600 = vmatprep.subr.mxu0 0.0
    %1601 = vmatpush1.msra.mxu0 0.0
    %1602 = vmatprep.subr.mxu0 0.0
    %1603 = vmatpush1.msra.mxu0 0.0
    %1604 = vmatprep.subr.mxu0 0.0
    %1605 = vmatpush1.msra.mxu0 0.0
    %1606 = vmatprep.subr.mxu0 0.0
    %1607 = vmatpush1.msra.mxu0 0.0
    %1608 = vmatprep.subr.mxu0 0.0
    %1609 = vmatpush1.msra.mxu0 0.0
    %1610 = vmatprep.subr.mxu0 %v217
    %1611 = vmatpush1.msra.mxu0 %v215
    %1612 = vmatprep.subr.mxu0 0.0
    %1613 = vmatpush2.msra.mxu0 0.0
    %1614 = vmatprep.subr.mxu0 0.0
    %1615 = vmatpush2.msra.mxu0 0.0
    %1616 = vmatprep.subr.mxu0 0.0
    %1617 = vmatpush2.msra.mxu0 0.0
    %1618 = vmatprep.subr.mxu0 0.0
    %1619 = vmatpush2.msra.mxu0 0.0
    %1620 = vmatprep.subr.mxu0 0.0
    %1621 = vmatpush2.msra.mxu0 0.0
    %1622 = vmatprep.subr.mxu0 0.0
    %1623 = vmatpush2.msra.mxu0 0.0
    %1624 = vmatprep.subr.mxu0 0.0
    %1625 = vmatpush2.msra.mxu0 0.0
    %1626 = vmatprep.subr.mxu0 0.0
    %1627 = vmatpush2.msra.mxu0 0.0
    %1628 = vmatprep.subr.mxu0 0.0
    %1629 = vmatpush2.msra.mxu0 0.0
    %1630 = vmatprep.subr.mxu0 0.0
    %1631 = vmatpush2.msra.mxu0 0.0
    %1632 = vmatprep.subr.mxu0 0.0
    %1633 = vmatpush2.msra.mxu0 0.0
    %1634 = vmatprep.subr.mxu0 0.0
    %1635 = vmatpush2.msra.mxu0 0.0
    %1636 = vmatprep.subr.mxu0 0.0
    %1637 = vmatpush2.msra.mxu0 0.0
    %1638 = vmatprep.subr.mxu0 0.0
    %1639 = vmatpush2.msra.mxu0 0.0
    %1640 = vmatprep.subr.mxu0 0.0
    %1641 = vmatpush2.msra.mxu0 0.0
    %1642 = vmatprep.subr.mxu0 0.0
    %1643 = vmatpush2.msra.mxu0 0.0
    %1644 = vmatprep.mubr.f32.mxu0 0.0
    %1645 = vmatmul.mubr.f32.gmra.mxu0 %v141
    %v1646 = vpop.f32.mrf.mxu0
    %v1647 = vadd.f32 0.0, %v1646
    %v1648 = vpop.f32.mrf.mxu0
    %v1649 = vadd.f32 0.0, %v1648
    %1650 = vmatprep.mubr.f32.mxu0 0.0
    %1651 = vmatmul.mubr.f32.gmra.mxu0 %v144
    %v1652 = vpop.f32.mrf.mxu0
    %v1653 = vadd.f32 0.0, %v1652
    %v1654 = vpop.f32.mrf.mxu0
    %v1655 = vadd.f32 0.0, %v1654
    %1656 = vdwg.mxu0
    %1657 = vmatprep.subr.mxu0 0.0
    %1658 = vmatpush1.msra.mxu0 0.0
    %1659 = vmatprep.subr.mxu0 0.0
    %1660 = vmatpush1.msra.mxu0 0.0
    %1661 = vmatprep.subr.mxu0 0.0
    %1662 = vmatpush1.msra.mxu0 0.0
    %1663 = vmatprep.subr.mxu0 0.0
    %1664 = vmatpush1.msra.mxu0 0.0
    %1665 = vmatprep.subr.mxu0 0.0
    %1666 = vmatpush1.msra.mxu0 0.0
    %1667 = vmatprep.subr.mxu0 0.0
    %1668 = vmatpush1.msra.mxu0 0.0
    %1669 = vmatprep.subr.mxu0 0.0
    %1670 = vmatpush1.msra.mxu0 0.0
    %1671 = vmatprep.subr.mxu0 0.0
    %1672 = vmatpush1.msra.mxu0 0.0
    %1673 = vmatprep.subr.mxu0 0.0
    %1674 = vmatpush1.msra.mxu0 0.0
    %1675 = vmatprep.subr.mxu0 0.0
    %1676 = vmatpush1.msra.mxu0 0.0
    %1677 = vmatprep.subr.mxu0 0.0
    %1678 = vmatpush1.msra.mxu0 0.0
    %1679 = vmatprep.subr.mxu0 0.0
    %1680 = vmatpush1.msra.mxu0 0.0
    %1681 = vmatprep.subr.mxu0 0.0
    %1682 = vmatpush1.msra.mxu0 0.0
    %1683 = vmatprep.subr.mxu0 0.0
    %1684 = vmatpush1.msra.mxu0 0.0
    %1685 = vmatprep.subr.mxu0 0.0
    %1686 = vmatpush1.msra.mxu0 0.0
    %1687 = vmatprep.subr.mxu0 %v221
    %1688 = vmatpush1.msra.mxu0 %v219
    %1689 = vmatprep.subr.mxu0 0.0
    %1690 = vmatpush2.msra.mxu0 0.0
    %1691 = vmatprep.subr.mxu0 0.0
    %1692 = vmatpush2.msra.mxu0 0.0
    %1693 = vmatprep.subr.mxu0 0.0
    %1694 = vmatpush2.msra.mxu0 0.0
    %1695 = vmatprep.subr.mxu0 0.0
    %1696 = vmatpush2.msra.mxu0 0.0
    %1697 = vmatprep.subr.mxu0 0.0
    %1698 = vmatpush2.msra.mxu0 0.0
    %1699 = vmatprep.subr.mxu0 0.0
    %1700 = vmatpush2.msra.mxu0 0.0
    %1701 = vmatprep.subr.mxu0 0.0
    %1702 = vmatpush2.msra.mxu0 0.0
    %1703 = vmatprep.subr.mxu0 0.0
    %1704 = vmatpush2.msra.mxu0 0.0
    %1705 = vmatprep.subr.mxu0 0.0
    %1706 = vmatpush2.msra.mxu0 0.0
    %1707 = vmatprep.subr.mxu0 0.0
    %1708 = vmatpush2.msra.mxu0 0.0
    %1709 = vmatprep.subr.mxu0 0.0
    %1710 = vmatpush2.msra.mxu0 0.0
    %1711 = vmatprep.subr.mxu0 0.0
    %1712 = vmatpush2.msra.mxu0 0.0
    %1713 = vmatprep.subr.mxu0 0.0
    %1714 = vmatpush2.msra.mxu0 0.0
    %1715 = vmatprep.subr.mxu0 0.0
    %1716 = vmatpush2.msra.mxu0 0.0
    %1717 = vmatprep.subr.mxu0 0.0
    %1718 = vmatpush2.msra.mxu0 0.0
    %1719 = vmatprep.subr.mxu0 0.0
    %1720 = vmatpush2.msra.mxu0 0.0
    %1721 = vmatprep.mubr.f32.mxu0 0.0
    %1722 = vmatmul.mubr.f32.gmra.mxu0 %v141
    %v1723 = vpop.f32.mrf.mxu0
    %v1724 = vadd.f32 0.0, %v1723
    %v1725 = vpop.f32.mrf.mxu0
    %v1726 = vadd.f32 0.0, %v1725
    %1727 = vmatprep.mubr.f32.mxu0 0.0
    %1728 = vmatmul.mubr.f32.gmra.mxu0 %v144
    %v1729 = vpop.f32.mrf.mxu0
    %v1730 = vadd.f32 0.0, %v1729
    %v1731 = vpop.f32.mrf.mxu0
    %v1732 = vadd.f32 0.0, %v1731
    %1733 = vdwg.mxu0
    %1734 = vmatprep.subr.mxu0 0.0
    %1735 = vmatpush1.msra.mxu0 0.0
    %1736 = vmatprep.subr.mxu0 0.0
    %1737 = vmatpush1.msra.mxu0 0.0
    %1738 = vmatprep.subr.mxu0 0.0
    %1739 = vmatpush1.msra.mxu0 0.0
    %1740 = vmatprep.subr.mxu0 0.0
    %1741 = vmatpush1.msra.mxu0 0.0
    %1742 = vmatprep.subr.mxu0 0.0
    %1743 = vmatpush1.msra.mxu0 0.0
    %1744 = vmatprep.subr.mxu0 0.0
    %1745 = vmatpush1.msra.mxu0 0.0
    %1746 = vmatprep.subr.mxu0 0.0
    %1747 = vmatpush1.msra.mxu0 0.0
    %1748 = vmatprep.subr.mxu0 0.0
    %1749 = vmatpush1.msra.mxu0 0.0
    %1750 = vmatprep.subr.mxu0 0.0
    %1751 = vmatpush1.msra.mxu0 0.0
    %1752 = vmatprep.subr.mxu0 0.0
    %1753 = vmatpush1.msra.mxu0 0.0
    %1754 = vmatprep.subr.mxu0 0.0
    %1755 = vmatpush1.msra.mxu0 0.0
    %1756 = vmatprep.subr.mxu0 0.0
    %1757 = vmatpush1.msra.mxu0 0.0
    %1758 = vmatprep.subr.mxu0 0.0
    %1759 = vmatpush1.msra.mxu0 0.0
    %1760 = vmatprep.subr.mxu0 0.0
    %1761 = vmatpush1.msra.mxu0 0.0
    %1762 = vmatprep.subr.mxu0 0.0
    %1763 = vmatpush1.msra.mxu0 0.0
    %1764 = vmatprep.subr.mxu0 %v225
    %1765 = vmatpush1.msra.mxu0 %v223
    %1766 = vmatprep.subr.mxu0 0.0
    %1767 = vmatpush2.msra.mxu0 0.0
    %1768 = vmatprep.subr.mxu0 0.0
    %1769 = vmatpush2.msra.mxu0 0.0
    %1770 = vmatprep.subr.mxu0 0.0
    %1771 = vmatpush2.msra.mxu0 0.0
    %1772 = vmatprep.subr.mxu0 0.0
    %1773 = vmatpush2.msra.mxu0 0.0
    %1774 = vmatprep.subr.mxu0 0.0
    %1775 = vmatpush2.msra.mxu0 0.0
    %1776 = vmatprep.subr.mxu0 0.0
    %1777 = vmatpush2.msra.mxu0 0.0
    %1778 = vmatprep.subr.mxu0 0.0
    %1779 = vmatpush2.msra.mxu0 0.0
    %1780 = vmatprep.subr.mxu0 0.0
    %1781 = vmatpush2.msra.mxu0 0.0
    %1782 = vmatprep.subr.mxu0 0.0
    %1783 = vmatpush2.msra.mxu0 0.0
    %1784 = vmatprep.subr.mxu0 0.0
    %1785 = vmatpush2.msra.mxu0 0.0
    %1786 = vmatprep.subr.mxu0 0.0
    %1787 = vmatpush2.msra.mxu0 0.0
    %1788 = vmatprep.subr.mxu0 0.0
    %1789 = vmatpush2.msra.mxu0 0.0
    %1790 = vmatprep.subr.mxu0 0.0
    %1791 = vmatpush2.msra.mxu0 0.0
    %1792 = vmatprep.subr.mxu0 0.0
    %1793 = vmatpush2.msra.mxu0 0.0
    %1794 = vmatprep.subr.mxu0 0.0
    %1795 = vmatpush2.msra.mxu0 0.0
    %1796 = vmatprep.subr.mxu0 0.0
    %1797 = vmatpush2.msra.mxu0 0.0
    %1798 = vmatprep.mubr.f32.mxu0 0.0
    %1799 = vmatmul.mubr.f32.gmra.mxu0 %v141
    %v1800 = vpop.f32.mrf.mxu0
    %v1801 = vadd.f32 0.0, %v1800
    %v1802 = vpop.f32.mrf.mxu0
    %v1803 = vadd.f32 0.0, %v1802
    %1804 = vmatprep.mubr.f32.mxu0 0.0
    %1805 = vmatmul.mubr.f32.gmra.mxu0 %v144
    %v1806 = vpop.f32.mrf.mxu0
    %v1807 = vadd.f32 0.0, %v1806
    %v1808 = vpop.f32.mrf.mxu0
    %v1809 = vadd.f32 0.0, %v1808
    %1810 = vdwg.mxu0
    %1811 = vmatprep.subr.mxu0 0.0
    %1812 = vmatpush1.msra.mxu0 0.0
    %1813 = vmatprep.subr.mxu0 0.0
    %1814 = vmatpush1.msra.mxu0 0.0
    %1815 = vmatprep.subr.mxu0 0.0
    %1816 = vmatpush1.msra.mxu0 0.0
    %1817 = vmatprep.subr.mxu0 0.0
    %1818 = vmatpush1.msra.mxu0 0.0
    %1819 = vmatprep.subr.mxu0 0.0
    %1820 = vmatpush1.msra.mxu0 0.0
    %1821 = vmatprep.subr.mxu0 0.0
    %1822 = vmatpush1.msra.mxu0 0.0
    %1823 = vmatprep.subr.mxu0 0.0
    %1824 = vmatpush1.msra.mxu0 0.0
    %1825 = vmatprep.subr.mxu0 0.0
    %1826 = vmatpush1.msra.mxu0 0.0
    %1827 = vmatprep.subr.mxu0 0.0
    %1828 = vmatpush1.msra.mxu0 0.0
    %1829 = vmatprep.subr.mxu0 0.0
    %1830 = vmatpush1.msra.mxu0 0.0
    %1831 = vmatprep.subr.mxu0 0.0
    %1832 = vmatpush1.msra.mxu0 0.0
    %1833 = vmatprep.subr.mxu0 0.0
    %1834 = vmatpush1.msra.mxu0 0.0
    %1835 = vmatprep.subr.mxu0 0.0
    %1836 = vmatpush1.msra.mxu0 0.0
    %1837 = vmatprep.subr.mxu0 0.0
    %1838 = vmatpush1.msra.mxu0 0.0
    %1839 = vmatprep.subr.mxu0 0.0
    %1840 = vmatpush1.msra.mxu0 0.0
    %1841 = vmatprep.subr.mxu0 %v229
    %1842 = vmatpush1.msra.mxu0 %v227
    %1843 = vmatprep.subr.mxu0 0.0
    %1844 = vmatpush2.msra.mxu0 0.0
    %1845 = vmatprep.subr.mxu0 0.0
    %1846 = vmatpush2.msra.mxu0 0.0
    %1847 = vmatprep.subr.mxu0 0.0
    %1848 = vmatpush2.msra.mxu0 0.0
    %1849 = vmatprep.subr.mxu0 0.0
    %1850 = vmatpush2.msra.mxu0 0.0
    %1851 = vmatprep.subr.mxu0 0.0
    %1852 = vmatpush2.msra.mxu0 0.0
    %1853 = vmatprep.subr.mxu0 0.0
    %1854 = vmatpush2.msra.mxu0 0.0
    %1855 = vmatprep.subr.mxu0 0.0
    %1856 = vmatpush2.msra.mxu0 0.0
    %1857 = vmatprep.subr.mxu0 0.0
    %1858 = vmatpush2.msra.mxu0 0.0
    %1859 = vmatprep.subr.mxu0 0.0
    %1860 = vmatpush2.msra.mxu0 0.0
    %1861 = vmatprep.subr.mxu0 0.0
    %1862 = vmatpush2.msra.mxu0 0.0
    %1863 = vmatprep.subr.mxu0 0.0
    %1864 = vmatpush2.msra.mxu0 0.0
    %1865 = vmatprep.subr.mxu0 0.0
    %1866 = vmatpush2.msra.mxu0 0.0
    %1867 = vmatprep.subr.mxu0 0.0
    %1868 = vmatpush2.msra.mxu0 0.0
    %1869 = vmatprep.subr.mxu0 0.0
    %1870 = vmatpush2.msra.mxu0 0.0
    %1871 = vmatprep.subr.mxu0 0.0
    %1872 = vmatpush2.msra.mxu0 0.0
    %1873 = vmatprep.subr.mxu0 0.0
    %1874 = vmatpush2.msra.mxu0 0.0
    %1875 = vmatprep.mubr.f32.mxu0 0.0
    %1876 = vmatmul.mubr.f32.gmra.mxu0 %v141
    %v1877 = vpop.f32.mrf.mxu0
    %v1878 = vadd.f32 0.0, %v1877
    %v1879 = vpop.f32.mrf.mxu0
    %v1880 = vadd.f32 0.0, %v1879
    %1881 = vmatprep.mubr.f32.mxu0 0.0
    %1882 = vmatmul.mubr.f32.gmra.mxu0 %v144
    %v1883 = vpop.f32.mrf.mxu0
    %v1884 = vadd.f32 0.0, %v1883
    %v1885 = vpop.f32.mrf.mxu0
    %v1886 = vadd.f32 0.0, %v1885
    %1887 = vdwg.mxu0
    %1888 = vmatprep.subr.mxu0 0.0
    %1889 = vmatpush1.msra.mxu0 0.0
    %1890 = vmatprep.subr.mxu0 0.0
    %1891 = vmatpush1.msra.mxu0 0.0
    %1892 = vmatprep.subr.mxu0 0.0
    %1893 = vmatpush1.msra.mxu0 0.0
    %1894 = vmatprep.subr.mxu0 0.0
    %1895 = vmatpush1.msra.mxu0 0.0
    %1896 = vmatprep.subr.mxu0 0.0
    %1897 = vmatpush1.msra.mxu0 0.0
    %1898 = vmatprep.subr.mxu0 0.0
    %1899 = vmatpush1.msra.mxu0 0.0
    %1900 = vmatprep.subr.mxu0 0.0
    %1901 = vmatpush1.msra.mxu0 0.0
    %1902 = vmatprep.subr.mxu0 0.0
    %1903 = vmatpush1.msra.mxu0 0.0
    %1904 = vmatprep.subr.mxu0 0.0
    %1905 = vmatpush1.msra.mxu0 0.0
    %1906 = vmatprep.subr.mxu0 0.0
    %1907 = vmatpush1.msra.mxu0 0.0
    %1908 = vmatprep.subr.mxu0 0.0
    %1909 = vmatpush1.msra.mxu0 0.0
    %1910 = vmatprep.subr.mxu0 0.0
    %1911 = vmatpush1.msra.mxu0 0.0
    %1912 = vmatprep.subr.mxu0 0.0
    %1913 = vmatpush1.msra.mxu0 0.0
    %1914 = vmatprep.subr.mxu0 0.0
    %1915 = vmatpush1.msra.mxu0 0.0
    %1916 = vmatprep.subr.mxu0 0.0
    %1917 = vmatpush1.msra.mxu0 0.0
    %1918 = vmatprep.subr.mxu0 %v233
    %1919 = vmatpush1.msra.mxu0 %v231
    %1920 = vmatprep.subr.mxu0 0.0
    %1921 = vmatpush2.msra.mxu0 0.0
    %1922 = vmatprep.subr.mxu0 0.0
    %1923 = vmatpush2.msra.mxu0 0.0
    %1924 = vmatprep.subr.mxu0 0.0
    %1925 = vmatpush2.msra.mxu0 0.0
    %1926 = vmatprep.subr.mxu0 0.0
    %1927 = vmatpush2.msra.mxu0 0.0
    %1928 = vmatprep.subr.mxu0 0.0
    %1929 = vmatpush2.msra.mxu0 0.0
    %1930 = vmatprep.subr.mxu0 0.0
    %1931 = vmatpush2.msra.mxu0 0.0
    %1932 = vmatprep.subr.mxu0 0.0
    %1933 = vmatpush2.msra.mxu0 0.0
    %1934 = vmatprep.subr.mxu0 0.0
    %1935 = vmatpush2.msra.mxu0 0.0
    %1936 = vmatprep.subr.mxu0 0.0
    %1937 = vmatpush2.msra.mxu0 0.0
    %1938 = vmatprep.subr.mxu0 0.0
    %1939 = vmatpush2.msra.mxu0 0.0
    %1940 = vmatprep.subr.mxu0 0.0
    %1941 = vmatpush2.msra.mxu0 0.0
    %1942 = vmatprep.subr.mxu0 0.0
    %1943 = vmatpush2.msra.mxu0 0.0
    %1944 = vmatprep.subr.mxu0 0.0
    %1945 = vmatpush2.msra.mxu0 0.0
    %1946 = vmatprep.subr.mxu0 0.0
    %1947 = vmatpush2.msra.mxu0 0.0
    %1948 = vmatprep.subr.mxu0 0.0
    %1949 = vmatpush2.msra.mxu0 0.0
    %1950 = vmatprep.subr.mxu0 0.0
    %1951 = vmatpush2.msra.mxu0 0.0
    %1952 = vmatprep.mubr.f32.mxu0 0.0
    %1953 = vmatmul.mubr.f32.gmra.mxu0 %v141
    %v1954 = vpop.f32.mrf.mxu0
    %v1955 = vadd.f32 0.0, %v1954
    %v1956 = vpop.f32.mrf.mxu0
    %v1957 = vadd.f32 0.0, %v1956
    %1958 = vmatprep.mubr.f32.mxu0 0.0
    %1959 = vmatmul.mubr.f32.gmra.mxu0 %v144
    %v1960 = vpop.f32.mrf.mxu0
    %v1961 = vadd.f32 0.0, %v1960
    %v1962 = vpop.f32.mrf.mxu0
    %v1963 = vadd.f32 0.0, %v1962
    %1964 = vdwg.mxu0
    %1965 = vmatprep.subr.mxu0 0.0
    %1966 = vmatpush1.msra.mxu0 0.0
    %1967 = vmatprep.subr.mxu0 0.0
    %1968 = vmatpush1.msra.mxu0 0.0
    %1969 = vmatprep.subr.mxu0 0.0
    %1970 = vmatpush1.msra.mxu0 0.0
    %1971 = vmatprep.subr.mxu0 0.0
    %1972 = vmatpush1.msra.mxu0 0.0
    %1973 = vmatprep.subr.mxu0 0.0
    %1974 = vmatpush1.msra.mxu0 0.0
    %1975 = vmatprep.subr.mxu0 0.0
    %1976 = vmatpush1.msra.mxu0 0.0
    %1977 = vmatprep.subr.mxu0 0.0
    %1978 = vmatpush1.msra.mxu0 0.0
    %1979 = vmatprep.subr.mxu0 0.0
    %1980 = vmatpush1.msra.mxu0 0.0
    %1981 = vmatprep.subr.mxu0 0.0
    %1982 = vmatpush1.msra.mxu0 0.0
    %1983 = vmatprep.subr.mxu0 0.0
    %1984 = vmatpush1.msra.mxu0 0.0
    %1985 = vmatprep.subr.mxu0 0.0
    %1986 = vmatpush1.msra.mxu0 0.0
    %1987 = vmatprep.subr.mxu0 0.0
    %1988 = vmatpush1.msra.mxu0 0.0
    %1989 = vmatprep.subr.mxu0 0.0
    %1990 = vmatpush1.msra.mxu0 0.0
    %1991 = vmatprep.subr.mxu0 0.0
    %1992 = vmatpush1.msra.mxu0 0.0
    %1993 = vmatprep.subr.mxu0 0.0
    %1994 = vmatpush1.msra.mxu0 0.0
    %1995 = vmatprep.subr.mxu0 %v237
    %1996 = vmatpush1.msra.mxu0 %v235
    %1997 = vmatprep.subr.mxu0 0.0
    %1998 = vmatpush2.msra.mxu0 0.0
    %1999 = vmatprep.subr.mxu0 0.0
    %2000 = vmatpush2.msra.mxu0 0.0
    %2001 = vmatprep.subr.mxu0 0.0
    %2002 = vmatpush2.msra.mxu0 0.0
    %2003 = vmatprep.subr.mxu0 0.0
    %2004 = vmatpush2.msra.mxu0 0.0
    %2005 = vmatprep.subr.mxu0 0.0
    %2006 = vmatpush2.msra.mxu0 0.0
    %2007 = vmatprep.subr.mxu0 0.0
    %2008 = vmatpush2.msra.mxu0 0.0
    %2009 = vmatprep.subr.mxu0 0.0
    %2010 = vmatpush2.msra.mxu0 0.0
    %2011 = vmatprep.subr.mxu0 0.0
    %2012 = vmatpush2.msra.mxu0 0.0
    %2013 = vmatprep.subr.mxu0 0.0
    %2014 = vmatpush2.msra.mxu0 0.0
    %2015 = vmatprep.subr.mxu0 0.0
    %2016 = vmatpush2.msra.mxu0 0.0
    %2017 = vmatprep.subr.mxu0 0.0
    %2018 = vmatpush2.msra.mxu0 0.0
    %2019 = vmatprep.subr.mxu0 0.0
    %2020 = vmatpush2.msra.mxu0 0.0
    %2021 = vmatprep.subr.mxu0 0.0
    %2022 = vmatpush2.msra.mxu0 0.0
    %2023 = vmatprep.subr.mxu0 0.0
    %2024 = vmatpush2.msra.mxu0 0.0
    %2025 = vmatprep.subr.mxu0 0.0
    %2026 = vmatpush2.msra.mxu0 0.0
    %2027 = vmatprep.subr.mxu0 0.0
    %2028 = vmatpush2.msra.mxu0 0.0
    %2029 = vmatprep.mubr.f32.mxu0 0.0
    %2030 = vmatmul.mubr.f32.gmra.mxu0 %v141
    %v2031 = vpop.f32.mrf.mxu0
    %v2032 = vadd.f32 0.0, %v2031
    %v2033 = vpop.f32.mrf.mxu0
    %v2034 = vadd.f32 0.0, %v2033
    %2035 = vmatprep.mubr.f32.mxu0 0.0
    %2036 = vmatmul.mubr.f32.gmra.mxu0 %v144
    %v2037 = vpop.f32.mrf.mxu0
    %v2038 = vadd.f32 0.0, %v2037
    %v2039 = vpop.f32.mrf.mxu0
    %v2040 = vadd.f32 0.0, %v2039
    %2041 = vdwg.mxu0
    %2042 = vmatprep.subr.mxu0 0.0
    %2043 = vmatpush1.msra.mxu0 0.0
    %2044 = vmatprep.subr.mxu0 0.0
    %2045 = vmatpush1.msra.mxu0 0.0
    %2046 = vmatprep.subr.mxu0 0.0
    %2047 = vmatpush1.msra.mxu0 0.0
    %2048 = vmatprep.subr.mxu0 0.0
    %2049 = vmatpush1.msra.mxu0 0.0
    %2050 = vmatprep.subr.mxu0 0.0
    %2051 = vmatpush1.msra.mxu0 0.0
    %2052 = vmatprep.subr.mxu0 0.0
    %2053 = vmatpush1.msra.mxu0 0.0
    %2054 = vmatprep.subr.mxu0 0.0
    %2055 = vmatpush1.msra.mxu0 0.0
    %2056 = vmatprep.subr.mxu0 0.0
    %2057 = vmatpush1.msra.mxu0 0.0
    %2058 = vmatprep.subr.mxu0 0.0
    %2059 = vmatpush1.msra.mxu0 0.0
    %2060 = vmatprep.subr.mxu0 0.0
    %2061 = vmatpush1.msra.mxu0 0.0
    %2062 = vmatprep.subr.mxu0 0.0
    %2063 = vmatpush1.msra.mxu0 0.0
    %2064 = vmatprep.subr.mxu0 0.0
    %2065 = vmatpush1.msra.mxu0 0.0
    %2066 = vmatprep.subr.mxu0 0.0
    %2067 = vmatpush1.msra.mxu0 0.0
    %2068 = vmatprep.subr.mxu0 0.0
    %2069 = vmatpush1.msra.mxu0 0.0
    %2070 = vmatprep.subr.mxu0 0.0
    %2071 = vmatpush1.msra.mxu0 0.0
    %2072 = vmatprep.subr.mxu0 %v241
    %2073 = vmatpush1.msra.mxu0 %v239
    %2074 = vmatprep.subr.mxu0 0.0
    %2075 = vmatpush2.msra.mxu0 0.0
    %2076 = vmatprep.subr.mxu0 0.0
    %2077 = vmatpush2.msra.mxu0 0.0
    %2078 = vmatprep.subr.mxu0 0.0
    %2079 = vmatpush2.msra.mxu0 0.0
    %2080 = vmatprep.subr.mxu0 0.0
    %2081 = vmatpush2.msra.mxu0 0.0
    %2082 = vmatprep.subr.mxu0 0.0
    %2083 = vmatpush2.msra.mxu0 0.0
    %2084 = vmatprep.subr.mxu0 0.0
    %2085 = vmatpush2.msra.mxu0 0.0
    %2086 = vmatprep.subr.mxu0 0.0
    %2087 = vmatpush2.msra.mxu0 0.0
    %2088 = vmatprep.subr.mxu0 0.0
    %2089 = vmatpush2.msra.mxu0 0.0
    %2090 = vmatprep.subr.mxu0 0.0
    %2091 = vmatpush2.msra.mxu0 0.0
    %2092 = vmatprep.subr.mxu0 0.0
    %2093 = vmatpush2.msra.mxu0 0.0
    %2094 = vmatprep.subr.mxu0 0.0
    %2095 = vmatpush2.msra.mxu0 0.0
    %2096 = vmatprep.subr.mxu0 0.0
    %2097 = vmatpush2.msra.mxu0 0.0
    %2098 = vmatprep.subr.mxu0 0.0
    %2099 = vmatpush2.msra.mxu0 0.0
    %2100 = vmatprep.subr.mxu0 0.0
    %2101 = vmatpush2.msra.mxu0 0.0
    %2102 = vmatprep.subr.mxu0 0.0
    %2103 = vmatpush2.msra.mxu0 0.0
    %2104 = vmatprep.subr.mxu0 0.0
    %2105 = vmatpush2.msra.mxu0 0.0
    %2106 = vmatprep.mubr.f32.mxu0 0.0
    %2107 = vmatmul.mubr.f32.gmra.mxu0 %v141
    %v2108 = vpop.f32.mrf.mxu0
    %v2109 = vadd.f32 0.0, %v2108
    %v2110 = vpop.f32.mrf.mxu0
    %v2111 = vadd.f32 0.0, %v2110
    %2112 = vmatprep.mubr.f32.mxu0 0.0
    %2113 = vmatmul.mubr.f32.gmra.mxu0 %v144
    %v2114 = vpop.f32.mrf.mxu0
    %v2115 = vadd.f32 0.0, %v2114
    %v2116 = vpop.f32.mrf.mxu0
    %v2117 = vadd.f32 0.0, %v2116
    %2118 = vdwg.mxu0
    %2119 = vmatprep.subr.mxu0 0.0
    %2120 = vmatpush1.msra.mxu0 0.0
    %2121 = vmatprep.subr.mxu0 0.0
    %2122 = vmatpush1.msra.mxu0 0.0
    %2123 = vmatprep.subr.mxu0 0.0
    %2124 = vmatpush1.msra.mxu0 0.0
    %2125 = vmatprep.subr.mxu0 0.0
    %2126 = vmatpush1.msra.mxu0 0.0
    %2127 = vmatprep.subr.mxu0 0.0
    %2128 = vmatpush1.msra.mxu0 0.0
    %2129 = vmatprep.subr.mxu0 0.0
    %2130 = vmatpush1.msra.mxu0 0.0
    %2131 = vmatprep.subr.mxu0 0.0
    %2132 = vmatpush1.msra.mxu0 0.0
    %2133 = vmatprep.subr.mxu0 0.0
    %2134 = vmatpush1.msra.mxu0 0.0
    %2135 = vmatprep.subr.mxu0 0.0
    %2136 = vmatpush1.msra.mxu0 0.0
    %2137 = vmatprep.subr.mxu0 0.0
    %2138 = vmatpush1.msra.mxu0 0.0
    %2139 = vmatprep.subr.mxu0 0.0
    %2140 = vmatpush1.msra.mxu0 0.0
    %2141 = vmatprep.subr.mxu0 0.0
    %2142 = vmatpush1.msra.mxu0 0.0
    %2143 = vmatprep.subr.mxu0 0.0
    %2144 = vmatpush1.msra.mxu0 0.0
    %2145 = vmatprep.subr.mxu0 0.0
    %2146 = vmatpush1.msra.mxu0 0.0
    %2147 = vmatprep.subr.mxu0 0.0
    %2148 = vmatpush1.msra.mxu0 0.0
    %2149 = vmatprep.subr.mxu0 %v245
    %2150 = vmatpush1.msra.mxu0 %v243
    %2151 = vmatprep.subr.mxu0 0.0
    %2152 = vmatpush2.msra.mxu0 0.0
    %2153 = vmatprep.subr.mxu0 0.0
    %2154 = vmatpush2.msra.mxu0 0.0
    %2155 = vmatprep.subr.mxu0 0.0
    %2156 = vmatpush2.msra.mxu0 0.0
    %2157 = vmatprep.subr.mxu0 0.0
    %2158 = vmatpush2.msra.mxu0 0.0
    %2159 = vmatprep.subr.mxu0 0.0
    %2160 = vmatpush2.msra.mxu0 0.0
    %2161 = vmatprep.subr.mxu0 0.0
    %2162 = vmatpush2.msra.mxu0 0.0
    %2163 = vmatprep.subr.mxu0 0.0
    %2164 = vmatpush2.msra.mxu0 0.0
    %2165 = vmatprep.subr.mxu0 0.0
    %2166 = vmatpush2.msra.mxu0 0.0
    %2167 = vmatprep.subr.mxu0 0.0
    %2168 = vmatpush2.msra.mxu0 0.0
    %2169 = vmatprep.subr.mxu0 0.0
    %2170 = vmatpush2.msra.mxu0 0.0
    %2171 = vmatprep.subr.mxu0 0.0
    %2172 = vmatpush2.msra.mxu0 0.0
    %2173 = vmatprep.subr.mxu0 0.0
    %2174 = vmatpush2.msra.mxu0 0.0
    %2175 = vmatprep.subr.mxu0 0.0
    %2176 = vmatpush2.msra.mxu0 0.0
    %2177 = vmatprep.subr.mxu0 0.0
    %2178 = vmatpush2.msra.mxu0 0.0
    %2179 = vmatprep.subr.mxu0 0.0
    %2180 = vmatpush2.msra.mxu0 0.0
    %2181 = vmatprep.subr.mxu0 0.0
    %2182 = vmatpush2.msra.mxu0 0.0
    %2183 = vmatprep.mubr.f32.mxu0 0.0
    %2184 = vmatmul.mubr.f32.gmra.mxu0 %v141
    %v2185 = vpop.f32.mrf.mxu0
    %v2186 = vadd.f32 0.0, %v2185
    %v2187 = vpop.f32.mrf.mxu0
    %v2188 = vadd.f32 0.0, %v2187
    %2189 = vmatprep.mubr.f32.mxu0 0.0
    %2190 = vmatmul.mubr.f32.gmra.mxu0 %v144
    %v2191 = vpop.f32.mrf.mxu0
    %v2192 = vadd.f32 0.0, %v2191
    %v2193 = vpop.f32.mrf.mxu0
    %v2194 = vadd.f32 0.0, %v2193
    %2195 = vdwg.mxu0
    %2196 = vmatprep.subr.mxu0 0.0
    %2197 = vmatpush1.msra.mxu0 0.0
    %2198 = vmatprep.subr.mxu0 0.0
    %2199 = vmatpush1.msra.mxu0 0.0
    %2200 = vmatprep.subr.mxu0 0.0
    %2201 = vmatpush1.msra.mxu0 0.0
    %2202 = vmatprep.subr.mxu0 0.0
    %2203 = vmatpush1.msra.mxu0 0.0
    %2204 = vmatprep.subr.mxu0 0.0
    %2205 = vmatpush1.msra.mxu0 0.0
    %2206 = vmatprep.subr.mxu0 0.0
    %2207 = vmatpush1.msra.mxu0 0.0
    %2208 = vmatprep.subr.mxu0 0.0
    %2209 = vmatpush1.msra.mxu0 0.0
    %2210 = vmatprep.subr.mxu0 0.0
    %2211 = vmatpush1.msra.mxu0 0.0
    %2212 = vmatprep.subr.mxu0 0.0
    %2213 = vmatpush1.msra.mxu0 0.0
    %2214 = vmatprep.subr.mxu0 0.0
    %2215 = vmatpush1.msra.mxu0 0.0
    %2216 = vmatprep.subr.mxu0 0.0
    %2217 = vmatpush1.msra.mxu0 0.0
    %2218 = vmatprep.subr.mxu0 0.0
    %2219 = vmatpush1.msra.mxu0 0.0
    %2220 = vmatprep.subr.mxu0 0.0
    %2221 = vmatpush1.msra.mxu0 0.0
    %2222 = vmatprep.subr.mxu0 0.0
    %2223 = vmatpush1.msra.mxu0 0.0
    %2224 = vmatprep.subr.mxu0 0.0
    %2225 = vmatpush1.msra.mxu0 0.0
    %2226 = vmatprep.subr.mxu0 %v249
    %2227 = vmatpush1.msra.mxu0 %v247
    %2228 = vmatprep.subr.mxu0 0.0
    %2229 = vmatpush2.msra.mxu0 0.0
    %2230 = vmatprep.subr.mxu0 0.0
    %2231 = vmatpush2.msra.mxu0 0.0
    %2232 = vmatprep.subr.mxu0 0.0
    %2233 = vmatpush2.msra.mxu0 0.0
    %2234 = vmatprep.subr.mxu0 0.0
    %2235 = vmatpush2.msra.mxu0 0.0
    %2236 = vmatprep.subr.mxu0 0.0
    %2237 = vmatpush2.msra.mxu0 0.0
    %2238 = vmatprep.subr.mxu0 0.0
    %2239 = vmatpush2.msra.mxu0 0.0
    %2240 = vmatprep.subr.mxu0 0.0
    %2241 = vmatpush2.msra.mxu0 0.0
    %2242 = vmatprep.subr.mxu0 0.0
    %2243 = vmatpush2.msra.mxu0 0.0
    %2244 = vmatprep.subr.mxu0 0.0
    %2245 = vmatpush2.msra.mxu0 0.0
    %2246 = vmatprep.subr.mxu0 0.0
    %2247 = vmatpush2.msra.mxu0 0.0
    %2248 = vmatprep.subr.mxu0 0.0
    %2249 = vmatpush2.msra.mxu0 0.0
    %2250 = vmatprep.subr.mxu0 0.0
    %2251 = vmatpush2.msra.mxu0 0.0
    %2252 = vmatprep.subr.mxu0 0.0
    %2253 = vmatpush2.msra.mxu0 0.0
    %2254 = vmatprep.subr.mxu0 0.0
    %2255 = vmatpush2.msra.mxu0 0.0
    %2256 = vmatprep.subr.mxu0 0.0
    %2257 = vmatpush2.msra.mxu0 0.0
    %2258 = vmatprep.subr.mxu0 0.0
    %2259 = vmatpush2.msra.mxu0 0.0
    %2260 = vmatprep.mubr.f32.mxu0 0.0
    %2261 = vmatmul.mubr.f32.gmra.mxu0 %v141
    %v2262 = vpop.f32.mrf.mxu0
    %v2263 = vadd.f32 0.0, %v2262
    %v2264 = vpop.f32.mrf.mxu0
    %v2265 = vadd.f32 0.0, %v2264
    %2266 = vmatprep.mubr.f32.mxu0 0.0
    %2267 = vmatmul.mubr.f32.gmra.mxu0 %v144
    %v2268 = vpop.f32.mrf.mxu0
    %v2269 = vadd.f32 0.0, %v2268
    %v2270 = vpop.f32.mrf.mxu0
    %v2271 = vadd.f32 0.0, %v2270
    %2272 = vdwg.mxu0
    %2273 = vmatprep.subr.mxu0 0.0
    %2274 = vmatpush1.msra.mxu0 0.0
    %2275 = vmatprep.subr.mxu0 0.0
    %2276 = vmatpush1.msra.mxu0 0.0
    %2277 = vmatprep.subr.mxu0 0.0
    %2278 = vmatpush1.msra.mxu0 0.0
    %2279 = vmatprep.subr.mxu0 0.0
    %2280 = vmatpush1.msra.mxu0 0.0
    %2281 = vmatprep.subr.mxu0 0.0
    %2282 = vmatpush1.msra.mxu0 0.0
    %2283 = vmatprep.subr.mxu0 0.0
    %2284 = vmatpush1.msra.mxu0 0.0
    %2285 = vmatprep.subr.mxu0 0.0
    %2286 = vmatpush1.msra.mxu0 0.0
    %2287 = vmatprep.subr.mxu0 0.0
    %2288 = vmatpush1.msra.mxu0 0.0
    %2289 = vmatprep.subr.mxu0 0.0
    %2290 = vmatpush1.msra.mxu0 0.0
    %2291 = vmatprep.subr.mxu0 0.0
    %2292 = vmatpush1.msra.mxu0 0.0
    %2293 = vmatprep.subr.mxu0 0.0
    %2294 = vmatpush1.msra.mxu0 0.0
    %2295 = vmatprep.subr.mxu0 0.0
    %2296 = vmatpush1.msra.mxu0 0.0
    %2297 = vmatprep.subr.mxu0 0.0
    %2298 = vmatpush1.msra.mxu0 0.0
    %2299 = vmatprep.subr.mxu0 0.0
    %2300 = vmatpush1.msra.mxu0 0.0
    %2301 = vmatprep.subr.mxu0 0.0
    %2302 = vmatpush1.msra.mxu0 0.0
    %2303 = vmatprep.subr.mxu0 %v253
    %2304 = vmatpush1.msra.mxu0 %v251
    %2305 = vmatprep.subr.mxu0 0.0
    %2306 = vmatpush2.msra.mxu0 0.0
    %2307 = vmatprep.subr.mxu0 0.0
    %2308 = vmatpush2.msra.mxu0 0.0
    %2309 = vmatprep.subr.mxu0 0.0
    %2310 = vmatpush2.msra.mxu0 0.0
    %2311 = vmatprep.subr.mxu0 0.0
    %2312 = vmatpush2.msra.mxu0 0.0
    %2313 = vmatprep.subr.mxu0 0.0
    %2314 = vmatpush2.msra.mxu0 0.0
    %2315 = vmatprep.subr.mxu0 0.0
    %2316 = vmatpush2.msra.mxu0 0.0
    %2317 = vmatprep.subr.mxu0 0.0
    %2318 = vmatpush2.msra.mxu0 0.0
    %2319 = vmatprep.subr.mxu0 0.0
    %2320 = vmatpush2.msra.mxu0 0.0
    %2321 = vmatprep.subr.mxu0 0.0
    %2322 = vmatpush2.msra.mxu0 0.0
    %2323 = vmatprep.subr.mxu0 0.0
    %2324 = vmatpush2.msra.mxu0 0.0
    %2325 = vmatprep.subr.mxu0 0.0
    %2326 = vmatpush2.msra.mxu0 0.0
    %2327 = vmatprep.subr.mxu0 0.0
    %2328 = vmatpush2.msra.mxu0 0.0
    %2329 = vmatprep.subr.mxu0 0.0
    %2330 = vmatpush2.msra.mxu0 0.0
    %2331 = vmatprep.subr.mxu0 0.0
    %2332 = vmatpush2.msra.mxu0 0.0
    %2333 = vmatprep.subr.mxu0 0.0
    %2334 = vmatpush2.msra.mxu0 0.0
    %2335 = vmatprep.subr.mxu0 0.0
    %2336 = vmatpush2.msra.mxu0 0.0
    %2337 = vmatprep.mubr.f32.mxu0 0.0
    %2338 = vmatmul.mubr.f32.gmra.mxu0 %v141
    %v2339 = vpop.f32.mrf.mxu0
    %v2340 = vadd.f32 0.0, %v2339
    %v2341 = vpop.f32.mrf.mxu0
    %v2342 = vadd.f32 0.0, %v2341
    %2343 = vmatprep.mubr.f32.mxu0 0.0
    %2344 = vmatmul.mubr.f32.gmra.mxu0 %v144
    %v2345 = vpop.f32.mrf.mxu0
    %v2346 = vadd.f32 0.0, %v2345
    %v2347 = vpop.f32.mrf.mxu0
    %v2348 = vadd.f32 0.0, %v2347
    %2349 = vdwg.mxu0
    %2350 = vmatprep.subr.mxu0 0.0
    %2351 = vmatpush1.msra.mxu0 0.0
    %2352 = vmatprep.subr.mxu0 0.0
    %2353 = vmatpush1.msra.mxu0 0.0
    %2354 = vmatprep.subr.mxu0 0.0
    %2355 = vmatpush1.msra.mxu0 0.0
    %2356 = vmatprep.subr.mxu0 0.0
    %2357 = vmatpush1.msra.mxu0 0.0
    %2358 = vmatprep.subr.mxu0 0.0
    %2359 = vmatpush1.msra.mxu0 0.0
    %2360 = vmatprep.subr.mxu0 0.0
    %2361 = vmatpush1.msra.mxu0 0.0
    %2362 = vmatprep.subr.mxu0 0.0
    %2363 = vmatpush1.msra.mxu0 0.0
    %2364 = vmatprep.subr.mxu0 0.0
    %2365 = vmatpush1.msra.mxu0 0.0
    %2366 = vmatprep.subr.mxu0 0.0
    %2367 = vmatpush1.msra.mxu0 0.0
    %2368 = vmatprep.subr.mxu0 0.0
    %2369 = vmatpush1.msra.mxu0 0.0
    %2370 = vmatprep.subr.mxu0 0.0
    %2371 = vmatpush1.msra.mxu0 0.0
    %2372 = vmatprep.subr.mxu0 0.0
    %2373 = vmatpush1.msra.mxu0 0.0
    %2374 = vmatprep.subr.mxu0 0.0
    %2375 = vmatpush1.msra.mxu0 0.0
    %2376 = vmatprep.subr.mxu0 0.0
    %2377 = vmatpush1.msra.mxu0 0.0
    %2378 = vmatprep.subr.mxu0 0.0
    %2379 = vmatpush1.msra.mxu0 0.0
    %2380 = vmatprep.subr.mxu0 %v257
    %2381 = vmatpush1.msra.mxu0 %v255
    %2382 = vmatprep.subr.mxu0 0.0
    %2383 = vmatpush2.msra.mxu0 0.0
    %2384 = vmatprep.subr.mxu0 0.0
    %2385 = vmatpush2.msra.mxu0 0.0
    %2386 = vmatprep.subr.mxu0 0.0
    %2387 = vmatpush2.msra.mxu0 0.0
    %2388 = vmatprep.subr.mxu0 0.0
    %2389 = vmatpush2.msra.mxu0 0.0
    %2390 = vmatprep.subr.mxu0 0.0
    %2391 = vmatpush2.msra.mxu0 0.0
    %2392 = vmatprep.subr.mxu0 0.0
    %2393 = vmatpush2.msra.mxu0 0.0
    %2394 = vmatprep.subr.mxu0 0.0
    %2395 = vmatpush2.msra.mxu0 0.0
    %2396 = vmatprep.subr.mxu0 0.0
    %2397 = vmatpush2.msra.mxu0 0.0
    %2398 = vmatprep.subr.mxu0 0.0
    %2399 = vmatpush2.msra.mxu0 0.0
    %2400 = vmatprep.subr.mxu0 0.0
    %2401 = vmatpush2.msra.mxu0 0.0
    %2402 = vmatprep.subr.mxu0 0.0
    %2403 = vmatpush2.msra.mxu0 0.0
    %2404 = vmatprep.subr.mxu0 0.0
    %2405 = vmatpush2.msra.mxu0 0.0
    %2406 = vmatprep.subr.mxu0 0.0
    %2407 = vmatpush2.msra.mxu0 0.0
    %2408 = vmatprep.subr.mxu0 0.0
    %2409 = vmatpush2.msra.mxu0 0.0
    %2410 = vmatprep.subr.mxu0 0.0
    %2411 = vmatpush2.msra.mxu0 0.0
    %2412 = vmatprep.subr.mxu0 0.0
    %2413 = vmatpush2.msra.mxu0 0.0
    %2414 = vmatprep.mubr.f32.mxu0 0.0
    %2415 = vmatmul.mubr.f32.gmra.mxu0 %v141
    %v2416 = vpop.f32.mrf.mxu0
    %v2417 = vadd.f32 0.0, %v2416
    %v2418 = vpop.f32.mrf.mxu0
    %v2419 = vadd.f32 0.0, %v2418
    %2420 = vmatprep.mubr.f32.mxu0 0.0
    %2421 = vmatmul.mubr.f32.gmra.mxu0 %v144
    %v2422 = vpop.f32.mrf.mxu0
    %v2423 = vadd.f32 0.0, %v2422
    %v2424 = vpop.f32.mrf.mxu0
    %v2425 = vadd.f32 0.0, %v2424
    %2426 = vdwg.mxu0
    %2427 = vmatprep.subr.mxu0 0.0
    %2428 = vmatpush1.msra.mxu0 0.0
    %2429 = vmatprep.subr.mxu0 0.0
    %2430 = vmatpush1.msra.mxu0 0.0
    %2431 = vmatprep.subr.mxu0 0.0
    %2432 = vmatpush1.msra.mxu0 0.0
    %2433 = vmatprep.subr.mxu0 0.0
    %2434 = vmatpush1.msra.mxu0 0.0
    %2435 = vmatprep.subr.mxu0 0.0
    %2436 = vmatpush1.msra.mxu0 0.0
    %2437 = vmatprep.subr.mxu0 0.0
    %2438 = vmatpush1.msra.mxu0 0.0
    %2439 = vmatprep.subr.mxu0 0.0
    %2440 = vmatpush1.msra.mxu0 0.0
    %2441 = vmatprep.subr.mxu0 0.0
    %2442 = vmatpush1.msra.mxu0 0.0
    %2443 = vmatprep.subr.mxu0 0.0
    %2444 = vmatpush1.msra.mxu0 0.0
    %2445 = vmatprep.subr.mxu0 0.0
    %2446 = vmatpush1.msra.mxu0 0.0
    %2447 = vmatprep.subr.mxu0 0.0
    %2448 = vmatpush1.msra.mxu0 0.0
    %2449 = vmatprep.subr.mxu0 0.0
    %2450 = vmatpush1.msra.mxu0 0.0
    %2451 = vmatprep.subr.mxu0 0.0
    %2452 = vmatpush1.msra.mxu0 0.0
    %2453 = vmatprep.subr.mxu0 0.0
    %2454 = vmatpush1.msra.mxu0 0.0
    %2455 = vmatprep.subr.mxu0 0.0
    %2456 = vmatpush1.msra.mxu0 0.0
    %2457 = vmatprep.subr.mxu0 %v261
    %2458 = vmatpush1.msra.mxu0 %v259
    %2459 = vmatprep.subr.mxu0 0.0
    %2460 = vmatpush2.msra.mxu0 0.0
    %2461 = vmatprep.subr.mxu0 0.0
    %2462 = vmatpush2.msra.mxu0 0.0
    %2463 = vmatprep.subr.mxu0 0.0
    %2464 = vmatpush2.msra.mxu0 0.0
    %2465 = vmatprep.subr.mxu0 0.0
    %2466 = vmatpush2.msra.mxu0 0.0
    %2467 = vmatprep.subr.mxu0 0.0
    %2468 = vmatpush2.msra.mxu0 0.0
    %2469 = vmatprep.subr.mxu0 0.0
    %2470 = vmatpush2.msra.mxu0 0.0
    %2471 = vmatprep.subr.mxu0 0.0
    %2472 = vmatpush2.msra.mxu0 0.0
    %2473 = vmatprep.subr.mxu0 0.0
    %2474 = vmatpush2.msra.mxu0 0.0
    %2475 = vmatprep.subr.mxu0 0.0
    %2476 = vmatpush2.msra.mxu0 0.0
    %2477 = vmatprep.subr.mxu0 0.0
    %2478 = vmatpush2.msra.mxu0 0.0
    %2479 = vmatprep.subr.mxu0 0.0
    %2480 = vmatpush2.msra.mxu0 0.0
    %2481 = vmatprep.subr.mxu0 0.0
    %2482 = vmatpush2.msra.mxu0 0.0
    %2483 = vmatprep.subr.mxu0 0.0
    %2484 = vmatpush2.msra.mxu0 0.0
    %2485 = vmatprep.subr.mxu0 0.0
    %2486 = vmatpush2.msra.mxu0 0.0
    %2487 = vmatprep.subr.mxu0 0.0
    %2488 = vmatpush2.msra.mxu0 0.0
    %2489 = vmatprep.subr.mxu0 0.0
    %2490 = vmatpush2.msra.mxu0 0.0
    %2491 = vmatprep.mubr.f32.mxu0 0.0
    %2492 = vmatmul.mubr.f32.gmra.mxu0 %v141
    %v2493 = vpop.f32.mrf.mxu0
    %v2494 = vadd.f32 0.0, %v2493
    %v2495 = vpop.f32.mrf.mxu0
    %v2496 = vadd.f32 0.0, %v2495
    %2497 = vmatprep.mubr.f32.mxu0 0.0
    %2498 = vmatmul.mubr.f32.gmra.mxu0 %v144
    %v2499 = vpop.f32.mrf.mxu0
    %v2500 = vadd.f32 0.0, %v2499
    %v2501 = vpop.f32.mrf.mxu0
    %v2502 = vadd.f32 0.0, %v2501
    %2503 = vdwg.mxu0
    %2504 = vmatprep.subr.mxu0 0.0
    %2505 = vmatpush1.msra.mxu0 0.0
    %2506 = vmatprep.subr.mxu0 0.0
    %2507 = vmatpush1.msra.mxu0 0.0
    %2508 = vmatprep.subr.mxu0 0.0
    %2509 = vmatpush1.msra.mxu0 0.0
    %2510 = vmatprep.subr.mxu0 0.0
    %2511 = vmatpush1.msra.mxu0 0.0
    %2512 = vmatprep.subr.mxu0 0.0
    %2513 = vmatpush1.msra.mxu0 0.0
    %2514 = vmatprep.subr.mxu0 0.0
    %2515 = vmatpush1.msra.mxu0 0.0
    %2516 = vmatprep.subr.mxu0 0.0
    %2517 = vmatpush1.msra.mxu0 0.0
    %2518 = vmatprep.subr.mxu0 0.0
    %2519 = vmatpush1.msra.mxu0 0.0
    %2520 = vmatprep.subr.mxu0 0.0
    %2521 = vmatpush1.msra.mxu0 0.0
    %2522 = vmatprep.subr.mxu0 0.0
    %2523 = vmatpush1.msra.mxu0 0.0
    %2524 = vmatprep.subr.mxu0 0.0
    %2525 = vmatpush1.msra.mxu0 0.0
    %2526 = vmatprep.subr.mxu0 0.0
    %2527 = vmatpush1.msra.mxu0 0.0
    %2528 = vmatprep.subr.mxu0 0.0
    %2529 = vmatpush1.msra.mxu0 0.0
    %2530 = vmatprep.subr.mxu0 0.0
    %2531 = vmatpush1.msra.mxu0 0.0
    %2532 = vmatprep.subr.mxu0 0.0
    %2533 = vmatpush1.msra.mxu0 0.0
    %2534 = vmatprep.subr.mxu0 %v265
    %2535 = vmatpush1.msra.mxu0 %v263
    %2536 = vmatprep.subr.mxu0 0.0
    %2537 = vmatpush2.msra.mxu0 0.0
    %2538 = vmatprep.subr.mxu0 0.0
    %2539 = vmatpush2.msra.mxu0 0.0
    %2540 = vmatprep.subr.mxu0 0.0
    %2541 = vmatpush2.msra.mxu0 0.0
    %2542 = vmatprep.subr.mxu0 0.0
    %2543 = vmatpush2.msra.mxu0 0.0
    %2544 = vmatprep.subr.mxu0 0.0
    %2545 = vmatpush2.msra.mxu0 0.0
    %2546 = vmatprep.subr.mxu0 0.0
    %2547 = vmatpush2.msra.mxu0 0.0
    %2548 = vmatprep.subr.mxu0 0.0
    %2549 = vmatpush2.msra.mxu0 0.0
    %2550 = vmatprep.subr.mxu0 0.0
    %2551 = vmatpush2.msra.mxu0 0.0
    %2552 = vmatprep.subr.mxu0 0.0
    %2553 = vmatpush2.msra.mxu0 0.0
    %2554 = vmatprep.subr.mxu0 0.0
    %2555 = vmatpush2.msra.mxu0 0.0
    %2556 = vmatprep.subr.mxu0 0.0
    %2557 = vmatpush2.msra.mxu0 0.0
    %2558 = vmatprep.subr.mxu0 0.0
    %2559 = vmatpush2.msra.mxu0 0.0
    %2560 = vmatprep.subr.mxu0 0.0
    %2561 = vmatpush2.msra.mxu0 0.0
    %2562 = vmatprep.subr.mxu0 0.0
    %2563 = vmatpush2.msra.mxu0 0.0
    %2564 = vmatprep.subr.mxu0 0.0
    %2565 = vmatpush2.msra.mxu0 0.0
    %2566 = vmatprep.subr.mxu0 0.0
    %2567 = vmatpush2.msra.mxu0 0.0
    %2568 = vmatprep.mubr.f32.mxu0 0.0
    %2569 = vmatmul.mubr.f32.gmra.mxu0 %v141
    %v2570 = vpop.f32.mrf.mxu0
    %v2571 = vadd.f32 0.0, %v2570
    %v2572 = vpop.f32.mrf.mxu0
    %v2573 = vadd.f32 0.0, %v2572
    %2574 = vmatprep.mubr.f32.mxu0 0.0
    %2575 = vmatmul.mubr.f32.gmra.mxu0 %v144
    %v2576 = vpop.f32.mrf.mxu0
    %v2577 = vadd.f32 0.0, %v2576
    %v2578 = vpop.f32.mrf.mxu0
    %v2579 = vadd.f32 0.0, %v2578
    %2580 = vdwg.mxu0
    %2581 = vmatprep.subr.mxu0 0.0
    %2582 = vmatpush1.msra.mxu0 0.0
    %2583 = vmatprep.subr.mxu0 0.0
    %2584 = vmatpush1.msra.mxu0 0.0
    %2585 = vmatprep.subr.mxu0 0.0
    %2586 = vmatpush1.msra.mxu0 0.0
    %2587 = vmatprep.subr.mxu0 0.0
    %2588 = vmatpush1.msra.mxu0 0.0
    %2589 = vmatprep.subr.mxu0 0.0
    %2590 = vmatpush1.msra.mxu0 0.0
    %2591 = vmatprep.subr.mxu0 0.0
    %2592 = vmatpush1.msra.mxu0 0.0
    %2593 = vmatprep.subr.mxu0 0.0
    %2594 = vmatpush1.msra.mxu0 0.0
    %2595 = vmatprep.subr.mxu0 0.0
    %2596 = vmatpush1.msra.mxu0 0.0
    %2597 = vmatprep.subr.mxu0 0.0
    %2598 = vmatpush1.msra.mxu0 0.0
    %2599 = vmatprep.subr.mxu0 0.0
    %2600 = vmatpush1.msra.mxu0 0.0
    %2601 = vmatprep.subr.mxu0 0.0
    %2602 = vmatpush1.msra.mxu0 0.0
    %2603 = vmatprep.subr.mxu0 0.0
    %2604 = vmatpush1.msra.mxu0 0.0
    %2605 = vmatprep.subr.mxu0 0.0
    %2606 = vmatpush1.msra.mxu0 0.0
    %2607 = vmatprep.subr.mxu0 0.0
    %2608 = vmatpush1.msra.mxu0 0.0
    %2609 = vmatprep.subr.mxu0 0.0
    %2610 = vmatpush1.msra.mxu0 0.0
    %2611 = vmatprep.subr.mxu0 %v269
    %2612 = vmatpush1.msra.mxu0 %v267
    %2613 = vmatprep.subr.mxu0 0.0
    %2614 = vmatpush2.msra.mxu0 0.0
    %2615 = vmatprep.subr.mxu0 0.0
    %2616 = vmatpush2.msra.mxu0 0.0
    %2617 = vmatprep.subr.mxu0 0.0
    %2618 = vmatpush2.msra.mxu0 0.0
    %2619 = vmatprep.subr.mxu0 0.0
    %2620 = vmatpush2.msra.mxu0 0.0
    %2621 = vmatprep.subr.mxu0 0.0
    %2622 = vmatpush2.msra.mxu0 0.0
    %2623 = vmatprep.subr.mxu0 0.0
    %2624 = vmatpush2.msra.mxu0 0.0
    %2625 = vmatprep.subr.mxu0 0.0
    %2626 = vmatpush2.msra.mxu0 0.0
    %2627 = vmatprep.subr.mxu0 0.0
    %2628 = vmatpush2.msra.mxu0 0.0
    %2629 = vmatprep.subr.mxu0 0.0
    %2630 = vmatpush2.msra.mxu0 0.0
    %2631 = vmatprep.subr.mxu0 0.0
    %2632 = vmatpush2.msra.mxu0 0.0
    %2633 = vmatprep.subr.mxu0 0.0
    %2634 = vmatpush2.msra.mxu0 0.0
    %2635 = vmatprep.subr.mxu0 0.0
    %2636 = vmatpush2.msra.mxu0 0.0
    %2637 = vmatprep.subr.mxu0 0.0
    %2638 = vmatpush2.msra.mxu0 0.0
    %2639 = vmatprep.subr.mxu0 0.0
    %2640 = vmatpush2.msra.mxu0 0.0
    %2641 = vmatprep.subr.mxu0 0.0
    %2642 = vmatpush2.msra.mxu0 0.0
    %2643 = vmatprep.subr.mxu0 0.0
    %2644 = vmatpush2.msra.mxu0 0.0
    %2645 = vmatprep.mubr.f32.mxu0 0.0
    %2646 = vmatmul.mubr.f32.gmra.mxu0 %v141
    %v2647 = vpop.f32.mrf.mxu0
    %v2648 = vadd.f32 0.0, %v2647
    %v2649 = vpop.f32.mrf.mxu0
    %v2650 = vadd.f32 0.0, %v2649
    %2651 = vmatprep.mubr.f32.mxu0 0.0
    %2652 = vmatmul.mubr.f32.gmra.mxu0 %v144
    %v2653 = vpop.f32.mrf.mxu0
    %v2654 = vadd.f32 0.0, %v2653
    %v2655 = vpop.f32.mrf.mxu0
    %v2656 = vadd.f32 0.0, %v2655
    %2657 = vdwg.mxu0
    %v2659 = vsel %vm139, %v70, 0
    %v2662 = vsel %vm139, %v71, 0
    %v2664 = vsel %vm146, %v38, 0
    %2666 = vmatprep.subr.mxu0 0.0
    %2667 = vmatpush1.msra.mxu0 0.0
    %2668 = vmatprep.subr.mxu0 0.0
    %2669 = vmatpush1.msra.mxu0 0.0
    %2670 = vmatprep.subr.mxu0 0.0
    %2671 = vmatpush1.msra.mxu0 0.0
    %2672 = vmatprep.subr.mxu0 0.0
    %2673 = vmatpush1.msra.mxu0 0.0
    %2674 = vmatprep.subr.mxu0 0.0
    %2675 = vmatpush1.msra.mxu0 0.0
    %2676 = vmatprep.subr.mxu0 0.0
    %2677 = vmatpush1.msra.mxu0 0.0
    %2678 = vmatprep.subr.mxu0 0.0
    %2679 = vmatpush1.msra.mxu0 0.0
    %2680 = vmatprep.subr.mxu0 0.0
    %2681 = vmatpush1.msra.mxu0 0.0
    %2682 = vmatprep.subr.mxu0 0.0
    %2683 = vmatpush1.msra.mxu0 0.0
    %2684 = vmatprep.subr.mxu0 0.0
    %2685 = vmatpush1.msra.mxu0 0.0
    %2686 = vmatprep.subr.mxu0 0.0
    %2687 = vmatpush1.msra.mxu0 0.0
    %2688 = vmatprep.subr.mxu0 0.0
    %2689 = vmatpush1.msra.mxu0 0.0
    %2690 = vmatprep.subr.mxu0 0.0
    %2691 = vmatpush1.msra.mxu0 0.0
    %2692 = vmatprep.subr.mxu0 0.0
    %2693 = vmatpush1.msra.mxu0 0.0
    %2694 = vmatprep.subr.mxu0 0.0
    %2695 = vmatpush1.msra.mxu0 0.0
    %2696 = vmatprep.subr.mxu0 %v147
    %2697 = vmatpush1.msra.mxu0 %v2664
    %2698 = vmatprep.subr.mxu0 0.0
    %2699 = vmatpush2.msra.mxu0 0.0
    %2700 = vmatprep.subr.mxu0 0.0
    %2701 = vmatpush2.msra.mxu0 0.0
    %2702 = vmatprep.subr.mxu0 0.0
    %2703 = vmatpush2.msra.mxu0 0.0
    %2704 = vmatprep.subr.mxu0 0.0
    %2705 = vmatpush2.msra.mxu0 0.0
    %2706 = vmatprep.subr.mxu0 0.0
    %2707 = vmatpush2.msra.mxu0 0.0
    %2708 = vmatprep.subr.mxu0 0.0
    %2709 = vmatpush2.msra.mxu0 0.0
    %2710 = vmatprep.subr.mxu0 0.0
    %2711 = vmatpush2.msra.mxu0 0.0
    %2712 = vmatprep.subr.mxu0 0.0
    %2713 = vmatpush2.msra.mxu0 0.0
    %2714 = vmatprep.subr.mxu0 0.0
    %2715 = vmatpush2.msra.mxu0 0.0
    %2716 = vmatprep.subr.mxu0 0.0
    %2717 = vmatpush2.msra.mxu0 0.0
    %2718 = vmatprep.subr.mxu0 0.0
    %2719 = vmatpush2.msra.mxu0 0.0
    %2720 = vmatprep.subr.mxu0 0.0
    %2721 = vmatpush2.msra.mxu0 0.0
    %2722 = vmatprep.subr.mxu0 0.0
    %2723 = vmatpush2.msra.mxu0 0.0
    %2724 = vmatprep.subr.mxu0 0.0
    %2725 = vmatpush2.msra.mxu0 0.0
    %2726 = vmatprep.subr.mxu0 0.0
    %2727 = vmatpush2.msra.mxu0 0.0
    %2728 = vmatprep.subr.mxu0 0.0
    %2729 = vmatpush2.msra.mxu0 0.0
    %2730 = vmatprep.mubr.f32.mxu0 0.0
    %2731 = vmatmul.mubr.f32.gmra.mxu0 %v2659
    %v2732 = vpop.f32.mrf.mxu0
    %v2733 = vadd.f32 %v338, %v2732
    %v2734 = vpop.f32.mrf.mxu0
    %v2735 = vadd.f32 %v340, %v2734
    %2736 = vmatprep.mubr.f32.mxu0 0.0
    %2737 = vmatmul.mubr.f32.gmra.mxu0 %v2662
    %v2738 = vpop.f32.mrf.mxu0
    %v2739 = vadd.f32 %v344, %v2738
    %v2740 = vpop.f32.mrf.mxu0
    %v2741 = vadd.f32 %v346, %v2740
    %2742 = vdwg.mxu0
    %2743 = vmatprep.subr.mxu0 0.0
    %2744 = vmatpush1.msra.mxu0 0.0
    %2745 = vmatprep.subr.mxu0 0.0
    %2746 = vmatpush1.msra.mxu0 0.0
    %2747 = vmatprep.subr.mxu0 0.0
    %2748 = vmatpush1.msra.mxu0 0.0
    %2749 = vmatprep.subr.mxu0 0.0
    %2750 = vmatpush1.msra.mxu0 0.0
    %2751 = vmatprep.subr.mxu0 0.0
    %2752 = vmatpush1.msra.mxu0 0.0
    %2753 = vmatprep.subr.mxu0 0.0
    %2754 = vmatpush1.msra.mxu0 0.0
    %2755 = vmatprep.subr.mxu0 0.0
    %2756 = vmatpush1.msra.mxu0 0.0
    %2757 = vmatprep.subr.mxu0 0.0
    %2758 = vmatpush1.msra.mxu0 0.0
    %2759 = vmatprep.subr.mxu0 0.0
    %2760 = vmatpush1.msra.mxu0 0.0
    %2761 = vmatprep.subr.mxu0 0.0
    %2762 = vmatpush1.msra.mxu0 0.0
    %2763 = vmatprep.subr.mxu0 0.0
    %2764 = vmatpush1.msra.mxu0 0.0
    %2765 = vmatprep.subr.mxu0 0.0
    %2766 = vmatpush1.msra.mxu0 0.0
    %2767 = vmatprep.subr.mxu0 0.0
    %2768 = vmatpush1.msra.mxu0 0.0
    %2769 = vmatprep.subr.mxu0 0.0
    %2770 = vmatpush1.msra.mxu0 0.0
    %2771 = vmatprep.subr.mxu0 0.0
    %2772 = vmatpush1.msra.mxu0 0.0
    %2773 = vmatprep.subr.mxu0 %v151
    %2774 = vmatpush1.msra.mxu0 %v149
    %2775 = vmatprep.subr.mxu0 0.0
    %2776 = vmatpush2.msra.mxu0 0.0
    %2777 = vmatprep.subr.mxu0 0.0
    %2778 = vmatpush2.msra.mxu0 0.0
    %2779 = vmatprep.subr.mxu0 0.0
    %2780 = vmatpush2.msra.mxu0 0.0
    %2781 = vmatprep.subr.mxu0 0.0
    %2782 = vmatpush2.msra.mxu0 0.0
    %2783 = vmatprep.subr.mxu0 0.0
    %2784 = vmatpush2.msra.mxu0 0.0
    %2785 = vmatprep.subr.mxu0 0.0
    %2786 = vmatpush2.msra.mxu0 0.0
    %2787 = vmatprep.subr.mxu0 0.0
    %2788 = vmatpush2.msra.mxu0 0.0
    %2789 = vmatprep.subr.mxu0 0.0
    %2790 = vmatpush2.msra.mxu0 0.0
    %2791 = vmatprep.subr.mxu0 0.0
    %2792 = vmatpush2.msra.mxu0 0.0
    %2793 = vmatprep.subr.mxu0 0.0
    %2794 = vmatpush2.msra.mxu0 0.0
    %2795 = vmatprep.subr.mxu0 0.0
    %2796 = vmatpush2.msra.mxu0 0.0
    %2797 = vmatprep.subr.mxu0 0.0
    %2798 = vmatpush2.msra.mxu0 0.0
    %2799 = vmatprep.subr.mxu0 0.0
    %2800 = vmatpush2.msra.mxu0 0.0
    %2801 = vmatprep.subr.mxu0 0.0
    %2802 = vmatpush2.msra.mxu0 0.0
    %2803 = vmatprep.subr.mxu0 0.0
    %2804 = vmatpush2.msra.mxu0 0.0
    %2805 = vmatprep.subr.mxu0 0.0
    %2806 = vmatpush2.msra.mxu0 0.0
    %2807 = vmatprep.mubr.f32.mxu0 0.0
    %2808 = vmatmul.mubr.f32.gmra.mxu0 %v2659
    %v2809 = vpop.f32.mrf.mxu0
    %v2810 = vadd.f32 %v415, %v2809
    %v2811 = vpop.f32.mrf.mxu0
    %v2812 = vadd.f32 %v417, %v2811
    %2813 = vmatprep.mubr.f32.mxu0 0.0
    %2814 = vmatmul.mubr.f32.gmra.mxu0 %v2662
    %v2815 = vpop.f32.mrf.mxu0
    %v2816 = vadd.f32 %v421, %v2815
    %v2817 = vpop.f32.mrf.mxu0
    %v2818 = vadd.f32 %v423, %v2817
    %2819 = vdwg.mxu0
    %2820 = vmatprep.subr.mxu0 0.0
    %2821 = vmatpush1.msra.mxu0 0.0
    %2822 = vmatprep.subr.mxu0 0.0
    %2823 = vmatpush1.msra.mxu0 0.0
    %2824 = vmatprep.subr.mxu0 0.0
    %2825 = vmatpush1.msra.mxu0 0.0
    %2826 = vmatprep.subr.mxu0 0.0
    %2827 = vmatpush1.msra.mxu0 0.0
    %2828 = vmatprep.subr.mxu0 0.0
    %2829 = vmatpush1.msra.mxu0 0.0
    %2830 = vmatprep.subr.mxu0 0.0
    %2831 = vmatpush1.msra.mxu0 0.0
    %2832 = vmatprep.subr.mxu0 0.0
    %2833 = vmatpush1.msra.mxu0 0.0
    %2834 = vmatprep.subr.mxu0 0.0
    %2835 = vmatpush1.msra.mxu0 0.0
    %2836 = vmatprep.subr.mxu0 0.0
    %2837 = vmatpush1.msra.mxu0 0.0
    %2838 = vmatprep.subr.mxu0 0.0
    %2839 = vmatpush1.msra.mxu0 0.0
    %2840 = vmatprep.subr.mxu0 0.0
    %2841 = vmatpush1.msra.mxu0 0.0
    %2842 = vmatprep.subr.mxu0 0.0
    %2843 = vmatpush1.msra.mxu0 0.0
    %2844 = vmatprep.subr.mxu0 0.0
    %2845 = vmatpush1.msra.mxu0 0.0
    %2846 = vmatprep.subr.mxu0 0.0
    %2847 = vmatpush1.msra.mxu0 0.0
    %2848 = vmatprep.subr.mxu0 0.0
    %2849 = vmatpush1.msra.mxu0 0.0
    %2850 = vmatprep.subr.mxu0 %v155
    %2851 = vmatpush1.msra.mxu0 %v153
    %2852 = vmatprep.subr.mxu0 0.0
    %2853 = vmatpush2.msra.mxu0 0.0
    %2854 = vmatprep.subr.mxu0 0.0
    %2855 = vmatpush2.msra.mxu0 0.0
    %2856 = vmatprep.subr.mxu0 0.0
    %2857 = vmatpush2.msra.mxu0 0.0
    %2858 = vmatprep.subr.mxu0 0.0
    %2859 = vmatpush2.msra.mxu0 0.0
    %2860 = vmatprep.subr.mxu0 0.0
    %2861 = vmatpush2.msra.mxu0 0.0
    %2862 = vmatprep.subr.mxu0 0.0
    %2863 = vmatpush2.msra.mxu0 0.0
    %2864 = vmatprep.subr.mxu0 0.0
    %2865 = vmatpush2.msra.mxu0 0.0
    %2866 = vmatprep.subr.mxu0 0.0
    %2867 = vmatpush2.msra.mxu0 0.0
    %2868 = vmatprep.subr.mxu0 0.0
    %2869 = vmatpush2.msra.mxu0 0.0
    %2870 = vmatprep.subr.mxu0 0.0
    %2871 = vmatpush2.msra.mxu0 0.0
    %2872 = vmatprep.subr.mxu0 0.0
    %2873 = vmatpush2.msra.mxu0 0.0
    %2874 = vmatprep.subr.mxu0 0.0
    %2875 = vmatpush2.msra.mxu0 0.0
    %2876 = vmatprep.subr.mxu0 0.0
    %2877 = vmatpush2.msra.mxu0 0.0
    %2878 = vmatprep.subr.mxu0 0.0
    %2879 = vmatpush2.msra.mxu0 0.0
    %2880 = vmatprep.subr.mxu0 0.0
    %2881 = vmatpush2.msra.mxu0 0.0
    %2882 = vmatprep.subr.mxu0 0.0
    %2883 = vmatpush2.msra.mxu0 0.0
    %2884 = vmatprep.mubr.f32.mxu0 0.0
    %2885 = vmatmul.mubr.f32.gmra.mxu0 %v2659
    %v2886 = vpop.f32.mrf.mxu0
    %v2887 = vadd.f32 %v492, %v2886
    %v2888 = vpop.f32.mrf.mxu0
    %v2889 = vadd.f32 %v494, %v2888
    %2890 = vmatprep.mubr.f32.mxu0 0.0
    %2891 = vmatmul.mubr.f32.gmra.mxu0 %v2662
    %v2892 = vpop.f32.mrf.mxu0
    %v2893 = vadd.f32 %v498, %v2892
    %v2894 = vpop.f32.mrf.mxu0
    %v2895 = vadd.f32 %v500, %v2894
    %2896 = vdwg.mxu0
    %2897 = vmatprep.subr.mxu0 0.0
    %2898 = vmatpush1.msra.mxu0 0.0
    %2899 = vmatprep.subr.mxu0 0.0
    %2900 = vmatpush1.msra.mxu0 0.0
    %2901 = vmatprep.subr.mxu0 0.0
    %2902 = vmatpush1.msra.mxu0 0.0
    %2903 = vmatprep.subr.mxu0 0.0
    %2904 = vmatpush1.msra.mxu0 0.0
    %2905 = vmatprep.subr.mxu0 0.0
    %2906 = vmatpush1.msra.mxu0 0.0
    %2907 = vmatprep.subr.mxu0 0.0
    %2908 = vmatpush1.msra.mxu0 0.0
    %2909 = vmatprep.subr.mxu0 0.0
    %2910 = vmatpush1.msra.mxu0 0.0
    %2911 = vmatprep.subr.mxu0 0.0
    %2912 = vmatpush1.msra.mxu0 0.0
    %2913 = vmatprep.subr.mxu0 0.0
    %2914 = vmatpush1.msra.mxu0 0.0
    %2915 = vmatprep.subr.mxu0 0.0
    %2916 = vmatpush1.msra.mxu0 0.0
    %2917 = vmatprep.subr.mxu0 0.0
    %2918 = vmatpush1.msra.mxu0 0.0
    %2919 = vmatprep.subr.mxu0 0.0
    %2920 = vmatpush1.msra.mxu0 0.0
    %2921 = vmatprep.subr.mxu0 0.0
    %2922 = vmatpush1.msra.mxu0 0.0
    %2923 = vmatprep.subr.mxu0 0.0
    %2924 = vmatpush1.msra.mxu0 0.0
    %2925 = vmatprep.subr.mxu0 0.0
    %2926 = vmatpush1.msra.mxu0 0.0
    %2927 = vmatprep.subr.mxu0 %v159
    %2928 = vmatpush1.msra.mxu0 %v157
    %2929 = vmatprep.subr.mxu0 0.0
    %2930 = vmatpush2.msra.mxu0 0.0
    %2931 = vmatprep.subr.mxu0 0.0
    %2932 = vmatpush2.msra.mxu0 0.0
    %2933 = vmatprep.subr.mxu0 0.0
    %2934 = vmatpush2.msra.mxu0 0.0
    %2935 = vmatprep.subr.mxu0 0.0
    %2936 = vmatpush2.msra.mxu0 0.0
    %2937 = vmatprep.subr.mxu0 0.0
    %2938 = vmatpush2.msra.mxu0 0.0
    %2939 = vmatprep.subr.mxu0 0.0
    %2940 = vmatpush2.msra.mxu0 0.0
    %2941 = vmatprep.subr.mxu0 0.0
    %2942 = vmatpush2.msra.mxu0 0.0
    %2943 = vmatprep.subr.mxu0 0.0
    %2944 = vmatpush2.msra.mxu0 0.0
    %2945 = vmatprep.subr.mxu0 0.0
    %2946 = vmatpush2.msra.mxu0 0.0
    %2947 = vmatprep.subr.mxu0 0.0
    %2948 = vmatpush2.msra.mxu0 0.0
    %2949 = vmatprep.subr.mxu0 0.0
    %2950 = vmatpush2.msra.mxu0 0.0
    %2951 = vmatprep.subr.mxu0 0.0
    %2952 = vmatpush2.msra.mxu0 0.0
    %2953 = vmatprep.subr.mxu0 0.0
    %2954 = vmatpush2.msra.mxu0 0.0
    %2955 = vmatprep.subr.mxu0 0.0
    %2956 = vmatpush2.msra.mxu0 0.0
    %2957 = vmatprep.subr.mxu0 0.0
    %2958 = vmatpush2.msra.mxu0 0.0
    %2959 = vmatprep.subr.mxu0 0.0
    %2960 = vmatpush2.msra.mxu0 0.0
    %2961 = vmatprep.mubr.f32.mxu0 0.0
    %2962 = vmatmul.mubr.f32.gmra.mxu0 %v2659
    %v2963 = vpop.f32.mrf.mxu0
    %v2964 = vadd.f32 %v569, %v2963
    %v2965 = vpop.f32.mrf.mxu0
    %v2966 = vadd.f32 %v571, %v2965
    %2967 = vmatprep.mubr.f32.mxu0 0.0
    %2968 = vmatmul.mubr.f32.gmra.mxu0 %v2662
    %v2969 = vpop.f32.mrf.mxu0
    %v2970 = vadd.f32 %v575, %v2969
    %v2971 = vpop.f32.mrf.mxu0
    %v2972 = vadd.f32 %v577, %v2971
    %2973 = vdwg.mxu0
    %2974 = vmatprep.subr.mxu0 0.0
    %2975 = vmatpush1.msra.mxu0 0.0
    %2976 = vmatprep.subr.mxu0 0.0
    %2977 = vmatpush1.msra.mxu0 0.0
    %2978 = vmatprep.subr.mxu0 0.0
    %2979 = vmatpush1.msra.mxu0 0.0
    %2980 = vmatprep.subr.mxu0 0.0
    %2981 = vmatpush1.msra.mxu0 0.0
    %2982 = vmatprep.subr.mxu0 0.0
    %2983 = vmatpush1.msra.mxu0 0.0
    %2984 = vmatprep.subr.mxu0 0.0
    %2985 = vmatpush1.msra.mxu0 0.0
    %2986 = vmatprep.subr.mxu0 0.0
    %2987 = vmatpush1.msra.mxu0 0.0
    %2988 = vmatprep.subr.mxu0 0.0
    %2989 = vmatpush1.msra.mxu0 0.0
    %2990 = vmatprep.subr.mxu0 0.0
    %2991 = vmatpush1.msra.mxu0 0.0
    %2992 = vmatprep.subr.mxu0 0.0
    %2993 = vmatpush1.msra.mxu0 0.0
    %2994 = vmatprep.subr.mxu0 0.0
    %2995 = vmatpush1.msra.mxu0 0.0
    %2996 = vmatprep.subr.mxu0 0.0
    %2997 = vmatpush1.msra.mxu0 0.0
    %2998 = vmatprep.subr.mxu0 0.0
    %2999 = vmatpush1.msra.mxu0 0.0
    %3000 = vmatprep.subr.mxu0 0.0
    %3001 = vmatpush1.msra.mxu0 0.0
    %3002 = vmatprep.subr.mxu0 0.0
    %3003 = vmatpush1.msra.mxu0 0.0
    %3004 = vmatprep.subr.mxu0 %v163
    %3005 = vmatpush1.msra.mxu0 %v161
    %3006 = vmatprep.subr.mxu0 0.0
    %3007 = vmatpush2.msra.mxu0 0.0
    %3008 = vmatprep.subr.mxu0 0.0
    %3009 = vmatpush2.msra.mxu0 0.0
    %3010 = vmatprep.subr.mxu0 0.0
    %3011 = vmatpush2.msra.mxu0 0.0
    %3012 = vmatprep.subr.mxu0 0.0
    %3013 = vmatpush2.msra.mxu0 0.0
    %3014 = vmatprep.subr.mxu0 0.0
    %3015 = vmatpush2.msra.mxu0 0.0
    %3016 = vmatprep.subr.mxu0 0.0
    %3017 = vmatpush2.msra.mxu0 0.0
    %3018 = vmatprep.subr.mxu0 0.0
    %3019 = vmatpush2.msra.mxu0 0.0
    %3020 = vmatprep.subr.mxu0 0.0
    %3021 = vmatpush2.msra.mxu0 0.0
    %3022 = vmatprep.subr.mxu0 0.0
    %3023 = vmatpush2.msra.mxu0 0.0
    %3024 = vmatprep.subr.mxu0 0.0
    %3025 = vmatpush2.msra.mxu0 0.0
    %3026 = vmatprep.subr.mxu0 0.0
    %3027 = vmatpush2.msra.mxu0 0.0
    %3028 = vmatprep.subr.mxu0 0.0
    %3029 = vmatpush2.msra.mxu0 0.0
    %3030 = vmatprep.subr.mxu0 0.0
    %3031 = vmatpush2.msra.mxu0 0.0
    %3032 = vmatprep.subr.mxu0 0.0
    %3033 = vmatpush2.msra.mxu0 0.0
    %3034 = vmatprep.subr.mxu0 0.0
    %3035 = vmatpush2.msra.mxu0 0.0
    %3036 = vmatprep.subr.mxu0 0.0
    %3037 = vmatpush2.msra.mxu0 0.0
    %3038 = vmatprep.mubr.f32.mxu0 0.0
    %3039 = vmatmul.mubr.f32.gmra.mxu0 %v2659
    %v3040 = vpop.f32.mrf.mxu0
    %v3041 = vadd.f32 %v646, %v3040
    %v3042 = vpop.f32.mrf.mxu0
    %v3043 = vadd.f32 %v648, %v3042
    %3044 = vmatprep.mubr.f32.mxu0 0.0
    %3045 = vmatmul.mubr.f32.gmra.mxu0 %v2662
    %v3046 = vpop.f32.mrf.mxu0
    %v3047 = vadd.f32 %v652, %v3046
    %v3048 = vpop.f32.mrf.mxu0
    %v3049 = vadd.f32 %v654, %v3048
    %3050 = vdwg.mxu0
    %3051 = vmatprep.subr.mxu0 0.0
    %3052 = vmatpush1.msra.mxu0 0.0
    %3053 = vmatprep.subr.mxu0 0.0
    %3054 = vmatpush1.msra.mxu0 0.0
    %3055 = vmatprep.subr.mxu0 0.0
    %3056 = vmatpush1.msra.mxu0 0.0
    %3057 = vmatprep.subr.mxu0 0.0
    %3058 = vmatpush1.msra.mxu0 0.0
    %3059 = vmatprep.subr.mxu0 0.0
    %3060 = vmatpush1.msra.mxu0 0.0
    %3061 = vmatprep.subr.mxu0 0.0
    %3062 = vmatpush1.msra.mxu0 0.0
    %3063 = vmatprep.subr.mxu0 0.0
    %3064 = vmatpush1.msra.mxu0 0.0
    %3065 = vmatprep.subr.mxu0 0.0
    %3066 = vmatpush1.msra.mxu0 0.0
    %3067 = vmatprep.subr.mxu0 0.0
    %3068 = vmatpush1.msra.mxu0 0.0
    %3069 = vmatprep.subr.mxu0 0.0
    %3070 = vmatpush1.msra.mxu0 0.0
    %3071 = vmatprep.subr.mxu0 0.0
    %3072 = vmatpush1.msra.mxu0 0.0
    %3073 = vmatprep.subr.mxu0 0.0
    %3074 = vmatpush1.msra.mxu0 0.0
    %3075 = vmatprep.subr.mxu0 0.0
    %3076 = vmatpush1.msra.mxu0 0.0
    %3077 = vmatprep.subr.mxu0 0.0
    %3078 = vmatpush1.msra.mxu0 0.0
    %3079 = vmatprep.subr.mxu0 0.0
    %3080 = vmatpush1.msra.mxu0 0.0
    %3081 = vmatprep.subr.mxu0 %v167
    %3082 = vmatpush1.msra.mxu0 %v165
    %3083 = vmatprep.subr.mxu0 0.0
    %3084 = vmatpush2.msra.mxu0 0.0
    %3085 = vmatprep.subr.mxu0 0.0
    %3086 = vmatpush2.msra.mxu0 0.0
    %3087 = vmatprep.subr.mxu0 0.0
    %3088 = vmatpush2.msra.mxu0 0.0
    %3089 = vmatprep.subr.mxu0 0.0
    %3090 = vmatpush2.msra.mxu0 0.0
    %3091 = vmatprep.subr.mxu0 0.0
    %3092 = vmatpush2.msra.mxu0 0.0
    %3093 = vmatprep.subr.mxu0 0.0
    %3094 = vmatpush2.msra.mxu0 0.0
    %3095 = vmatprep.subr.mxu0 0.0
    %3096 = vmatpush2.msra.mxu0 0.0
    %3097 = vmatprep.subr.mxu0 0.0
    %3098 = vmatpush2.msra.mxu0 0.0
    %3099 = vmatprep.subr.mxu0 0.0
    %3100 = vmatpush2.msra.mxu0 0.0
    %3101 = vmatprep.subr.mxu0 0.0
    %3102 = vmatpush2.msra.mxu0 0.0
    %3103 = vmatprep.subr.mxu0 0.0
    %3104 = vmatpush2.msra.mxu0 0.0
    %3105 = vmatprep.subr.mxu0 0.0
    %3106 = vmatpush2.msra.mxu0 0.0
    %3107 = vmatprep.subr.mxu0 0.0
    %3108 = vmatpush2.msra.mxu0 0.0
    %3109 = vmatprep.subr.mxu0 0.0
    %3110 = vmatpush2.msra.mxu0 0.0
    %3111 = vmatprep.subr.mxu0 0.0
    %3112 = vmatpush2.msra.mxu0 0.0
    %3113 = vmatprep.subr.mxu0 0.0
    %3114 = vmatpush2.msra.mxu0 0.0
    %3115 = vmatprep.mubr.f32.mxu0 0.0
    %3116 = vmatmul.mubr.f32.gmra.mxu0 %v2659
    %v3117 = vpop.f32.mrf.mxu0
    %v3118 = vadd.f32 %v723, %v3117
    %v3119 = vpop.f32.mrf.mxu0
    %v3120 = vadd.f32 %v725, %v3119
    %3121 = vmatprep.mubr.f32.mxu0 0.0
    %3122 = vmatmul.mubr.f32.gmra.mxu0 %v2662
    %v3123 = vpop.f32.mrf.mxu0
    %v3124 = vadd.f32 %v729, %v3123
    %v3125 = vpop.f32.mrf.mxu0
    %v3126 = vadd.f32 %v731, %v3125
    %3127 = vdwg.mxu0
    %3128 = vmatprep.subr.mxu0 0.0
    %3129 = vmatpush1.msra.mxu0 0.0
    %3130 = vmatprep.subr.mxu0 0.0
    %3131 = vmatpush1.msra.mxu0 0.0
    %3132 = vmatprep.subr.mxu0 0.0
    %3133 = vmatpush1.msra.mxu0 0.0
    %3134 = vmatprep.subr.mxu0 0.0
    %3135 = vmatpush1.msra.mxu0 0.0
    %3136 = vmatprep.subr.mxu0 0.0
    %3137 = vmatpush1.msra.mxu0 0.0
    %3138 = vmatprep.subr.mxu0 0.0
    %3139 = vmatpush1.msra.mxu0 0.0
    %3140 = vmatprep.subr.mxu0 0.0
    %3141 = vmatpush1.msra.mxu0 0.0
    %3142 = vmatprep.subr.mxu0 0.0
    %3143 = vmatpush1.msra.mxu0 0.0
    %3144 = vmatprep.subr.mxu0 0.0
    %3145 = vmatpush1.msra.mxu0 0.0
    %3146 = vmatprep.subr.mxu0 0.0
    %3147 = vmatpush1.msra.mxu0 0.0
    %3148 = vmatprep.subr.mxu0 0.0
    %3149 = vmatpush1.msra.mxu0 0.0
    %3150 = vmatprep.subr.mxu0 0.0
    %3151 = vmatpush1.msra.mxu0 0.0
    %3152 = vmatprep.subr.mxu0 0.0
    %3153 = vmatpush1.msra.mxu0 0.0
    %3154 = vmatprep.subr.mxu0 0.0
    %3155 = vmatpush1.msra.mxu0 0.0
    %3156 = vmatprep.subr.mxu0 0.0
    %3157 = vmatpush1.msra.mxu0 0.0
    %3158 = vmatprep.subr.mxu0 %v171
    %3159 = vmatpush1.msra.mxu0 %v169
    %3160 = vmatprep.subr.mxu0 0.0
    %3161 = vmatpush2.msra.mxu0 0.0
    %3162 = vmatprep.subr.mxu0 0.0
    %3163 = vmatpush2.msra.mxu0 0.0
    %3164 = vmatprep.subr.mxu0 0.0
    %3165 = vmatpush2.msra.mxu0 0.0
    %3166 = vmatprep.subr.mxu0 0.0
    %3167 = vmatpush2.msra.mxu0 0.0
    %3168 = vmatprep.subr.mxu0 0.0
    %3169 = vmatpush2.msra.mxu0 0.0
    %3170 = vmatprep.subr.mxu0 0.0
    %3171 = vmatpush2.msra.mxu0 0.0
    %3172 = vmatprep.subr.mxu0 0.0
    %3173 = vmatpush2.msra.mxu0 0.0
    %3174 = vmatprep.subr.mxu0 0.0
    %3175 = vmatpush2.msra.mxu0 0.0
    %3176 = vmatprep.subr.mxu0 0.0
    %3177 = vmatpush2.msra.mxu0 0.0
    %3178 = vmatprep.subr.mxu0 0.0
    %3179 = vmatpush2.msra.mxu0 0.0
    %3180 = vmatprep.subr.mxu0 0.0
    %3181 = vmatpush2.msra.mxu0 0.0
    %3182 = vmatprep.subr.mxu0 0.0
    %3183 = vmatpush2.msra.mxu0 0.0
    %3184 = vmatprep.subr.mxu0 0.0
    %3185 = vmatpush2.msra.mxu0 0.0
    %3186 = vmatprep.subr.mxu0 0.0
    %3187 = vmatpush2.msra.mxu0 0.0
    %3188 = vmatprep.subr.mxu0 0.0
    %3189 = vmatpush2.msra.mxu0 0.0
    %3190 = vmatprep.subr.mxu0 0.0
    %3191 = vmatpush2.msra.mxu0 0.0
    %3192 = vmatprep.mubr.f32.mxu0 0.0
    %3193 = vmatmul.mubr.f32.gmra.mxu0 %v2659
    %v3194 = vpop.f32.mrf.mxu0
    %v3195 = vadd.f32 %v800, %v3194
    %v3196 = vpop.f32.mrf.mxu0
    %v3197 = vadd.f32 %v802, %v3196
    %3198 = vmatprep.mubr.f32.mxu0 0.0
    %3199 = vmatmul.mubr.f32.gmra.mxu0 %v2662
    %v3200 = vpop.f32.mrf.mxu0
    %v3201 = vadd.f32 %v806, %v3200
    %v3202 = vpop.f32.mrf.mxu0
    %v3203 = vadd.f32 %v808, %v3202
    %3204 = vdwg.mxu0
    %3205 = vmatprep.subr.mxu0 0.0
    %3206 = vmatpush1.msra.mxu0 0.0
    %3207 = vmatprep.subr.mxu0 0.0
    %3208 = vmatpush1.msra.mxu0 0.0
    %3209 = vmatprep.subr.mxu0 0.0
    %3210 = vmatpush1.msra.mxu0 0.0
    %3211 = vmatprep.subr.mxu0 0.0
    %3212 = vmatpush1.msra.mxu0 0.0
    %3213 = vmatprep.subr.mxu0 0.0
    %3214 = vmatpush1.msra.mxu0 0.0
    %3215 = vmatprep.subr.mxu0 0.0
    %3216 = vmatpush1.msra.mxu0 0.0
    %3217 = vmatprep.subr.mxu0 0.0
    %3218 = vmatpush1.msra.mxu0 0.0
    %3219 = vmatprep.subr.mxu0 0.0
    %3220 = vmatpush1.msra.mxu0 0.0
    %3221 = vmatprep.subr.mxu0 0.0
    %3222 = vmatpush1.msra.mxu0 0.0
    %3223 = vmatprep.subr.mxu0 0.0
    %3224 = vmatpush1.msra.mxu0 0.0
    %3225 = vmatprep.subr.mxu0 0.0
    %3226 = vmatpush1.msra.mxu0 0.0
    %3227 = vmatprep.subr.mxu0 0.0
    %3228 = vmatpush1.msra.mxu0 0.0
    %3229 = vmatprep.subr.mxu0 0.0
    %3230 = vmatpush1.msra.mxu0 0.0
    %3231 = vmatprep.subr.mxu0 0.0
    %3232 = vmatpush1.msra.mxu0 0.0
    %3233 = vmatprep.subr.mxu0 0.0
    %3234 = vmatpush1.msra.mxu0 0.0
    %3235 = vmatprep.subr.mxu0 %v175
    %3236 = vmatpush1.msra.mxu0 %v173
    %3237 = vmatprep.subr.mxu0 0.0
    %3238 = vmatpush2.msra.mxu0 0.0
    %3239 = vmatprep.subr.mxu0 0.0
    %3240 = vmatpush2.msra.mxu0 0.0
    %3241 = vmatprep.subr.mxu0 0.0
    %3242 = vmatpush2.msra.mxu0 0.0
    %3243 = vmatprep.subr.mxu0 0.0
    %3244 = vmatpush2.msra.mxu0 0.0
    %3245 = vmatprep.subr.mxu0 0.0
    %3246 = vmatpush2.msra.mxu0 0.0
    %3247 = vmatprep.subr.mxu0 0.0
    %3248 = vmatpush2.msra.mxu0 0.0
    %3249 = vmatprep.subr.mxu0 0.0
    %3250 = vmatpush2.msra.mxu0 0.0
    %3251 = vmatprep.subr.mxu0 0.0
    %3252 = vmatpush2.msra.mxu0 0.0
    %3253 = vmatprep.subr.mxu0 0.0
    %3254 = vmatpush2.msra.mxu0 0.0
    %3255 = vmatprep.subr.mxu0 0.0
    %3256 = vmatpush2.msra.mxu0 0.0
    %3257 = vmatprep.subr.mxu0 0.0
    %3258 = vmatpush2.msra.mxu0 0.0
    %3259 = vmatprep.subr.mxu0 0.0
    %3260 = vmatpush2.msra.mxu0 0.0
    %3261 = vmatprep.subr.mxu0 0.0
    %3262 = vmatpush2.msra.mxu0 0.0
    %3263 = vmatprep.subr.mxu0 0.0
    %3264 = vmatpush2.msra.mxu0 0.0
    %3265 = vmatprep.subr.mxu0 0.0
    %3266 = vmatpush2.msra.mxu0 0.0
    %3267 = vmatprep.subr.mxu0 0.0
    %3268 = vmatpush2.msra.mxu0 0.0
    %3269 = vmatprep.mubr.f32.mxu0 0.0
    %3270 = vmatmul.mubr.f32.gmra.mxu0 %v2659
    %v3271 = vpop.f32.mrf.mxu0
    %v3272 = vadd.f32 %v877, %v3271
    %v3273 = vpop.f32.mrf.mxu0
    %v3274 = vadd.f32 %v879, %v3273
    %3275 = vmatprep.mubr.f32.mxu0 0.0
    %3276 = vmatmul.mubr.f32.gmra.mxu0 %v2662
    %v3277 = vpop.f32.mrf.mxu0
    %v3278 = vadd.f32 %v883, %v3277
    %v3279 = vpop.f32.mrf.mxu0
    %v3280 = vadd.f32 %v885, %v3279
    %3281 = vdwg.mxu0
    %3282 = vmatprep.subr.mxu0 0.0
    %3283 = vmatpush1.msra.mxu0 0.0
    %3284 = vmatprep.subr.mxu0 0.0
    %3285 = vmatpush1.msra.mxu0 0.0
    %3286 = vmatprep.subr.mxu0 0.0
    %3287 = vmatpush1.msra.mxu0 0.0
    %3288 = vmatprep.subr.mxu0 0.0
    %3289 = vmatpush1.msra.mxu0 0.0
    %3290 = vmatprep.subr.mxu0 0.0
    %3291 = vmatpush1.msra.mxu0 0.0
    %3292 = vmatprep.subr.mxu0 0.0
    %3293 = vmatpush1.msra.mxu0 0.0
    %3294 = vmatprep.subr.mxu0 0.0
    %3295 = vmatpush1.msra.mxu0 0.0
    %3296 = vmatprep.subr.mxu0 0.0
    %3297 = vmatpush1.msra.mxu0 0.0
    %3298 = vmatprep.subr.mxu0 0.0
    %3299 = vmatpush1.msra.mxu0 0.0
    %3300 = vmatprep.subr.mxu0 0.0
    %3301 = vmatpush1.msra.mxu0 0.0
    %3302 = vmatprep.subr.mxu0 0.0
    %3303 = vmatpush1.msra.mxu0 0.0
    %3304 = vmatprep.subr.mxu0 0.0
    %3305 = vmatpush1.msra.mxu0 0.0
    %3306 = vmatprep.subr.mxu0 0.0
    %3307 = vmatpush1.msra.mxu0 0.0
    %3308 = vmatprep.subr.mxu0 0.0
    %3309 = vmatpush1.msra.mxu0 0.0
    %3310 = vmatprep.subr.mxu0 0.0
    %3311 = vmatpush1.msra.mxu0 0.0
    %3312 = vmatprep.subr.mxu0 %v179
    %3313 = vmatpush1.msra.mxu0 %v177
    %3314 = vmatprep.subr.mxu0 0.0
    %3315 = vmatpush2.msra.mxu0 0.0
    %3316 = vmatprep.subr.mxu0 0.0
    %3317 = vmatpush2.msra.mxu0 0.0
    %3318 = vmatprep.subr.mxu0 0.0
    %3319 = vmatpush2.msra.mxu0 0.0
    %3320 = vmatprep.subr.mxu0 0.0
    %3321 = vmatpush2.msra.mxu0 0.0
    %3322 = vmatprep.subr.mxu0 0.0
    %3323 = vmatpush2.msra.mxu0 0.0
    %3324 = vmatprep.subr.mxu0 0.0
    %3325 = vmatpush2.msra.mxu0 0.0
    %3326 = vmatprep.subr.mxu0 0.0
    %3327 = vmatpush2.msra.mxu0 0.0
    %3328 = vmatprep.subr.mxu0 0.0
    %3329 = vmatpush2.msra.mxu0 0.0
    %3330 = vmatprep.subr.mxu0 0.0
    %3331 = vmatpush2.msra.mxu0 0.0
    %3332 = vmatprep.subr.mxu0 0.0
    %3333 = vmatpush2.msra.mxu0 0.0
    %3334 = vmatprep.subr.mxu0 0.0
    %3335 = vmatpush2.msra.mxu0 0.0
    %3336 = vmatprep.subr.mxu0 0.0
    %3337 = vmatpush2.msra.mxu0 0.0
    %3338 = vmatprep.subr.mxu0 0.0
    %3339 = vmatpush2.msra.mxu0 0.0
    %3340 = vmatprep.subr.mxu0 0.0
    %3341 = vmatpush2.msra.mxu0 0.0
    %3342 = vmatprep.subr.mxu0 0.0
    %3343 = vmatpush2.msra.mxu0 0.0
    %3344 = vmatprep.subr.mxu0 0.0
    %3345 = vmatpush2.msra.mxu0 0.0
    %3346 = vmatprep.mubr.f32.mxu0 0.0
    %3347 = vmatmul.mubr.f32.gmra.mxu0 %v2659
    %v3348 = vpop.f32.mrf.mxu0
    %v3349 = vadd.f32 %v954, %v3348
    %v3350 = vpop.f32.mrf.mxu0
    %v3351 = vadd.f32 %v956, %v3350
    %3352 = vmatprep.mubr.f32.mxu0 0.0
    %3353 = vmatmul.mubr.f32.gmra.mxu0 %v2662
    %v3354 = vpop.f32.mrf.mxu0
    %v3355 = vadd.f32 %v960, %v3354
    %v3356 = vpop.f32.mrf.mxu0
    %v3357 = vadd.f32 %v962, %v3356
    %3358 = vdwg.mxu0
    %3359 = vmatprep.subr.mxu0 0.0
    %3360 = vmatpush1.msra.mxu0 0.0
    %3361 = vmatprep.subr.mxu0 0.0
    %3362 = vmatpush1.msra.mxu0 0.0
    %3363 = vmatprep.subr.mxu0 0.0
    %3364 = vmatpush1.msra.mxu0 0.0
    %3365 = vmatprep.subr.mxu0 0.0
    %3366 = vmatpush1.msra.mxu0 0.0
    %3367 = vmatprep.subr.mxu0 0.0
    %3368 = vmatpush1.msra.mxu0 0.0
    %3369 = vmatprep.subr.mxu0 0.0
    %3370 = vmatpush1.msra.mxu0 0.0
    %3371 = vmatprep.subr.mxu0 0.0
    %3372 = vmatpush1.msra.mxu0 0.0
    %3373 = vmatprep.subr.mxu0 0.0
    %3374 = vmatpush1.msra.mxu0 0.0
    %3375 = vmatprep.subr.mxu0 0.0
    %3376 = vmatpush1.msra.mxu0 0.0
    %3377 = vmatprep.subr.mxu0 0.0
    %3378 = vmatpush1.msra.mxu0 0.0
    %3379 = vmatprep.subr.mxu0 0.0
    %3380 = vmatpush1.msra.mxu0 0.0
    %3381 = vmatprep.subr.mxu0 0.0
    %3382 = vmatpush1.msra.mxu0 0.0
    %3383 = vmatprep.subr.mxu0 0.0
    %3384 = vmatpush1.msra.mxu0 0.0
    %3385 = vmatprep.subr.mxu0 0.0
    %3386 = vmatpush1.msra.mxu0 0.0
    %3387 = vmatprep.subr.mxu0 0.0
    %3388 = vmatpush1.msra.mxu0 0.0
    %3389 = vmatprep.subr.mxu0 %v183
    %3390 = vmatpush1.msra.mxu0 %v181
    %3391 = vmatprep.subr.mxu0 0.0
    %3392 = vmatpush2.msra.mxu0 0.0
    %3393 = vmatprep.subr.mxu0 0.0
    %3394 = vmatpush2.msra.mxu0 0.0
    %3395 = vmatprep.subr.mxu0 0.0
    %3396 = vmatpush2.msra.mxu0 0.0
    %3397 = vmatprep.subr.mxu0 0.0
    %3398 = vmatpush2.msra.mxu0 0.0
    %3399 = vmatprep.subr.mxu0 0.0
    %3400 = vmatpush2.msra.mxu0 0.0
    %3401 = vmatprep.subr.mxu0 0.0
    %3402 = vmatpush2.msra.mxu0 0.0
    %3403 = vmatprep.subr.mxu0 0.0
    %3404 = vmatpush2.msra.mxu0 0.0
    %3405 = vmatprep.subr.mxu0 0.0
    %3406 = vmatpush2.msra.mxu0 0.0
    %3407 = vmatprep.subr.mxu0 0.0
    %3408 = vmatpush2.msra.mxu0 0.0
    %3409 = vmatprep.subr.mxu0 0.0
    %3410 = vmatpush2.msra.mxu0 0.0
    %3411 = vmatprep.subr.mxu0 0.0
    %3412 = vmatpush2.msra.mxu0 0.0
    %3413 = vmatprep.subr.mxu0 0.0
    %3414 = vmatpush2.msra.mxu0 0.0
    %3415 = vmatprep.subr.mxu0 0.0
    %3416 = vmatpush2.msra.mxu0 0.0
    %3417 = vmatprep.subr.mxu0 0.0
    %3418 = vmatpush2.msra.mxu0 0.0
    %3419 = vmatprep.subr.mxu0 0.0
    %3420 = vmatpush2.msra.mxu0 0.0
    %3421 = vmatprep.subr.mxu0 0.0
    %3422 = vmatpush2.msra.mxu0 0.0
    %3423 = vmatprep.mubr.f32.mxu0 0.0
    %3424 = vmatmul.mubr.f32.gmra.mxu0 %v2659
    %v3425 = vpop.f32.mrf.mxu0
    %v3426 = vadd.f32 %v1031, %v3425
    %v3427 = vpop.f32.mrf.mxu0
    %v3428 = vadd.f32 %v1033, %v3427
    %3429 = vmatprep.mubr.f32.mxu0 0.0
    %3430 = vmatmul.mubr.f32.gmra.mxu0 %v2662
    %v3431 = vpop.f32.mrf.mxu0
    %v3432 = vadd.f32 %v1037, %v3431
    %v3433 = vpop.f32.mrf.mxu0
    %v3434 = vadd.f32 %v1039, %v3433
    %3435 = vdwg.mxu0
    %3436 = vmatprep.subr.mxu0 0.0
    %3437 = vmatpush1.msra.mxu0 0.0
    %3438 = vmatprep.subr.mxu0 0.0
    %3439 = vmatpush1.msra.mxu0 0.0
    %3440 = vmatprep.subr.mxu0 0.0
    %3441 = vmatpush1.msra.mxu0 0.0
    %3442 = vmatprep.subr.mxu0 0.0
    %3443 = vmatpush1.msra.mxu0 0.0
    %3444 = vmatprep.subr.mxu0 0.0
    %3445 = vmatpush1.msra.mxu0 0.0
    %3446 = vmatprep.subr.mxu0 0.0
    %3447 = vmatpush1.msra.mxu0 0.0
    %3448 = vmatprep.subr.mxu0 0.0
    %3449 = vmatpush1.msra.mxu0 0.0
    %3450 = vmatprep.subr.mxu0 0.0
    %3451 = vmatpush1.msra.mxu0 0.0
    %3452 = vmatprep.subr.mxu0 0.0
    %3453 = vmatpush1.msra.mxu0 0.0
    %3454 = vmatprep.subr.mxu0 0.0
    %3455 = vmatpush1.msra.mxu0 0.0
    %3456 = vmatprep.subr.mxu0 0.0
    %3457 = vmatpush1.msra.mxu0 0.0
    %3458 = vmatprep.subr.mxu0 0.0
    %3459 = vmatpush1.msra.mxu0 0.0
    %3460 = vmatprep.subr.mxu0 0.0
    %3461 = vmatpush1.msra.mxu0 0.0
    %3462 = vmatprep.subr.mxu0 0.0
    %3463 = vmatpush1.msra.mxu0 0.0
    %3464 = vmatprep.subr.mxu0 0.0
    %3465 = vmatpush1.msra.mxu0 0.0
    %3466 = vmatprep.subr.mxu0 %v187
    %3467 = vmatpush1.msra.mxu0 %v185
    %3468 = vmatprep.subr.mxu0 0.0
    %3469 = vmatpush2.msra.mxu0 0.0
    %3470 = vmatprep.subr.mxu0 0.0
    %3471 = vmatpush2.msra.mxu0 0.0
    %3472 = vmatprep.subr.mxu0 0.0
    %3473 = vmatpush2.msra.mxu0 0.0
    %3474 = vmatprep.subr.mxu0 0.0
    %3475 = vmatpush2.msra.mxu0 0.0
    %3476 = vmatprep.subr.mxu0 0.0
    %3477 = vmatpush2.msra.mxu0 0.0
    %3478 = vmatprep.subr.mxu0 0.0
    %3479 = vmatpush2.msra.mxu0 0.0
    %3480 = vmatprep.subr.mxu0 0.0
    %3481 = vmatpush2.msra.mxu0 0.0
    %3482 = vmatprep.subr.mxu0 0.0
    %3483 = vmatpush2.msra.mxu0 0.0
    %3484 = vmatprep.subr.mxu0 0.0
    %3485 = vmatpush2.msra.mxu0 0.0
    %3486 = vmatprep.subr.mxu0 0.0
    %3487 = vmatpush2.msra.mxu0 0.0
    %3488 = vmatprep.subr.mxu0 0.0
    %3489 = vmatpush2.msra.mxu0 0.0
    %3490 = vmatprep.subr.mxu0 0.0
    %3491 = vmatpush2.msra.mxu0 0.0
    %3492 = vmatprep.subr.mxu0 0.0
    %3493 = vmatpush2.msra.mxu0 0.0
    %3494 = vmatprep.subr.mxu0 0.0
    %3495 = vmatpush2.msra.mxu0 0.0
    %3496 = vmatprep.subr.mxu0 0.0
    %3497 = vmatpush2.msra.mxu0 0.0
    %3498 = vmatprep.subr.mxu0 0.0
    %3499 = vmatpush2.msra.mxu0 0.0
    %3500 = vmatprep.mubr.f32.mxu0 0.0
    %3501 = vmatmul.mubr.f32.gmra.mxu0 %v2659
    %v3502 = vpop.f32.mrf.mxu0
    %v3503 = vadd.f32 %v1108, %v3502
    %v3504 = vpop.f32.mrf.mxu0
    %v3505 = vadd.f32 %v1110, %v3504
    %3506 = vmatprep.mubr.f32.mxu0 0.0
    %3507 = vmatmul.mubr.f32.gmra.mxu0 %v2662
    %v3508 = vpop.f32.mrf.mxu0
    %v3509 = vadd.f32 %v1114, %v3508
    %v3510 = vpop.f32.mrf.mxu0
    %v3511 = vadd.f32 %v1116, %v3510
    %3512 = vdwg.mxu0
    %3513 = vmatprep.subr.mxu0 0.0
    %3514 = vmatpush1.msra.mxu0 0.0
    %3515 = vmatprep.subr.mxu0 0.0
    %3516 = vmatpush1.msra.mxu0 0.0
    %3517 = vmatprep.subr.mxu0 0.0
    %3518 = vmatpush1.msra.mxu0 0.0
    %3519 = vmatprep.subr.mxu0 0.0
    %3520 = vmatpush1.msra.mxu0 0.0
    %3521 = vmatprep.subr.mxu0 0.0
    %3522 = vmatpush1.msra.mxu0 0.0
    %3523 = vmatprep.subr.mxu0 0.0
    %3524 = vmatpush1.msra.mxu0 0.0
    %3525 = vmatprep.subr.mxu0 0.0
    %3526 = vmatpush1.msra.mxu0 0.0
    %3527 = vmatprep.subr.mxu0 0.0
    %3528 = vmatpush1.msra.mxu0 0.0
    %3529 = vmatprep.subr.mxu0 0.0
    %3530 = vmatpush1.msra.mxu0 0.0
    %3531 = vmatprep.subr.mxu0 0.0
    %3532 = vmatpush1.msra.mxu0 0.0
    %3533 = vmatprep.subr.mxu0 0.0
    %3534 = vmatpush1.msra.mxu0 0.0
    %3535 = vmatprep.subr.mxu0 0.0
    %3536 = vmatpush1.msra.mxu0 0.0
    %3537 = vmatprep.subr.mxu0 0.0
    %3538 = vmatpush1.msra.mxu0 0.0
    %3539 = vmatprep.subr.mxu0 0.0
    %3540 = vmatpush1.msra.mxu0 0.0
    %3541 = vmatprep.subr.mxu0 0.0
    %3542 = vmatpush1.msra.mxu0 0.0
    %3543 = vmatprep.subr.mxu0 %v191
    %3544 = vmatpush1.msra.mxu0 %v189
    %3545 = vmatprep.subr.mxu0 0.0
    %3546 = vmatpush2.msra.mxu0 0.0
    %3547 = vmatprep.subr.mxu0 0.0
    %3548 = vmatpush2.msra.mxu0 0.0
    %3549 = vmatprep.subr.mxu0 0.0
    %3550 = vmatpush2.msra.mxu0 0.0
    %3551 = vmatprep.subr.mxu0 0.0
    %3552 = vmatpush2.msra.mxu0 0.0
    %3553 = vmatprep.subr.mxu0 0.0
    %3554 = vmatpush2.msra.mxu0 0.0
    %3555 = vmatprep.subr.mxu0 0.0
    %3556 = vmatpush2.msra.mxu0 0.0
    %3557 = vmatprep.subr.mxu0 0.0
    %3558 = vmatpush2.msra.mxu0 0.0
    %3559 = vmatprep.subr.mxu0 0.0
    %3560 = vmatpush2.msra.mxu0 0.0
    %3561 = vmatprep.subr.mxu0 0.0
    %3562 = vmatpush2.msra.mxu0 0.0
    %3563 = vmatprep.subr.mxu0 0.0
    %3564 = vmatpush2.msra.mxu0 0.0
    %3565 = vmatprep.subr.mxu0 0.0
    %3566 = vmatpush2.msra.mxu0 0.0
    %3567 = vmatprep.subr.mxu0 0.0
    %3568 = vmatpush2.msra.mxu0 0.0
    %3569 = vmatprep.subr.mxu0 0.0
    %3570 = vmatpush2.msra.mxu0 0.0
    %3571 = vmatprep.subr.mxu0 0.0
    %3572 = vmatpush2.msra.mxu0 0.0
    %3573 = vmatprep.subr.mxu0 0.0
    %3574 = vmatpush2.msra.mxu0 0.0
    %3575 = vmatprep.subr.mxu0 0.0
    %3576 = vmatpush2.msra.mxu0 0.0
    %3577 = vmatprep.mubr.f32.mxu0 0.0
    %3578 = vmatmul.mubr.f32.gmra.mxu0 %v2659
    %v3579 = vpop.f32.mrf.mxu0
    %v3580 = vadd.f32 %v1185, %v3579
    %v3581 = vpop.f32.mrf.mxu0
    %v3582 = vadd.f32 %v1187, %v3581
    %3583 = vmatprep.mubr.f32.mxu0 0.0
    %3584 = vmatmul.mubr.f32.gmra.mxu0 %v2662
    %v3585 = vpop.f32.mrf.mxu0
    %v3586 = vadd.f32 %v1191, %v3585
    %v3587 = vpop.f32.mrf.mxu0
    %v3588 = vadd.f32 %v1193, %v3587
    %3589 = vdwg.mxu0
    %3590 = vmatprep.subr.mxu0 0.0
    %3591 = vmatpush1.msra.mxu0 0.0
    %3592 = vmatprep.subr.mxu0 0.0
    %3593 = vmatpush1.msra.mxu0 0.0
    %3594 = vmatprep.subr.mxu0 0.0
    %3595 = vmatpush1.msra.mxu0 0.0
    %3596 = vmatprep.subr.mxu0 0.0
    %3597 = vmatpush1.msra.mxu0 0.0
    %3598 = vmatprep.subr.mxu0 0.0
    %3599 = vmatpush1.msra.mxu0 0.0
    %3600 = vmatprep.subr.mxu0 0.0
    %3601 = vmatpush1.msra.mxu0 0.0
    %3602 = vmatprep.subr.mxu0 0.0
    %3603 = vmatpush1.msra.mxu0 0.0
    %3604 = vmatprep.subr.mxu0 0.0
    %3605 = vmatpush1.msra.mxu0 0.0
    %3606 = vmatprep.subr.mxu0 0.0
    %3607 = vmatpush1.msra.mxu0 0.0
    %3608 = vmatprep.subr.mxu0 0.0
    %3609 = vmatpush1.msra.mxu0 0.0
    %3610 = vmatprep.subr.mxu0 0.0
    %3611 = vmatpush1.msra.mxu0 0.0
    %3612 = vmatprep.subr.mxu0 0.0
    %3613 = vmatpush1.msra.mxu0 0.0
    %3614 = vmatprep.subr.mxu0 0.0
    %3615 = vmatpush1.msra.mxu0 0.0
    %3616 = vmatprep.subr.mxu0 0.0
    %3617 = vmatpush1.msra.mxu0 0.0
    %3618 = vmatprep.subr.mxu0 0.0
    %3619 = vmatpush1.msra.mxu0 0.0
    %3620 = vmatprep.subr.mxu0 %v195
    %3621 = vmatpush1.msra.mxu0 %v193
    %3622 = vmatprep.subr.mxu0 0.0
    %3623 = vmatpush2.msra.mxu0 0.0
    %3624 = vmatprep.subr.mxu0 0.0
    %3625 = vmatpush2.msra.mxu0 0.0
    %3626 = vmatprep.subr.mxu0 0.0
    %3627 = vmatpush2.msra.mxu0 0.0
    %3628 = vmatprep.subr.mxu0 0.0
    %3629 = vmatpush2.msra.mxu0 0.0
    %3630 = vmatprep.subr.mxu0 0.0
    %3631 = vmatpush2.msra.mxu0 0.0
    %3632 = vmatprep.subr.mxu0 0.0
    %3633 = vmatpush2.msra.mxu0 0.0
    %3634 = vmatprep.subr.mxu0 0.0
    %3635 = vmatpush2.msra.mxu0 0.0
    %3636 = vmatprep.subr.mxu0 0.0
    %3637 = vmatpush2.msra.mxu0 0.0
    %3638 = vmatprep.subr.mxu0 0.0
    %3639 = vmatpush2.msra.mxu0 0.0
    %3640 = vmatprep.subr.mxu0 0.0
    %3641 = vmatpush2.msra.mxu0 0.0
    %3642 = vmatprep.subr.mxu0 0.0
    %3643 = vmatpush2.msra.mxu0 0.0
    %3644 = vmatprep.subr.mxu0 0.0
    %3645 = vmatpush2.msra.mxu0 0.0
    %3646 = vmatprep.subr.mxu0 0.0
    %3647 = vmatpush2.msra.mxu0 0.0
    %3648 = vmatprep.subr.mxu0 0.0
    %3649 = vmatpush2.msra.mxu0 0.0
    %3650 = vmatprep.subr.mxu0 0.0
    %3651 = vmatpush2.msra.mxu0 0.0
    %3652 = vmatprep.subr.mxu0 0.0
    %3653 = vmatpush2.msra.mxu0 0.0
    %3654 = vmatprep.mubr.f32.mxu0 0.0
    %3655 = vmatmul.mubr.f32.gmra.mxu0 %v2659
    %v3656 = vpop.f32.mrf.mxu0
    %v3657 = vadd.f32 %v1262, %v3656
    %v3658 = vpop.f32.mrf.mxu0
    %v3659 = vadd.f32 %v1264, %v3658
    %3660 = vmatprep.mubr.f32.mxu0 0.0
    %3661 = vmatmul.mubr.f32.gmra.mxu0 %v2662
    %v3662 = vpop.f32.mrf.mxu0
    %v3663 = vadd.f32 %v1268, %v3662
    %v3664 = vpop.f32.mrf.mxu0
    %v3665 = vadd.f32 %v1270, %v3664
    %3666 = vdwg.mxu0
    %3667 = vmatprep.subr.mxu0 0.0
    %3668 = vmatpush1.msra.mxu0 0.0
    %3669 = vmatprep.subr.mxu0 0.0
    %3670 = vmatpush1.msra.mxu0 0.0
    %3671 = vmatprep.subr.mxu0 0.0
    %3672 = vmatpush1.msra.mxu0 0.0
    %3673 = vmatprep.subr.mxu0 0.0
    %3674 = vmatpush1.msra.mxu0 0.0
    %3675 = vmatprep.subr.mxu0 0.0
    %3676 = vmatpush1.msra.mxu0 0.0
    %3677 = vmatprep.subr.mxu0 0.0
    %3678 = vmatpush1.msra.mxu0 0.0
    %3679 = vmatprep.subr.mxu0 0.0
    %3680 = vmatpush1.msra.mxu0 0.0
    %3681 = vmatprep.subr.mxu0 0.0
    %3682 = vmatpush1.msra.mxu0 0.0
    %3683 = vmatprep.subr.mxu0 0.0
    %3684 = vmatpush1.msra.mxu0 0.0
    %3685 = vmatprep.subr.mxu0 0.0
    %3686 = vmatpush1.msra.mxu0 0.0
    %3687 = vmatprep.subr.mxu0 0.0
    %3688 = vmatpush1.msra.mxu0 0.0
    %3689 = vmatprep.subr.mxu0 0.0
    %3690 = vmatpush1.msra.mxu0 0.0
    %3691 = vmatprep.subr.mxu0 0.0
    %3692 = vmatpush1.msra.mxu0 0.0
    %3693 = vmatprep.subr.mxu0 0.0
    %3694 = vmatpush1.msra.mxu0 0.0
    %3695 = vmatprep.subr.mxu0 0.0
    %3696 = vmatpush1.msra.mxu0 0.0
    %3697 = vmatprep.subr.mxu0 %v199
    %3698 = vmatpush1.msra.mxu0 %v197
    %3699 = vmatprep.subr.mxu0 0.0
    %3700 = vmatpush2.msra.mxu0 0.0
    %3701 = vmatprep.subr.mxu0 0.0
    %3702 = vmatpush2.msra.mxu0 0.0
    %3703 = vmatprep.subr.mxu0 0.0
    %3704 = vmatpush2.msra.mxu0 0.0
    %3705 = vmatprep.subr.mxu0 0.0
    %3706 = vmatpush2.msra.mxu0 0.0
    %3707 = vmatprep.subr.mxu0 0.0
    %3708 = vmatpush2.msra.mxu0 0.0
    %3709 = vmatprep.subr.mxu0 0.0
    %3710 = vmatpush2.msra.mxu0 0.0
    %3711 = vmatprep.subr.mxu0 0.0
    %3712 = vmatpush2.msra.mxu0 0.0
    %3713 = vmatprep.subr.mxu0 0.0
    %3714 = vmatpush2.msra.mxu0 0.0
    %3715 = vmatprep.subr.mxu0 0.0
    %3716 = vmatpush2.msra.mxu0 0.0
    %3717 = vmatprep.subr.mxu0 0.0
    %3718 = vmatpush2.msra.mxu0 0.0
    %3719 = vmatprep.subr.mxu0 0.0
    %3720 = vmatpush2.msra.mxu0 0.0
    %3721 = vmatprep.subr.mxu0 0.0
    %3722 = vmatpush2.msra.mxu0 0.0
    %3723 = vmatprep.subr.mxu0 0.0
    %3724 = vmatpush2.msra.mxu0 0.0
    %3725 = vmatprep.subr.mxu0 0.0
    %3726 = vmatpush2.msra.mxu0 0.0
    %3727 = vmatprep.subr.mxu0 0.0
    %3728 = vmatpush2.msra.mxu0 0.0
    %3729 = vmatprep.subr.mxu0 0.0
    %3730 = vmatpush2.msra.mxu0 0.0
    %3731 = vmatprep.mubr.f32.mxu0 0.0
    %3732 = vmatmul.mubr.f32.gmra.mxu0 %v2659
    %v3733 = vpop.f32.mrf.mxu0
    %v3734 = vadd.f32 %v1339, %v3733
    %v3735 = vpop.f32.mrf.mxu0
    %v3736 = vadd.f32 %v1341, %v3735
    %3737 = vmatprep.mubr.f32.mxu0 0.0
    %3738 = vmatmul.mubr.f32.gmra.mxu0 %v2662
    %v3739 = vpop.f32.mrf.mxu0
    %v3740 = vadd.f32 %v1345, %v3739
    %v3741 = vpop.f32.mrf.mxu0
    %v3742 = vadd.f32 %v1347, %v3741
    %3743 = vdwg.mxu0
    %3744 = vmatprep.subr.mxu0 0.0
    %3745 = vmatpush1.msra.mxu0 0.0
    %3746 = vmatprep.subr.mxu0 0.0
    %3747 = vmatpush1.msra.mxu0 0.0
    %3748 = vmatprep.subr.mxu0 0.0
    %3749 = vmatpush1.msra.mxu0 0.0
    %3750 = vmatprep.subr.mxu0 0.0
    %3751 = vmatpush1.msra.mxu0 0.0
    %3752 = vmatprep.subr.mxu0 0.0
    %3753 = vmatpush1.msra.mxu0 0.0
    %3754 = vmatprep.subr.mxu0 0.0
    %3755 = vmatpush1.msra.mxu0 0.0
    %3756 = vmatprep.subr.mxu0 0.0
    %3757 = vmatpush1.msra.mxu0 0.0
    %3758 = vmatprep.subr.mxu0 0.0
    %3759 = vmatpush1.msra.mxu0 0.0
    %3760 = vmatprep.subr.mxu0 0.0
    %3761 = vmatpush1.msra.mxu0 0.0
    %3762 = vmatprep.subr.mxu0 0.0
    %3763 = vmatpush1.msra.mxu0 0.0
    %3764 = vmatprep.subr.mxu0 0.0
    %3765 = vmatpush1.msra.mxu0 0.0
    %3766 = vmatprep.subr.mxu0 0.0
    %3767 = vmatpush1.msra.mxu0 0.0
    %3768 = vmatprep.subr.mxu0 0.0
    %3769 = vmatpush1.msra.mxu0 0.0
    %3770 = vmatprep.subr.mxu0 0.0
    %3771 = vmatpush1.msra.mxu0 0.0
    %3772 = vmatprep.subr.mxu0 0.0
    %3773 = vmatpush1.msra.mxu0 0.0
    %3774 = vmatprep.subr.mxu0 %v203
    %3775 = vmatpush1.msra.mxu0 %v201
    %3776 = vmatprep.subr.mxu0 0.0
    %3777 = vmatpush2.msra.mxu0 0.0
    %3778 = vmatprep.subr.mxu0 0.0
    %3779 = vmatpush2.msra.mxu0 0.0
    %3780 = vmatprep.subr.mxu0 0.0
    %3781 = vmatpush2.msra.mxu0 0.0
    %3782 = vmatprep.subr.mxu0 0.0
    %3783 = vmatpush2.msra.mxu0 0.0
    %3784 = vmatprep.subr.mxu0 0.0
    %3785 = vmatpush2.msra.mxu0 0.0
    %3786 = vmatprep.subr.mxu0 0.0
    %3787 = vmatpush2.msra.mxu0 0.0
    %3788 = vmatprep.subr.mxu0 0.0
    %3789 = vmatpush2.msra.mxu0 0.0
    %3790 = vmatprep.subr.mxu0 0.0
    %3791 = vmatpush2.msra.mxu0 0.0
    %3792 = vmatprep.subr.mxu0 0.0
    %3793 = vmatpush2.msra.mxu0 0.0
    %3794 = vmatprep.subr.mxu0 0.0
    %3795 = vmatpush2.msra.mxu0 0.0
    %3796 = vmatprep.subr.mxu0 0.0
    %3797 = vmatpush2.msra.mxu0 0.0
    %3798 = vmatprep.subr.mxu0 0.0
    %3799 = vmatpush2.msra.mxu0 0.0
    %3800 = vmatprep.subr.mxu0 0.0
    %3801 = vmatpush2.msra.mxu0 0.0
    %3802 = vmatprep.subr.mxu0 0.0
    %3803 = vmatpush2.msra.mxu0 0.0
    %3804 = vmatprep.subr.mxu0 0.0
    %3805 = vmatpush2.msra.mxu0 0.0
    %3806 = vmatprep.subr.mxu0 0.0
    %3807 = vmatpush2.msra.mxu0 0.0
    %3808 = vmatprep.mubr.f32.mxu0 0.0
    %3809 = vmatmul.mubr.f32.gmra.mxu0 %v2659
    %v3810 = vpop.f32.mrf.mxu0
    %v3811 = vadd.f32 %v1416, %v3810
    %v3812 = vpop.f32.mrf.mxu0
    %v3813 = vadd.f32 %v1418, %v3812
    %3814 = vmatprep.mubr.f32.mxu0 0.0
    %3815 = vmatmul.mubr.f32.gmra.mxu0 %v2662
    %v3816 = vpop.f32.mrf.mxu0
    %v3817 = vadd.f32 %v1422, %v3816
    %v3818 = vpop.f32.mrf.mxu0
    %v3819 = vadd.f32 %v1424, %v3818
    %3820 = vdwg.mxu0
    %3821 = vmatprep.subr.mxu0 0.0
    %3822 = vmatpush1.msra.mxu0 0.0
    %3823 = vmatprep.subr.mxu0 0.0
    %3824 = vmatpush1.msra.mxu0 0.0
    %3825 = vmatprep.subr.mxu0 0.0
    %3826 = vmatpush1.msra.mxu0 0.0
    %3827 = vmatprep.subr.mxu0 0.0
    %3828 = vmatpush1.msra.mxu0 0.0
    %3829 = vmatprep.subr.mxu0 0.0
    %3830 = vmatpush1.msra.mxu0 0.0
    %3831 = vmatprep.subr.mxu0 0.0
    %3832 = vmatpush1.msra.mxu0 0.0
    %3833 = vmatprep.subr.mxu0 0.0
    %3834 = vmatpush1.msra.mxu0 0.0
    %3835 = vmatprep.subr.mxu0 0.0
    %3836 = vmatpush1.msra.mxu0 0.0
    %3837 = vmatprep.subr.mxu0 0.0
    %3838 = vmatpush1.msra.mxu0 0.0
    %3839 = vmatprep.subr.mxu0 0.0
    %3840 = vmatpush1.msra.mxu0 0.0
    %3841 = vmatprep.subr.mxu0 0.0
    %3842 = vmatpush1.msra.mxu0 0.0
    %3843 = vmatprep.subr.mxu0 0.0
    %3844 = vmatpush1.msra.mxu0 0.0
    %3845 = vmatprep.subr.mxu0 0.0
    %3846 = vmatpush1.msra.mxu0 0.0
    %3847 = vmatprep.subr.mxu0 0.0
    %3848 = vmatpush1.msra.mxu0 0.0
    %3849 = vmatprep.subr.mxu0 0.0
    %3850 = vmatpush1.msra.mxu0 0.0
    %3851 = vmatprep.subr.mxu0 %v207
    %3852 = vmatpush1.msra.mxu0 %v205
    %3853 = vmatprep.subr.mxu0 0.0
    %3854 = vmatpush2.msra.mxu0 0.0
    %3855 = vmatprep.subr.mxu0 0.0
    %3856 = vmatpush2.msra.mxu0 0.0
    %3857 = vmatprep.subr.mxu0 0.0
    %3858 = vmatpush2.msra.mxu0 0.0
    %3859 = vmatprep.subr.mxu0 0.0
    %3860 = vmatpush2.msra.mxu0 0.0
    %3861 = vmatprep.subr.mxu0 0.0
    %3862 = vmatpush2.msra.mxu0 0.0
    %3863 = vmatprep.subr.mxu0 0.0
    %3864 = vmatpush2.msra.mxu0 0.0
    %3865 = vmatprep.subr.mxu0 0.0
    %3866 = vmatpush2.msra.mxu0 0.0
    %3867 = vmatprep.subr.mxu0 0.0
    %3868 = vmatpush2.msra.mxu0 0.0
    %3869 = vmatprep.subr.mxu0 0.0
    %3870 = vmatpush2.msra.mxu0 0.0
    %3871 = vmatprep.subr.mxu0 0.0
    %3872 = vmatpush2.msra.mxu0 0.0
    %3873 = vmatprep.subr.mxu0 0.0
    %3874 = vmatpush2.msra.mxu0 0.0
    %3875 = vmatprep.subr.mxu0 0.0
    %3876 = vmatpush2.msra.mxu0 0.0
    %3877 = vmatprep.subr.mxu0 0.0
    %3878 = vmatpush2.msra.mxu0 0.0
    %3879 = vmatprep.subr.mxu0 0.0
    %3880 = vmatpush2.msra.mxu0 0.0
    %3881 = vmatprep.subr.mxu0 0.0
    %3882 = vmatpush2.msra.mxu0 0.0
    %3883 = vmatprep.subr.mxu0 0.0
    %3884 = vmatpush2.msra.mxu0 0.0
    %3885 = vmatprep.mubr.f32.mxu0 0.0
    %3886 = vmatmul.mubr.f32.gmra.mxu0 %v2659
    %v3887 = vpop.f32.mrf.mxu0
    %v3888 = vadd.f32 %v1493, %v3887
    %v3889 = vpop.f32.mrf.mxu0
    %v3890 = vadd.f32 %v1495, %v3889
    %3891 = vmatprep.mubr.f32.mxu0 0.0
    %3892 = vmatmul.mubr.f32.gmra.mxu0 %v2662
    %v3893 = vpop.f32.mrf.mxu0
    %v3894 = vadd.f32 %v1499, %v3893
    %v3895 = vpop.f32.mrf.mxu0
    %v3896 = vadd.f32 %v1501, %v3895
    %3897 = vdwg.mxu0
    %3898 = vmatprep.subr.mxu0 0.0
    %3899 = vmatpush1.msra.mxu0 0.0
    %3900 = vmatprep.subr.mxu0 0.0
    %3901 = vmatpush1.msra.mxu0 0.0
    %3902 = vmatprep.subr.mxu0 0.0
    %3903 = vmatpush1.msra.mxu0 0.0
    %3904 = vmatprep.subr.mxu0 0.0
    %3905 = vmatpush1.msra.mxu0 0.0
    %3906 = vmatprep.subr.mxu0 0.0
    %3907 = vmatpush1.msra.mxu0 0.0
    %3908 = vmatprep.subr.mxu0 0.0
    %3909 = vmatpush1.msra.mxu0 0.0
    %3910 = vmatprep.subr.mxu0 0.0
    %3911 = vmatpush1.msra.mxu0 0.0
    %3912 = vmatprep.subr.mxu0 0.0
    %3913 = vmatpush1.msra.mxu0 0.0
    %3914 = vmatprep.subr.mxu0 0.0
    %3915 = vmatpush1.msra.mxu0 0.0
    %3916 = vmatprep.subr.mxu0 0.0
    %3917 = vmatpush1.msra.mxu0 0.0
    %3918 = vmatprep.subr.mxu0 0.0
    %3919 = vmatpush1.msra.mxu0 0.0
    %3920 = vmatprep.subr.mxu0 0.0
    %3921 = vmatpush1.msra.mxu0 0.0
    %3922 = vmatprep.subr.mxu0 0.0
    %3923 = vmatpush1.msra.mxu0 0.0
    %3924 = vmatprep.subr.mxu0 0.0
    %3925 = vmatpush1.msra.mxu0 0.0
    %3926 = vmatprep.subr.mxu0 0.0
    %3927 = vmatpush1.msra.mxu0 0.0
    %3928 = vmatprep.subr.mxu0 %v211
    %3929 = vmatpush1.msra.mxu0 %v209
    %3930 = vmatprep.subr.mxu0 0.0
    %3931 = vmatpush2.msra.mxu0 0.0
    %3932 = vmatprep.subr.mxu0 0.0
    %3933 = vmatpush2.msra.mxu0 0.0
    %3934 = vmatprep.subr.mxu0 0.0
    %3935 = vmatpush2.msra.mxu0 0.0
    %3936 = vmatprep.subr.mxu0 0.0
    %3937 = vmatpush2.msra.mxu0 0.0
    %3938 = vmatprep.subr.mxu0 0.0
    %3939 = vmatpush2.msra.mxu0 0.0
    %3940 = vmatprep.subr.mxu0 0.0
    %3941 = vmatpush2.msra.mxu0 0.0
    %3942 = vmatprep.subr.mxu0 0.0
    %3943 = vmatpush2.msra.mxu0 0.0
    %3944 = vmatprep.subr.mxu0 0.0
    %3945 = vmatpush2.msra.mxu0 0.0
    %3946 = vmatprep.subr.mxu0 0.0
    %3947 = vmatpush2.msra.mxu0 0.0
    %3948 = vmatprep.subr.mxu0 0.0
    %3949 = vmatpush2.msra.mxu0 0.0
    %3950 = vmatprep.subr.mxu0 0.0
    %3951 = vmatpush2.msra.mxu0 0.0
    %3952 = vmatprep.subr.mxu0 0.0
    %3953 = vmatpush2.msra.mxu0 0.0
    %3954 = vmatprep.subr.mxu0 0.0
    %3955 = vmatpush2.msra.mxu0 0.0
    %3956 = vmatprep.subr.mxu0 0.0
    %3957 = vmatpush2.msra.mxu0 0.0
    %3958 = vmatprep.subr.mxu0 0.0
    %3959 = vmatpush2.msra.mxu0 0.0
    %3960 = vmatprep.subr.mxu0 0.0
    %3961 = vmatpush2.msra.mxu0 0.0
    %3962 = vmatprep.mubr.f32.mxu0 0.0
    %3963 = vmatmul.mubr.f32.gmra.mxu0 %v2659
    %v3964 = vpop.f32.mrf.mxu0
    %v3965 = vadd.f32 %v1570, %v3964
    %v3966 = vpop.f32.mrf.mxu0
    %v3967 = vadd.f32 %v1572, %v3966
    %3968 = vmatprep.mubr.f32.mxu0 0.0
    %3969 = vmatmul.mubr.f32.gmra.mxu0 %v2662
    %v3970 = vpop.f32.mrf.mxu0
    %v3971 = vadd.f32 %v1576, %v3970
    %v3972 = vpop.f32.mrf.mxu0
    %v3973 = vadd.f32 %v1578, %v3972
    %3974 = vdwg.mxu0
    %3975 = vmatprep.subr.mxu0 0.0
    %3976 = vmatpush1.msra.mxu0 0.0
    %3977 = vmatprep.subr.mxu0 0.0
    %3978 = vmatpush1.msra.mxu0 0.0
    %3979 = vmatprep.subr.mxu0 0.0
    %3980 = vmatpush1.msra.mxu0 0.0
    %3981 = vmatprep.subr.mxu0 0.0
    %3982 = vmatpush1.msra.mxu0 0.0
    %3983 = vmatprep.subr.mxu0 0.0
    %3984 = vmatpush1.msra.mxu0 0.0
    %3985 = vmatprep.subr.mxu0 0.0
    %3986 = vmatpush1.msra.mxu0 0.0
    %3987 = vmatprep.subr.mxu0 0.0
    %3988 = vmatpush1.msra.mxu0 0.0
    %3989 = vmatprep.subr.mxu0 0.0
    %3990 = vmatpush1.msra.mxu0 0.0
    %3991 = vmatprep.subr.mxu0 0.0
    %3992 = vmatpush1.msra.mxu0 0.0
    %3993 = vmatprep.subr.mxu0 0.0
    %3994 = vmatpush1.msra.mxu0 0.0
    %3995 = vmatprep.subr.mxu0 0.0
    %3996 = vmatpush1.msra.mxu0 0.0
    %3997 = vmatprep.subr.mxu0 0.0
    %3998 = vmatpush1.msra.mxu0 0.0
    %3999 = vmatprep.subr.mxu0 0.0
    %4000 = vmatpush1.msra.mxu0 0.0
    %4001 = vmatprep.subr.mxu0 0.0
    %4002 = vmatpush1.msra.mxu0 0.0
    %4003 = vmatprep.subr.mxu0 0.0
    %4004 = vmatpush1.msra.mxu0 0.0
    %4005 = vmatprep.subr.mxu0 %v215
    %4006 = vmatpush1.msra.mxu0 %v213
    %4007 = vmatprep.subr.mxu0 0.0
    %4008 = vmatpush2.msra.mxu0 0.0
    %4009 = vmatprep.subr.mxu0 0.0
    %4010 = vmatpush2.msra.mxu0 0.0
    %4011 = vmatprep.subr.mxu0 0.0
    %4012 = vmatpush2.msra.mxu0 0.0
    %4013 = vmatprep.subr.mxu0 0.0
    %4014 = vmatpush2.msra.mxu0 0.0
    %4015 = vmatprep.subr.mxu0 0.0
    %4016 = vmatpush2.msra.mxu0 0.0
    %4017 = vmatprep.subr.mxu0 0.0
    %4018 = vmatpush2.msra.mxu0 0.0
    %4019 = vmatprep.subr.mxu0 0.0
    %4020 = vmatpush2.msra.mxu0 0.0
    %4021 = vmatprep.subr.mxu0 0.0
    %4022 = vmatpush2.msra.mxu0 0.0
    %4023 = vmatprep.subr.mxu0 0.0
    %4024 = vmatpush2.msra.mxu0 0.0
    %4025 = vmatprep.subr.mxu0 0.0
    %4026 = vmatpush2.msra.mxu0 0.0
    %4027 = vmatprep.subr.mxu0 0.0
    %4028 = vmatpush2.msra.mxu0 0.0
    %4029 = vmatprep.subr.mxu0 0.0
    %4030 = vmatpush2.msra.mxu0 0.0
    %4031 = vmatprep.subr.mxu0 0.0
    %4032 = vmatpush2.msra.mxu0 0.0
    %4033 = vmatprep.subr.mxu0 0.0
    %4034 = vmatpush2.msra.mxu0 0.0
    %4035 = vmatprep.subr.mxu0 0.0
    %4036 = vmatpush2.msra.mxu0 0.0
    %4037 = vmatprep.subr.mxu0 0.0
    %4038 = vmatpush2.msra.mxu0 0.0
    %4039 = vmatprep.mubr.f32.mxu0 0.0
    %4040 = vmatmul.mubr.f32.gmra.mxu0 %v2659
    %v4041 = vpop.f32.mrf.mxu0
    %v4042 = vadd.f32 %v1647, %v4041
    %v4043 = vpop.f32.mrf.mxu0
    %v4044 = vadd.f32 %v1649, %v4043
    %4045 = vmatprep.mubr.f32.mxu0 0.0
    %4046 = vmatmul.mubr.f32.gmra.mxu0 %v2662
    %v4047 = vpop.f32.mrf.mxu0
    %v4048 = vadd.f32 %v1653, %v4047
    %v4049 = vpop.f32.mrf.mxu0
    %v4050 = vadd.f32 %v1655, %v4049
    %4051 = vdwg.mxu0
    %4052 = vmatprep.subr.mxu0 0.0
    %4053 = vmatpush1.msra.mxu0 0.0
    %4054 = vmatprep.subr.mxu0 0.0
    %4055 = vmatpush1.msra.mxu0 0.0
    %4056 = vmatprep.subr.mxu0 0.0
    %4057 = vmatpush1.msra.mxu0 0.0
    %4058 = vmatprep.subr.mxu0 0.0
    %4059 = vmatpush1.msra.mxu0 0.0
    %4060 = vmatprep.subr.mxu0 0.0
    %4061 = vmatpush1.msra.mxu0 0.0
    %4062 = vmatprep.subr.mxu0 0.0
    %4063 = vmatpush1.msra.mxu0 0.0
    %4064 = vmatprep.subr.mxu0 0.0
    %4065 = vmatpush1.msra.mxu0 0.0
    %4066 = vmatprep.subr.mxu0 0.0
    %4067 = vmatpush1.msra.mxu0 0.0
    %4068 = vmatprep.subr.mxu0 0.0
    %4069 = vmatpush1.msra.mxu0 0.0
    %4070 = vmatprep.subr.mxu0 0.0
    %4071 = vmatpush1.msra.mxu0 0.0
    %4072 = vmatprep.subr.mxu0 0.0
    %4073 = vmatpush1.msra.mxu0 0.0
    %4074 = vmatprep.subr.mxu0 0.0
    %4075 = vmatpush1.msra.mxu0 0.0
    %4076 = vmatprep.subr.mxu0 0.0
    %4077 = vmatpush1.msra.mxu0 0.0
    %4078 = vmatprep.subr.mxu0 0.0
    %4079 = vmatpush1.msra.mxu0 0.0
    %4080 = vmatprep.subr.mxu0 0.0
    %4081 = vmatpush1.msra.mxu0 0.0
    %4082 = vmatprep.subr.mxu0 %v219
    %4083 = vmatpush1.msra.mxu0 %v217
    %4084 = vmatprep.subr.mxu0 0.0
    %4085 = vmatpush2.msra.mxu0 0.0
    %4086 = vmatprep.subr.mxu0 0.0
    %4087 = vmatpush2.msra.mxu0 0.0
    %4088 = vmatprep.subr.mxu0 0.0
    %4089 = vmatpush2.msra.mxu0 0.0
    %4090 = vmatprep.subr.mxu0 0.0
    %4091 = vmatpush2.msra.mxu0 0.0
    %4092 = vmatprep.subr.mxu0 0.0
    %4093 = vmatpush2.msra.mxu0 0.0
    %4094 = vmatprep.subr.mxu0 0.0
    %4095 = vmatpush2.msra.mxu0 0.0
    %4096 = vmatprep.subr.mxu0 0.0
    %4097 = vmatpush2.msra.mxu0 0.0
    %4098 = vmatprep.subr.mxu0 0.0
    %4099 = vmatpush2.msra.mxu0 0.0
    %4100 = vmatprep.subr.mxu0 0.0
    %4101 = vmatpush2.msra.mxu0 0.0
    %4102 = vmatprep.subr.mxu0 0.0
    %4103 = vmatpush2.msra.mxu0 0.0
    %4104 = vmatprep.subr.mxu0 0.0
    %4105 = vmatpush2.msra.mxu0 0.0
    %4106 = vmatprep.subr.mxu0 0.0
    %4107 = vmatpush2.msra.mxu0 0.0
    %4108 = vmatprep.subr.mxu0 0.0
    %4109 = vmatpush2.msra.mxu0 0.0
    %4110 = vmatprep.subr.mxu0 0.0
    %4111 = vmatpush2.msra.mxu0 0.0
    %4112 = vmatprep.subr.mxu0 0.0
    %4113 = vmatpush2.msra.mxu0 0.0
    %4114 = vmatprep.subr.mxu0 0.0
    %4115 = vmatpush2.msra.mxu0 0.0
    %4116 = vmatprep.mubr.f32.mxu0 0.0
    %4117 = vmatmul.mubr.f32.gmra.mxu0 %v2659
    %v4118 = vpop.f32.mrf.mxu0
    %v4119 = vadd.f32 %v1724, %v4118
    %v4120 = vpop.f32.mrf.mxu0
    %v4121 = vadd.f32 %v1726, %v4120
    %4122 = vmatprep.mubr.f32.mxu0 0.0
    %4123 = vmatmul.mubr.f32.gmra.mxu0 %v2662
    %v4124 = vpop.f32.mrf.mxu0
    %v4125 = vadd.f32 %v1730, %v4124
    %v4126 = vpop.f32.mrf.mxu0
    %v4127 = vadd.f32 %v1732, %v4126
    %4128 = vdwg.mxu0
    %4129 = vmatprep.subr.mxu0 0.0
    %4130 = vmatpush1.msra.mxu0 0.0
    %4131 = vmatprep.subr.mxu0 0.0
    %4132 = vmatpush1.msra.mxu0 0.0
    %4133 = vmatprep.subr.mxu0 0.0
    %4134 = vmatpush1.msra.mxu0 0.0
    %4135 = vmatprep.subr.mxu0 0.0
    %4136 = vmatpush1.msra.mxu0 0.0
    %4137 = vmatprep.subr.mxu0 0.0
    %4138 = vmatpush1.msra.mxu0 0.0
    %4139 = vmatprep.subr.mxu0 0.0
    %4140 = vmatpush1.msra.mxu0 0.0
    %4141 = vmatprep.subr.mxu0 0.0
    %4142 = vmatpush1.msra.mxu0 0.0
    %4143 = vmatprep.subr.mxu0 0.0
    %4144 = vmatpush1.msra.mxu0 0.0
    %4145 = vmatprep.subr.mxu0 0.0
    %4146 = vmatpush1.msra.mxu0 0.0
    %4147 = vmatprep.subr.mxu0 0.0
    %4148 = vmatpush1.msra.mxu0 0.0
    %4149 = vmatprep.subr.mxu0 0.0
    %4150 = vmatpush1.msra.mxu0 0.0
    %4151 = vmatprep.subr.mxu0 0.0
    %4152 = vmatpush1.msra.mxu0 0.0
    %4153 = vmatprep.subr.mxu0 0.0
    %4154 = vmatpush1.msra.mxu0 0.0
    %4155 = vmatprep.subr.mxu0 0.0
    %4156 = vmatpush1.msra.mxu0 0.0
    %4157 = vmatprep.subr.mxu0 0.0
    %4158 = vmatpush1.msra.mxu0 0.0
    %4159 = vmatprep.subr.mxu0 %v223
    %4160 = vmatpush1.msra.mxu0 %v221
    %4161 = vmatprep.subr.mxu0 0.0
    %4162 = vmatpush2.msra.mxu0 0.0
    %4163 = vmatprep.subr.mxu0 0.0
    %4164 = vmatpush2.msra.mxu0 0.0
    %4165 = vmatprep.subr.mxu0 0.0
    %4166 = vmatpush2.msra.mxu0 0.0
    %4167 = vmatprep.subr.mxu0 0.0
    %4168 = vmatpush2.msra.mxu0 0.0
    %4169 = vmatprep.subr.mxu0 0.0
    %4170 = vmatpush2.msra.mxu0 0.0
    %4171 = vmatprep.subr.mxu0 0.0
    %4172 = vmatpush2.msra.mxu0 0.0
    %4173 = vmatprep.subr.mxu0 0.0
    %4174 = vmatpush2.msra.mxu0 0.0
    %4175 = vmatprep.subr.mxu0 0.0
    %4176 = vmatpush2.msra.mxu0 0.0
    %4177 = vmatprep.subr.mxu0 0.0
    %4178 = vmatpush2.msra.mxu0 0.0
    %4179 = vmatprep.subr.mxu0 0.0
    %4180 = vmatpush2.msra.mxu0 0.0
    %4181 = vmatprep.subr.mxu0 0.0
    %4182 = vmatpush2.msra.mxu0 0.0
    %4183 = vmatprep.subr.mxu0 0.0
    %4184 = vmatpush2.msra.mxu0 0.0
    %4185 = vmatprep.subr.mxu0 0.0
    %4186 = vmatpush2.msra.mxu0 0.0
    %4187 = vmatprep.subr.mxu0 0.0
    %4188 = vmatpush2.msra.mxu0 0.0
    %4189 = vmatprep.subr.mxu0 0.0
    %4190 = vmatpush2.msra.mxu0 0.0
    %4191 = vmatprep.subr.mxu0 0.0
    %4192 = vmatpush2.msra.mxu0 0.0
    %4193 = vmatprep.mubr.f32.mxu0 0.0
    %4194 = vmatmul.mubr.f32.gmra.mxu0 %v2659
    %v4195 = vpop.f32.mrf.mxu0
    %v4196 = vadd.f32 %v1801, %v4195
    %v4197 = vpop.f32.mrf.mxu0
    %v4198 = vadd.f32 %v1803, %v4197
    %4199 = vmatprep.mubr.f32.mxu0 0.0
    %4200 = vmatmul.mubr.f32.gmra.mxu0 %v2662
    %v4201 = vpop.f32.mrf.mxu0
    %v4202 = vadd.f32 %v1807, %v4201
    %v4203 = vpop.f32.mrf.mxu0
    %v4204 = vadd.f32 %v1809, %v4203
    %4205 = vdwg.mxu0
    %4206 = vmatprep.subr.mxu0 0.0
    %4207 = vmatpush1.msra.mxu0 0.0
    %4208 = vmatprep.subr.mxu0 0.0
    %4209 = vmatpush1.msra.mxu0 0.0
    %4210 = vmatprep.subr.mxu0 0.0
    %4211 = vmatpush1.msra.mxu0 0.0
    %4212 = vmatprep.subr.mxu0 0.0
    %4213 = vmatpush1.msra.mxu0 0.0
    %4214 = vmatprep.subr.mxu0 0.0
    %4215 = vmatpush1.msra.mxu0 0.0
    %4216 = vmatprep.subr.mxu0 0.0
    %4217 = vmatpush1.msra.mxu0 0.0
    %4218 = vmatprep.subr.mxu0 0.0
    %4219 = vmatpush1.msra.mxu0 0.0
    %4220 = vmatprep.subr.mxu0 0.0
    %4221 = vmatpush1.msra.mxu0 0.0
    %4222 = vmatprep.subr.mxu0 0.0
    %4223 = vmatpush1.msra.mxu0 0.0
    %4224 = vmatprep.subr.mxu0 0.0
    %4225 = vmatpush1.msra.mxu0 0.0
    %4226 = vmatprep.subr.mxu0 0.0
    %4227 = vmatpush1.msra.mxu0 0.0
    %4228 = vmatprep.subr.mxu0 0.0
    %4229 = vmatpush1.msra.mxu0 0.0
    %4230 = vmatprep.subr.mxu0 0.0
    %4231 = vmatpush1.msra.mxu0 0.0
    %4232 = vmatprep.subr.mxu0 0.0
    %4233 = vmatpush1.msra.mxu0 0.0
    %4234 = vmatprep.subr.mxu0 0.0
    %4235 = vmatpush1.msra.mxu0 0.0
    %4236 = vmatprep.subr.mxu0 %v227
    %4237 = vmatpush1.msra.mxu0 %v225
    %4238 = vmatprep.subr.mxu0 0.0
    %4239 = vmatpush2.msra.mxu0 0.0
    %4240 = vmatprep.subr.mxu0 0.0
    %4241 = vmatpush2.msra.mxu0 0.0
    %4242 = vmatprep.subr.mxu0 0.0
    %4243 = vmatpush2.msra.mxu0 0.0
    %4244 = vmatprep.subr.mxu0 0.0
    %4245 = vmatpush2.msra.mxu0 0.0
    %4246 = vmatprep.subr.mxu0 0.0
    %4247 = vmatpush2.msra.mxu0 0.0
    %4248 = vmatprep.subr.mxu0 0.0
    %4249 = vmatpush2.msra.mxu0 0.0
    %4250 = vmatprep.subr.mxu0 0.0
    %4251 = vmatpush2.msra.mxu0 0.0
    %4252 = vmatprep.subr.mxu0 0.0
    %4253 = vmatpush2.msra.mxu0 0.0
    %4254 = vmatprep.subr.mxu0 0.0
    %4255 = vmatpush2.msra.mxu0 0.0
    %4256 = vmatprep.subr.mxu0 0.0
    %4257 = vmatpush2.msra.mxu0 0.0
    %4258 = vmatprep.subr.mxu0 0.0
    %4259 = vmatpush2.msra.mxu0 0.0
    %4260 = vmatprep.subr.mxu0 0.0
    %4261 = vmatpush2.msra.mxu0 0.0
    %4262 = vmatprep.subr.mxu0 0.0
    %4263 = vmatpush2.msra.mxu0 0.0
    %4264 = vmatprep.subr.mxu0 0.0
    %4265 = vmatpush2.msra.mxu0 0.0
    %4266 = vmatprep.subr.mxu0 0.0
    %4267 = vmatpush2.msra.mxu0 0.0
    %4268 = vmatprep.subr.mxu0 0.0
    %4269 = vmatpush2.msra.mxu0 0.0
    %4270 = vmatprep.mubr.f32.mxu0 0.0
    %4271 = vmatmul.mubr.f32.gmra.mxu0 %v2659
    %v4272 = vpop.f32.mrf.mxu0
    %v4273 = vadd.f32 %v1878, %v4272
    %v4274 = vpop.f32.mrf.mxu0
    %v4275 = vadd.f32 %v1880, %v4274
    %4276 = vmatprep.mubr.f32.mxu0 0.0
    %4277 = vmatmul.mubr.f32.gmra.mxu0 %v2662
    %v4278 = vpop.f32.mrf.mxu0
    %v4279 = vadd.f32 %v1884, %v4278
    %v4280 = vpop.f32.mrf.mxu0
    %v4281 = vadd.f32 %v1886, %v4280
    %4282 = vdwg.mxu0
    %4283 = vmatprep.subr.mxu0 0.0
    %4284 = vmatpush1.msra.mxu0 0.0
    %4285 = vmatprep.subr.mxu0 0.0
    %4286 = vmatpush1.msra.mxu0 0.0
    %4287 = vmatprep.subr.mxu0 0.0
    %4288 = vmatpush1.msra.mxu0 0.0
    %4289 = vmatprep.subr.mxu0 0.0
    %4290 = vmatpush1.msra.mxu0 0.0
    %4291 = vmatprep.subr.mxu0 0.0
    %4292 = vmatpush1.msra.mxu0 0.0
    %4293 = vmatprep.subr.mxu0 0.0
    %4294 = vmatpush1.msra.mxu0 0.0
    %4295 = vmatprep.subr.mxu0 0.0
    %4296 = vmatpush1.msra.mxu0 0.0
    %4297 = vmatprep.subr.mxu0 0.0
    %4298 = vmatpush1.msra.mxu0 0.0
    %4299 = vmatprep.subr.mxu0 0.0
    %4300 = vmatpush1.msra.mxu0 0.0
    %4301 = vmatprep.subr.mxu0 0.0
    %4302 = vmatpush1.msra.mxu0 0.0
    %4303 = vmatprep.subr.mxu0 0.0
    %4304 = vmatpush1.msra.mxu0 0.0
    %4305 = vmatprep.subr.mxu0 0.0
    %4306 = vmatpush1.msra.mxu0 0.0
    %4307 = vmatprep.subr.mxu0 0.0
    %4308 = vmatpush1.msra.mxu0 0.0
    %4309 = vmatprep.subr.mxu0 0.0
    %4310 = vmatpush1.msra.mxu0 0.0
    %4311 = vmatprep.subr.mxu0 0.0
    %4312 = vmatpush1.msra.mxu0 0.0
    %4313 = vmatprep.subr.mxu0 %v231
    %4314 = vmatpush1.msra.mxu0 %v229
    %4315 = vmatprep.subr.mxu0 0.0
    %4316 = vmatpush2.msra.mxu0 0.0
    %4317 = vmatprep.subr.mxu0 0.0
    %4318 = vmatpush2.msra.mxu0 0.0
    %4319 = vmatprep.subr.mxu0 0.0
    %4320 = vmatpush2.msra.mxu0 0.0
    %4321 = vmatprep.subr.mxu0 0.0
    %4322 = vmatpush2.msra.mxu0 0.0
    %4323 = vmatprep.subr.mxu0 0.0
    %4324 = vmatpush2.msra.mxu0 0.0
    %4325 = vmatprep.subr.mxu0 0.0
    %4326 = vmatpush2.msra.mxu0 0.0
    %4327 = vmatprep.subr.mxu0 0.0
    %4328 = vmatpush2.msra.mxu0 0.0
    %4329 = vmatprep.subr.mxu0 0.0
    %4330 = vmatpush2.msra.mxu0 0.0
    %4331 = vmatprep.subr.mxu0 0.0
    %4332 = vmatpush2.msra.mxu0 0.0
    %4333 = vmatprep.subr.mxu0 0.0
    %4334 = vmatpush2.msra.mxu0 0.0
    %4335 = vmatprep.subr.mxu0 0.0
    %4336 = vmatpush2.msra.mxu0 0.0
    %4337 = vmatprep.subr.mxu0 0.0
    %4338 = vmatpush2.msra.mxu0 0.0
    %4339 = vmatprep.subr.mxu0 0.0
    %4340 = vmatpush2.msra.mxu0 0.0
    %4341 = vmatprep.subr.mxu0 0.0
    %4342 = vmatpush2.msra.mxu0 0.0
    %4343 = vmatprep.subr.mxu0 0.0
    %4344 = vmatpush2.msra.mxu0 0.0
    %4345 = vmatprep.subr.mxu0 0.0
    %4346 = vmatpush2.msra.mxu0 0.0
    %4347 = vmatprep.mubr.f32.mxu0 0.0
    %4348 = vmatmul.mubr.f32.gmra.mxu0 %v2659
    %v4349 = vpop.f32.mrf.mxu0
    %v4350 = vadd.f32 %v1955, %v4349
    %v4351 = vpop.f32.mrf.mxu0
    %v4352 = vadd.f32 %v1957, %v4351
    %4353 = vmatprep.mubr.f32.mxu0 0.0
    %4354 = vmatmul.mubr.f32.gmra.mxu0 %v2662
    %v4355 = vpop.f32.mrf.mxu0
    %v4356 = vadd.f32 %v1961, %v4355
    %v4357 = vpop.f32.mrf.mxu0
    %v4358 = vadd.f32 %v1963, %v4357
    %4359 = vdwg.mxu0
    %4360 = vmatprep.subr.mxu0 0.0
    %4361 = vmatpush1.msra.mxu0 0.0
    %4362 = vmatprep.subr.mxu0 0.0
    %4363 = vmatpush1.msra.mxu0 0.0
    %4364 = vmatprep.subr.mxu0 0.0
    %4365 = vmatpush1.msra.mxu0 0.0
    %4366 = vmatprep.subr.mxu0 0.0
    %4367 = vmatpush1.msra.mxu0 0.0
    %4368 = vmatprep.subr.mxu0 0.0
    %4369 = vmatpush1.msra.mxu0 0.0
    %4370 = vmatprep.subr.mxu0 0.0
    %4371 = vmatpush1.msra.mxu0 0.0
    %4372 = vmatprep.subr.mxu0 0.0
    %4373 = vmatpush1.msra.mxu0 0.0
    %4374 = vmatprep.subr.mxu0 0.0
    %4375 = vmatpush1.msra.mxu0 0.0
    %4376 = vmatprep.subr.mxu0 0.0
    %4377 = vmatpush1.msra.mxu0 0.0
    %4378 = vmatprep.subr.mxu0 0.0
    %4379 = vmatpush1.msra.mxu0 0.0
    %4380 = vmatprep.subr.mxu0 0.0
    %4381 = vmatpush1.msra.mxu0 0.0
    %4382 = vmatprep.subr.mxu0 0.0
    %4383 = vmatpush1.msra.mxu0 0.0
    %4384 = vmatprep.subr.mxu0 0.0
    %4385 = vmatpush1.msra.mxu0 0.0
    %4386 = vmatprep.subr.mxu0 0.0
    %4387 = vmatpush1.msra.mxu0 0.0
    %4388 = vmatprep.subr.mxu0 0.0
    %4389 = vmatpush1.msra.mxu0 0.0
    %4390 = vmatprep.subr.mxu0 %v235
    %4391 = vmatpush1.msra.mxu0 %v233
    %4392 = vmatprep.subr.mxu0 0.0
    %4393 = vmatpush2.msra.mxu0 0.0
    %4394 = vmatprep.subr.mxu0 0.0
    %4395 = vmatpush2.msra.mxu0 0.0
    %4396 = vmatprep.subr.mxu0 0.0
    %4397 = vmatpush2.msra.mxu0 0.0
    %4398 = vmatprep.subr.mxu0 0.0
    %4399 = vmatpush2.msra.mxu0 0.0
    %4400 = vmatprep.subr.mxu0 0.0
    %4401 = vmatpush2.msra.mxu0 0.0
    %4402 = vmatprep.subr.mxu0 0.0
    %4403 = vmatpush2.msra.mxu0 0.0
    %4404 = vmatprep.subr.mxu0 0.0
    %4405 = vmatpush2.msra.mxu0 0.0
    %4406 = vmatprep.subr.mxu0 0.0
    %4407 = vmatpush2.msra.mxu0 0.0
    %4408 = vmatprep.subr.mxu0 0.0
    %4409 = vmatpush2.msra.mxu0 0.0
    %4410 = vmatprep.subr.mxu0 0.0
    %4411 = vmatpush2.msra.mxu0 0.0
    %4412 = vmatprep.subr.mxu0 0.0
    %4413 = vmatpush2.msra.mxu0 0.0
    %4414 = vmatprep.subr.mxu0 0.0
    %4415 = vmatpush2.msra.mxu0 0.0
    %4416 = vmatprep.subr.mxu0 0.0
    %4417 = vmatpush2.msra.mxu0 0.0
    %4418 = vmatprep.subr.mxu0 0.0
    %4419 = vmatpush2.msra.mxu0 0.0
    %4420 = vmatprep.subr.mxu0 0.0
    %4421 = vmatpush2.msra.mxu0 0.0
    %4422 = vmatprep.subr.mxu0 0.0
    %4423 = vmatpush2.msra.mxu0 0.0
    %4424 = vmatprep.mubr.f32.mxu0 0.0
    %4425 = vmatmul.mubr.f32.gmra.mxu0 %v2659
    %v4426 = vpop.f32.mrf.mxu0
    %v4427 = vadd.f32 %v2032, %v4426
    %v4428 = vpop.f32.mrf.mxu0
    %v4429 = vadd.f32 %v2034, %v4428
    %4430 = vmatprep.mubr.f32.mxu0 0.0
    %4431 = vmatmul.mubr.f32.gmra.mxu0 %v2662
    %v4432 = vpop.f32.mrf.mxu0
    %v4433 = vadd.f32 %v2038, %v4432
    %v4434 = vpop.f32.mrf.mxu0
    %v4435 = vadd.f32 %v2040, %v4434
    %4436 = vdwg.mxu0
    %4437 = vmatprep.subr.mxu0 0.0
    %4438 = vmatpush1.msra.mxu0 0.0
    %4439 = vmatprep.subr.mxu0 0.0
    %4440 = vmatpush1.msra.mxu0 0.0
    %4441 = vmatprep.subr.mxu0 0.0
    %4442 = vmatpush1.msra.mxu0 0.0
    %4443 = vmatprep.subr.mxu0 0.0
    %4444 = vmatpush1.msra.mxu0 0.0
    %4445 = vmatprep.subr.mxu0 0.0
    %4446 = vmatpush1.msra.mxu0 0.0
    %4447 = vmatprep.subr.mxu0 0.0
    %4448 = vmatpush1.msra.mxu0 0.0
    %4449 = vmatprep.subr.mxu0 0.0
    %4450 = vmatpush1.msra.mxu0 0.0
    %4451 = vmatprep.subr.mxu0 0.0
    %4452 = vmatpush1.msra.mxu0 0.0
    %4453 = vmatprep.subr.mxu0 0.0
    %4454 = vmatpush1.msra.mxu0 0.0
    %4455 = vmatprep.subr.mxu0 0.0
    %4456 = vmatpush1.msra.mxu0 0.0
    %4457 = vmatprep.subr.mxu0 0.0
    %4458 = vmatpush1.msra.mxu0 0.0
    %4459 = vmatprep.subr.mxu0 0.0
    %4460 = vmatpush1.msra.mxu0 0.0
    %4461 = vmatprep.subr.mxu0 0.0
    %4462 = vmatpush1.msra.mxu0 0.0
    %4463 = vmatprep.subr.mxu0 0.0
    %4464 = vmatpush1.msra.mxu0 0.0
    %4465 = vmatprep.subr.mxu0 0.0
    %4466 = vmatpush1.msra.mxu0 0.0
    %4467 = vmatprep.subr.mxu0 %v239
    %4468 = vmatpush1.msra.mxu0 %v237
    %4469 = vmatprep.subr.mxu0 0.0
    %4470 = vmatpush2.msra.mxu0 0.0
    %4471 = vmatprep.subr.mxu0 0.0
    %4472 = vmatpush2.msra.mxu0 0.0
    %4473 = vmatprep.subr.mxu0 0.0
    %4474 = vmatpush2.msra.mxu0 0.0
    %4475 = vmatprep.subr.mxu0 0.0
    %4476 = vmatpush2.msra.mxu0 0.0
    %4477 = vmatprep.subr.mxu0 0.0
    %4478 = vmatpush2.msra.mxu0 0.0
    %4479 = vmatprep.subr.mxu0 0.0
    %4480 = vmatpush2.msra.mxu0 0.0
    %4481 = vmatprep.subr.mxu0 0.0
    %4482 = vmatpush2.msra.mxu0 0.0
    %4483 = vmatprep.subr.mxu0 0.0
    %4484 = vmatpush2.msra.mxu0 0.0
    %4485 = vmatprep.subr.mxu0 0.0
    %4486 = vmatpush2.msra.mxu0 0.0
    %4487 = vmatprep.subr.mxu0 0.0
    %4488 = vmatpush2.msra.mxu0 0.0
    %4489 = vmatprep.subr.mxu0 0.0
    %4490 = vmatpush2.msra.mxu0 0.0
    %4491 = vmatprep.subr.mxu0 0.0
    %4492 = vmatpush2.msra.mxu0 0.0
    %4493 = vmatprep.subr.mxu0 0.0
    %4494 = vmatpush2.msra.mxu0 0.0
    %4495 = vmatprep.subr.mxu0 0.0
    %4496 = vmatpush2.msra.mxu0 0.0
    %4497 = vmatprep.subr.mxu0 0.0
    %4498 = vmatpush2.msra.mxu0 0.0
    %4499 = vmatprep.subr.mxu0 0.0
    %4500 = vmatpush2.msra.mxu0 0.0
    %4501 = vmatprep.mubr.f32.mxu0 0.0
    %4502 = vmatmul.mubr.f32.gmra.mxu0 %v2659
    %v4503 = vpop.f32.mrf.mxu0
    %v4504 = vadd.f32 %v2109, %v4503
    %v4505 = vpop.f32.mrf.mxu0
    %v4506 = vadd.f32 %v2111, %v4505
    %4507 = vmatprep.mubr.f32.mxu0 0.0
    %4508 = vmatmul.mubr.f32.gmra.mxu0 %v2662
    %v4509 = vpop.f32.mrf.mxu0
    %v4510 = vadd.f32 %v2115, %v4509
    %v4511 = vpop.f32.mrf.mxu0
    %v4512 = vadd.f32 %v2117, %v4511
    %4513 = vdwg.mxu0
    %4514 = vmatprep.subr.mxu0 0.0
    %4515 = vmatpush1.msra.mxu0 0.0
    %4516 = vmatprep.subr.mxu0 0.0
    %4517 = vmatpush1.msra.mxu0 0.0
    %4518 = vmatprep.subr.mxu0 0.0
    %4519 = vmatpush1.msra.mxu0 0.0
    %4520 = vmatprep.subr.mxu0 0.0
    %4521 = vmatpush1.msra.mxu0 0.0
    %4522 = vmatprep.subr.mxu0 0.0
    %4523 = vmatpush1.msra.mxu0 0.0
    %4524 = vmatprep.subr.mxu0 0.0
    %4525 = vmatpush1.msra.mxu0 0.0
    %4526 = vmatprep.subr.mxu0 0.0
    %4527 = vmatpush1.msra.mxu0 0.0
    %4528 = vmatprep.subr.mxu0 0.0
    %4529 = vmatpush1.msra.mxu0 0.0
    %4530 = vmatprep.subr.mxu0 0.0
    %4531 = vmatpush1.msra.mxu0 0.0
    %4532 = vmatprep.subr.mxu0 0.0
    %4533 = vmatpush1.msra.mxu0 0.0
    %4534 = vmatprep.subr.mxu0 0.0
    %4535 = vmatpush1.msra.mxu0 0.0
    %4536 = vmatprep.subr.mxu0 0.0
    %4537 = vmatpush1.msra.mxu0 0.0
    %4538 = vmatprep.subr.mxu0 0.0
    %4539 = vmatpush1.msra.mxu0 0.0
    %4540 = vmatprep.subr.mxu0 0.0
    %4541 = vmatpush1.msra.mxu0 0.0
    %4542 = vmatprep.subr.mxu0 0.0
    %4543 = vmatpush1.msra.mxu0 0.0
    %4544 = vmatprep.subr.mxu0 %v243
    %4545 = vmatpush1.msra.mxu0 %v241
    %4546 = vmatprep.subr.mxu0 0.0
    %4547 = vmatpush2.msra.mxu0 0.0
    %4548 = vmatprep.subr.mxu0 0.0
    %4549 = vmatpush2.msra.mxu0 0.0
    %4550 = vmatprep.subr.mxu0 0.0
    %4551 = vmatpush2.msra.mxu0 0.0
    %4552 = vmatprep.subr.mxu0 0.0
    %4553 = vmatpush2.msra.mxu0 0.0
    %4554 = vmatprep.subr.mxu0 0.0
    %4555 = vmatpush2.msra.mxu0 0.0
    %4556 = vmatprep.subr.mxu0 0.0
    %4557 = vmatpush2.msra.mxu0 0.0
    %4558 = vmatprep.subr.mxu0 0.0
    %4559 = vmatpush2.msra.mxu0 0.0
    %4560 = vmatprep.subr.mxu0 0.0
    %4561 = vmatpush2.msra.mxu0 0.0
    %4562 = vmatprep.subr.mxu0 0.0
    %4563 = vmatpush2.msra.mxu0 0.0
    %4564 = vmatprep.subr.mxu0 0.0
    %4565 = vmatpush2.msra.mxu0 0.0
    %4566 = vmatprep.subr.mxu0 0.0
    %4567 = vmatpush2.msra.mxu0 0.0
    %4568 = vmatprep.subr.mxu0 0.0
    %4569 = vmatpush2.msra.mxu0 0.0
    %4570 = vmatprep.subr.mxu0 0.0
    %4571 = vmatpush2.msra.mxu0 0.0
    %4572 = vmatprep.subr.mxu0 0.0
    %4573 = vmatpush2.msra.mxu0 0.0
    %4574 = vmatprep.subr.mxu0 0.0
    %4575 = vmatpush2.msra.mxu0 0.0
    %4576 = vmatprep.subr.mxu0 0.0
    %4577 = vmatpush2.msra.mxu0 0.0
    %4578 = vmatprep.mubr.f32.mxu0 0.0
    %4579 = vmatmul.mubr.f32.gmra.mxu0 %v2659
    %v4580 = vpop.f32.mrf.mxu0
    %v4581 = vadd.f32 %v2186, %v4580
    %v4582 = vpop.f32.mrf.mxu0
    %v4583 = vadd.f32 %v2188, %v4582
    %4584 = vmatprep.mubr.f32.mxu0 0.0
    %4585 = vmatmul.mubr.f32.gmra.mxu0 %v2662
    %v4586 = vpop.f32.mrf.mxu0
    %v4587 = vadd.f32 %v2192, %v4586
    %v4588 = vpop.f32.mrf.mxu0
    %v4589 = vadd.f32 %v2194, %v4588
    %4590 = vdwg.mxu0
    %4591 = vmatprep.subr.mxu0 0.0
    %4592 = vmatpush1.msra.mxu0 0.0
    %4593 = vmatprep.subr.mxu0 0.0
    %4594 = vmatpush1.msra.mxu0 0.0
    %4595 = vmatprep.subr.mxu0 0.0
    %4596 = vmatpush1.msra.mxu0 0.0
    %4597 = vmatprep.subr.mxu0 0.0
    %4598 = vmatpush1.msra.mxu0 0.0
    %4599 = vmatprep.subr.mxu0 0.0
    %4600 = vmatpush1.msra.mxu0 0.0
    %4601 = vmatprep.subr.mxu0 0.0
    %4602 = vmatpush1.msra.mxu0 0.0
    %4603 = vmatprep.subr.mxu0 0.0
    %4604 = vmatpush1.msra.mxu0 0.0
    %4605 = vmatprep.subr.mxu0 0.0
    %4606 = vmatpush1.msra.mxu0 0.0
    %4607 = vmatprep.subr.mxu0 0.0
    %4608 = vmatpush1.msra.mxu0 0.0
    %4609 = vmatprep.subr.mxu0 0.0
    %4610 = vmatpush1.msra.mxu0 0.0
    %4611 = vmatprep.subr.mxu0 0.0
    %4612 = vmatpush1.msra.mxu0 0.0
    %4613 = vmatprep.subr.mxu0 0.0
    %4614 = vmatpush1.msra.mxu0 0.0
    %4615 = vmatprep.subr.mxu0 0.0
    %4616 = vmatpush1.msra.mxu0 0.0
    %4617 = vmatprep.subr.mxu0 0.0
    %4618 = vmatpush1.msra.mxu0 0.0
    %4619 = vmatprep.subr.mxu0 0.0
    %4620 = vmatpush1.msra.mxu0 0.0
    %4621 = vmatprep.subr.mxu0 %v247
    %4622 = vmatpush1.msra.mxu0 %v245
    %4623 = vmatprep.subr.mxu0 0.0
    %4624 = vmatpush2.msra.mxu0 0.0
    %4625 = vmatprep.subr.mxu0 0.0
    %4626 = vmatpush2.msra.mxu0 0.0
    %4627 = vmatprep.subr.mxu0 0.0
    %4628 = vmatpush2.msra.mxu0 0.0
    %4629 = vmatprep.subr.mxu0 0.0
    %4630 = vmatpush2.msra.mxu0 0.0
    %4631 = vmatprep.subr.mxu0 0.0
    %4632 = vmatpush2.msra.mxu0 0.0
    %4633 = vmatprep.subr.mxu0 0.0
    %4634 = vmatpush2.msra.mxu0 0.0
    %4635 = vmatprep.subr.mxu0 0.0
    %4636 = vmatpush2.msra.mxu0 0.0
    %4637 = vmatprep.subr.mxu0 0.0
    %4638 = vmatpush2.msra.mxu0 0.0
    %4639 = vmatprep.subr.mxu0 0.0
    %4640 = vmatpush2.msra.mxu0 0.0
    %4641 = vmatprep.subr.mxu0 0.0
    %4642 = vmatpush2.msra.mxu0 0.0
    %4643 = vmatprep.subr.mxu0 0.0
    %4644 = vmatpush2.msra.mxu0 0.0
    %4645 = vmatprep.subr.mxu0 0.0
    %4646 = vmatpush2.msra.mxu0 0.0
    %4647 = vmatprep.subr.mxu0 0.0
    %4648 = vmatpush2.msra.mxu0 0.0
    %4649 = vmatprep.subr.mxu0 0.0
    %4650 = vmatpush2.msra.mxu0 0.0
    %4651 = vmatprep.subr.mxu0 0.0
    %4652 = vmatpush2.msra.mxu0 0.0
    %4653 = vmatprep.subr.mxu0 0.0
    %4654 = vmatpush2.msra.mxu0 0.0
    %4655 = vmatprep.mubr.f32.mxu0 0.0
    %4656 = vmatmul.mubr.f32.gmra.mxu0 %v2659
    %v4657 = vpop.f32.mrf.mxu0
    %v4658 = vadd.f32 %v2263, %v4657
    %v4659 = vpop.f32.mrf.mxu0
    %v4660 = vadd.f32 %v2265, %v4659
    %4661 = vmatprep.mubr.f32.mxu0 0.0
    %4662 = vmatmul.mubr.f32.gmra.mxu0 %v2662
    %v4663 = vpop.f32.mrf.mxu0
    %v4664 = vadd.f32 %v2269, %v4663
    %v4665 = vpop.f32.mrf.mxu0
    %v4666 = vadd.f32 %v2271, %v4665
    %4667 = vdwg.mxu0
    %4668 = vmatprep.subr.mxu0 0.0
    %4669 = vmatpush1.msra.mxu0 0.0
    %4670 = vmatprep.subr.mxu0 0.0
    %4671 = vmatpush1.msra.mxu0 0.0
    %4672 = vmatprep.subr.mxu0 0.0
    %4673 = vmatpush1.msra.mxu0 0.0
    %4674 = vmatprep.subr.mxu0 0.0
    %4675 = vmatpush1.msra.mxu0 0.0
    %4676 = vmatprep.subr.mxu0 0.0
    %4677 = vmatpush1.msra.mxu0 0.0
    %4678 = vmatprep.subr.mxu0 0.0
    %4679 = vmatpush1.msra.mxu0 0.0
    %4680 = vmatprep.subr.mxu0 0.0
    %4681 = vmatpush1.msra.mxu0 0.0
    %4682 = vmatprep.subr.mxu0 0.0
    %4683 = vmatpush1.msra.mxu0 0.0
    %4684 = vmatprep.subr.mxu0 0.0
    %4685 = vmatpush1.msra.mxu0 0.0
    %4686 = vmatprep.subr.mxu0 0.0
    %4687 = vmatpush1.msra.mxu0 0.0
    %4688 = vmatprep.subr.mxu0 0.0
    %4689 = vmatpush1.msra.mxu0 0.0
    %4690 = vmatprep.subr.mxu0 0.0
    %4691 = vmatpush1.msra.mxu0 0.0
    %4692 = vmatprep.subr.mxu0 0.0
    %4693 = vmatpush1.msra.mxu0 0.0
    %4694 = vmatprep.subr.mxu0 0.0
    %4695 = vmatpush1.msra.mxu0 0.0
    %4696 = vmatprep.subr.mxu0 0.0
    %4697 = vmatpush1.msra.mxu0 0.0
    %4698 = vmatprep.subr.mxu0 %v251
    %4699 = vmatpush1.msra.mxu0 %v249
    %4700 = vmatprep.subr.mxu0 0.0
    %4701 = vmatpush2.msra.mxu0 0.0
    %4702 = vmatprep.subr.mxu0 0.0
    %4703 = vmatpush2.msra.mxu0 0.0
    %4704 = vmatprep.subr.mxu0 0.0
    %4705 = vmatpush2.msra.mxu0 0.0
    %4706 = vmatprep.subr.mxu0 0.0
    %4707 = vmatpush2.msra.mxu0 0.0
    %4708 = vmatprep.subr.mxu0 0.0
    %4709 = vmatpush2.msra.mxu0 0.0
    %4710 = vmatprep.subr.mxu0 0.0
    %4711 = vmatpush2.msra.mxu0 0.0
    %4712 = vmatprep.subr.mxu0 0.0
    %4713 = vmatpush2.msra.mxu0 0.0
    %4714 = vmatprep.subr.mxu0 0.0
    %4715 = vmatpush2.msra.mxu0 0.0
    %4716 = vmatprep.subr.mxu0 0.0
    %4717 = vmatpush2.msra.mxu0 0.0
    %4718 = vmatprep.subr.mxu0 0.0
    %4719 = vmatpush2.msra.mxu0 0.0
    %4720 = vmatprep.subr.mxu0 0.0
    %4721 = vmatpush2.msra.mxu0 0.0
    %4722 = vmatprep.subr.mxu0 0.0
    %4723 = vmatpush2.msra.mxu0 0.0
    %4724 = vmatprep.subr.mxu0 0.0
    %4725 = vmatpush2.msra.mxu0 0.0
    %4726 = vmatprep.subr.mxu0 0.0
    %4727 = vmatpush2.msra.mxu0 0.0
    %4728 = vmatprep.subr.mxu0 0.0
    %4729 = vmatpush2.msra.mxu0 0.0
    %4730 = vmatprep.subr.mxu0 0.0
    %4731 = vmatpush2.msra.mxu0 0.0
    %4732 = vmatprep.mubr.f32.mxu0 0.0
    %4733 = vmatmul.mubr.f32.gmra.mxu0 %v2659
    %v4734 = vpop.f32.mrf.mxu0
    %v4735 = vadd.f32 %v2340, %v4734
    %v4736 = vpop.f32.mrf.mxu0
    %v4737 = vadd.f32 %v2342, %v4736
    %4738 = vmatprep.mubr.f32.mxu0 0.0
    %4739 = vmatmul.mubr.f32.gmra.mxu0 %v2662
    %v4740 = vpop.f32.mrf.mxu0
    %v4741 = vadd.f32 %v2346, %v4740
    %v4742 = vpop.f32.mrf.mxu0
    %v4743 = vadd.f32 %v2348, %v4742
    %4744 = vdwg.mxu0
    %4745 = vmatprep.subr.mxu0 0.0
    %4746 = vmatpush1.msra.mxu0 0.0
    %4747 = vmatprep.subr.mxu0 0.0
    %4748 = vmatpush1.msra.mxu0 0.0
    %4749 = vmatprep.subr.mxu0 0.0
    %4750 = vmatpush1.msra.mxu0 0.0
    %4751 = vmatprep.subr.mxu0 0.0
    %4752 = vmatpush1.msra.mxu0 0.0
    %4753 = vmatprep.subr.mxu0 0.0
    %4754 = vmatpush1.msra.mxu0 0.0
    %4755 = vmatprep.subr.mxu0 0.0
    %4756 = vmatpush1.msra.mxu0 0.0
    %4757 = vmatprep.subr.mxu0 0.0
    %4758 = vmatpush1.msra.mxu0 0.0
    %4759 = vmatprep.subr.mxu0 0.0
    %4760 = vmatpush1.msra.mxu0 0.0
    %4761 = vmatprep.subr.mxu0 0.0
    %4762 = vmatpush1.msra.mxu0 0.0
    %4763 = vmatprep.subr.mxu0 0.0
    %4764 = vmatpush1.msra.mxu0 0.0
    %4765 = vmatprep.subr.mxu0 0.0
    %4766 = vmatpush1.msra.mxu0 0.0
    %4767 = vmatprep.subr.mxu0 0.0
    %4768 = vmatpush1.msra.mxu0 0.0
    %4769 = vmatprep.subr.mxu0 0.0
    %4770 = vmatpush1.msra.mxu0 0.0
    %4771 = vmatprep.subr.mxu0 0.0
    %4772 = vmatpush1.msra.mxu0 0.0
    %4773 = vmatprep.subr.mxu0 0.0
    %4774 = vmatpush1.msra.mxu0 0.0
    %4775 = vmatprep.subr.mxu0 %v255
    %4776 = vmatpush1.msra.mxu0 %v253
    %4777 = vmatprep.subr.mxu0 0.0
    %4778 = vmatpush2.msra.mxu0 0.0
    %4779 = vmatprep.subr.mxu0 0.0
    %4780 = vmatpush2.msra.mxu0 0.0
    %4781 = vmatprep.subr.mxu0 0.0
    %4782 = vmatpush2.msra.mxu0 0.0
    %4783 = vmatprep.subr.mxu0 0.0
    %4784 = vmatpush2.msra.mxu0 0.0
    %4785 = vmatprep.subr.mxu0 0.0
    %4786 = vmatpush2.msra.mxu0 0.0
    %4787 = vmatprep.subr.mxu0 0.0
    %4788 = vmatpush2.msra.mxu0 0.0
    %4789 = vmatprep.subr.mxu0 0.0
    %4790 = vmatpush2.msra.mxu0 0.0
    %4791 = vmatprep.subr.mxu0 0.0
    %4792 = vmatpush2.msra.mxu0 0.0
    %4793 = vmatprep.subr.mxu0 0.0
    %4794 = vmatpush2.msra.mxu0 0.0
    %4795 = vmatprep.subr.mxu0 0.0
    %4796 = vmatpush2.msra.mxu0 0.0
    %4797 = vmatprep.subr.mxu0 0.0
    %4798 = vmatpush2.msra.mxu0 0.0
    %4799 = vmatprep.subr.mxu0 0.0
    %4800 = vmatpush2.msra.mxu0 0.0
    %4801 = vmatprep.subr.mxu0 0.0
    %4802 = vmatpush2.msra.mxu0 0.0
    %4803 = vmatprep.subr.mxu0 0.0
    %4804 = vmatpush2.msra.mxu0 0.0
    %4805 = vmatprep.subr.mxu0 0.0
    %4806 = vmatpush2.msra.mxu0 0.0
    %4807 = vmatprep.subr.mxu0 0.0
    %4808 = vmatpush2.msra.mxu0 0.0
    %4809 = vmatprep.mubr.f32.mxu0 0.0
    %4810 = vmatmul.mubr.f32.gmra.mxu0 %v2659
    %v4811 = vpop.f32.mrf.mxu0
    %v4812 = vadd.f32 %v2417, %v4811
    %v4813 = vpop.f32.mrf.mxu0
    %v4814 = vadd.f32 %v2419, %v4813
    %4815 = vmatprep.mubr.f32.mxu0 0.0
    %4816 = vmatmul.mubr.f32.gmra.mxu0 %v2662
    %v4817 = vpop.f32.mrf.mxu0
    %v4818 = vadd.f32 %v2423, %v4817
    %v4819 = vpop.f32.mrf.mxu0
    %v4820 = vadd.f32 %v2425, %v4819
    %4821 = vdwg.mxu0
    %4822 = vmatprep.subr.mxu0 0.0
    %4823 = vmatpush1.msra.mxu0 0.0
    %4824 = vmatprep.subr.mxu0 0.0
    %4825 = vmatpush1.msra.mxu0 0.0
    %4826 = vmatprep.subr.mxu0 0.0
    %4827 = vmatpush1.msra.mxu0 0.0
    %4828 = vmatprep.subr.mxu0 0.0
    %4829 = vmatpush1.msra.mxu0 0.0
    %4830 = vmatprep.subr.mxu0 0.0
    %4831 = vmatpush1.msra.mxu0 0.0
    %4832 = vmatprep.subr.mxu0 0.0
    %4833 = vmatpush1.msra.mxu0 0.0
    %4834 = vmatprep.subr.mxu0 0.0
    %4835 = vmatpush1.msra.mxu0 0.0
    %4836 = vmatprep.subr.mxu0 0.0
    %4837 = vmatpush1.msra.mxu0 0.0
    %4838 = vmatprep.subr.mxu0 0.0
    %4839 = vmatpush1.msra.mxu0 0.0
    %4840 = vmatprep.subr.mxu0 0.0
    %4841 = vmatpush1.msra.mxu0 0.0
    %4842 = vmatprep.subr.mxu0 0.0
    %4843 = vmatpush1.msra.mxu0 0.0
    %4844 = vmatprep.subr.mxu0 0.0
    %4845 = vmatpush1.msra.mxu0 0.0
    %4846 = vmatprep.subr.mxu0 0.0
    %4847 = vmatpush1.msra.mxu0 0.0
    %4848 = vmatprep.subr.mxu0 0.0
    %4849 = vmatpush1.msra.mxu0 0.0
    %4850 = vmatprep.subr.mxu0 0.0
    %4851 = vmatpush1.msra.mxu0 0.0
    %4852 = vmatprep.subr.mxu0 %v259
    %4853 = vmatpush1.msra.mxu0 %v257
    %4854 = vmatprep.subr.mxu0 0.0
    %4855 = vmatpush2.msra.mxu0 0.0
    %4856 = vmatprep.subr.mxu0 0.0
    %4857 = vmatpush2.msra.mxu0 0.0
    %4858 = vmatprep.subr.mxu0 0.0
    %4859 = vmatpush2.msra.mxu0 0.0
    %4860 = vmatprep.subr.mxu0 0.0
    %4861 = vmatpush2.msra.mxu0 0.0
    %4862 = vmatprep.subr.mxu0 0.0
    %4863 = vmatpush2.msra.mxu0 0.0
    %4864 = vmatprep.subr.mxu0 0.0
    %4865 = vmatpush2.msra.mxu0 0.0
    %4866 = vmatprep.subr.mxu0 0.0
    %4867 = vmatpush2.msra.mxu0 0.0
    %4868 = vmatprep.subr.mxu0 0.0
    %4869 = vmatpush2.msra.mxu0 0.0
    %4870 = vmatprep.subr.mxu0 0.0
    %4871 = vmatpush2.msra.mxu0 0.0
    %4872 = vmatprep.subr.mxu0 0.0
    %4873 = vmatpush2.msra.mxu0 0.0
    %4874 = vmatprep.subr.mxu0 0.0
    %4875 = vmatpush2.msra.mxu0 0.0
    %4876 = vmatprep.subr.mxu0 0.0
    %4877 = vmatpush2.msra.mxu0 0.0
    %4878 = vmatprep.subr.mxu0 0.0
    %4879 = vmatpush2.msra.mxu0 0.0
    %4880 = vmatprep.subr.mxu0 0.0
    %4881 = vmatpush2.msra.mxu0 0.0
    %4882 = vmatprep.subr.mxu0 0.0
    %4883 = vmatpush2.msra.mxu0 0.0
    %4884 = vmatprep.subr.mxu0 0.0
    %4885 = vmatpush2.msra.mxu0 0.0
    %4886 = vmatprep.mubr.f32.mxu0 0.0
    %4887 = vmatmul.mubr.f32.gmra.mxu0 %v2659
    %v4888 = vpop.f32.mrf.mxu0
    %v4889 = vadd.f32 %v2494, %v4888
    %v4890 = vpop.f32.mrf.mxu0
    %v4891 = vadd.f32 %v2496, %v4890
    %4892 = vmatprep.mubr.f32.mxu0 0.0
    %4893 = vmatmul.mubr.f32.gmra.mxu0 %v2662
    %v4894 = vpop.f32.mrf.mxu0
    %v4895 = vadd.f32 %v2500, %v4894
    %v4896 = vpop.f32.mrf.mxu0
    %v4897 = vadd.f32 %v2502, %v4896
    %4898 = vdwg.mxu0
    %4899 = vmatprep.subr.mxu0 0.0
    %4900 = vmatpush1.msra.mxu0 0.0
    %4901 = vmatprep.subr.mxu0 0.0
    %4902 = vmatpush1.msra.mxu0 0.0
    %4903 = vmatprep.subr.mxu0 0.0
    %4904 = vmatpush1.msra.mxu0 0.0
    %4905 = vmatprep.subr.mxu0 0.0
    %4906 = vmatpush1.msra.mxu0 0.0
    %4907 = vmatprep.subr.mxu0 0.0
    %4908 = vmatpush1.msra.mxu0 0.0
    %4909 = vmatprep.subr.mxu0 0.0
    %4910 = vmatpush1.msra.mxu0 0.0
    %4911 = vmatprep.subr.mxu0 0.0
    %4912 = vmatpush1.msra.mxu0 0.0
    %4913 = vmatprep.subr.mxu0 0.0
    %4914 = vmatpush1.msra.mxu0 0.0
    %4915 = vmatprep.subr.mxu0 0.0
    %4916 = vmatpush1.msra.mxu0 0.0
    %4917 = vmatprep.subr.mxu0 0.0
    %4918 = vmatpush1.msra.mxu0 0.0
    %4919 = vmatprep.subr.mxu0 0.0
    %4920 = vmatpush1.msra.mxu0 0.0
    %4921 = vmatprep.subr.mxu0 0.0
    %4922 = vmatpush1.msra.mxu0 0.0
    %4923 = vmatprep.subr.mxu0 0.0
    %4924 = vmatpush1.msra.mxu0 0.0
    %4925 = vmatprep.subr.mxu0 0.0
    %4926 = vmatpush1.msra.mxu0 0.0
    %4927 = vmatprep.subr.mxu0 0.0
    %4928 = vmatpush1.msra.mxu0 0.0
    %4929 = vmatprep.subr.mxu0 %v263
    %4930 = vmatpush1.msra.mxu0 %v261
    %4931 = vmatprep.subr.mxu0 0.0
    %4932 = vmatpush2.msra.mxu0 0.0
    %4933 = vmatprep.subr.mxu0 0.0
    %4934 = vmatpush2.msra.mxu0 0.0
    %4935 = vmatprep.subr.mxu0 0.0
    %4936 = vmatpush2.msra.mxu0 0.0
    %4937 = vmatprep.subr.mxu0 0.0
    %4938 = vmatpush2.msra.mxu0 0.0
    %4939 = vmatprep.subr.mxu0 0.0
    %4940 = vmatpush2.msra.mxu0 0.0
    %4941 = vmatprep.subr.mxu0 0.0
    %4942 = vmatpush2.msra.mxu0 0.0
    %4943 = vmatprep.subr.mxu0 0.0
    %4944 = vmatpush2.msra.mxu0 0.0
    %4945 = vmatprep.subr.mxu0 0.0
    %4946 = vmatpush2.msra.mxu0 0.0
    %4947 = vmatprep.subr.mxu0 0.0
    %4948 = vmatpush2.msra.mxu0 0.0
    %4949 = vmatprep.subr.mxu0 0.0
    %4950 = vmatpush2.msra.mxu0 0.0
    %4951 = vmatprep.subr.mxu0 0.0
    %4952 = vmatpush2.msra.mxu0 0.0
    %4953 = vmatprep.subr.mxu0 0.0
    %4954 = vmatpush2.msra.mxu0 0.0
    %4955 = vmatprep.subr.mxu0 0.0
    %4956 = vmatpush2.msra.mxu0 0.0
    %4957 = vmatprep.subr.mxu0 0.0
    %4958 = vmatpush2.msra.mxu0 0.0
    %4959 = vmatprep.subr.mxu0 0.0
    %4960 = vmatpush2.msra.mxu0 0.0
    %4961 = vmatprep.subr.mxu0 0.0
    %4962 = vmatpush2.msra.mxu0 0.0
    %4963 = vmatprep.mubr.f32.mxu0 0.0
    %4964 = vmatmul.mubr.f32.gmra.mxu0 %v2659
    %v4965 = vpop.f32.mrf.mxu0
    %v4966 = vadd.f32 %v2571, %v4965
    %v4967 = vpop.f32.mrf.mxu0
    %v4968 = vadd.f32 %v2573, %v4967
    %4969 = vmatprep.mubr.f32.mxu0 0.0
    %4970 = vmatmul.mubr.f32.gmra.mxu0 %v2662
    %v4971 = vpop.f32.mrf.mxu0
    %v4972 = vadd.f32 %v2577, %v4971
    %v4973 = vpop.f32.mrf.mxu0
    %v4974 = vadd.f32 %v2579, %v4973
    %4975 = vdwg.mxu0
    %4976 = vmatprep.subr.mxu0 0.0
    %4977 = vmatpush1.msra.mxu0 0.0
    %4978 = vmatprep.subr.mxu0 0.0
    %4979 = vmatpush1.msra.mxu0 0.0
    %4980 = vmatprep.subr.mxu0 0.0
    %4981 = vmatpush1.msra.mxu0 0.0
    %4982 = vmatprep.subr.mxu0 0.0
    %4983 = vmatpush1.msra.mxu0 0.0
    %4984 = vmatprep.subr.mxu0 0.0
    %4985 = vmatpush1.msra.mxu0 0.0
    %4986 = vmatprep.subr.mxu0 0.0
    %4987 = vmatpush1.msra.mxu0 0.0
    %4988 = vmatprep.subr.mxu0 0.0
    %4989 = vmatpush1.msra.mxu0 0.0
    %4990 = vmatprep.subr.mxu0 0.0
    %4991 = vmatpush1.msra.mxu0 0.0
    %4992 = vmatprep.subr.mxu0 0.0
    %4993 = vmatpush1.msra.mxu0 0.0
    %4994 = vmatprep.subr.mxu0 0.0
    %4995 = vmatpush1.msra.mxu0 0.0
    %4996 = vmatprep.subr.mxu0 0.0
    %4997 = vmatpush1.msra.mxu0 0.0
    %4998 = vmatprep.subr.mxu0 0.0
    %4999 = vmatpush1.msra.mxu0 0.0
    %5000 = vmatprep.subr.mxu0 0.0
    %5001 = vmatpush1.msra.mxu0 0.0
    %5002 = vmatprep.subr.mxu0 0.0
    %5003 = vmatpush1.msra.mxu0 0.0
    %5004 = vmatprep.subr.mxu0 0.0
    %5005 = vmatpush1.msra.mxu0 0.0
    %5006 = vmatprep.subr.mxu0 %v267
    %5007 = vmatpush1.msra.mxu0 %v265
    %5008 = vmatprep.subr.mxu0 0.0
    %5009 = vmatpush2.msra.mxu0 0.0
    %5010 = vmatprep.subr.mxu0 0.0
    %5011 = vmatpush2.msra.mxu0 0.0
    %5012 = vmatprep.subr.mxu0 0.0
    %5013 = vmatpush2.msra.mxu0 0.0
    %5014 = vmatprep.subr.mxu0 0.0
    %5015 = vmatpush2.msra.mxu0 0.0
    %5016 = vmatprep.subr.mxu0 0.0
    %5017 = vmatpush2.msra.mxu0 0.0
    %5018 = vmatprep.subr.mxu0 0.0
    %5019 = vmatpush2.msra.mxu0 0.0
    %5020 = vmatprep.subr.mxu0 0.0
    %5021 = vmatpush2.msra.mxu0 0.0
    %5022 = vmatprep.subr.mxu0 0.0
    %5023 = vmatpush2.msra.mxu0 0.0
    %5024 = vmatprep.subr.mxu0 0.0
    %5025 = vmatpush2.msra.mxu0 0.0
    %5026 = vmatprep.subr.mxu0 0.0
    %5027 = vmatpush2.msra.mxu0 0.0
    %5028 = vmatprep.subr.mxu0 0.0
    %5029 = vmatpush2.msra.mxu0 0.0
    %5030 = vmatprep.subr.mxu0 0.0
    %5031 = vmatpush2.msra.mxu0 0.0
    %5032 = vmatprep.subr.mxu0 0.0
    %5033 = vmatpush2.msra.mxu0 0.0
    %5034 = vmatprep.subr.mxu0 0.0
    %5035 = vmatpush2.msra.mxu0 0.0
    %5036 = vmatprep.subr.mxu0 0.0
    %5037 = vmatpush2.msra.mxu0 0.0
    %5038 = vmatprep.subr.mxu0 0.0
    %5039 = vmatpush2.msra.mxu0 0.0
    %5040 = vmatprep.mubr.f32.mxu0 0.0
    %5041 = vmatmul.mubr.f32.gmra.mxu0 %v2659
    %v5042 = vpop.f32.mrf.mxu0
    %v5043 = vadd.f32 %v2648, %v5042
    %v5044 = vpop.f32.mrf.mxu0
    %v5045 = vadd.f32 %v2650, %v5044
    %5046 = vmatprep.mubr.f32.mxu0 0.0
    %5047 = vmatmul.mubr.f32.gmra.mxu0 %v2662
    %v5048 = vpop.f32.mrf.mxu0
    %v5049 = vadd.f32 %v2654, %v5048
    %v5050 = vpop.f32.mrf.mxu0
    %v5051 = vadd.f32 %v2656, %v5050
    %5052 = vdwg.mxu0
    %5054 = vset.pattern.permute.xlu0 0
    %5055 = vperm.xlu0 %5054, %v74
    %v5056 = vpop.permute.xlu0 %5055
    %5059 = vset.pattern.permute.xlu0 0
    %5060 = vperm.xlu0 %5059, %v75
    %v5061 = vpop.permute.xlu0 %5060
    %v5063 = vadd.f32 %v2733, %v5056
    %v5064 = vadd.f32 %v2735, %v5056
    %v5065 = vadd.f32 %v2810, %v5056
    %v5066 = vadd.f32 %v2812, %v5056
    %v5067 = vadd.f32 %v2887, %v5056
    %v5068 = vadd.f32 %v2889, %v5056
    %v5069 = vadd.f32 %v2964, %v5056
    %v5070 = vadd.f32 %v2966, %v5056
    %v5071 = vadd.f32 %v3041, %v5056
    %v5072 = vadd.f32 %v3043, %v5056
    %v5073 = vadd.f32 %v3118, %v5056
    %v5074 = vadd.f32 %v3120, %v5056
    %v5075 = vadd.f32 %v3195, %v5056
    %v5076 = vadd.f32 %v3197, %v5056
    %v5077 = vadd.f32 %v3272, %v5056
    %v5078 = vadd.f32 %v3274, %v5056
    %v5079 = vadd.f32 %v3349, %v5056
    %v5080 = vadd.f32 %v3351, %v5056
    %v5081 = vadd.f32 %v3426, %v5056
    %v5082 = vadd.f32 %v3428, %v5056
    %v5083 = vadd.f32 %v3503, %v5056
    %v5084 = vadd.f32 %v3505, %v5056
    %v5085 = vadd.f32 %v3580, %v5056
    %v5086 = vadd.f32 %v3582, %v5056
    %v5087 = vadd.f32 %v3657, %v5056
    %v5088 = vadd.f32 %v3659, %v5056
    %v5089 = vadd.f32 %v3734, %v5056
    %v5090 = vadd.f32 %v3736, %v5056
    %v5091 = vadd.f32 %v3811, %v5056
    %v5092 = vadd.f32 %v3813, %v5056
    %v5093 = vadd.f32 %v3888, %v5056
    %v5094 = vadd.f32 %v3890, %v5056
    %v5095 = vadd.f32 %v3965, %v5056
    %v5096 = vadd.f32 %v3967, %v5056
    %v5097 = vadd.f32 %v4042, %v5056
    %v5098 = vadd.f32 %v4044, %v5056
    %v5099 = vadd.f32 %v4119, %v5056
    %v5100 = vadd.f32 %v4121, %v5056
    %v5101 = vadd.f32 %v4196, %v5056
    %v5102 = vadd.f32 %v4198, %v5056
    %v5103 = vadd.f32 %v4273, %v5056
    %v5104 = vadd.f32 %v4275, %v5056
    %v5105 = vadd.f32 %v4350, %v5056
    %v5106 = vadd.f32 %v4352, %v5056
    %v5107 = vadd.f32 %v4427, %v5056
    %v5108 = vadd.f32 %v4429, %v5056
    %v5109 = vadd.f32 %v4504, %v5056
    %v5110 = vadd.f32 %v4506, %v5056
    %v5111 = vadd.f32 %v4581, %v5056
    %v5112 = vadd.f32 %v4583, %v5056
    %v5113 = vadd.f32 %v4658, %v5056
    %v5114 = vadd.f32 %v4660, %v5056
    %v5115 = vadd.f32 %v4735, %v5056
    %v5116 = vadd.f32 %v4737, %v5056
    %v5117 = vadd.f32 %v4812, %v5056
    %v5118 = vadd.f32 %v4814, %v5056
    %v5119 = vadd.f32 %v4889, %v5056
    %v5120 = vadd.f32 %v4891, %v5056
    %v5121 = vadd.f32 %v4966, %v5056
    %v5122 = vadd.f32 %v4968, %v5056
    %v5123 = vadd.f32 %v5043, %v5056
    %v5124 = vadd.f32 %v5045, %v5056
    %v5125 = vadd.f32 %v2739, %v5061
    %v5126 = vadd.f32 %v2741, %v5061
    %v5127 = vadd.f32 %v2816, %v5061
    %v5128 = vadd.f32 %v2818, %v5061
    %v5129 = vadd.f32 %v2893, %v5061
    %v5130 = vadd.f32 %v2895, %v5061
    %v5131 = vadd.f32 %v2970, %v5061
    %v5132 = vadd.f32 %v2972, %v5061
    %v5133 = vadd.f32 %v3047, %v5061
    %v5134 = vadd.f32 %v3049, %v5061
    %v5135 = vadd.f32 %v3124, %v5061
    %v5136 = vadd.f32 %v3126, %v5061
    %v5137 = vadd.f32 %v3201, %v5061
    %v5138 = vadd.f32 %v3203, %v5061
    %v5139 = vadd.f32 %v3278, %v5061
    %v5140 = vadd.f32 %v3280, %v5061
    %v5141 = vadd.f32 %v3355, %v5061
    %v5142 = vadd.f32 %v3357, %v5061
    %v5143 = vadd.f32 %v3432, %v5061
    %v5144 = vadd.f32 %v3434, %v5061
    %v5145 = vadd.f32 %v3509, %v5061
    %v5146 = vadd.f32 %v3511, %v5061
    %v5147 = vadd.f32 %v3586, %v5061
    %v5148 = vadd.f32 %v3588, %v5061
    %v5149 = vadd.f32 %v3663, %v5061
    %v5150 = vadd.f32 %v3665, %v5061
    %v5151 = vadd.f32 %v3740, %v5061
    %v5152 = vadd.f32 %v3742, %v5061
    %v5153 = vadd.f32 %v3817, %v5061
    %v5154 = vadd.f32 %v3819, %v5061
    %v5155 = vadd.f32 %v3894, %v5061
    %v5156 = vadd.f32 %v3896, %v5061
    %v5157 = vadd.f32 %v3971, %v5061
    %v5158 = vadd.f32 %v3973, %v5061
    %v5159 = vadd.f32 %v4048, %v5061
    %v5160 = vadd.f32 %v4050, %v5061
    %v5161 = vadd.f32 %v4125, %v5061
    %v5162 = vadd.f32 %v4127, %v5061
    %v5163 = vadd.f32 %v4202, %v5061
    %v5164 = vadd.f32 %v4204, %v5061
    %v5165 = vadd.f32 %v4279, %v5061
    %v5166 = vadd.f32 %v4281, %v5061
    %v5167 = vadd.f32 %v4356, %v5061
    %v5168 = vadd.f32 %v4358, %v5061
    %v5169 = vadd.f32 %v4433, %v5061
    %v5170 = vadd.f32 %v4435, %v5061
    %v5171 = vadd.f32 %v4510, %v5061
    %v5172 = vadd.f32 %v4512, %v5061
    %v5173 = vadd.f32 %v4587, %v5061
    %v5174 = vadd.f32 %v4589, %v5061
    %v5175 = vadd.f32 %v4664, %v5061
    %v5176 = vadd.f32 %v4666, %v5061
    %v5177 = vadd.f32 %v4741, %v5061
    %v5178 = vadd.f32 %v4743, %v5061
    %v5179 = vadd.f32 %v4818, %v5061
    %v5180 = vadd.f32 %v4820, %v5061
    %v5181 = vadd.f32 %v4895, %v5061
    %v5182 = vadd.f32 %v4897, %v5061
    %v5183 = vadd.f32 %v4972, %v5061
    %v5184 = vadd.f32 %v4974, %v5061
    %v5185 = vadd.f32 %v5049, %v5061
    %v5186 = vadd.f32 %v5051, %v5061
    %v5187 = vmax.f32 %v5063, 0.0
    %v5188 = vmax.f32 %v5064, 0.0
    %v5189 = vmax.f32 %v5065, 0.0
    %v5190 = vmax.f32 %v5066, 0.0
    %v5191 = vmax.f32 %v5067, 0.0
    %v5192 = vmax.f32 %v5068, 0.0
    %v5193 = vmax.f32 %v5069, 0.0
    %v5194 = vmax.f32 %v5070, 0.0
    %v5195 = vmax.f32 %v5071, 0.0
    %v5196 = vmax.f32 %v5072, 0.0
    %v5197 = vmax.f32 %v5073, 0.0
    %v5198 = vmax.f32 %v5074, 0.0
    %v5199 = vmax.f32 %v5075, 0.0
    %v5200 = vmax.f32 %v5076, 0.0
    %v5201 = vmax.f32 %v5077, 0.0
    %v5202 = vmax.f32 %v5078, 0.0
    %v5203 = vmax.f32 %v5079, 0.0
    %v5204 = vmax.f32 %v5080, 0.0
    %v5205 = vmax.f32 %v5081, 0.0
    %v5206 = vmax.f32 %v5082, 0.0
    %v5207 = vmax.f32 %v5083, 0.0
    %v5208 = vmax.f32 %v5084, 0.0
    %v5209 = vmax.f32 %v5085, 0.0
    %v5210 = vmax.f32 %v5086, 0.0
    %v5211 = vmax.f32 %v5087, 0.0
    %v5212 = vmax.f32 %v5088, 0.0
    %v5213 = vmax.f32 %v5089, 0.0
    %v5214 = vmax.f32 %v5090, 0.0
    %v5215 = vmax.f32 %v5091, 0.0
    %v5216 = vmax.f32 %v5092, 0.0
    %v5217 = vmax.f32 %v5093, 0.0
    %v5218 = vmax.f32 %v5094, 0.0
    %v5219 = vmax.f32 %v5095, 0.0
    %v5220 = vmax.f32 %v5096, 0.0
    %v5221 = vmax.f32 %v5097, 0.0
    %v5222 = vmax.f32 %v5098, 0.0
    %v5223 = vmax.f32 %v5099, 0.0
    %v5224 = vmax.f32 %v5100, 0.0
    %v5225 = vmax.f32 %v5101, 0.0
    %v5226 = vmax.f32 %v5102, 0.0
    %v5227 = vmax.f32 %v5103, 0.0
    %v5228 = vmax.f32 %v5104, 0.0
    %v5229 = vmax.f32 %v5105, 0.0
    %v5230 = vmax.f32 %v5106, 0.0
    %v5231 = vmax.f32 %v5107, 0.0
    %v5232 = vmax.f32 %v5108, 0.0
    %v5233 = vmax.f32 %v5109, 0.0
    %v5234 = vmax.f32 %v5110, 0.0
    %v5235 = vmax.f32 %v5111, 0.0
    %v5236 = vmax.f32 %v5112, 0.0
    %v5237 = vmax.f32 %v5113, 0.0
    %v5238 = vmax.f32 %v5114, 0.0
    %v5239 = vmax.f32 %v5115, 0.0
    %v5240 = vmax.f32 %v5116, 0.0
    %v5241 = vmax.f32 %v5117, 0.0
    %v5242 = vmax.f32 %v5118, 0.0
    %v5243 = vmax.f32 %v5119, 0.0
    %v5244 = vmax.f32 %v5120, 0.0
    %v5245 = vmax.f32 %v5121, 0.0
    %v5246 = vmax.f32 %v5122, 0.0
    %v5247 = vmax.f32 %v5123, 0.0
    %v5248 = vmax.f32 %v5124, 0.0
    %v5249 = vmax.f32 %v5125, 0.0
    %v5250 = vmax.f32 %v5126, 0.0
    %v5251 = vmax.f32 %v5127, 0.0
    %v5252 = vmax.f32 %v5128, 0.0
    %v5253 = vmax.f32 %v5129, 0.0
    %v5254 = vmax.f32 %v5130, 0.0
    %v5255 = vmax.f32 %v5131, 0.0
    %v5256 = vmax.f32 %v5132, 0.0
    %v5257 = vmax.f32 %v5133, 0.0
    %v5258 = vmax.f32 %v5134, 0.0
    %v5259 = vmax.f32 %v5135, 0.0
    %v5260 = vmax.f32 %v5136, 0.0
    %v5261 = vmax.f32 %v5137, 0.0
    %v5262 = vmax.f32 %v5138, 0.0
    %v5263 = vmax.f32 %v5139, 0.0
    %v5264 = vmax.f32 %v5140, 0.0
    %v5265 = vmax.f32 %v5141, 0.0
    %v5266 = vmax.f32 %v5142, 0.0
    %v5267 = vmax.f32 %v5143, 0.0
    %v5268 = vmax.f32 %v5144, 0.0
    %v5269 = vmax.f32 %v5145, 0.0
    %v5270 = vmax.f32 %v5146, 0.0
    %v5271 = vmax.f32 %v5147, 0.0
    %v5272 = vmax.f32 %v5148, 0.0
    %v5273 = vmax.f32 %v5149, 0.0
    %v5274 = vmax.f32 %v5150, 0.0
    %v5275 = vmax.f32 %v5151, 0.0
    %v5276 = vmax.f32 %v5152, 0.0
    %v5277 = vmax.f32 %v5153, 0.0
    %v5278 = vmax.f32 %v5154, 0.0
    %v5279 = vmax.f32 %v5155, 0.0
    %v5280 = vmax.f32 %v5156, 0.0
    %v5281 = vmax.f32 %v5157, 0.0
    %v5282 = vmax.f32 %v5158, 0.0
    %v5283 = vmax.f32 %v5159, 0.0
    %v5284 = vmax.f32 %v5160, 0.0
    %v5285 = vmax.f32 %v5161, 0.0
    %v5286 = vmax.f32 %v5162, 0.0
    %v5287 = vmax.f32 %v5163, 0.0
    %v5288 = vmax.f32 %v5164, 0.0
    %v5289 = vmax.f32 %v5165, 0.0
    %v5290 = vmax.f32 %v5166, 0.0
    %v5291 = vmax.f32 %v5167, 0.0
    %v5292 = vmax.f32 %v5168, 0.0
    %v5293 = vmax.f32 %v5169, 0.0
    %v5294 = vmax.f32 %v5170, 0.0
    %v5295 = vmax.f32 %v5171, 0.0
    %v5296 = vmax.f32 %v5172, 0.0
    %v5297 = vmax.f32 %v5173, 0.0
    %v5298 = vmax.f32 %v5174, 0.0
    %v5299 = vmax.f32 %v5175, 0.0
    %v5300 = vmax.f32 %v5176, 0.0
    %v5301 = vmax.f32 %v5177, 0.0
    %v5302 = vmax.f32 %v5178, 0.0
    %v5303 = vmax.f32 %v5179, 0.0
    %v5304 = vmax.f32 %v5180, 0.0
    %v5305 = vmax.f32 %v5181, 0.0
    %v5306 = vmax.f32 %v5182, 0.0
    %v5307 = vmax.f32 %v5183, 0.0
    %v5308 = vmax.f32 %v5184, 0.0
    %v5309 = vmax.f32 %v5185, 0.0
    %v5310 = vmax.f32 %v5186, 0.0
    %v5311 = vadd.f32 %v5187, %v5188
    %v5312 = vadd.f32 %v5249, %v5250
    %v5313 = vadd.f32 %v5189, %v5190
    %v5314 = vadd.f32 %v5251, %v5252
    %v5315 = vadd.f32 %v5191, %v5192
    %v5316 = vadd.f32 %v5253, %v5254
    %v5317 = vadd.f32 %v5193, %v5194
    %v5318 = vadd.f32 %v5255, %v5256
    %v5319 = vadd.f32 %v5195, %v5196
    %v5320 = vadd.f32 %v5257, %v5258
    %v5321 = vadd.f32 %v5197, %v5198
    %v5322 = vadd.f32 %v5259, %v5260
    %v5323 = vadd.f32 %v5199, %v5200
    %v5324 = vadd.f32 %v5261, %v5262
    %v5325 = vadd.f32 %v5201, %v5202
    %v5326 = vadd.f32 %v5263, %v5264
    %v5327 = vadd.f32 %v5203, %v5204
    %v5328 = vadd.f32 %v5265, %v5266
    %v5329 = vadd.f32 %v5205, %v5206
    %v5330 = vadd.f32 %v5267, %v5268
    %v5331 = vadd.f32 %v5207, %v5208
    %v5332 = vadd.f32 %v5269, %v5270
    %v5333 = vadd.f32 %v5209, %v5210
    %v5334 = vadd.f32 %v5271, %v5272
    %v5335 = vadd.f32 %v5211, %v5212
    %v5336 = vadd.f32 %v5273, %v5274
    %v5337 = vadd.f32 %v5213, %v5214
    %v5338 = vadd.f32 %v5275, %v5276
    %v5339 = vadd.f32 %v5215, %v5216
    %v5340 = vadd.f32 %v5277, %v5278
    %v5341 = vadd.f32 %v5217, %v5218
    %v5342 = vadd.f32 %v5279, %v5280
    %v5343 = vadd.f32 %v5219, %v5220
    %v5344 = vadd.f32 %v5281, %v5282
    %v5345 = vadd.f32 %v5221, %v5222
    %v5346 = vadd.f32 %v5283, %v5284
    %v5347 = vadd.f32 %v5223, %v5224
    %v5348 = vadd.f32 %v5285, %v5286
    %v5349 = vadd.f32 %v5225, %v5226
    %v5350 = vadd.f32 %v5287, %v5288
    %v5351 = vadd.f32 %v5227, %v5228
    %v5352 = vadd.f32 %v5289, %v5290
    %v5353 = vadd.f32 %v5229, %v5230
    %v5354 = vadd.f32 %v5291, %v5292
    %v5355 = vadd.f32 %v5231, %v5232
    %v5356 = vadd.f32 %v5293, %v5294
    %v5357 = vadd.f32 %v5233, %v5234
    %v5358 = vadd.f32 %v5295, %v5296
    %v5359 = vadd.f32 %v5235, %v5236
    %v5360 = vadd.f32 %v5297, %v5298
    %v5361 = vadd.f32 %v5237, %v5238
    %v5362 = vadd.f32 %v5299, %v5300
    %v5363 = vadd.f32 %v5239, %v5240
    %v5364 = vadd.f32 %v5301, %v5302
    %v5365 = vadd.f32 %v5241, %v5242
    %v5366 = vadd.f32 %v5303, %v5304
    %v5367 = vadd.f32 %v5243, %v5244
    %v5368 = vadd.f32 %v5305, %v5306
    %v5369 = vadd.f32 %v5245, %v5246
    %v5370 = vadd.f32 %v5307, %v5308
    %v5371 = vadd.f32 %v5247, %v5248
    %v5372 = vadd.f32 %v5309, %v5310
    %v5373 = vld [vmem:[#allocation5 + $0x30] sm:$0xff]
    %v5374 = vld [vmem:[#allocation5 + $0x38] sm:$0xff]
    %v5375 = vld [vmem:[#allocation5 + $0x40] sm:$0xff]
    %v5376 = vld [vmem:[#allocation5 + $0x48] sm:$0xff]
    %v5377 = vld [vmem:[#allocation5 + $0x50] sm:$0xff]
    %v5378 = vld [vmem:[#allocation5 + $0x58] sm:$0xff]
    %vm5379 = vcmask 130048
    %v5381 = vsel %vm5379, %v5375, 0
    %v5384 = vsel %vm5379, %v5376, 0
    %5386 = vmatprep.subr.mxu0 0.0
    %5387 = vmatpush1.msra.mxu0 0.0
    %5388 = vmatprep.subr.mxu0 0.0
    %5389 = vmatpush1.msra.mxu0 0.0
    %5390 = vmatprep.subr.mxu0 0.0
    %5391 = vmatpush1.msra.mxu0 0.0
    %5392 = vmatprep.subr.mxu0 0.0
    %5393 = vmatpush1.msra.mxu0 0.0
    %5394 = vmatprep.subr.mxu0 0.0
    %5395 = vmatpush1.msra.mxu0 0.0
    %5396 = vmatprep.subr.mxu0 0.0
    %5397 = vmatpush1.msra.mxu0 0.0
    %5398 = vmatprep.subr.mxu0 0.0
    %5399 = vmatpush1.msra.mxu0 0.0
    %5400 = vmatprep.subr.mxu0 0.0
    %5401 = vmatpush1.msra.mxu0 0.0
    %5402 = vmatprep.subr.mxu0 0.0
    %5403 = vmatpush1.msra.mxu0 0.0
    %5404 = vmatprep.subr.mxu0 0.0
    %5405 = vmatpush1.msra.mxu0 0.0
    %5406 = vmatprep.subr.mxu0 0.0
    %5407 = vmatpush1.msra.mxu0 0.0
    %5408 = vmatprep.subr.mxu0 0.0
    %5409 = vmatpush1.msra.mxu0 0.0
    %5410 = vmatprep.subr.mxu0 0.0
    %5411 = vmatpush1.msra.mxu0 0.0
    %5412 = vmatprep.subr.mxu0 0.0
    %5413 = vmatpush1.msra.mxu0 0.0
    %5414 = vmatprep.subr.mxu0 %v5316
    %5415 = vmatpush1.msra.mxu0 %v5314
    %5416 = vmatprep.subr.mxu0 %v5315
    %5417 = vmatpush1.msra.mxu0 %v5313
    %5418 = vmatprep.subr.mxu0 0.0
    %5419 = vmatpush2.msra.mxu0 0.0
    %5420 = vmatprep.subr.mxu0 0.0
    %5421 = vmatpush2.msra.mxu0 0.0
    %5422 = vmatprep.subr.mxu0 0.0
    %5423 = vmatpush2.msra.mxu0 0.0
    %5424 = vmatprep.subr.mxu0 0.0
    %5425 = vmatpush2.msra.mxu0 0.0
    %5426 = vmatprep.subr.mxu0 0.0
    %5427 = vmatpush2.msra.mxu0 0.0
    %5428 = vmatprep.subr.mxu0 0.0
    %5429 = vmatpush2.msra.mxu0 0.0
    %5430 = vmatprep.subr.mxu0 0.0
    %5431 = vmatpush2.msra.mxu0 0.0
    %5432 = vmatprep.subr.mxu0 0.0
    %5433 = vmatpush2.msra.mxu0 0.0
    %5434 = vmatprep.subr.mxu0 0.0
    %5435 = vmatpush2.msra.mxu0 0.0
    %5436 = vmatprep.subr.mxu0 0.0
    %5437 = vmatpush2.msra.mxu0 0.0
    %5438 = vmatprep.subr.mxu0 0.0
    %5439 = vmatpush2.msra.mxu0 0.0
    %5440 = vmatprep.subr.mxu0 0.0
    %5441 = vmatpush2.msra.mxu0 0.0
    %5442 = vmatprep.subr.mxu0 0.0
    %5443 = vmatpush2.msra.mxu0 0.0
    %5444 = vmatprep.subr.mxu0 0.0
    %5445 = vmatpush2.msra.mxu0 0.0
    %5446 = vmatprep.subr.mxu0 0.0
    %5447 = vmatpush2.msra.mxu0 0.0
    %5448 = vmatprep.subr.mxu0 0.0
    %5449 = vmatpush2.msra.mxu0 0.0
    %5450 = vmatprep.mubr.f32.mxu0 0.0
    %5451 = vmatmul.mubr.f32.gmra.mxu0 %v5381
    %v5452 = vpop.f32.mrf.mxu0
    %v5453 = vadd.f32 0.0, %v5452
    %v5454 = vpop.f32.mrf.mxu0
    %v5455 = vadd.f32 0.0, %v5454
    %5456 = vmatprep.mubr.f32.mxu0 0.0
    %5457 = vmatmul.mubr.f32.gmra.mxu0 %v5384
    %v5458 = vpop.f32.mrf.mxu0
    %v5459 = vadd.f32 0.0, %v5458
    %v5460 = vpop.f32.mrf.mxu0
    %v5461 = vadd.f32 0.0, %v5460
    %5462 = vdwg.mxu0
    %5463 = vmatprep.subr.mxu0 0.0
    %5464 = vmatpush1.msra.mxu0 0.0
    %5465 = vmatprep.subr.mxu0 0.0
    %5466 = vmatpush1.msra.mxu0 0.0
    %5467 = vmatprep.subr.mxu0 0.0
    %5468 = vmatpush1.msra.mxu0 0.0
    %5469 = vmatprep.subr.mxu0 0.0
    %5470 = vmatpush1.msra.mxu0 0.0
    %5471 = vmatprep.subr.mxu0 0.0
    %5472 = vmatpush1.msra.mxu0 0.0
    %5473 = vmatprep.subr.mxu0 0.0
    %5474 = vmatpush1.msra.mxu0 0.0
    %5475 = vmatprep.subr.mxu0 0.0
    %5476 = vmatpush1.msra.mxu0 0.0
    %5477 = vmatprep.subr.mxu0 0.0
    %5478 = vmatpush1.msra.mxu0 0.0
    %5479 = vmatprep.subr.mxu0 0.0
    %5480 = vmatpush1.msra.mxu0 0.0
    %5481 = vmatprep.subr.mxu0 0.0
    %5482 = vmatpush1.msra.mxu0 0.0
    %5483 = vmatprep.subr.mxu0 0.0
    %5484 = vmatpush1.msra.mxu0 0.0
    %5485 = vmatprep.subr.mxu0 0.0
    %5486 = vmatpush1.msra.mxu0 0.0
    %5487 = vmatprep.subr.mxu0 0.0
    %5488 = vmatpush1.msra.mxu0 0.0
    %5489 = vmatprep.subr.mxu0 0.0
    %5490 = vmatpush1.msra.mxu0 0.0
    %5491 = vmatprep.subr.mxu0 %v5320
    %5492 = vmatpush1.msra.mxu0 %v5318
    %5493 = vmatprep.subr.mxu0 %v5319
    %5494 = vmatpush1.msra.mxu0 %v5317
    %5495 = vmatprep.subr.mxu0 0.0
    %5496 = vmatpush2.msra.mxu0 0.0
    %5497 = vmatprep.subr.mxu0 0.0
    %5498 = vmatpush2.msra.mxu0 0.0
    %5499 = vmatprep.subr.mxu0 0.0
    %5500 = vmatpush2.msra.mxu0 0.0
    %5501 = vmatprep.subr.mxu0 0.0
    %5502 = vmatpush2.msra.mxu0 0.0
    %5503 = vmatprep.subr.mxu0 0.0
    %5504 = vmatpush2.msra.mxu0 0.0
    %5505 = vmatprep.subr.mxu0 0.0
    %5506 = vmatpush2.msra.mxu0 0.0
    %5507 = vmatprep.subr.mxu0 0.0
    %5508 = vmatpush2.msra.mxu0 0.0
    %5509 = vmatprep.subr.mxu0 0.0
    %5510 = vmatpush2.msra.mxu0 0.0
    %5511 = vmatprep.subr.mxu0 0.0
    %5512 = vmatpush2.msra.mxu0 0.0
    %5513 = vmatprep.subr.mxu0 0.0
    %5514 = vmatpush2.msra.mxu0 0.0
    %5515 = vmatprep.subr.mxu0 0.0
    %5516 = vmatpush2.msra.mxu0 0.0
    %5517 = vmatprep.subr.mxu0 0.0
    %5518 = vmatpush2.msra.mxu0 0.0
    %5519 = vmatprep.subr.mxu0 0.0
    %5520 = vmatpush2.msra.mxu0 0.0
    %5521 = vmatprep.subr.mxu0 0.0
    %5522 = vmatpush2.msra.mxu0 0.0
    %5523 = vmatprep.subr.mxu0 0.0
    %5524 = vmatpush2.msra.mxu0 0.0
    %5525 = vmatprep.subr.mxu0 0.0
    %5526 = vmatpush2.msra.mxu0 0.0
    %5527 = vmatprep.mubr.f32.mxu0 0.0
    %5528 = vmatmul.mubr.f32.gmra.mxu0 %v5381
    %v5529 = vpop.f32.mrf.mxu0
    %v5530 = vadd.f32 0.0, %v5529
    %v5531 = vpop.f32.mrf.mxu0
    %v5532 = vadd.f32 0.0, %v5531
    %5533 = vmatprep.mubr.f32.mxu0 0.0
    %5534 = vmatmul.mubr.f32.gmra.mxu0 %v5384
    %v5535 = vpop.f32.mrf.mxu0
    %v5536 = vadd.f32 0.0, %v5535
    %v5537 = vpop.f32.mrf.mxu0
    %v5538 = vadd.f32 0.0, %v5537
    %5539 = vdwg.mxu0
    %5540 = vmatprep.subr.mxu0 0.0
    %5541 = vmatpush1.msra.mxu0 0.0
    %5542 = vmatprep.subr.mxu0 0.0
    %5543 = vmatpush1.msra.mxu0 0.0
    %5544 = vmatprep.subr.mxu0 0.0
    %5545 = vmatpush1.msra.mxu0 0.0
    %5546 = vmatprep.subr.mxu0 0.0
    %5547 = vmatpush1.msra.mxu0 0.0
    %5548 = vmatprep.subr.mxu0 0.0
    %5549 = vmatpush1.msra.mxu0 0.0
    %5550 = vmatprep.subr.mxu0 0.0
    %5551 = vmatpush1.msra.mxu0 0.0
    %5552 = vmatprep.subr.mxu0 0.0
    %5553 = vmatpush1.msra.mxu0 0.0
    %5554 = vmatprep.subr.mxu0 0.0
    %5555 = vmatpush1.msra.mxu0 0.0
    %5556 = vmatprep.subr.mxu0 0.0
    %5557 = vmatpush1.msra.mxu0 0.0
    %5558 = vmatprep.subr.mxu0 0.0
    %5559 = vmatpush1.msra.mxu0 0.0
    %5560 = vmatprep.subr.mxu0 0.0
    %5561 = vmatpush1.msra.mxu0 0.0
    %5562 = vmatprep.subr.mxu0 0.0
    %5563 = vmatpush1.msra.mxu0 0.0
    %5564 = vmatprep.subr.mxu0 0.0
    %5565 = vmatpush1.msra.mxu0 0.0
    %5566 = vmatprep.subr.mxu0 0.0
    %5567 = vmatpush1.msra.mxu0 0.0
    %5568 = vmatprep.subr.mxu0 %v5324
    %5569 = vmatpush1.msra.mxu0 %v5322
    %5570 = vmatprep.subr.mxu0 %v5323
    %5571 = vmatpush1.msra.mxu0 %v5321
    %5572 = vmatprep.subr.mxu0 0.0
    %5573 = vmatpush2.msra.mxu0 0.0
    %5574 = vmatprep.subr.mxu0 0.0
    %5575 = vmatpush2.msra.mxu0 0.0
    %5576 = vmatprep.subr.mxu0 0.0
    %5577 = vmatpush2.msra.mxu0 0.0
    %5578 = vmatprep.subr.mxu0 0.0
    %5579 = vmatpush2.msra.mxu0 0.0
    %5580 = vmatprep.subr.mxu0 0.0
    %5581 = vmatpush2.msra.mxu0 0.0
    %5582 = vmatprep.subr.mxu0 0.0
    %5583 = vmatpush2.msra.mxu0 0.0
    %5584 = vmatprep.subr.mxu0 0.0
    %5585 = vmatpush2.msra.mxu0 0.0
    %5586 = vmatprep.subr.mxu0 0.0
    %5587 = vmatpush2.msra.mxu0 0.0
    %5588 = vmatprep.subr.mxu0 0.0
    %5589 = vmatpush2.msra.mxu0 0.0
    %5590 = vmatprep.subr.mxu0 0.0
    %5591 = vmatpush2.msra.mxu0 0.0
    %5592 = vmatprep.subr.mxu0 0.0
    %5593 = vmatpush2.msra.mxu0 0.0
    %5594 = vmatprep.subr.mxu0 0.0
    %5595 = vmatpush2.msra.mxu0 0.0
    %5596 = vmatprep.subr.mxu0 0.0
    %5597 = vmatpush2.msra.mxu0 0.0
    %5598 = vmatprep.subr.mxu0 0.0
    %5599 = vmatpush2.msra.mxu0 0.0
    %5600 = vmatprep.subr.mxu0 0.0
    %5601 = vmatpush2.msra.mxu0 0.0
    %5602 = vmatprep.subr.mxu0 0.0
    %5603 = vmatpush2.msra.mxu0 0.0
    %5604 = vmatprep.mubr.f32.mxu0 0.0
    %5605 = vmatmul.mubr.f32.gmra.mxu0 %v5381
    %v5606 = vpop.f32.mrf.mxu0
    %v5607 = vadd.f32 0.0, %v5606
    %v5608 = vpop.f32.mrf.mxu0
    %v5609 = vadd.f32 0.0, %v5608
    %5610 = vmatprep.mubr.f32.mxu0 0.0
    %5611 = vmatmul.mubr.f32.gmra.mxu0 %v5384
    %v5612 = vpop.f32.mrf.mxu0
    %v5613 = vadd.f32 0.0, %v5612
    %v5614 = vpop.f32.mrf.mxu0
    %v5615 = vadd.f32 0.0, %v5614
    %5616 = vdwg.mxu0
    %5617 = vmatprep.subr.mxu0 0.0
    %5618 = vmatpush1.msra.mxu0 0.0
    %5619 = vmatprep.subr.mxu0 0.0
    %5620 = vmatpush1.msra.mxu0 0.0
    %5621 = vmatprep.subr.mxu0 0.0
    %5622 = vmatpush1.msra.mxu0 0.0
    %5623 = vmatprep.subr.mxu0 0.0
    %5624 = vmatpush1.msra.mxu0 0.0
    %5625 = vmatprep.subr.mxu0 0.0
    %5626 = vmatpush1.msra.mxu0 0.0
    %5627 = vmatprep.subr.mxu0 0.0
    %5628 = vmatpush1.msra.mxu0 0.0
    %5629 = vmatprep.subr.mxu0 0.0
    %5630 = vmatpush1.msra.mxu0 0.0
    %5631 = vmatprep.subr.mxu0 0.0
    %5632 = vmatpush1.msra.mxu0 0.0
    %5633 = vmatprep.subr.mxu0 0.0
    %5634 = vmatpush1.msra.mxu0 0.0
    %5635 = vmatprep.subr.mxu0 0.0
    %5636 = vmatpush1.msra.mxu0 0.0
    %5637 = vmatprep.subr.mxu0 0.0
    %5638 = vmatpush1.msra.mxu0 0.0
    %5639 = vmatprep.subr.mxu0 0.0
    %5640 = vmatpush1.msra.mxu0 0.0
    %5641 = vmatprep.subr.mxu0 0.0
    %5642 = vmatpush1.msra.mxu0 0.0
    %5643 = vmatprep.subr.mxu0 0.0
    %5644 = vmatpush1.msra.mxu0 0.0
    %5645 = vmatprep.subr.mxu0 %v5328
    %5646 = vmatpush1.msra.mxu0 %v5326
    %5647 = vmatprep.subr.mxu0 %v5327
    %5648 = vmatpush1.msra.mxu0 %v5325
    %5649 = vmatprep.subr.mxu0 0.0
    %5650 = vmatpush2.msra.mxu0 0.0
    %5651 = vmatprep.subr.mxu0 0.0
    %5652 = vmatpush2.msra.mxu0 0.0
    %5653 = vmatprep.subr.mxu0 0.0
    %5654 = vmatpush2.msra.mxu0 0.0
    %5655 = vmatprep.subr.mxu0 0.0
    %5656 = vmatpush2.msra.mxu0 0.0
    %5657 = vmatprep.subr.mxu0 0.0
    %5658 = vmatpush2.msra.mxu0 0.0
    %5659 = vmatprep.subr.mxu0 0.0
    %5660 = vmatpush2.msra.mxu0 0.0
    %5661 = vmatprep.subr.mxu0 0.0
    %5662 = vmatpush2.msra.mxu0 0.0
    %5663 = vmatprep.subr.mxu0 0.0
    %5664 = vmatpush2.msra.mxu0 0.0
    %5665 = vmatprep.subr.mxu0 0.0
    %5666 = vmatpush2.msra.mxu0 0.0
    %5667 = vmatprep.subr.mxu0 0.0
    %5668 = vmatpush2.msra.mxu0 0.0
    %5669 = vmatprep.subr.mxu0 0.0
    %5670 = vmatpush2.msra.mxu0 0.0
    %5671 = vmatprep.subr.mxu0 0.0
    %5672 = vmatpush2.msra.mxu0 0.0
    %5673 = vmatprep.subr.mxu0 0.0
    %5674 = vmatpush2.msra.mxu0 0.0
    %5675 = vmatprep.subr.mxu0 0.0
    %5676 = vmatpush2.msra.mxu0 0.0
    %5677 = vmatprep.subr.mxu0 0.0
    %5678 = vmatpush2.msra.mxu0 0.0
    %5679 = vmatprep.subr.mxu0 0.0
    %5680 = vmatpush2.msra.mxu0 0.0
    %5681 = vmatprep.mubr.f32.mxu0 0.0
    %5682 = vmatmul.mubr.f32.gmra.mxu0 %v5381
    %v5683 = vpop.f32.mrf.mxu0
    %v5684 = vadd.f32 0.0, %v5683
    %v5685 = vpop.f32.mrf.mxu0
    %v5686 = vadd.f32 0.0, %v5685
    %5687 = vmatprep.mubr.f32.mxu0 0.0
    %5688 = vmatmul.mubr.f32.gmra.mxu0 %v5384
    %v5689 = vpop.f32.mrf.mxu0
    %v5690 = vadd.f32 0.0, %v5689
    %v5691 = vpop.f32.mrf.mxu0
    %v5692 = vadd.f32 0.0, %v5691
    %5693 = vdwg.mxu0
    %5694 = vmatprep.subr.mxu0 0.0
    %5695 = vmatpush1.msra.mxu0 0.0
    %5696 = vmatprep.subr.mxu0 0.0
    %5697 = vmatpush1.msra.mxu0 0.0
    %5698 = vmatprep.subr.mxu0 0.0
    %5699 = vmatpush1.msra.mxu0 0.0
    %5700 = vmatprep.subr.mxu0 0.0
    %5701 = vmatpush1.msra.mxu0 0.0
    %5702 = vmatprep.subr.mxu0 0.0
    %5703 = vmatpush1.msra.mxu0 0.0
    %5704 = vmatprep.subr.mxu0 0.0
    %5705 = vmatpush1.msra.mxu0 0.0
    %5706 = vmatprep.subr.mxu0 0.0
    %5707 = vmatpush1.msra.mxu0 0.0
    %5708 = vmatprep.subr.mxu0 0.0
    %5709 = vmatpush1.msra.mxu0 0.0
    %5710 = vmatprep.subr.mxu0 0.0
    %5711 = vmatpush1.msra.mxu0 0.0
    %5712 = vmatprep.subr.mxu0 0.0
    %5713 = vmatpush1.msra.mxu0 0.0
    %5714 = vmatprep.subr.mxu0 0.0
    %5715 = vmatpush1.msra.mxu0 0.0
    %5716 = vmatprep.subr.mxu0 0.0
    %5717 = vmatpush1.msra.mxu0 0.0
    %5718 = vmatprep.subr.mxu0 0.0
    %5719 = vmatpush1.msra.mxu0 0.0
    %5720 = vmatprep.subr.mxu0 0.0
    %5721 = vmatpush1.msra.mxu0 0.0
    %5722 = vmatprep.subr.mxu0 %v5332
    %5723 = vmatpush1.msra.mxu0 %v5330
    %5724 = vmatprep.subr.mxu0 %v5331
    %5725 = vmatpush1.msra.mxu0 %v5329
    %5726 = vmatprep.subr.mxu0 0.0
    %5727 = vmatpush2.msra.mxu0 0.0
    %5728 = vmatprep.subr.mxu0 0.0
    %5729 = vmatpush2.msra.mxu0 0.0
    %5730 = vmatprep.subr.mxu0 0.0
    %5731 = vmatpush2.msra.mxu0 0.0
    %5732 = vmatprep.subr.mxu0 0.0
    %5733 = vmatpush2.msra.mxu0 0.0
    %5734 = vmatprep.subr.mxu0 0.0
    %5735 = vmatpush2.msra.mxu0 0.0
    %5736 = vmatprep.subr.mxu0 0.0
    %5737 = vmatpush2.msra.mxu0 0.0
    %5738 = vmatprep.subr.mxu0 0.0
    %5739 = vmatpush2.msra.mxu0 0.0
    %5740 = vmatprep.subr.mxu0 0.0
    %5741 = vmatpush2.msra.mxu0 0.0
    %5742 = vmatprep.subr.mxu0 0.0
    %5743 = vmatpush2.msra.mxu0 0.0
    %5744 = vmatprep.subr.mxu0 0.0
    %5745 = vmatpush2.msra.mxu0 0.0
    %5746 = vmatprep.subr.mxu0 0.0
    %5747 = vmatpush2.msra.mxu0 0.0
    %5748 = vmatprep.subr.mxu0 0.0
    %5749 = vmatpush2.msra.mxu0 0.0
    %5750 = vmatprep.subr.mxu0 0.0
    %5751 = vmatpush2.msra.mxu0 0.0
    %5752 = vmatprep.subr.mxu0 0.0
    %5753 = vmatpush2.msra.mxu0 0.0
    %5754 = vmatprep.subr.mxu0 0.0
    %5755 = vmatpush2.msra.mxu0 0.0
    %5756 = vmatprep.subr.mxu0 0.0
    %5757 = vmatpush2.msra.mxu0 0.0
    %5758 = vmatprep.mubr.f32.mxu0 0.0
    %5759 = vmatmul.mubr.f32.gmra.mxu0 %v5381
    %v5760 = vpop.f32.mrf.mxu0
    %v5761 = vadd.f32 0.0, %v5760
    %v5762 = vpop.f32.mrf.mxu0
    %v5763 = vadd.f32 0.0, %v5762
    %5764 = vmatprep.mubr.f32.mxu0 0.0
    %5765 = vmatmul.mubr.f32.gmra.mxu0 %v5384
    %v5766 = vpop.f32.mrf.mxu0
    %v5767 = vadd.f32 0.0, %v5766
    %v5768 = vpop.f32.mrf.mxu0
    %v5769 = vadd.f32 0.0, %v5768
    %5770 = vdwg.mxu0
    %5771 = vmatprep.subr.mxu0 0.0
    %5772 = vmatpush1.msra.mxu0 0.0
    %5773 = vmatprep.subr.mxu0 0.0
    %5774 = vmatpush1.msra.mxu0 0.0
    %5775 = vmatprep.subr.mxu0 0.0
    %5776 = vmatpush1.msra.mxu0 0.0
    %5777 = vmatprep.subr.mxu0 0.0
    %5778 = vmatpush1.msra.mxu0 0.0
    %5779 = vmatprep.subr.mxu0 0.0
    %5780 = vmatpush1.msra.mxu0 0.0
    %5781 = vmatprep.subr.mxu0 0.0
    %5782 = vmatpush1.msra.mxu0 0.0
    %5783 = vmatprep.subr.mxu0 0.0
    %5784 = vmatpush1.msra.mxu0 0.0
    %5785 = vmatprep.subr.mxu0 0.0
    %5786 = vmatpush1.msra.mxu0 0.0
    %5787 = vmatprep.subr.mxu0 0.0
    %5788 = vmatpush1.msra.mxu0 0.0
    %5789 = vmatprep.subr.mxu0 0.0
    %5790 = vmatpush1.msra.mxu0 0.0
    %5791 = vmatprep.subr.mxu0 0.0
    %5792 = vmatpush1.msra.mxu0 0.0
    %5793 = vmatprep.subr.mxu0 0.0
    %5794 = vmatpush1.msra.mxu0 0.0
    %5795 = vmatprep.subr.mxu0 0.0
    %5796 = vmatpush1.msra.mxu0 0.0
    %5797 = vmatprep.subr.mxu0 0.0
    %5798 = vmatpush1.msra.mxu0 0.0
    %5799 = vmatprep.subr.mxu0 %v5336
    %5800 = vmatpush1.msra.mxu0 %v5334
    %5801 = vmatprep.subr.mxu0 %v5335
    %5802 = vmatpush1.msra.mxu0 %v5333
    %5803 = vmatprep.subr.mxu0 0.0
    %5804 = vmatpush2.msra.mxu0 0.0
    %5805 = vmatprep.subr.mxu0 0.0
    %5806 = vmatpush2.msra.mxu0 0.0
    %5807 = vmatprep.subr.mxu0 0.0
    %5808 = vmatpush2.msra.mxu0 0.0
    %5809 = vmatprep.subr.mxu0 0.0
    %5810 = vmatpush2.msra.mxu0 0.0
    %5811 = vmatprep.subr.mxu0 0.0
    %5812 = vmatpush2.msra.mxu0 0.0
    %5813 = vmatprep.subr.mxu0 0.0
    %5814 = vmatpush2.msra.mxu0 0.0
    %5815 = vmatprep.subr.mxu0 0.0
    %5816 = vmatpush2.msra.mxu0 0.0
    %5817 = vmatprep.subr.mxu0 0.0
    %5818 = vmatpush2.msra.mxu0 0.0
    %5819 = vmatprep.subr.mxu0 0.0
    %5820 = vmatpush2.msra.mxu0 0.0
    %5821 = vmatprep.subr.mxu0 0.0
    %5822 = vmatpush2.msra.mxu0 0.0
    %5823 = vmatprep.subr.mxu0 0.0
    %5824 = vmatpush2.msra.mxu0 0.0
    %5825 = vmatprep.subr.mxu0 0.0
    %5826 = vmatpush2.msra.mxu0 0.0
    %5827 = vmatprep.subr.mxu0 0.0
    %5828 = vmatpush2.msra.mxu0 0.0
    %5829 = vmatprep.subr.mxu0 0.0
    %5830 = vmatpush2.msra.mxu0 0.0
    %5831 = vmatprep.subr.mxu0 0.0
    %5832 = vmatpush2.msra.mxu0 0.0
    %5833 = vmatprep.subr.mxu0 0.0
    %5834 = vmatpush2.msra.mxu0 0.0
    %5835 = vmatprep.mubr.f32.mxu0 0.0
    %5836 = vmatmul.mubr.f32.gmra.mxu0 %v5381
    %v5837 = vpop.f32.mrf.mxu0
    %v5838 = vadd.f32 0.0, %v5837
    %v5839 = vpop.f32.mrf.mxu0
    %v5840 = vadd.f32 0.0, %v5839
    %5841 = vmatprep.mubr.f32.mxu0 0.0
    %5842 = vmatmul.mubr.f32.gmra.mxu0 %v5384
    %v5843 = vpop.f32.mrf.mxu0
    %v5844 = vadd.f32 0.0, %v5843
    %v5845 = vpop.f32.mrf.mxu0
    %v5846 = vadd.f32 0.0, %v5845
    %5847 = vdwg.mxu0
    %5848 = vmatprep.subr.mxu0 0.0
    %5849 = vmatpush1.msra.mxu0 0.0
    %5850 = vmatprep.subr.mxu0 0.0
    %5851 = vmatpush1.msra.mxu0 0.0
    %5852 = vmatprep.subr.mxu0 0.0
    %5853 = vmatpush1.msra.mxu0 0.0
    %5854 = vmatprep.subr.mxu0 0.0
    %5855 = vmatpush1.msra.mxu0 0.0
    %5856 = vmatprep.subr.mxu0 0.0
    %5857 = vmatpush1.msra.mxu0 0.0
    %5858 = vmatprep.subr.mxu0 0.0
    %5859 = vmatpush1.msra.mxu0 0.0
    %5860 = vmatprep.subr.mxu0 0.0
    %5861 = vmatpush1.msra.mxu0 0.0
    %5862 = vmatprep.subr.mxu0 0.0
    %5863 = vmatpush1.msra.mxu0 0.0
    %5864 = vmatprep.subr.mxu0 0.0
    %5865 = vmatpush1.msra.mxu0 0.0
    %5866 = vmatprep.subr.mxu0 0.0
    %5867 = vmatpush1.msra.mxu0 0.0
    %5868 = vmatprep.subr.mxu0 0.0
    %5869 = vmatpush1.msra.mxu0 0.0
    %5870 = vmatprep.subr.mxu0 0.0
    %5871 = vmatpush1.msra.mxu0 0.0
    %5872 = vmatprep.subr.mxu0 0.0
    %5873 = vmatpush1.msra.mxu0 0.0
    %5874 = vmatprep.subr.mxu0 0.0
    %5875 = vmatpush1.msra.mxu0 0.0
    %5876 = vmatprep.subr.mxu0 %v5340
    %5877 = vmatpush1.msra.mxu0 %v5338
    %5878 = vmatprep.subr.mxu0 %v5339
    %5879 = vmatpush1.msra.mxu0 %v5337
    %5880 = vmatprep.subr.mxu0 0.0
    %5881 = vmatpush2.msra.mxu0 0.0
    %5882 = vmatprep.subr.mxu0 0.0
    %5883 = vmatpush2.msra.mxu0 0.0
    %5884 = vmatprep.subr.mxu0 0.0
    %5885 = vmatpush2.msra.mxu0 0.0
    %5886 = vmatprep.subr.mxu0 0.0
    %5887 = vmatpush2.msra.mxu0 0.0
    %5888 = vmatprep.subr.mxu0 0.0
    %5889 = vmatpush2.msra.mxu0 0.0
    %5890 = vmatprep.subr.mxu0 0.0
    %5891 = vmatpush2.msra.mxu0 0.0
    %5892 = vmatprep.subr.mxu0 0.0
    %5893 = vmatpush2.msra.mxu0 0.0
    %5894 = vmatprep.subr.mxu0 0.0
    %5895 = vmatpush2.msra.mxu0 0.0
    %5896 = vmatprep.subr.mxu0 0.0
    %5897 = vmatpush2.msra.mxu0 0.0
    %5898 = vmatprep.subr.mxu0 0.0
    %5899 = vmatpush2.msra.mxu0 0.0
    %5900 = vmatprep.subr.mxu0 0.0
    %5901 = vmatpush2.msra.mxu0 0.0
    %5902 = vmatprep.subr.mxu0 0.0
    %5903 = vmatpush2.msra.mxu0 0.0
    %5904 = vmatprep.subr.mxu0 0.0
    %5905 = vmatpush2.msra.mxu0 0.0
    %5906 = vmatprep.subr.mxu0 0.0
    %5907 = vmatpush2.msra.mxu0 0.0
    %5908 = vmatprep.subr.mxu0 0.0
    %5909 = vmatpush2.msra.mxu0 0.0
    %5910 = vmatprep.subr.mxu0 0.0
    %5911 = vmatpush2.msra.mxu0 0.0
    %5912 = vmatprep.mubr.f32.mxu0 0.0
    %5913 = vmatmul.mubr.f32.gmra.mxu0 %v5381
    %v5914 = vpop.f32.mrf.mxu0
    %v5915 = vadd.f32 0.0, %v5914
    %v5916 = vpop.f32.mrf.mxu0
    %v5917 = vadd.f32 0.0, %v5916
    %5918 = vmatprep.mubr.f32.mxu0 0.0
    %5919 = vmatmul.mubr.f32.gmra.mxu0 %v5384
    %v5920 = vpop.f32.mrf.mxu0
    %v5921 = vadd.f32 0.0, %v5920
    %v5922 = vpop.f32.mrf.mxu0
    %v5923 = vadd.f32 0.0, %v5922
    %5924 = vdwg.mxu0
    %5925 = vmatprep.subr.mxu0 0.0
    %5926 = vmatpush1.msra.mxu0 0.0
    %5927 = vmatprep.subr.mxu0 0.0
    %5928 = vmatpush1.msra.mxu0 0.0
    %5929 = vmatprep.subr.mxu0 0.0
    %5930 = vmatpush1.msra.mxu0 0.0
    %5931 = vmatprep.subr.mxu0 0.0
    %5932 = vmatpush1.msra.mxu0 0.0
    %5933 = vmatprep.subr.mxu0 0.0
    %5934 = vmatpush1.msra.mxu0 0.0
    %5935 = vmatprep.subr.mxu0 0.0
    %5936 = vmatpush1.msra.mxu0 0.0
    %5937 = vmatprep.subr.mxu0 0.0
    %5938 = vmatpush1.msra.mxu0 0.0
    %5939 = vmatprep.subr.mxu0 0.0
    %5940 = vmatpush1.msra.mxu0 0.0
    %5941 = vmatprep.subr.mxu0 0.0
    %5942 = vmatpush1.msra.mxu0 0.0
    %5943 = vmatprep.subr.mxu0 0.0
    %5944 = vmatpush1.msra.mxu0 0.0
    %5945 = vmatprep.subr.mxu0 0.0
    %5946 = vmatpush1.msra.mxu0 0.0
    %5947 = vmatprep.subr.mxu0 0.0
    %5948 = vmatpush1.msra.mxu0 0.0
    %5949 = vmatprep.subr.mxu0 0.0
    %5950 = vmatpush1.msra.mxu0 0.0
    %5951 = vmatprep.subr.mxu0 0.0
    %5952 = vmatpush1.msra.mxu0 0.0
    %5953 = vmatprep.subr.mxu0 %v5344
    %5954 = vmatpush1.msra.mxu0 %v5342
    %5955 = vmatprep.subr.mxu0 %v5343
    %5956 = vmatpush1.msra.mxu0 %v5341
    %5957 = vmatprep.subr.mxu0 0.0
    %5958 = vmatpush2.msra.mxu0 0.0
    %5959 = vmatprep.subr.mxu0 0.0
    %5960 = vmatpush2.msra.mxu0 0.0
    %5961 = vmatprep.subr.mxu0 0.0
    %5962 = vmatpush2.msra.mxu0 0.0
    %5963 = vmatprep.subr.mxu0 0.0
    %5964 = vmatpush2.msra.mxu0 0.0
    %5965 = vmatprep.subr.mxu0 0.0
    %5966 = vmatpush2.msra.mxu0 0.0
    %5967 = vmatprep.subr.mxu0 0.0
    %5968 = vmatpush2.msra.mxu0 0.0
    %5969 = vmatprep.subr.mxu0 0.0
    %5970 = vmatpush2.msra.mxu0 0.0
    %5971 = vmatprep.subr.mxu0 0.0
    %5972 = vmatpush2.msra.mxu0 0.0
    %5973 = vmatprep.subr.mxu0 0.0
    %5974 = vmatpush2.msra.mxu0 0.0
    %5975 = vmatprep.subr.mxu0 0.0
    %5976 = vmatpush2.msra.mxu0 0.0
    %5977 = vmatprep.subr.mxu0 0.0
    %5978 = vmatpush2.msra.mxu0 0.0
    %5979 = vmatprep.subr.mxu0 0.0
    %5980 = vmatpush2.msra.mxu0 0.0
    %5981 = vmatprep.subr.mxu0 0.0
    %5982 = vmatpush2.msra.mxu0 0.0
    %5983 = vmatprep.subr.mxu0 0.0
    %5984 = vmatpush2.msra.mxu0 0.0
    %5985 = vmatprep.subr.mxu0 0.0
    %5986 = vmatpush2.msra.mxu0 0.0
    %5987 = vmatprep.subr.mxu0 0.0
    %5988 = vmatpush2.msra.mxu0 0.0
    %5989 = vmatprep.mubr.f32.mxu0 0.0
    %5990 = vmatmul.mubr.f32.gmra.mxu0 %v5381
    %v5991 = vpop.f32.mrf.mxu0
    %v5992 = vadd.f32 0.0, %v5991
    %v5993 = vpop.f32.mrf.mxu0
    %v5994 = vadd.f32 0.0, %v5993
    %5995 = vmatprep.mubr.f32.mxu0 0.0
    %5996 = vmatmul.mubr.f32.gmra.mxu0 %v5384
    %v5997 = vpop.f32.mrf.mxu0
    %v5998 = vadd.f32 0.0, %v5997
    %v5999 = vpop.f32.mrf.mxu0
    %v6000 = vadd.f32 0.0, %v5999
    %6001 = vdwg.mxu0
    %6002 = vmatprep.subr.mxu0 0.0
    %6003 = vmatpush1.msra.mxu0 0.0
    %6004 = vmatprep.subr.mxu0 0.0
    %6005 = vmatpush1.msra.mxu0 0.0
    %6006 = vmatprep.subr.mxu0 0.0
    %6007 = vmatpush1.msra.mxu0 0.0
    %6008 = vmatprep.subr.mxu0 0.0
    %6009 = vmatpush1.msra.mxu0 0.0
    %6010 = vmatprep.subr.mxu0 0.0
    %6011 = vmatpush1.msra.mxu0 0.0
    %6012 = vmatprep.subr.mxu0 0.0
    %6013 = vmatpush1.msra.mxu0 0.0
    %6014 = vmatprep.subr.mxu0 0.0
    %6015 = vmatpush1.msra.mxu0 0.0
    %6016 = vmatprep.subr.mxu0 0.0
    %6017 = vmatpush1.msra.mxu0 0.0
    %6018 = vmatprep.subr.mxu0 0.0
    %6019 = vmatpush1.msra.mxu0 0.0
    %6020 = vmatprep.subr.mxu0 0.0
    %6021 = vmatpush1.msra.mxu0 0.0
    %6022 = vmatprep.subr.mxu0 0.0
    %6023 = vmatpush1.msra.mxu0 0.0
    %6024 = vmatprep.subr.mxu0 0.0
    %6025 = vmatpush1.msra.mxu0 0.0
    %6026 = vmatprep.subr.mxu0 0.0
    %6027 = vmatpush1.msra.mxu0 0.0
    %6028 = vmatprep.subr.mxu0 0.0
    %6029 = vmatpush1.msra.mxu0 0.0
    %6030 = vmatprep.subr.mxu0 %v5348
    %6031 = vmatpush1.msra.mxu0 %v5346
    %6032 = vmatprep.subr.mxu0 %v5347
    %6033 = vmatpush1.msra.mxu0 %v5345
    %6034 = vmatprep.subr.mxu0 0.0
    %6035 = vmatpush2.msra.mxu0 0.0
    %6036 = vmatprep.subr.mxu0 0.0
    %6037 = vmatpush2.msra.mxu0 0.0
    %6038 = vmatprep.subr.mxu0 0.0
    %6039 = vmatpush2.msra.mxu0 0.0
    %6040 = vmatprep.subr.mxu0 0.0
    %6041 = vmatpush2.msra.mxu0 0.0
    %6042 = vmatprep.subr.mxu0 0.0
    %6043 = vmatpush2.msra.mxu0 0.0
    %6044 = vmatprep.subr.mxu0 0.0
    %6045 = vmatpush2.msra.mxu0 0.0
    %6046 = vmatprep.subr.mxu0 0.0
    %6047 = vmatpush2.msra.mxu0 0.0
    %6048 = vmatprep.subr.mxu0 0.0
    %6049 = vmatpush2.msra.mxu0 0.0
    %6050 = vmatprep.subr.mxu0 0.0
    %6051 = vmatpush2.msra.mxu0 0.0
    %6052 = vmatprep.subr.mxu0 0.0
    %6053 = vmatpush2.msra.mxu0 0.0
    %6054 = vmatprep.subr.mxu0 0.0
    %6055 = vmatpush2.msra.mxu0 0.0
    %6056 = vmatprep.subr.mxu0 0.0
    %6057 = vmatpush2.msra.mxu0 0.0
    %6058 = vmatprep.subr.mxu0 0.0
    %6059 = vmatpush2.msra.mxu0 0.0
    %6060 = vmatprep.subr.mxu0 0.0
    %6061 = vmatpush2.msra.mxu0 0.0
    %6062 = vmatprep.subr.mxu0 0.0
    %6063 = vmatpush2.msra.mxu0 0.0
    %6064 = vmatprep.subr.mxu0 0.0
    %6065 = vmatpush2.msra.mxu0 0.0
    %6066 = vmatprep.mubr.f32.mxu0 0.0
    %6067 = vmatmul.mubr.f32.gmra.mxu0 %v5381
    %v6068 = vpop.f32.mrf.mxu0
    %v6069 = vadd.f32 0.0, %v6068
    %v6070 = vpop.f32.mrf.mxu0
    %v6071 = vadd.f32 0.0, %v6070
    %6072 = vmatprep.mubr.f32.mxu0 0.0
    %6073 = vmatmul.mubr.f32.gmra.mxu0 %v5384
    %v6074 = vpop.f32.mrf.mxu0
    %v6075 = vadd.f32 0.0, %v6074
    %v6076 = vpop.f32.mrf.mxu0
    %v6077 = vadd.f32 0.0, %v6076
    %6078 = vdwg.mxu0
    %6079 = vmatprep.subr.mxu0 0.0
    %6080 = vmatpush1.msra.mxu0 0.0
    %6081 = vmatprep.subr.mxu0 0.0
    %6082 = vmatpush1.msra.mxu0 0.0
    %6083 = vmatprep.subr.mxu0 0.0
    %6084 = vmatpush1.msra.mxu0 0.0
    %6085 = vmatprep.subr.mxu0 0.0
    %6086 = vmatpush1.msra.mxu0 0.0
    %6087 = vmatprep.subr.mxu0 0.0
    %6088 = vmatpush1.msra.mxu0 0.0
    %6089 = vmatprep.subr.mxu0 0.0
    %6090 = vmatpush1.msra.mxu0 0.0
    %6091 = vmatprep.subr.mxu0 0.0
    %6092 = vmatpush1.msra.mxu0 0.0
    %6093 = vmatprep.subr.mxu0 0.0
    %6094 = vmatpush1.msra.mxu0 0.0
    %6095 = vmatprep.subr.mxu0 0.0
    %6096 = vmatpush1.msra.mxu0 0.0
    %6097 = vmatprep.subr.mxu0 0.0
    %6098 = vmatpush1.msra.mxu0 0.0
    %6099 = vmatprep.subr.mxu0 0.0
    %6100 = vmatpush1.msra.mxu0 0.0
    %6101 = vmatprep.subr.mxu0 0.0
    %6102 = vmatpush1.msra.mxu0 0.0
    %6103 = vmatprep.subr.mxu0 0.0
    %6104 = vmatpush1.msra.mxu0 0.0
    %6105 = vmatprep.subr.mxu0 0.0
    %6106 = vmatpush1.msra.mxu0 0.0
    %6107 = vmatprep.subr.mxu0 %v5352
    %6108 = vmatpush1.msra.mxu0 %v5350
    %6109 = vmatprep.subr.mxu0 %v5351
    %6110 = vmatpush1.msra.mxu0 %v5349
    %6111 = vmatprep.subr.mxu0 0.0
    %6112 = vmatpush2.msra.mxu0 0.0
    %6113 = vmatprep.subr.mxu0 0.0
    %6114 = vmatpush2.msra.mxu0 0.0
    %6115 = vmatprep.subr.mxu0 0.0
    %6116 = vmatpush2.msra.mxu0 0.0
    %6117 = vmatprep.subr.mxu0 0.0
    %6118 = vmatpush2.msra.mxu0 0.0
    %6119 = vmatprep.subr.mxu0 0.0
    %6120 = vmatpush2.msra.mxu0 0.0
    %6121 = vmatprep.subr.mxu0 0.0
    %6122 = vmatpush2.msra.mxu0 0.0
    %6123 = vmatprep.subr.mxu0 0.0
    %6124 = vmatpush2.msra.mxu0 0.0
    %6125 = vmatprep.subr.mxu0 0.0
    %6126 = vmatpush2.msra.mxu0 0.0
    %6127 = vmatprep.subr.mxu0 0.0
    %6128 = vmatpush2.msra.mxu0 0.0
    %6129 = vmatprep.subr.mxu0 0.0
    %6130 = vmatpush2.msra.mxu0 0.0
    %6131 = vmatprep.subr.mxu0 0.0
    %6132 = vmatpush2.msra.mxu0 0.0
    %6133 = vmatprep.subr.mxu0 0.0
    %6134 = vmatpush2.msra.mxu0 0.0
    %6135 = vmatprep.subr.mxu0 0.0
    %6136 = vmatpush2.msra.mxu0 0.0
    %6137 = vmatprep.subr.mxu0 0.0
    %6138 = vmatpush2.msra.mxu0 0.0
    %6139 = vmatprep.subr.mxu0 0.0
    %6140 = vmatpush2.msra.mxu0 0.0
    %6141 = vmatprep.subr.mxu0 0.0
    %6142 = vmatpush2.msra.mxu0 0.0
    %6143 = vmatprep.mubr.f32.mxu0 0.0
    %6144 = vmatmul.mubr.f32.gmra.mxu0 %v5381
    %v6145 = vpop.f32.mrf.mxu0
    %v6146 = vadd.f32 0.0, %v6145
    %v6147 = vpop.f32.mrf.mxu0
    %v6148 = vadd.f32 0.0, %v6147
    %6149 = vmatprep.mubr.f32.mxu0 0.0
    %6150 = vmatmul.mubr.f32.gmra.mxu0 %v5384
    %v6151 = vpop.f32.mrf.mxu0
    %v6152 = vadd.f32 0.0, %v6151
    %v6153 = vpop.f32.mrf.mxu0
    %v6154 = vadd.f32 0.0, %v6153
    %6155 = vdwg.mxu0
    %6156 = vmatprep.subr.mxu0 0.0
    %6157 = vmatpush1.msra.mxu0 0.0
    %6158 = vmatprep.subr.mxu0 0.0
    %6159 = vmatpush1.msra.mxu0 0.0
    %6160 = vmatprep.subr.mxu0 0.0
    %6161 = vmatpush1.msra.mxu0 0.0
    %6162 = vmatprep.subr.mxu0 0.0
    %6163 = vmatpush1.msra.mxu0 0.0
    %6164 = vmatprep.subr.mxu0 0.0
    %6165 = vmatpush1.msra.mxu0 0.0
    %6166 = vmatprep.subr.mxu0 0.0
    %6167 = vmatpush1.msra.mxu0 0.0
    %6168 = vmatprep.subr.mxu0 0.0
    %6169 = vmatpush1.msra.mxu0 0.0
    %6170 = vmatprep.subr.mxu0 0.0
    %6171 = vmatpush1.msra.mxu0 0.0
    %6172 = vmatprep.subr.mxu0 0.0
    %6173 = vmatpush1.msra.mxu0 0.0
    %6174 = vmatprep.subr.mxu0 0.0
    %6175 = vmatpush1.msra.mxu0 0.0
    %6176 = vmatprep.subr.mxu0 0.0
    %6177 = vmatpush1.msra.mxu0 0.0
    %6178 = vmatprep.subr.mxu0 0.0
    %6179 = vmatpush1.msra.mxu0 0.0
    %6180 = vmatprep.subr.mxu0 0.0
    %6181 = vmatpush1.msra.mxu0 0.0
    %6182 = vmatprep.subr.mxu0 0.0
    %6183 = vmatpush1.msra.mxu0 0.0
    %6184 = vmatprep.subr.mxu0 %v5356
    %6185 = vmatpush1.msra.mxu0 %v5354
    %6186 = vmatprep.subr.mxu0 %v5355
    %6187 = vmatpush1.msra.mxu0 %v5353
    %6188 = vmatprep.subr.mxu0 0.0
    %6189 = vmatpush2.msra.mxu0 0.0
    %6190 = vmatprep.subr.mxu0 0.0
    %6191 = vmatpush2.msra.mxu0 0.0
    %6192 = vmatprep.subr.mxu0 0.0
    %6193 = vmatpush2.msra.mxu0 0.0
    %6194 = vmatprep.subr.mxu0 0.0
    %6195 = vmatpush2.msra.mxu0 0.0
    %6196 = vmatprep.subr.mxu0 0.0
    %6197 = vmatpush2.msra.mxu0 0.0
    %6198 = vmatprep.subr.mxu0 0.0
    %6199 = vmatpush2.msra.mxu0 0.0
    %6200 = vmatprep.subr.mxu0 0.0
    %6201 = vmatpush2.msra.mxu0 0.0
    %6202 = vmatprep.subr.mxu0 0.0
    %6203 = vmatpush2.msra.mxu0 0.0
    %6204 = vmatprep.subr.mxu0 0.0
    %6205 = vmatpush2.msra.mxu0 0.0
    %6206 = vmatprep.subr.mxu0 0.0
    %6207 = vmatpush2.msra.mxu0 0.0
    %6208 = vmatprep.subr.mxu0 0.0
    %6209 = vmatpush2.msra.mxu0 0.0
    %6210 = vmatprep.subr.mxu0 0.0
    %6211 = vmatpush2.msra.mxu0 0.0
    %6212 = vmatprep.subr.mxu0 0.0
    %6213 = vmatpush2.msra.mxu0 0.0
    %6214 = vmatprep.subr.mxu0 0.0
    %6215 = vmatpush2.msra.mxu0 0.0
    %6216 = vmatprep.subr.mxu0 0.0
    %6217 = vmatpush2.msra.mxu0 0.0
    %6218 = vmatprep.subr.mxu0 0.0
    %6219 = vmatpush2.msra.mxu0 0.0
    %6220 = vmatprep.mubr.f32.mxu0 0.0
    %6221 = vmatmul.mubr.f32.gmra.mxu0 %v5381
    %v6222 = vpop.f32.mrf.mxu0
    %v6223 = vadd.f32 0.0, %v6222
    %v6224 = vpop.f32.mrf.mxu0
    %v6225 = vadd.f32 0.0, %v6224
    %6226 = vmatprep.mubr.f32.mxu0 0.0
    %6227 = vmatmul.mubr.f32.gmra.mxu0 %v5384
    %v6228 = vpop.f32.mrf.mxu0
    %v6229 = vadd.f32 0.0, %v6228
    %v6230 = vpop.f32.mrf.mxu0
    %v6231 = vadd.f32 0.0, %v6230
    %6232 = vdwg.mxu0
    %6233 = vmatprep.subr.mxu0 0.0
    %6234 = vmatpush1.msra.mxu0 0.0
    %6235 = vmatprep.subr.mxu0 0.0
    %6236 = vmatpush1.msra.mxu0 0.0
    %6237 = vmatprep.subr.mxu0 0.0
    %6238 = vmatpush1.msra.mxu0 0.0
    %6239 = vmatprep.subr.mxu0 0.0
    %6240 = vmatpush1.msra.mxu0 0.0
    %6241 = vmatprep.subr.mxu0 0.0
    %6242 = vmatpush1.msra.mxu0 0.0
    %6243 = vmatprep.subr.mxu0 0.0
    %6244 = vmatpush1.msra.mxu0 0.0
    %6245 = vmatprep.subr.mxu0 0.0
    %6246 = vmatpush1.msra.mxu0 0.0
    %6247 = vmatprep.subr.mxu0 0.0
    %6248 = vmatpush1.msra.mxu0 0.0
    %6249 = vmatprep.subr.mxu0 0.0
    %6250 = vmatpush1.msra.mxu0 0.0
    %6251 = vmatprep.subr.mxu0 0.0
    %6252 = vmatpush1.msra.mxu0 0.0
    %6253 = vmatprep.subr.mxu0 0.0
    %6254 = vmatpush1.msra.mxu0 0.0
    %6255 = vmatprep.subr.mxu0 0.0
    %6256 = vmatpush1.msra.mxu0 0.0
    %6257 = vmatprep.subr.mxu0 0.0
    %6258 = vmatpush1.msra.mxu0 0.0
    %6259 = vmatprep.subr.mxu0 0.0
    %6260 = vmatpush1.msra.mxu0 0.0
    %6261 = vmatprep.subr.mxu0 %v5360
    %6262 = vmatpush1.msra.mxu0 %v5358
    %6263 = vmatprep.subr.mxu0 %v5359
    %6264 = vmatpush1.msra.mxu0 %v5357
    %6265 = vmatprep.subr.mxu0 0.0
    %6266 = vmatpush2.msra.mxu0 0.0
    %6267 = vmatprep.subr.mxu0 0.0
    %6268 = vmatpush2.msra.mxu0 0.0
    %6269 = vmatprep.subr.mxu0 0.0
    %6270 = vmatpush2.msra.mxu0 0.0
    %6271 = vmatprep.subr.mxu0 0.0
    %6272 = vmatpush2.msra.mxu0 0.0
    %6273 = vmatprep.subr.mxu0 0.0
    %6274 = vmatpush2.msra.mxu0 0.0
    %6275 = vmatprep.subr.mxu0 0.0
    %6276 = vmatpush2.msra.mxu0 0.0
    %6277 = vmatprep.subr.mxu0 0.0
    %6278 = vmatpush2.msra.mxu0 0.0
    %6279 = vmatprep.subr.mxu0 0.0
    %6280 = vmatpush2.msra.mxu0 0.0
    %6281 = vmatprep.subr.mxu0 0.0
    %6282 = vmatpush2.msra.mxu0 0.0
    %6283 = vmatprep.subr.mxu0 0.0
    %6284 = vmatpush2.msra.mxu0 0.0
    %6285 = vmatprep.subr.mxu0 0.0
    %6286 = vmatpush2.msra.mxu0 0.0
    %6287 = vmatprep.subr.mxu0 0.0
    %6288 = vmatpush2.msra.mxu0 0.0
    %6289 = vmatprep.subr.mxu0 0.0
    %6290 = vmatpush2.msra.mxu0 0.0
    %6291 = vmatprep.subr.mxu0 0.0
    %6292 = vmatpush2.msra.mxu0 0.0
    %6293 = vmatprep.subr.mxu0 0.0
    %6294 = vmatpush2.msra.mxu0 0.0
    %6295 = vmatprep.subr.mxu0 0.0
    %6296 = vmatpush2.msra.mxu0 0.0
    %6297 = vmatprep.mubr.f32.mxu0 0.0
    %6298 = vmatmul.mubr.f32.gmra.mxu0 %v5381
    %v6299 = vpop.f32.mrf.mxu0
    %v6300 = vadd.f32 0.0, %v6299
    %v6301 = vpop.f32.mrf.mxu0
    %v6302 = vadd.f32 0.0, %v6301
    %6303 = vmatprep.mubr.f32.mxu0 0.0
    %6304 = vmatmul.mubr.f32.gmra.mxu0 %v5384
    %v6305 = vpop.f32.mrf.mxu0
    %v6306 = vadd.f32 0.0, %v6305
    %v6307 = vpop.f32.mrf.mxu0
    %v6308 = vadd.f32 0.0, %v6307
    %6309 = vdwg.mxu0
    %6310 = vmatprep.subr.mxu0 0.0
    %6311 = vmatpush1.msra.mxu0 0.0
    %6312 = vmatprep.subr.mxu0 0.0
    %6313 = vmatpush1.msra.mxu0 0.0
    %6314 = vmatprep.subr.mxu0 0.0
    %6315 = vmatpush1.msra.mxu0 0.0
    %6316 = vmatprep.subr.mxu0 0.0
    %6317 = vmatpush1.msra.mxu0 0.0
    %6318 = vmatprep.subr.mxu0 0.0
    %6319 = vmatpush1.msra.mxu0 0.0
    %6320 = vmatprep.subr.mxu0 0.0
    %6321 = vmatpush1.msra.mxu0 0.0
    %6322 = vmatprep.subr.mxu0 0.0
    %6323 = vmatpush1.msra.mxu0 0.0
    %6324 = vmatprep.subr.mxu0 0.0
    %6325 = vmatpush1.msra.mxu0 0.0
    %6326 = vmatprep.subr.mxu0 0.0
    %6327 = vmatpush1.msra.mxu0 0.0
    %6328 = vmatprep.subr.mxu0 0.0
    %6329 = vmatpush1.msra.mxu0 0.0
    %6330 = vmatprep.subr.mxu0 0.0
    %6331 = vmatpush1.msra.mxu0 0.0
    %6332 = vmatprep.subr.mxu0 0.0
    %6333 = vmatpush1.msra.mxu0 0.0
    %6334 = vmatprep.subr.mxu0 0.0
    %6335 = vmatpush1.msra.mxu0 0.0
    %6336 = vmatprep.subr.mxu0 0.0
    %6337 = vmatpush1.msra.mxu0 0.0
    %6338 = vmatprep.subr.mxu0 %v5364
    %6339 = vmatpush1.msra.mxu0 %v5362
    %6340 = vmatprep.subr.mxu0 %v5363
    %6341 = vmatpush1.msra.mxu0 %v5361
    %6342 = vmatprep.subr.mxu0 0.0
    %6343 = vmatpush2.msra.mxu0 0.0
    %6344 = vmatprep.subr.mxu0 0.0
    %6345 = vmatpush2.msra.mxu0 0.0
    %6346 = vmatprep.subr.mxu0 0.0
    %6347 = vmatpush2.msra.mxu0 0.0
    %6348 = vmatprep.subr.mxu0 0.0
    %6349 = vmatpush2.msra.mxu0 0.0
    %6350 = vmatprep.subr.mxu0 0.0
    %6351 = vmatpush2.msra.mxu0 0.0
    %6352 = vmatprep.subr.mxu0 0.0
    %6353 = vmatpush2.msra.mxu0 0.0
    %6354 = vmatprep.subr.mxu0 0.0
    %6355 = vmatpush2.msra.mxu0 0.0
    %6356 = vmatprep.subr.mxu0 0.0
    %6357 = vmatpush2.msra.mxu0 0.0
    %6358 = vmatprep.subr.mxu0 0.0
    %6359 = vmatpush2.msra.mxu0 0.0
    %6360 = vmatprep.subr.mxu0 0.0
    %6361 = vmatpush2.msra.mxu0 0.0
    %6362 = vmatprep.subr.mxu0 0.0
    %6363 = vmatpush2.msra.mxu0 0.0
    %6364 = vmatprep.subr.mxu0 0.0
    %6365 = vmatpush2.msra.mxu0 0.0
    %6366 = vmatprep.subr.mxu0 0.0
    %6367 = vmatpush2.msra.mxu0 0.0
    %6368 = vmatprep.subr.mxu0 0.0
    %6369 = vmatpush2.msra.mxu0 0.0
    %6370 = vmatprep.subr.mxu0 0.0
    %6371 = vmatpush2.msra.mxu0 0.0
    %6372 = vmatprep.subr.mxu0 0.0
    %6373 = vmatpush2.msra.mxu0 0.0
    %6374 = vmatprep.mubr.f32.mxu0 0.0
    %6375 = vmatmul.mubr.f32.gmra.mxu0 %v5381
    %v6376 = vpop.f32.mrf.mxu0
    %v6377 = vadd.f32 0.0, %v6376
    %v6378 = vpop.f32.mrf.mxu0
    %v6379 = vadd.f32 0.0, %v6378
    %6380 = vmatprep.mubr.f32.mxu0 0.0
    %6381 = vmatmul.mubr.f32.gmra.mxu0 %v5384
    %v6382 = vpop.f32.mrf.mxu0
    %v6383 = vadd.f32 0.0, %v6382
    %v6384 = vpop.f32.mrf.mxu0
    %v6385 = vadd.f32 0.0, %v6384
    %6386 = vdwg.mxu0
    %6387 = vmatprep.subr.mxu0 0.0
    %6388 = vmatpush1.msra.mxu0 0.0
    %6389 = vmatprep.subr.mxu0 0.0
    %6390 = vmatpush1.msra.mxu0 0.0
    %6391 = vmatprep.subr.mxu0 0.0
    %6392 = vmatpush1.msra.mxu0 0.0
    %6393 = vmatprep.subr.mxu0 0.0
    %6394 = vmatpush1.msra.mxu0 0.0
    %6395 = vmatprep.subr.mxu0 0.0
    %6396 = vmatpush1.msra.mxu0 0.0
    %6397 = vmatprep.subr.mxu0 0.0
    %6398 = vmatpush1.msra.mxu0 0.0
    %6399 = vmatprep.subr.mxu0 0.0
    %6400 = vmatpush1.msra.mxu0 0.0
    %6401 = vmatprep.subr.mxu0 0.0
    %6402 = vmatpush1.msra.mxu0 0.0
    %6403 = vmatprep.subr.mxu0 0.0
    %6404 = vmatpush1.msra.mxu0 0.0
    %6405 = vmatprep.subr.mxu0 0.0
    %6406 = vmatpush1.msra.mxu0 0.0
    %6407 = vmatprep.subr.mxu0 0.0
    %6408 = vmatpush1.msra.mxu0 0.0
    %6409 = vmatprep.subr.mxu0 0.0
    %6410 = vmatpush1.msra.mxu0 0.0
    %6411 = vmatprep.subr.mxu0 0.0
    %6412 = vmatpush1.msra.mxu0 0.0
    %6413 = vmatprep.subr.mxu0 0.0
    %6414 = vmatpush1.msra.mxu0 0.0
    %6415 = vmatprep.subr.mxu0 %v5368
    %6416 = vmatpush1.msra.mxu0 %v5366
    %6417 = vmatprep.subr.mxu0 %v5367
    %6418 = vmatpush1.msra.mxu0 %v5365
    %6419 = vmatprep.subr.mxu0 0.0
    %6420 = vmatpush2.msra.mxu0 0.0
    %6421 = vmatprep.subr.mxu0 0.0
    %6422 = vmatpush2.msra.mxu0 0.0
    %6423 = vmatprep.subr.mxu0 0.0
    %6424 = vmatpush2.msra.mxu0 0.0
    %6425 = vmatprep.subr.mxu0 0.0
    %6426 = vmatpush2.msra.mxu0 0.0
    %6427 = vmatprep.subr.mxu0 0.0
    %6428 = vmatpush2.msra.mxu0 0.0
    %6429 = vmatprep.subr.mxu0 0.0
    %6430 = vmatpush2.msra.mxu0 0.0
    %6431 = vmatprep.subr.mxu0 0.0
    %6432 = vmatpush2.msra.mxu0 0.0
    %6433 = vmatprep.subr.mxu0 0.0
    %6434 = vmatpush2.msra.mxu0 0.0
    %6435 = vmatprep.subr.mxu0 0.0
    %6436 = vmatpush2.msra.mxu0 0.0
    %6437 = vmatprep.subr.mxu0 0.0
    %6438 = vmatpush2.msra.mxu0 0.0
    %6439 = vmatprep.subr.mxu0 0.0
    %6440 = vmatpush2.msra.mxu0 0.0
    %6441 = vmatprep.subr.mxu0 0.0
    %6442 = vmatpush2.msra.mxu0 0.0
    %6443 = vmatprep.subr.mxu0 0.0
    %6444 = vmatpush2.msra.mxu0 0.0
    %6445 = vmatprep.subr.mxu0 0.0
    %6446 = vmatpush2.msra.mxu0 0.0
    %6447 = vmatprep.subr.mxu0 0.0
    %6448 = vmatpush2.msra.mxu0 0.0
    %6449 = vmatprep.subr.mxu0 0.0
    %6450 = vmatpush2.msra.mxu0 0.0
    %6451 = vmatprep.mubr.f32.mxu0 0.0
    %6452 = vmatmul.mubr.f32.gmra.mxu0 %v5381
    %v6453 = vpop.f32.mrf.mxu0
    %v6454 = vadd.f32 0.0, %v6453
    %v6455 = vpop.f32.mrf.mxu0
    %v6456 = vadd.f32 0.0, %v6455
    %6457 = vmatprep.mubr.f32.mxu0 0.0
    %6458 = vmatmul.mubr.f32.gmra.mxu0 %v5384
    %v6459 = vpop.f32.mrf.mxu0
    %v6460 = vadd.f32 0.0, %v6459
    %v6461 = vpop.f32.mrf.mxu0
    %v6462 = vadd.f32 0.0, %v6461
    %6463 = vdwg.mxu0
    %6464 = vmatprep.subr.mxu0 0.0
    %6465 = vmatpush1.msra.mxu0 0.0
    %6466 = vmatprep.subr.mxu0 0.0
    %6467 = vmatpush1.msra.mxu0 0.0
    %6468 = vmatprep.subr.mxu0 0.0
    %6469 = vmatpush1.msra.mxu0 0.0
    %6470 = vmatprep.subr.mxu0 0.0
    %6471 = vmatpush1.msra.mxu0 0.0
    %6472 = vmatprep.subr.mxu0 0.0
    %6473 = vmatpush1.msra.mxu0 0.0
    %6474 = vmatprep.subr.mxu0 0.0
    %6475 = vmatpush1.msra.mxu0 0.0
    %6476 = vmatprep.subr.mxu0 0.0
    %6477 = vmatpush1.msra.mxu0 0.0
    %6478 = vmatprep.subr.mxu0 0.0
    %6479 = vmatpush1.msra.mxu0 0.0
    %6480 = vmatprep.subr.mxu0 0.0
    %6481 = vmatpush1.msra.mxu0 0.0
    %6482 = vmatprep.subr.mxu0 0.0
    %6483 = vmatpush1.msra.mxu0 0.0
    %6484 = vmatprep.subr.mxu0 0.0
    %6485 = vmatpush1.msra.mxu0 0.0
    %6486 = vmatprep.subr.mxu0 0.0
    %6487 = vmatpush1.msra.mxu0 0.0
    %6488 = vmatprep.subr.mxu0 0.0
    %6489 = vmatpush1.msra.mxu0 0.0
    %6490 = vmatprep.subr.mxu0 0.0
    %6491 = vmatpush1.msra.mxu0 0.0
    %6492 = vmatprep.subr.mxu0 %v5372
    %6493 = vmatpush1.msra.mxu0 %v5370
    %6494 = vmatprep.subr.mxu0 %v5371
    %6495 = vmatpush1.msra.mxu0 %v5369
    %6496 = vmatprep.subr.mxu0 0.0
    %6497 = vmatpush2.msra.mxu0 0.0
    %6498 = vmatprep.subr.mxu0 0.0
    %6499 = vmatpush2.msra.mxu0 0.0
    %6500 = vmatprep.subr.mxu0 0.0
    %6501 = vmatpush2.msra.mxu0 0.0
    %6502 = vmatprep.subr.mxu0 0.0
    %6503 = vmatpush2.msra.mxu0 0.0
    %6504 = vmatprep.subr.mxu0 0.0
    %6505 = vmatpush2.msra.mxu0 0.0
    %6506 = vmatprep.subr.mxu0 0.0
    %6507 = vmatpush2.msra.mxu0 0.0
    %6508 = vmatprep.subr.mxu0 0.0
    %6509 = vmatpush2.msra.mxu0 0.0
    %6510 = vmatprep.subr.mxu0 0.0
    %6511 = vmatpush2.msra.mxu0 0.0
    %6512 = vmatprep.subr.mxu0 0.0
    %6513 = vmatpush2.msra.mxu0 0.0
    %6514 = vmatprep.subr.mxu0 0.0
    %6515 = vmatpush2.msra.mxu0 0.0
    %6516 = vmatprep.subr.mxu0 0.0
    %6517 = vmatpush2.msra.mxu0 0.0
    %6518 = vmatprep.subr.mxu0 0.0
    %6519 = vmatpush2.msra.mxu0 0.0
    %6520 = vmatprep.subr.mxu0 0.0
    %6521 = vmatpush2.msra.mxu0 0.0
    %6522 = vmatprep.subr.mxu0 0.0
    %6523 = vmatpush2.msra.mxu0 0.0
    %6524 = vmatprep.subr.mxu0 0.0
    %6525 = vmatpush2.msra.mxu0 0.0
    %6526 = vmatprep.subr.mxu0 0.0
    %6527 = vmatpush2.msra.mxu0 0.0
    %6528 = vmatprep.mubr.f32.mxu0 0.0
    %6529 = vmatmul.mubr.f32.gmra.mxu0 %v5381
    %v6530 = vpop.f32.mrf.mxu0
    %v6531 = vadd.f32 0.0, %v6530
    %v6532 = vpop.f32.mrf.mxu0
    %v6533 = vadd.f32 0.0, %v6532
    %6534 = vmatprep.mubr.f32.mxu0 0.0
    %6535 = vmatmul.mubr.f32.gmra.mxu0 %v5384
    %v6536 = vpop.f32.mrf.mxu0
    %v6537 = vadd.f32 0.0, %v6536
    %v6538 = vpop.f32.mrf.mxu0
    %v6539 = vadd.f32 0.0, %v6538
    %6540 = vdwg.mxu0
    %v6542 = vsel %vm5379, %v5373, 0
    %v6545 = vsel %vm5379, %v5374, 0
    %6547 = vmatprep.subr.mxu0 0.0
    %6548 = vmatpush1.msra.mxu0 0.0
    %6549 = vmatprep.subr.mxu0 0.0
    %6550 = vmatpush1.msra.mxu0 0.0
    %6551 = vmatprep.subr.mxu0 0.0
    %6552 = vmatpush1.msra.mxu0 0.0
    %6553 = vmatprep.subr.mxu0 0.0
    %6554 = vmatpush1.msra.mxu0 0.0
    %6555 = vmatprep.subr.mxu0 0.0
    %6556 = vmatpush1.msra.mxu0 0.0
    %6557 = vmatprep.subr.mxu0 0.0
    %6558 = vmatpush1.msra.mxu0 0.0
    %6559 = vmatprep.subr.mxu0 0.0
    %6560 = vmatpush1.msra.mxu0 0.0
    %6561 = vmatprep.subr.mxu0 0.0
    %6562 = vmatpush1.msra.mxu0 0.0
    %6563 = vmatprep.subr.mxu0 0.0
    %6564 = vmatpush1.msra.mxu0 0.0
    %6565 = vmatprep.subr.mxu0 0.0
    %6566 = vmatpush1.msra.mxu0 0.0
    %6567 = vmatprep.subr.mxu0 0.0
    %6568 = vmatpush1.msra.mxu0 0.0
    %6569 = vmatprep.subr.mxu0 0.0
    %6570 = vmatpush1.msra.mxu0 0.0
    %6571 = vmatprep.subr.mxu0 0.0
    %6572 = vmatpush1.msra.mxu0 0.0
    %6573 = vmatprep.subr.mxu0 0.0
    %6574 = vmatpush1.msra.mxu0 0.0
    %6575 = vmatprep.subr.mxu0 %v5314
    %6576 = vmatpush1.msra.mxu0 %v5312
    %6577 = vmatprep.subr.mxu0 %v5313
    %6578 = vmatpush1.msra.mxu0 %v5311
    %6579 = vmatprep.subr.mxu0 0.0
    %6580 = vmatpush2.msra.mxu0 0.0
    %6581 = vmatprep.subr.mxu0 0.0
    %6582 = vmatpush2.msra.mxu0 0.0
    %6583 = vmatprep.subr.mxu0 0.0
    %6584 = vmatpush2.msra.mxu0 0.0
    %6585 = vmatprep.subr.mxu0 0.0
    %6586 = vmatpush2.msra.mxu0 0.0
    %6587 = vmatprep.subr.mxu0 0.0
    %6588 = vmatpush2.msra.mxu0 0.0
    %6589 = vmatprep.subr.mxu0 0.0
    %6590 = vmatpush2.msra.mxu0 0.0
    %6591 = vmatprep.subr.mxu0 0.0
    %6592 = vmatpush2.msra.mxu0 0.0
    %6593 = vmatprep.subr.mxu0 0.0
    %6594 = vmatpush2.msra.mxu0 0.0
    %6595 = vmatprep.subr.mxu0 0.0
    %6596 = vmatpush2.msra.mxu0 0.0
    %6597 = vmatprep.subr.mxu0 0.0
    %6598 = vmatpush2.msra.mxu0 0.0
    %6599 = vmatprep.subr.mxu0 0.0
    %6600 = vmatpush2.msra.mxu0 0.0
    %6601 = vmatprep.subr.mxu0 0.0
    %6602 = vmatpush2.msra.mxu0 0.0
    %6603 = vmatprep.subr.mxu0 0.0
    %6604 = vmatpush2.msra.mxu0 0.0
    %6605 = vmatprep.subr.mxu0 0.0
    %6606 = vmatpush2.msra.mxu0 0.0
    %6607 = vmatprep.subr.mxu0 0.0
    %6608 = vmatpush2.msra.mxu0 0.0
    %6609 = vmatprep.subr.mxu0 0.0
    %6610 = vmatpush2.msra.mxu0 0.0
    %6611 = vmatprep.mubr.f32.mxu0 0.0
    %6612 = vmatmul.mubr.f32.gmra.mxu0 %v6542
    %v6613 = vpop.f32.mrf.mxu0
    %v6614 = vadd.f32 %v5453, %v6613
    %v6615 = vpop.f32.mrf.mxu0
    %v6616 = vadd.f32 %v5455, %v6615
    %6617 = vmatprep.mubr.f32.mxu0 0.0
    %6618 = vmatmul.mubr.f32.gmra.mxu0 %v6545
    %v6619 = vpop.f32.mrf.mxu0
    %v6620 = vadd.f32 %v5459, %v6619
    %v6621 = vpop.f32.mrf.mxu0
    %v6622 = vadd.f32 %v5461, %v6621
    %6623 = vdwg.mxu0
    %6624 = vmatprep.subr.mxu0 0.0
    %6625 = vmatpush1.msra.mxu0 0.0
    %6626 = vmatprep.subr.mxu0 0.0
    %6627 = vmatpush1.msra.mxu0 0.0
    %6628 = vmatprep.subr.mxu0 0.0
    %6629 = vmatpush1.msra.mxu0 0.0
    %6630 = vmatprep.subr.mxu0 0.0
    %6631 = vmatpush1.msra.mxu0 0.0
    %6632 = vmatprep.subr.mxu0 0.0
    %6633 = vmatpush1.msra.mxu0 0.0
    %6634 = vmatprep.subr.mxu0 0.0
    %6635 = vmatpush1.msra.mxu0 0.0
    %6636 = vmatprep.subr.mxu0 0.0
    %6637 = vmatpush1.msra.mxu0 0.0
    %6638 = vmatprep.subr.mxu0 0.0
    %6639 = vmatpush1.msra.mxu0 0.0
    %6640 = vmatprep.subr.mxu0 0.0
    %6641 = vmatpush1.msra.mxu0 0.0
    %6642 = vmatprep.subr.mxu0 0.0
    %6643 = vmatpush1.msra.mxu0 0.0
    %6644 = vmatprep.subr.mxu0 0.0
    %6645 = vmatpush1.msra.mxu0 0.0
    %6646 = vmatprep.subr.mxu0 0.0
    %6647 = vmatpush1.msra.mxu0 0.0
    %6648 = vmatprep.subr.mxu0 0.0
    %6649 = vmatpush1.msra.mxu0 0.0
    %6650 = vmatprep.subr.mxu0 0.0
    %6651 = vmatpush1.msra.mxu0 0.0
    %6652 = vmatprep.subr.mxu0 %v5318
    %6653 = vmatpush1.msra.mxu0 %v5316
    %6654 = vmatprep.subr.mxu0 %v5317
    %6655 = vmatpush1.msra.mxu0 %v5315
    %6656 = vmatprep.subr.mxu0 0.0
    %6657 = vmatpush2.msra.mxu0 0.0
    %6658 = vmatprep.subr.mxu0 0.0
    %6659 = vmatpush2.msra.mxu0 0.0
    %6660 = vmatprep.subr.mxu0 0.0
    %6661 = vmatpush2.msra.mxu0 0.0
    %6662 = vmatprep.subr.mxu0 0.0
    %6663 = vmatpush2.msra.mxu0 0.0
    %6664 = vmatprep.subr.mxu0 0.0
    %6665 = vmatpush2.msra.mxu0 0.0
    %6666 = vmatprep.subr.mxu0 0.0
    %6667 = vmatpush2.msra.mxu0 0.0
    %6668 = vmatprep.subr.mxu0 0.0
    %6669 = vmatpush2.msra.mxu0 0.0
    %6670 = vmatprep.subr.mxu0 0.0
    %6671 = vmatpush2.msra.mxu0 0.0
    %6672 = vmatprep.subr.mxu0 0.0
    %6673 = vmatpush2.msra.mxu0 0.0
    %6674 = vmatprep.subr.mxu0 0.0
    %6675 = vmatpush2.msra.mxu0 0.0
    %6676 = vmatprep.subr.mxu0 0.0
    %6677 = vmatpush2.msra.mxu0 0.0
    %6678 = vmatprep.subr.mxu0 0.0
    %6679 = vmatpush2.msra.mxu0 0.0
    %6680 = vmatprep.subr.mxu0 0.0
    %6681 = vmatpush2.msra.mxu0 0.0
    %6682 = vmatprep.subr.mxu0 0.0
    %6683 = vmatpush2.msra.mxu0 0.0
    %6684 = vmatprep.subr.mxu0 0.0
    %6685 = vmatpush2.msra.mxu0 0.0
    %6686 = vmatprep.subr.mxu0 0.0
    %6687 = vmatpush2.msra.mxu0 0.0
    %6688 = vmatprep.mubr.f32.mxu0 0.0
    %6689 = vmatmul.mubr.f32.gmra.mxu0 %v6542
    %v6690 = vpop.f32.mrf.mxu0
    %v6691 = vadd.f32 %v5530, %v6690
    %v6692 = vpop.f32.mrf.mxu0
    %v6693 = vadd.f32 %v5532, %v6692
    %6694 = vmatprep.mubr.f32.mxu0 0.0
    %6695 = vmatmul.mubr.f32.gmra.mxu0 %v6545
    %v6696 = vpop.f32.mrf.mxu0
    %v6697 = vadd.f32 %v5536, %v6696
    %v6698 = vpop.f32.mrf.mxu0
    %v6699 = vadd.f32 %v5538, %v6698
    %6700 = vdwg.mxu0
    %6701 = vmatprep.subr.mxu0 0.0
    %6702 = vmatpush1.msra.mxu0 0.0
    %6703 = vmatprep.subr.mxu0 0.0
    %6704 = vmatpush1.msra.mxu0 0.0
    %6705 = vmatprep.subr.mxu0 0.0
    %6706 = vmatpush1.msra.mxu0 0.0
    %6707 = vmatprep.subr.mxu0 0.0
    %6708 = vmatpush1.msra.mxu0 0.0
    %6709 = vmatprep.subr.mxu0 0.0
    %6710 = vmatpush1.msra.mxu0 0.0
    %6711 = vmatprep.subr.mxu0 0.0
    %6712 = vmatpush1.msra.mxu0 0.0
    %6713 = vmatprep.subr.mxu0 0.0
    %6714 = vmatpush1.msra.mxu0 0.0
    %6715 = vmatprep.subr.mxu0 0.0
    %6716 = vmatpush1.msra.mxu0 0.0
    %6717 = vmatprep.subr.mxu0 0.0
    %6718 = vmatpush1.msra.mxu0 0.0
    %6719 = vmatprep.subr.mxu0 0.0
    %6720 = vmatpush1.msra.mxu0 0.0
    %6721 = vmatprep.subr.mxu0 0.0
    %6722 = vmatpush1.msra.mxu0 0.0
    %6723 = vmatprep.subr.mxu0 0.0
    %6724 = vmatpush1.msra.mxu0 0.0
    %6725 = vmatprep.subr.mxu0 0.0
    %6726 = vmatpush1.msra.mxu0 0.0
    %6727 = vmatprep.subr.mxu0 0.0
    %6728 = vmatpush1.msra.mxu0 0.0
    %6729 = vmatprep.subr.mxu0 %v5322
    %6730 = vmatpush1.msra.mxu0 %v5320
    %6731 = vmatprep.subr.mxu0 %v5321
    %6732 = vmatpush1.msra.mxu0 %v5319
    %6733 = vmatprep.subr.mxu0 0.0
    %6734 = vmatpush2.msra.mxu0 0.0
    %6735 = vmatprep.subr.mxu0 0.0
    %6736 = vmatpush2.msra.mxu0 0.0
    %6737 = vmatprep.subr.mxu0 0.0
    %6738 = vmatpush2.msra.mxu0 0.0
    %6739 = vmatprep.subr.mxu0 0.0
    %6740 = vmatpush2.msra.mxu0 0.0
    %6741 = vmatprep.subr.mxu0 0.0
    %6742 = vmatpush2.msra.mxu0 0.0
    %6743 = vmatprep.subr.mxu0 0.0
    %6744 = vmatpush2.msra.mxu0 0.0
    %6745 = vmatprep.subr.mxu0 0.0
    %6746 = vmatpush2.msra.mxu0 0.0
    %6747 = vmatprep.subr.mxu0 0.0
    %6748 = vmatpush2.msra.mxu0 0.0
    %6749 = vmatprep.subr.mxu0 0.0
    %6750 = vmatpush2.msra.mxu0 0.0
    %6751 = vmatprep.subr.mxu0 0.0
    %6752 = vmatpush2.msra.mxu0 0.0
    %6753 = vmatprep.subr.mxu0 0.0
    %6754 = vmatpush2.msra.mxu0 0.0
    %6755 = vmatprep.subr.mxu0 0.0
    %6756 = vmatpush2.msra.mxu0 0.0
    %6757 = vmatprep.subr.mxu0 0.0
    %6758 = vmatpush2.msra.mxu0 0.0
    %6759 = vmatprep.subr.mxu0 0.0
    %6760 = vmatpush2.msra.mxu0 0.0
    %6761 = vmatprep.subr.mxu0 0.0
    %6762 = vmatpush2.msra.mxu0 0.0
    %6763 = vmatprep.subr.mxu0 0.0
    %6764 = vmatpush2.msra.mxu0 0.0
    %6765 = vmatprep.mubr.f32.mxu0 0.0
    %6766 = vmatmul.mubr.f32.gmra.mxu0 %v6542
    %v6767 = vpop.f32.mrf.mxu0
    %v6768 = vadd.f32 %v5607, %v6767
    %v6769 = vpop.f32.mrf.mxu0
    %v6770 = vadd.f32 %v5609, %v6769
    %6771 = vmatprep.mubr.f32.mxu0 0.0
    %6772 = vmatmul.mubr.f32.gmra.mxu0 %v6545
    %v6773 = vpop.f32.mrf.mxu0
    %v6774 = vadd.f32 %v5613, %v6773
    %v6775 = vpop.f32.mrf.mxu0
    %v6776 = vadd.f32 %v5615, %v6775
    %6777 = vdwg.mxu0
    %6778 = vmatprep.subr.mxu0 0.0
    %6779 = vmatpush1.msra.mxu0 0.0
    %6780 = vmatprep.subr.mxu0 0.0
    %6781 = vmatpush1.msra.mxu0 0.0
    %6782 = vmatprep.subr.mxu0 0.0
    %6783 = vmatpush1.msra.mxu0 0.0
    %6784 = vmatprep.subr.mxu0 0.0
    %6785 = vmatpush1.msra.mxu0 0.0
    %6786 = vmatprep.subr.mxu0 0.0
    %6787 = vmatpush1.msra.mxu0 0.0
    %6788 = vmatprep.subr.mxu0 0.0
    %6789 = vmatpush1.msra.mxu0 0.0
    %6790 = vmatprep.subr.mxu0 0.0
    %6791 = vmatpush1.msra.mxu0 0.0
    %6792 = vmatprep.subr.mxu0 0.0
    %6793 = vmatpush1.msra.mxu0 0.0
    %6794 = vmatprep.subr.mxu0 0.0
    %6795 = vmatpush1.msra.mxu0 0.0
    %6796 = vmatprep.subr.mxu0 0.0
    %6797 = vmatpush1.msra.mxu0 0.0
    %6798 = vmatprep.subr.mxu0 0.0
    %6799 = vmatpush1.msra.mxu0 0.0
    %6800 = vmatprep.subr.mxu0 0.0
    %6801 = vmatpush1.msra.mxu0 0.0
    %6802 = vmatprep.subr.mxu0 0.0
    %6803 = vmatpush1.msra.mxu0 0.0
    %6804 = vmatprep.subr.mxu0 0.0
    %6805 = vmatpush1.msra.mxu0 0.0
    %6806 = vmatprep.subr.mxu0 %v5326
    %6807 = vmatpush1.msra.mxu0 %v5324
    %6808 = vmatprep.subr.mxu0 %v5325
    %6809 = vmatpush1.msra.mxu0 %v5323
    %6810 = vmatprep.subr.mxu0 0.0
    %6811 = vmatpush2.msra.mxu0 0.0
    %6812 = vmatprep.subr.mxu0 0.0
    %6813 = vmatpush2.msra.mxu0 0.0
    %6814 = vmatprep.subr.mxu0 0.0
    %6815 = vmatpush2.msra.mxu0 0.0
    %6816 = vmatprep.subr.mxu0 0.0
    %6817 = vmatpush2.msra.mxu0 0.0
    %6818 = vmatprep.subr.mxu0 0.0
    %6819 = vmatpush2.msra.mxu0 0.0
    %6820 = vmatprep.subr.mxu0 0.0
    %6821 = vmatpush2.msra.mxu0 0.0
    %6822 = vmatprep.subr.mxu0 0.0
    %6823 = vmatpush2.msra.mxu0 0.0
    %6824 = vmatprep.subr.mxu0 0.0
    %6825 = vmatpush2.msra.mxu0 0.0
    %6826 = vmatprep.subr.mxu0 0.0
    %6827 = vmatpush2.msra.mxu0 0.0
    %6828 = vmatprep.subr.mxu0 0.0
    %6829 = vmatpush2.msra.mxu0 0.0
    %6830 = vmatprep.subr.mxu0 0.0
    %6831 = vmatpush2.msra.mxu0 0.0
    %6832 = vmatprep.subr.mxu0 0.0
    %6833 = vmatpush2.msra.mxu0 0.0
    %6834 = vmatprep.subr.mxu0 0.0
    %6835 = vmatpush2.msra.mxu0 0.0
    %6836 = vmatprep.subr.mxu0 0.0
    %6837 = vmatpush2.msra.mxu0 0.0
    %6838 = vmatprep.subr.mxu0 0.0
    %6839 = vmatpush2.msra.mxu0 0.0
    %6840 = vmatprep.subr.mxu0 0.0
    %6841 = vmatpush2.msra.mxu0 0.0
    %6842 = vmatprep.mubr.f32.mxu0 0.0
    %6843 = vmatmul.mubr.f32.gmra.mxu0 %v6542
    %v6844 = vpop.f32.mrf.mxu0
    %v6845 = vadd.f32 %v5684, %v6844
    %v6846 = vpop.f32.mrf.mxu0
    %v6847 = vadd.f32 %v5686, %v6846
    %6848 = vmatprep.mubr.f32.mxu0 0.0
    %6849 = vmatmul.mubr.f32.gmra.mxu0 %v6545
    %v6850 = vpop.f32.mrf.mxu0
    %v6851 = vadd.f32 %v5690, %v6850
    %v6852 = vpop.f32.mrf.mxu0
    %v6853 = vadd.f32 %v5692, %v6852
    %6854 = vdwg.mxu0
    %6855 = vmatprep.subr.mxu0 0.0
    %6856 = vmatpush1.msra.mxu0 0.0
    %6857 = vmatprep.subr.mxu0 0.0
    %6858 = vmatpush1.msra.mxu0 0.0
    %6859 = vmatprep.subr.mxu0 0.0
    %6860 = vmatpush1.msra.mxu0 0.0
    %6861 = vmatprep.subr.mxu0 0.0
    %6862 = vmatpush1.msra.mxu0 0.0
    %6863 = vmatprep.subr.mxu0 0.0
    %6864 = vmatpush1.msra.mxu0 0.0
    %6865 = vmatprep.subr.mxu0 0.0
    %6866 = vmatpush1.msra.mxu0 0.0
    %6867 = vmatprep.subr.mxu0 0.0
    %6868 = vmatpush1.msra.mxu0 0.0
    %6869 = vmatprep.subr.mxu0 0.0
    %6870 = vmatpush1.msra.mxu0 0.0
    %6871 = vmatprep.subr.mxu0 0.0
    %6872 = vmatpush1.msra.mxu0 0.0
    %6873 = vmatprep.subr.mxu0 0.0
    %6874 = vmatpush1.msra.mxu0 0.0
    %6875 = vmatprep.subr.mxu0 0.0
    %6876 = vmatpush1.msra.mxu0 0.0
    %6877 = vmatprep.subr.mxu0 0.0
    %6878 = vmatpush1.msra.mxu0 0.0
    %6879 = vmatprep.subr.mxu0 0.0
    %6880 = vmatpush1.msra.mxu0 0.0
    %6881 = vmatprep.subr.mxu0 0.0
    %6882 = vmatpush1.msra.mxu0 0.0
    %6883 = vmatprep.subr.mxu0 %v5330
    %6884 = vmatpush1.msra.mxu0 %v5328
    %6885 = vmatprep.subr.mxu0 %v5329
    %6886 = vmatpush1.msra.mxu0 %v5327
    %6887 = vmatprep.subr.mxu0 0.0
    %6888 = vmatpush2.msra.mxu0 0.0
    %6889 = vmatprep.subr.mxu0 0.0
    %6890 = vmatpush2.msra.mxu0 0.0
    %6891 = vmatprep.subr.mxu0 0.0
    %6892 = vmatpush2.msra.mxu0 0.0
    %6893 = vmatprep.subr.mxu0 0.0
    %6894 = vmatpush2.msra.mxu0 0.0
    %6895 = vmatprep.subr.mxu0 0.0
    %6896 = vmatpush2.msra.mxu0 0.0
    %6897 = vmatprep.subr.mxu0 0.0
    %6898 = vmatpush2.msra.mxu0 0.0
    %6899 = vmatprep.subr.mxu0 0.0
    %6900 = vmatpush2.msra.mxu0 0.0
    %6901 = vmatprep.subr.mxu0 0.0
    %6902 = vmatpush2.msra.mxu0 0.0
    %6903 = vmatprep.subr.mxu0 0.0
    %6904 = vmatpush2.msra.mxu0 0.0
    %6905 = vmatprep.subr.mxu0 0.0
    %6906 = vmatpush2.msra.mxu0 0.0
    %6907 = vmatprep.subr.mxu0 0.0
    %6908 = vmatpush2.msra.mxu0 0.0
    %6909 = vmatprep.subr.mxu0 0.0
    %6910 = vmatpush2.msra.mxu0 0.0
    %6911 = vmatprep.subr.mxu0 0.0
    %6912 = vmatpush2.msra.mxu0 0.0
    %6913 = vmatprep.subr.mxu0 0.0
    %6914 = vmatpush2.msra.mxu0 0.0
    %6915 = vmatprep.subr.mxu0 0.0
    %6916 = vmatpush2.msra.mxu0 0.0
    %6917 = vmatprep.subr.mxu0 0.0
    %6918 = vmatpush2.msra.mxu0 0.0
    %6919 = vmatprep.mubr.f32.mxu0 0.0
    %6920 = vmatmul.mubr.f32.gmra.mxu0 %v6542
    %v6921 = vpop.f32.mrf.mxu0
    %v6922 = vadd.f32 %v5761, %v6921
    %v6923 = vpop.f32.mrf.mxu0
    %v6924 = vadd.f32 %v5763, %v6923
    %6925 = vmatprep.mubr.f32.mxu0 0.0
    %6926 = vmatmul.mubr.f32.gmra.mxu0 %v6545
    %v6927 = vpop.f32.mrf.mxu0
    %v6928 = vadd.f32 %v5767, %v6927
    %v6929 = vpop.f32.mrf.mxu0
    %v6930 = vadd.f32 %v5769, %v6929
    %6931 = vdwg.mxu0
    %6932 = vmatprep.subr.mxu0 0.0
    %6933 = vmatpush1.msra.mxu0 0.0
    %6934 = vmatprep.subr.mxu0 0.0
    %6935 = vmatpush1.msra.mxu0 0.0
    %6936 = vmatprep.subr.mxu0 0.0
    %6937 = vmatpush1.msra.mxu0 0.0
    %6938 = vmatprep.subr.mxu0 0.0
    %6939 = vmatpush1.msra.mxu0 0.0
    %6940 = vmatprep.subr.mxu0 0.0
    %6941 = vmatpush1.msra.mxu0 0.0
    %6942 = vmatprep.subr.mxu0 0.0
    %6943 = vmatpush1.msra.mxu0 0.0
    %6944 = vmatprep.subr.mxu0 0.0
    %6945 = vmatpush1.msra.mxu0 0.0
    %6946 = vmatprep.subr.mxu0 0.0
    %6947 = vmatpush1.msra.mxu0 0.0
    %6948 = vmatprep.subr.mxu0 0.0
    %6949 = vmatpush1.msra.mxu0 0.0
    %6950 = vmatprep.subr.mxu0 0.0
    %6951 = vmatpush1.msra.mxu0 0.0
    %6952 = vmatprep.subr.mxu0 0.0
    %6953 = vmatpush1.msra.mxu0 0.0
    %6954 = vmatprep.subr.mxu0 0.0
    %6955 = vmatpush1.msra.mxu0 0.0
    %6956 = vmatprep.subr.mxu0 0.0
    %6957 = vmatpush1.msra.mxu0 0.0
    %6958 = vmatprep.subr.mxu0 0.0
    %6959 = vmatpush1.msra.mxu0 0.0
    %6960 = vmatprep.subr.mxu0 %v5334
    %6961 = vmatpush1.msra.mxu0 %v5332
    %6962 = vmatprep.subr.mxu0 %v5333
    %6963 = vmatpush1.msra.mxu0 %v5331
    %6964 = vmatprep.subr.mxu0 0.0
    %6965 = vmatpush2.msra.mxu0 0.0
    %6966 = vmatprep.subr.mxu0 0.0
    %6967 = vmatpush2.msra.mxu0 0.0
    %6968 = vmatprep.subr.mxu0 0.0
    %6969 = vmatpush2.msra.mxu0 0.0
    %6970 = vmatprep.subr.mxu0 0.0
    %6971 = vmatpush2.msra.mxu0 0.0
    %6972 = vmatprep.subr.mxu0 0.0
    %6973 = vmatpush2.msra.mxu0 0.0
    %6974 = vmatprep.subr.mxu0 0.0
    %6975 = vmatpush2.msra.mxu0 0.0
    %6976 = vmatprep.subr.mxu0 0.0
    %6977 = vmatpush2.msra.mxu0 0.0
    %6978 = vmatprep.subr.mxu0 0.0
    %6979 = vmatpush2.msra.mxu0 0.0
    %6980 = vmatprep.subr.mxu0 0.0
    %6981 = vmatpush2.msra.mxu0 0.0
    %6982 = vmatprep.subr.mxu0 0.0
    %6983 = vmatpush2.msra.mxu0 0.0
    %6984 = vmatprep.subr.mxu0 0.0
    %6985 = vmatpush2.msra.mxu0 0.0
    %6986 = vmatprep.subr.mxu0 0.0
    %6987 = vmatpush2.msra.mxu0 0.0
    %6988 = vmatprep.subr.mxu0 0.0
    %6989 = vmatpush2.msra.mxu0 0.0
    %6990 = vmatprep.subr.mxu0 0.0
    %6991 = vmatpush2.msra.mxu0 0.0
    %6992 = vmatprep.subr.mxu0 0.0
    %6993 = vmatpush2.msra.mxu0 0.0
    %6994 = vmatprep.subr.mxu0 0.0
    %6995 = vmatpush2.msra.mxu0 0.0
    %6996 = vmatprep.mubr.f32.mxu0 0.0
    %6997 = vmatmul.mubr.f32.gmra.mxu0 %v6542
    %v6998 = vpop.f32.mrf.mxu0
    %v6999 = vadd.f32 %v5838, %v6998
    %v7000 = vpop.f32.mrf.mxu0
    %v7001 = vadd.f32 %v5840, %v7000
    %7002 = vmatprep.mubr.f32.mxu0 0.0
    %7003 = vmatmul.mubr.f32.gmra.mxu0 %v6545
    %v7004 = vpop.f32.mrf.mxu0
    %v7005 = vadd.f32 %v5844, %v7004
    %v7006 = vpop.f32.mrf.mxu0
    %v7007 = vadd.f32 %v5846, %v7006
    %7008 = vdwg.mxu0
    %7009 = vmatprep.subr.mxu0 0.0
    %7010 = vmatpush1.msra.mxu0 0.0
    %7011 = vmatprep.subr.mxu0 0.0
    %7012 = vmatpush1.msra.mxu0 0.0
    %7013 = vmatprep.subr.mxu0 0.0
    %7014 = vmatpush1.msra.mxu0 0.0
    %7015 = vmatprep.subr.mxu0 0.0
    %7016 = vmatpush1.msra.mxu0 0.0
    %7017 = vmatprep.subr.mxu0 0.0
    %7018 = vmatpush1.msra.mxu0 0.0
    %7019 = vmatprep.subr.mxu0 0.0
    %7020 = vmatpush1.msra.mxu0 0.0
    %7021 = vmatprep.subr.mxu0 0.0
    %7022 = vmatpush1.msra.mxu0 0.0
    %7023 = vmatprep.subr.mxu0 0.0
    %7024 = vmatpush1.msra.mxu0 0.0
    %7025 = vmatprep.subr.mxu0 0.0
    %7026 = vmatpush1.msra.mxu0 0.0
    %7027 = vmatprep.subr.mxu0 0.0
    %7028 = vmatpush1.msra.mxu0 0.0
    %7029 = vmatprep.subr.mxu0 0.0
    %7030 = vmatpush1.msra.mxu0 0.0
    %7031 = vmatprep.subr.mxu0 0.0
    %7032 = vmatpush1.msra.mxu0 0.0
    %7033 = vmatprep.subr.mxu0 0.0
    %7034 = vmatpush1.msra.mxu0 0.0
    %7035 = vmatprep.subr.mxu0 0.0
    %7036 = vmatpush1.msra.mxu0 0.0
    %7037 = vmatprep.subr.mxu0 %v5338
    %7038 = vmatpush1.msra.mxu0 %v5336
    %7039 = vmatprep.subr.mxu0 %v5337
    %7040 = vmatpush1.msra.mxu0 %v5335
    %7041 = vmatprep.subr.mxu0 0.0
    %7042 = vmatpush2.msra.mxu0 0.0
    %7043 = vmatprep.subr.mxu0 0.0
    %7044 = vmatpush2.msra.mxu0 0.0
    %7045 = vmatprep.subr.mxu0 0.0
    %7046 = vmatpush2.msra.mxu0 0.0
    %7047 = vmatprep.subr.mxu0 0.0
    %7048 = vmatpush2.msra.mxu0 0.0
    %7049 = vmatprep.subr.mxu0 0.0
    %7050 = vmatpush2.msra.mxu0 0.0
    %7051 = vmatprep.subr.mxu0 0.0
    %7052 = vmatpush2.msra.mxu0 0.0
    %7053 = vmatprep.subr.mxu0 0.0
    %7054 = vmatpush2.msra.mxu0 0.0
    %7055 = vmatprep.subr.mxu0 0.0
    %7056 = vmatpush2.msra.mxu0 0.0
    %7057 = vmatprep.subr.mxu0 0.0
    %7058 = vmatpush2.msra.mxu0 0.0
    %7059 = vmatprep.subr.mxu0 0.0
    %7060 = vmatpush2.msra.mxu0 0.0
    %7061 = vmatprep.subr.mxu0 0.0
    %7062 = vmatpush2.msra.mxu0 0.0
    %7063 = vmatprep.subr.mxu0 0.0
    %7064 = vmatpush2.msra.mxu0 0.0
    %7065 = vmatprep.subr.mxu0 0.0
    %7066 = vmatpush2.msra.mxu0 0.0
    %7067 = vmatprep.subr.mxu0 0.0
    %7068 = vmatpush2.msra.mxu0 0.0
    %7069 = vmatprep.subr.mxu0 0.0
    %7070 = vmatpush2.msra.mxu0 0.0
    %7071 = vmatprep.subr.mxu0 0.0
    %7072 = vmatpush2.msra.mxu0 0.0
    %7073 = vmatprep.mubr.f32.mxu0 0.0
    %7074 = vmatmul.mubr.f32.gmra.mxu0 %v6542
    %v7075 = vpop.f32.mrf.mxu0
    %v7076 = vadd.f32 %v5915, %v7075
    %v7077 = vpop.f32.mrf.mxu0
    %v7078 = vadd.f32 %v5917, %v7077
    %7079 = vmatprep.mubr.f32.mxu0 0.0
    %7080 = vmatmul.mubr.f32.gmra.mxu0 %v6545
    %v7081 = vpop.f32.mrf.mxu0
    %v7082 = vadd.f32 %v5921, %v7081
    %v7083 = vpop.f32.mrf.mxu0
    %v7084 = vadd.f32 %v5923, %v7083
    %7085 = vdwg.mxu0
    %7086 = vmatprep.subr.mxu0 0.0
    %7087 = vmatpush1.msra.mxu0 0.0
    %7088 = vmatprep.subr.mxu0 0.0
    %7089 = vmatpush1.msra.mxu0 0.0
    %7090 = vmatprep.subr.mxu0 0.0
    %7091 = vmatpush1.msra.mxu0 0.0
    %7092 = vmatprep.subr.mxu0 0.0
    %7093 = vmatpush1.msra.mxu0 0.0
    %7094 = vmatprep.subr.mxu0 0.0
    %7095 = vmatpush1.msra.mxu0 0.0
    %7096 = vmatprep.subr.mxu0 0.0
    %7097 = vmatpush1.msra.mxu0 0.0
    %7098 = vmatprep.subr.mxu0 0.0
    %7099 = vmatpush1.msra.mxu0 0.0
    %7100 = vmatprep.subr.mxu0 0.0
    %7101 = vmatpush1.msra.mxu0 0.0
    %7102 = vmatprep.subr.mxu0 0.0
    %7103 = vmatpush1.msra.mxu0 0.0
    %7104 = vmatprep.subr.mxu0 0.0
    %7105 = vmatpush1.msra.mxu0 0.0
    %7106 = vmatprep.subr.mxu0 0.0
    %7107 = vmatpush1.msra.mxu0 0.0
    %7108 = vmatprep.subr.mxu0 0.0
    %7109 = vmatpush1.msra.mxu0 0.0
    %7110 = vmatprep.subr.mxu0 0.0
    %7111 = vmatpush1.msra.mxu0 0.0
    %7112 = vmatprep.subr.mxu0 0.0
    %7113 = vmatpush1.msra.mxu0 0.0
    %7114 = vmatprep.subr.mxu0 %v5342
    %7115 = vmatpush1.msra.mxu0 %v5340
    %7116 = vmatprep.subr.mxu0 %v5341
    %7117 = vmatpush1.msra.mxu0 %v5339
    %7118 = vmatprep.subr.mxu0 0.0
    %7119 = vmatpush2.msra.mxu0 0.0
    %7120 = vmatprep.subr.mxu0 0.0
    %7121 = vmatpush2.msra.mxu0 0.0
    %7122 = vmatprep.subr.mxu0 0.0
    %7123 = vmatpush2.msra.mxu0 0.0
    %7124 = vmatprep.subr.mxu0 0.0
    %7125 = vmatpush2.msra.mxu0 0.0
    %7126 = vmatprep.subr.mxu0 0.0
    %7127 = vmatpush2.msra.mxu0 0.0
    %7128 = vmatprep.subr.mxu0 0.0
    %7129 = vmatpush2.msra.mxu0 0.0
    %7130 = vmatprep.subr.mxu0 0.0
    %7131 = vmatpush2.msra.mxu0 0.0
    %7132 = vmatprep.subr.mxu0 0.0
    %7133 = vmatpush2.msra.mxu0 0.0
    %7134 = vmatprep.subr.mxu0 0.0
    %7135 = vmatpush2.msra.mxu0 0.0
    %7136 = vmatprep.subr.mxu0 0.0
    %7137 = vmatpush2.msra.mxu0 0.0
    %7138 = vmatprep.subr.mxu0 0.0
    %7139 = vmatpush2.msra.mxu0 0.0
    %7140 = vmatprep.subr.mxu0 0.0
    %7141 = vmatpush2.msra.mxu0 0.0
    %7142 = vmatprep.subr.mxu0 0.0
    %7143 = vmatpush2.msra.mxu0 0.0
    %7144 = vmatprep.subr.mxu0 0.0
    %7145 = vmatpush2.msra.mxu0 0.0
    %7146 = vmatprep.subr.mxu0 0.0
    %7147 = vmatpush2.msra.mxu0 0.0
    %7148 = vmatprep.subr.mxu0 0.0
    %7149 = vmatpush2.msra.mxu0 0.0
    %7150 = vmatprep.mubr.f32.mxu0 0.0
    %7151 = vmatmul.mubr.f32.gmra.mxu0 %v6542
    %v7152 = vpop.f32.mrf.mxu0
    %v7153 = vadd.f32 %v5992, %v7152
    %v7154 = vpop.f32.mrf.mxu0
    %v7155 = vadd.f32 %v5994, %v7154
    %7156 = vmatprep.mubr.f32.mxu0 0.0
    %7157 = vmatmul.mubr.f32.gmra.mxu0 %v6545
    %v7158 = vpop.f32.mrf.mxu0
    %v7159 = vadd.f32 %v5998, %v7158
    %v7160 = vpop.f32.mrf.mxu0
    %v7161 = vadd.f32 %v6000, %v7160
    %7162 = vdwg.mxu0
    %7163 = vmatprep.subr.mxu0 0.0
    %7164 = vmatpush1.msra.mxu0 0.0
    %7165 = vmatprep.subr.mxu0 0.0
    %7166 = vmatpush1.msra.mxu0 0.0
    %7167 = vmatprep.subr.mxu0 0.0
    %7168 = vmatpush1.msra.mxu0 0.0
    %7169 = vmatprep.subr.mxu0 0.0
    %7170 = vmatpush1.msra.mxu0 0.0
    %7171 = vmatprep.subr.mxu0 0.0
    %7172 = vmatpush1.msra.mxu0 0.0
    %7173 = vmatprep.subr.mxu0 0.0
    %7174 = vmatpush1.msra.mxu0 0.0
    %7175 = vmatprep.subr.mxu0 0.0
    %7176 = vmatpush1.msra.mxu0 0.0
    %7177 = vmatprep.subr.mxu0 0.0
    %7178 = vmatpush1.msra.mxu0 0.0
    %7179 = vmatprep.subr.mxu0 0.0
    %7180 = vmatpush1.msra.mxu0 0.0
    %7181 = vmatprep.subr.mxu0 0.0
    %7182 = vmatpush1.msra.mxu0 0.0
    %7183 = vmatprep.subr.mxu0 0.0
    %7184 = vmatpush1.msra.mxu0 0.0
    %7185 = vmatprep.subr.mxu0 0.0
    %7186 = vmatpush1.msra.mxu0 0.0
    %7187 = vmatprep.subr.mxu0 0.0
    %7188 = vmatpush1.msra.mxu0 0.0
    %7189 = vmatprep.subr.mxu0 0.0
    %7190 = vmatpush1.msra.mxu0 0.0
    %7191 = vmatprep.subr.mxu0 %v5346
    %7192 = vmatpush1.msra.mxu0 %v5344
    %7193 = vmatprep.subr.mxu0 %v5345
    %7194 = vmatpush1.msra.mxu0 %v5343
    %7195 = vmatprep.subr.mxu0 0.0
    %7196 = vmatpush2.msra.mxu0 0.0
    %7197 = vmatprep.subr.mxu0 0.0
    %7198 = vmatpush2.msra.mxu0 0.0
    %7199 = vmatprep.subr.mxu0 0.0
    %7200 = vmatpush2.msra.mxu0 0.0
    %7201 = vmatprep.subr.mxu0 0.0
    %7202 = vmatpush2.msra.mxu0 0.0
    %7203 = vmatprep.subr.mxu0 0.0
    %7204 = vmatpush2.msra.mxu0 0.0
    %7205 = vmatprep.subr.mxu0 0.0
    %7206 = vmatpush2.msra.mxu0 0.0
    %7207 = vmatprep.subr.mxu0 0.0
    %7208 = vmatpush2.msra.mxu0 0.0
    %7209 = vmatprep.subr.mxu0 0.0
    %7210 = vmatpush2.msra.mxu0 0.0
    %7211 = vmatprep.subr.mxu0 0.0
    %7212 = vmatpush2.msra.mxu0 0.0
    %7213 = vmatprep.subr.mxu0 0.0
    %7214 = vmatpush2.msra.mxu0 0.0
    %7215 = vmatprep.subr.mxu0 0.0
    %7216 = vmatpush2.msra.mxu0 0.0
    %7217 = vmatprep.subr.mxu0 0.0
    %7218 = vmatpush2.msra.mxu0 0.0
    %7219 = vmatprep.subr.mxu0 0.0
    %7220 = vmatpush2.msra.mxu0 0.0
    %7221 = vmatprep.subr.mxu0 0.0
    %7222 = vmatpush2.msra.mxu0 0.0
    %7223 = vmatprep.subr.mxu0 0.0
    %7224 = vmatpush2.msra.mxu0 0.0
    %7225 = vmatprep.subr.mxu0 0.0
    %7226 = vmatpush2.msra.mxu0 0.0
    %7227 = vmatprep.mubr.f32.mxu0 0.0
    %7228 = vmatmul.mubr.f32.gmra.mxu0 %v6542
    %v7229 = vpop.f32.mrf.mxu0
    %v7230 = vadd.f32 %v6069, %v7229
    %v7231 = vpop.f32.mrf.mxu0
    %v7232 = vadd.f32 %v6071, %v7231
    %7233 = vmatprep.mubr.f32.mxu0 0.0
    %7234 = vmatmul.mubr.f32.gmra.mxu0 %v6545
    %v7235 = vpop.f32.mrf.mxu0
    %v7236 = vadd.f32 %v6075, %v7235
    %v7237 = vpop.f32.mrf.mxu0
    %v7238 = vadd.f32 %v6077, %v7237
    %7239 = vdwg.mxu0
    %7240 = vmatprep.subr.mxu0 0.0
    %7241 = vmatpush1.msra.mxu0 0.0
    %7242 = vmatprep.subr.mxu0 0.0
    %7243 = vmatpush1.msra.mxu0 0.0
    %7244 = vmatprep.subr.mxu0 0.0
    %7245 = vmatpush1.msra.mxu0 0.0
    %7246 = vmatprep.subr.mxu0 0.0
    %7247 = vmatpush1.msra.mxu0 0.0
    %7248 = vmatprep.subr.mxu0 0.0
    %7249 = vmatpush1.msra.mxu0 0.0
    %7250 = vmatprep.subr.mxu0 0.0
    %7251 = vmatpush1.msra.mxu0 0.0
    %7252 = vmatprep.subr.mxu0 0.0
    %7253 = vmatpush1.msra.mxu0 0.0
    %7254 = vmatprep.subr.mxu0 0.0
    %7255 = vmatpush1.msra.mxu0 0.0
    %7256 = vmatprep.subr.mxu0 0.0
    %7257 = vmatpush1.msra.mxu0 0.0
    %7258 = vmatprep.subr.mxu0 0.0
    %7259 = vmatpush1.msra.mxu0 0.0
    %7260 = vmatprep.subr.mxu0 0.0
    %7261 = vmatpush1.msra.mxu0 0.0
    %7262 = vmatprep.subr.mxu0 0.0
    %7263 = vmatpush1.msra.mxu0 0.0
    %7264 = vmatprep.subr.mxu0 0.0
    %7265 = vmatpush1.msra.mxu0 0.0
    %7266 = vmatprep.subr.mxu0 0.0
    %7267 = vmatpush1.msra.mxu0 0.0
    %7268 = vmatprep.subr.mxu0 %v5350
    %7269 = vmatpush1.msra.mxu0 %v5348
    %7270 = vmatprep.subr.mxu0 %v5349
    %7271 = vmatpush1.msra.mxu0 %v5347
    %7272 = vmatprep.subr.mxu0 0.0
    %7273 = vmatpush2.msra.mxu0 0.0
    %7274 = vmatprep.subr.mxu0 0.0
    %7275 = vmatpush2.msra.mxu0 0.0
    %7276 = vmatprep.subr.mxu0 0.0
    %7277 = vmatpush2.msra.mxu0 0.0
    %7278 = vmatprep.subr.mxu0 0.0
    %7279 = vmatpush2.msra.mxu0 0.0
    %7280 = vmatprep.subr.mxu0 0.0
    %7281 = vmatpush2.msra.mxu0 0.0
    %7282 = vmatprep.subr.mxu0 0.0
    %7283 = vmatpush2.msra.mxu0 0.0
    %7284 = vmatprep.subr.mxu0 0.0
    %7285 = vmatpush2.msra.mxu0 0.0
    %7286 = vmatprep.subr.mxu0 0.0
    %7287 = vmatpush2.msra.mxu0 0.0
    %7288 = vmatprep.subr.mxu0 0.0
    %7289 = vmatpush2.msra.mxu0 0.0
    %7290 = vmatprep.subr.mxu0 0.0
    %7291 = vmatpush2.msra.mxu0 0.0
    %7292 = vmatprep.subr.mxu0 0.0
    %7293 = vmatpush2.msra.mxu0 0.0
    %7294 = vmatprep.subr.mxu0 0.0
    %7295 = vmatpush2.msra.mxu0 0.0
    %7296 = vmatprep.subr.mxu0 0.0
    %7297 = vmatpush2.msra.mxu0 0.0
    %7298 = vmatprep.subr.mxu0 0.0
    %7299 = vmatpush2.msra.mxu0 0.0
    %7300 = vmatprep.subr.mxu0 0.0
    %7301 = vmatpush2.msra.mxu0 0.0
    %7302 = vmatprep.subr.mxu0 0.0
    %7303 = vmatpush2.msra.mxu0 0.0
    %7304 = vmatprep.mubr.f32.mxu0 0.0
    %7305 = vmatmul.mubr.f32.gmra.mxu0 %v6542
    %v7306 = vpop.f32.mrf.mxu0
    %v7307 = vadd.f32 %v6146, %v7306
    %v7308 = vpop.f32.mrf.mxu0
    %v7309 = vadd.f32 %v6148, %v7308
    %7310 = vmatprep.mubr.f32.mxu0 0.0
    %7311 = vmatmul.mubr.f32.gmra.mxu0 %v6545
    %v7312 = vpop.f32.mrf.mxu0
    %v7313 = vadd.f32 %v6152, %v7312
    %v7314 = vpop.f32.mrf.mxu0
    %v7315 = vadd.f32 %v6154, %v7314
    %7316 = vdwg.mxu0
    %7317 = vmatprep.subr.mxu0 0.0
    %7318 = vmatpush1.msra.mxu0 0.0
    %7319 = vmatprep.subr.mxu0 0.0
    %7320 = vmatpush1.msra.mxu0 0.0
    %7321 = vmatprep.subr.mxu0 0.0
    %7322 = vmatpush1.msra.mxu0 0.0
    %7323 = vmatprep.subr.mxu0 0.0
    %7324 = vmatpush1.msra.mxu0 0.0
    %7325 = vmatprep.subr.mxu0 0.0
    %7326 = vmatpush1.msra.mxu0 0.0
    %7327 = vmatprep.subr.mxu0 0.0
    %7328 = vmatpush1.msra.mxu0 0.0
    %7329 = vmatprep.subr.mxu0 0.0
    %7330 = vmatpush1.msra.mxu0 0.0
    %7331 = vmatprep.subr.mxu0 0.0
    %7332 = vmatpush1.msra.mxu0 0.0
    %7333 = vmatprep.subr.mxu0 0.0
    %7334 = vmatpush1.msra.mxu0 0.0
    %7335 = vmatprep.subr.mxu0 0.0
    %7336 = vmatpush1.msra.mxu0 0.0
    %7337 = vmatprep.subr.mxu0 0.0
    %7338 = vmatpush1.msra.mxu0 0.0
    %7339 = vmatprep.subr.mxu0 0.0
    %7340 = vmatpush1.msra.mxu0 0.0
    %7341 = vmatprep.subr.mxu0 0.0
    %7342 = vmatpush1.msra.mxu0 0.0
    %7343 = vmatprep.subr.mxu0 0.0
    %7344 = vmatpush1.msra.mxu0 0.0
    %7345 = vmatprep.subr.mxu0 %v5354
    %7346 = vmatpush1.msra.mxu0 %v5352
    %7347 = vmatprep.subr.mxu0 %v5353
    %7348 = vmatpush1.msra.mxu0 %v5351
    %7349 = vmatprep.subr.mxu0 0.0
    %7350 = vmatpush2.msra.mxu0 0.0
    %7351 = vmatprep.subr.mxu0 0.0
    %7352 = vmatpush2.msra.mxu0 0.0
    %7353 = vmatprep.subr.mxu0 0.0
    %7354 = vmatpush2.msra.mxu0 0.0
    %7355 = vmatprep.subr.mxu0 0.0
    %7356 = vmatpush2.msra.mxu0 0.0
    %7357 = vmatprep.subr.mxu0 0.0
    %7358 = vmatpush2.msra.mxu0 0.0
    %7359 = vmatprep.subr.mxu0 0.0
    %7360 = vmatpush2.msra.mxu0 0.0
    %7361 = vmatprep.subr.mxu0 0.0
    %7362 = vmatpush2.msra.mxu0 0.0
    %7363 = vmatprep.subr.mxu0 0.0
    %7364 = vmatpush2.msra.mxu0 0.0
    %7365 = vmatprep.subr.mxu0 0.0
    %7366 = vmatpush2.msra.mxu0 0.0
    %7367 = vmatprep.subr.mxu0 0.0
    %7368 = vmatpush2.msra.mxu0 0.0
    %7369 = vmatprep.subr.mxu0 0.0
    %7370 = vmatpush2.msra.mxu0 0.0
    %7371 = vmatprep.subr.mxu0 0.0
    %7372 = vmatpush2.msra.mxu0 0.0
    %7373 = vmatprep.subr.mxu0 0.0
    %7374 = vmatpush2.msra.mxu0 0.0
    %7375 = vmatprep.subr.mxu0 0.0
    %7376 = vmatpush2.msra.mxu0 0.0
    %7377 = vmatprep.subr.mxu0 0.0
    %7378 = vmatpush2.msra.mxu0 0.0
    %7379 = vmatprep.subr.mxu0 0.0
    %7380 = vmatpush2.msra.mxu0 0.0
    %7381 = vmatprep.mubr.f32.mxu0 0.0
    %7382 = vmatmul.mubr.f32.gmra.mxu0 %v6542
    %v7383 = vpop.f32.mrf.mxu0
    %v7384 = vadd.f32 %v6223, %v7383
    %v7385 = vpop.f32.mrf.mxu0
    %v7386 = vadd.f32 %v6225, %v7385
    %7387 = vmatprep.mubr.f32.mxu0 0.0
    %7388 = vmatmul.mubr.f32.gmra.mxu0 %v6545
    %v7389 = vpop.f32.mrf.mxu0
    %v7390 = vadd.f32 %v6229, %v7389
    %v7391 = vpop.f32.mrf.mxu0
    %v7392 = vadd.f32 %v6231, %v7391
    %7393 = vdwg.mxu0
    %7394 = vmatprep.subr.mxu0 0.0
    %7395 = vmatpush1.msra.mxu0 0.0
    %7396 = vmatprep.subr.mxu0 0.0
    %7397 = vmatpush1.msra.mxu0 0.0
    %7398 = vmatprep.subr.mxu0 0.0
    %7399 = vmatpush1.msra.mxu0 0.0
    %7400 = vmatprep.subr.mxu0 0.0
    %7401 = vmatpush1.msra.mxu0 0.0
    %7402 = vmatprep.subr.mxu0 0.0
    %7403 = vmatpush1.msra.mxu0 0.0
    %7404 = vmatprep.subr.mxu0 0.0
    %7405 = vmatpush1.msra.mxu0 0.0
    %7406 = vmatprep.subr.mxu0 0.0
    %7407 = vmatpush1.msra.mxu0 0.0
    %7408 = vmatprep.subr.mxu0 0.0
    %7409 = vmatpush1.msra.mxu0 0.0
    %7410 = vmatprep.subr.mxu0 0.0
    %7411 = vmatpush1.msra.mxu0 0.0
    %7412 = vmatprep.subr.mxu0 0.0
    %7413 = vmatpush1.msra.mxu0 0.0
    %7414 = vmatprep.subr.mxu0 0.0
    %7415 = vmatpush1.msra.mxu0 0.0
    %7416 = vmatprep.subr.mxu0 0.0
    %7417 = vmatpush1.msra.mxu0 0.0
    %7418 = vmatprep.subr.mxu0 0.0
    %7419 = vmatpush1.msra.mxu0 0.0
    %7420 = vmatprep.subr.mxu0 0.0
    %7421 = vmatpush1.msra.mxu0 0.0
    %7422 = vmatprep.subr.mxu0 %v5358
    %7423 = vmatpush1.msra.mxu0 %v5356
    %7424 = vmatprep.subr.mxu0 %v5357
    %7425 = vmatpush1.msra.mxu0 %v5355
    %7426 = vmatprep.subr.mxu0 0.0
    %7427 = vmatpush2.msra.mxu0 0.0
    %7428 = vmatprep.subr.mxu0 0.0
    %7429 = vmatpush2.msra.mxu0 0.0
    %7430 = vmatprep.subr.mxu0 0.0
    %7431 = vmatpush2.msra.mxu0 0.0
    %7432 = vmatprep.subr.mxu0 0.0
    %7433 = vmatpush2.msra.mxu0 0.0
    %7434 = vmatprep.subr.mxu0 0.0
    %7435 = vmatpush2.msra.mxu0 0.0
    %7436 = vmatprep.subr.mxu0 0.0
    %7437 = vmatpush2.msra.mxu0 0.0
    %7438 = vmatprep.subr.mxu0 0.0
    %7439 = vmatpush2.msra.mxu0 0.0
    %7440 = vmatprep.subr.mxu0 0.0
    %7441 = vmatpush2.msra.mxu0 0.0
    %7442 = vmatprep.subr.mxu0 0.0
    %7443 = vmatpush2.msra.mxu0 0.0
    %7444 = vmatprep.subr.mxu0 0.0
    %7445 = vmatpush2.msra.mxu0 0.0
    %7446 = vmatprep.subr.mxu0 0.0
    %7447 = vmatpush2.msra.mxu0 0.0
    %7448 = vmatprep.subr.mxu0 0.0
    %7449 = vmatpush2.msra.mxu0 0.0
    %7450 = vmatprep.subr.mxu0 0.0
    %7451 = vmatpush2.msra.mxu0 0.0
    %7452 = vmatprep.subr.mxu0 0.0
    %7453 = vmatpush2.msra.mxu0 0.0
    %7454 = vmatprep.subr.mxu0 0.0
    %7455 = vmatpush2.msra.mxu0 0.0
    %7456 = vmatprep.subr.mxu0 0.0
    %7457 = vmatpush2.msra.mxu0 0.0
    %7458 = vmatprep.mubr.f32.mxu0 0.0
    %7459 = vmatmul.mubr.f32.gmra.mxu0 %v6542
    %v7460 = vpop.f32.mrf.mxu0
    %v7461 = vadd.f32 %v6300, %v7460
    %v7462 = vpop.f32.mrf.mxu0
    %v7463 = vadd.f32 %v6302, %v7462
    %7464 = vmatprep.mubr.f32.mxu0 0.0
    %7465 = vmatmul.mubr.f32.gmra.mxu0 %v6545
    %v7466 = vpop.f32.mrf.mxu0
    %v7467 = vadd.f32 %v6306, %v7466
    %v7468 = vpop.f32.mrf.mxu0
    %v7469 = vadd.f32 %v6308, %v7468
    %7470 = vdwg.mxu0
    %7471 = vmatprep.subr.mxu0 0.0
    %7472 = vmatpush1.msra.mxu0 0.0
    %7473 = vmatprep.subr.mxu0 0.0
    %7474 = vmatpush1.msra.mxu0 0.0
    %7475 = vmatprep.subr.mxu0 0.0
    %7476 = vmatpush1.msra.mxu0 0.0
    %7477 = vmatprep.subr.mxu0 0.0
    %7478 = vmatpush1.msra.mxu0 0.0
    %7479 = vmatprep.subr.mxu0 0.0
    %7480 = vmatpush1.msra.mxu0 0.0
    %7481 = vmatprep.subr.mxu0 0.0
    %7482 = vmatpush1.msra.mxu0 0.0
    %7483 = vmatprep.subr.mxu0 0.0
    %7484 = vmatpush1.msra.mxu0 0.0
    %7485 = vmatprep.subr.mxu0 0.0
    %7486 = vmatpush1.msra.mxu0 0.0
    %7487 = vmatprep.subr.mxu0 0.0
    %7488 = vmatpush1.msra.mxu0 0.0
    %7489 = vmatprep.subr.mxu0 0.0
    %7490 = vmatpush1.msra.mxu0 0.0
    %7491 = vmatprep.subr.mxu0 0.0
    %7492 = vmatpush1.msra.mxu0 0.0
    %7493 = vmatprep.subr.mxu0 0.0
    %7494 = vmatpush1.msra.mxu0 0.0
    %7495 = vmatprep.subr.mxu0 0.0
    %7496 = vmatpush1.msra.mxu0 0.0
    %7497 = vmatprep.subr.mxu0 0.0
    %7498 = vmatpush1.msra.mxu0 0.0
    %7499 = vmatprep.subr.mxu0 %v5362
    %7500 = vmatpush1.msra.mxu0 %v5360
    %7501 = vmatprep.subr.mxu0 %v5361
    %7502 = vmatpush1.msra.mxu0 %v5359
    %7503 = vmatprep.subr.mxu0 0.0
    %7504 = vmatpush2.msra.mxu0 0.0
    %7505 = vmatprep.subr.mxu0 0.0
    %7506 = vmatpush2.msra.mxu0 0.0
    %7507 = vmatprep.subr.mxu0 0.0
    %7508 = vmatpush2.msra.mxu0 0.0
    %7509 = vmatprep.subr.mxu0 0.0
    %7510 = vmatpush2.msra.mxu0 0.0
    %7511 = vmatprep.subr.mxu0 0.0
    %7512 = vmatpush2.msra.mxu0 0.0
    %7513 = vmatprep.subr.mxu0 0.0
    %7514 = vmatpush2.msra.mxu0 0.0
    %7515 = vmatprep.subr.mxu0 0.0
    %7516 = vmatpush2.msra.mxu0 0.0
    %7517 = vmatprep.subr.mxu0 0.0
    %7518 = vmatpush2.msra.mxu0 0.0
    %7519 = vmatprep.subr.mxu0 0.0
    %7520 = vmatpush2.msra.mxu0 0.0
    %7521 = vmatprep.subr.mxu0 0.0
    %7522 = vmatpush2.msra.mxu0 0.0
    %7523 = vmatprep.subr.mxu0 0.0
    %7524 = vmatpush2.msra.mxu0 0.0
    %7525 = vmatprep.subr.mxu0 0.0
    %7526 = vmatpush2.msra.mxu0 0.0
    %7527 = vmatprep.subr.mxu0 0.0
    %7528 = vmatpush2.msra.mxu0 0.0
    %7529 = vmatprep.subr.mxu0 0.0
    %7530 = vmatpush2.msra.mxu0 0.0
    %7531 = vmatprep.subr.mxu0 0.0
    %7532 = vmatpush2.msra.mxu0 0.0
    %7533 = vmatprep.subr.mxu0 0.0
    %7534 = vmatpush2.msra.mxu0 0.0
    %7535 = vmatprep.mubr.f32.mxu0 0.0
    %7536 = vmatmul.mubr.f32.gmra.mxu0 %v6542
    %v7537 = vpop.f32.mrf.mxu0
    %v7538 = vadd.f32 %v6377, %v7537
    %v7539 = vpop.f32.mrf.mxu0
    %v7540 = vadd.f32 %v6379, %v7539
    %7541 = vmatprep.mubr.f32.mxu0 0.0
    %7542 = vmatmul.mubr.f32.gmra.mxu0 %v6545
    %v7543 = vpop.f32.mrf.mxu0
    %v7544 = vadd.f32 %v6383, %v7543
    %v7545 = vpop.f32.mrf.mxu0
    %v7546 = vadd.f32 %v6385, %v7545
    %7547 = vdwg.mxu0
    %7548 = vmatprep.subr.mxu0 0.0
    %7549 = vmatpush1.msra.mxu0 0.0
    %7550 = vmatprep.subr.mxu0 0.0
    %7551 = vmatpush1.msra.mxu0 0.0
    %7552 = vmatprep.subr.mxu0 0.0
    %7553 = vmatpush1.msra.mxu0 0.0
    %7554 = vmatprep.subr.mxu0 0.0
    %7555 = vmatpush1.msra.mxu0 0.0
    %7556 = vmatprep.subr.mxu0 0.0
    %7557 = vmatpush1.msra.mxu0 0.0
    %7558 = vmatprep.subr.mxu0 0.0
    %7559 = vmatpush1.msra.mxu0 0.0
    %7560 = vmatprep.subr.mxu0 0.0
    %7561 = vmatpush1.msra.mxu0 0.0
    %7562 = vmatprep.subr.mxu0 0.0
    %7563 = vmatpush1.msra.mxu0 0.0
    %7564 = vmatprep.subr.mxu0 0.0
    %7565 = vmatpush1.msra.mxu0 0.0
    %7566 = vmatprep.subr.mxu0 0.0
    %7567 = vmatpush1.msra.mxu0 0.0
    %7568 = vmatprep.subr.mxu0 0.0
    %7569 = vmatpush1.msra.mxu0 0.0
    %7570 = vmatprep.subr.mxu0 0.0
    %7571 = vmatpush1.msra.mxu0 0.0
    %7572 = vmatprep.subr.mxu0 0.0
    %7573 = vmatpush1.msra.mxu0 0.0
    %7574 = vmatprep.subr.mxu0 0.0
    %7575 = vmatpush1.msra.mxu0 0.0
    %7576 = vmatprep.subr.mxu0 %v5366
    %7577 = vmatpush1.msra.mxu0 %v5364
    %7578 = vmatprep.subr.mxu0 %v5365
    %7579 = vmatpush1.msra.mxu0 %v5363
    %7580 = vmatprep.subr.mxu0 0.0
    %7581 = vmatpush2.msra.mxu0 0.0
    %7582 = vmatprep.subr.mxu0 0.0
    %7583 = vmatpush2.msra.mxu0 0.0
    %7584 = vmatprep.subr.mxu0 0.0
    %7585 = vmatpush2.msra.mxu0 0.0
    %7586 = vmatprep.subr.mxu0 0.0
    %7587 = vmatpush2.msra.mxu0 0.0
    %7588 = vmatprep.subr.mxu0 0.0
    %7589 = vmatpush2.msra.mxu0 0.0
    %7590 = vmatprep.subr.mxu0 0.0
    %7591 = vmatpush2.msra.mxu0 0.0
    %7592 = vmatprep.subr.mxu0 0.0
    %7593 = vmatpush2.msra.mxu0 0.0
    %7594 = vmatprep.subr.mxu0 0.0
    %7595 = vmatpush2.msra.mxu0 0.0
    %7596 = vmatprep.subr.mxu0 0.0
    %7597 = vmatpush2.msra.mxu0 0.0
    %7598 = vmatprep.subr.mxu0 0.0
    %7599 = vmatpush2.msra.mxu0 0.0
    %7600 = vmatprep.subr.mxu0 0.0
    %7601 = vmatpush2.msra.mxu0 0.0
    %7602 = vmatprep.subr.mxu0 0.0
    %7603 = vmatpush2.msra.mxu0 0.0
    %7604 = vmatprep.subr.mxu0 0.0
    %7605 = vmatpush2.msra.mxu0 0.0
    %7606 = vmatprep.subr.mxu0 0.0
    %7607 = vmatpush2.msra.mxu0 0.0
    %7608 = vmatprep.subr.mxu0 0.0
    %7609 = vmatpush2.msra.mxu0 0.0
    %7610 = vmatprep.subr.mxu0 0.0
    %7611 = vmatpush2.msra.mxu0 0.0
    %7612 = vmatprep.mubr.f32.mxu0 0.0
    %7613 = vmatmul.mubr.f32.gmra.mxu0 %v6542
    %v7614 = vpop.f32.mrf.mxu0
    %v7615 = vadd.f32 %v6454, %v7614
    %v7616 = vpop.f32.mrf.mxu0
    %v7617 = vadd.f32 %v6456, %v7616
    %7618 = vmatprep.mubr.f32.mxu0 0.0
    %7619 = vmatmul.mubr.f32.gmra.mxu0 %v6545
    %v7620 = vpop.f32.mrf.mxu0
    %v7621 = vadd.f32 %v6460, %v7620
    %v7622 = vpop.f32.mrf.mxu0
    %v7623 = vadd.f32 %v6462, %v7622
    %7624 = vdwg.mxu0
    %7625 = vmatprep.subr.mxu0 0.0
    %7626 = vmatpush1.msra.mxu0 0.0
    %7627 = vmatprep.subr.mxu0 0.0
    %7628 = vmatpush1.msra.mxu0 0.0
    %7629 = vmatprep.subr.mxu0 0.0
    %7630 = vmatpush1.msra.mxu0 0.0
    %7631 = vmatprep.subr.mxu0 0.0
    %7632 = vmatpush1.msra.mxu0 0.0
    %7633 = vmatprep.subr.mxu0 0.0
    %7634 = vmatpush1.msra.mxu0 0.0
    %7635 = vmatprep.subr.mxu0 0.0
    %7636 = vmatpush1.msra.mxu0 0.0
    %7637 = vmatprep.subr.mxu0 0.0
    %7638 = vmatpush1.msra.mxu0 0.0
    %7639 = vmatprep.subr.mxu0 0.0
    %7640 = vmatpush1.msra.mxu0 0.0
    %7641 = vmatprep.subr.mxu0 0.0
    %7642 = vmatpush1.msra.mxu0 0.0
    %7643 = vmatprep.subr.mxu0 0.0
    %7644 = vmatpush1.msra.mxu0 0.0
    %7645 = vmatprep.subr.mxu0 0.0
    %7646 = vmatpush1.msra.mxu0 0.0
    %7647 = vmatprep.subr.mxu0 0.0
    %7648 = vmatpush1.msra.mxu0 0.0
    %7649 = vmatprep.subr.mxu0 0.0
    %7650 = vmatpush1.msra.mxu0 0.0
    %7651 = vmatprep.subr.mxu0 0.0
    %7652 = vmatpush1.msra.mxu0 0.0
    %7653 = vmatprep.subr.mxu0 %v5370
    %7654 = vmatpush1.msra.mxu0 %v5368
    %7655 = vmatprep.subr.mxu0 %v5369
    %7656 = vmatpush1.msra.mxu0 %v5367
    %7657 = vmatprep.subr.mxu0 0.0
    %7658 = vmatpush2.msra.mxu0 0.0
    %7659 = vmatprep.subr.mxu0 0.0
    %7660 = vmatpush2.msra.mxu0 0.0
    %7661 = vmatprep.subr.mxu0 0.0
    %7662 = vmatpush2.msra.mxu0 0.0
    %7663 = vmatprep.subr.mxu0 0.0
    %7664 = vmatpush2.msra.mxu0 0.0
    %7665 = vmatprep.subr.mxu0 0.0
    %7666 = vmatpush2.msra.mxu0 0.0
    %7667 = vmatprep.subr.mxu0 0.0
    %7668 = vmatpush2.msra.mxu0 0.0
    %7669 = vmatprep.subr.mxu0 0.0
    %7670 = vmatpush2.msra.mxu0 0.0
    %7671 = vmatprep.subr.mxu0 0.0
    %7672 = vmatpush2.msra.mxu0 0.0
    %7673 = vmatprep.subr.mxu0 0.0
    %7674 = vmatpush2.msra.mxu0 0.0
    %7675 = vmatprep.subr.mxu0 0.0
    %7676 = vmatpush2.msra.mxu0 0.0
    %7677 = vmatprep.subr.mxu0 0.0
    %7678 = vmatpush2.msra.mxu0 0.0
    %7679 = vmatprep.subr.mxu0 0.0
    %7680 = vmatpush2.msra.mxu0 0.0
    %7681 = vmatprep.subr.mxu0 0.0
    %7682 = vmatpush2.msra.mxu0 0.0
    %7683 = vmatprep.subr.mxu0 0.0
    %7684 = vmatpush2.msra.mxu0 0.0
    %7685 = vmatprep.subr.mxu0 0.0
    %7686 = vmatpush2.msra.mxu0 0.0
    %7687 = vmatprep.subr.mxu0 0.0
    %7688 = vmatpush2.msra.mxu0 0.0
    %7689 = vmatprep.mubr.f32.mxu0 0.0
    %7690 = vmatmul.mubr.f32.gmra.mxu0 %v6542
    %v7691 = vpop.f32.mrf.mxu0
    %v7692 = vadd.f32 %v6531, %v7691
    %v7693 = vpop.f32.mrf.mxu0
    %v7694 = vadd.f32 %v6533, %v7693
    %7695 = vmatprep.mubr.f32.mxu0 0.0
    %7696 = vmatmul.mubr.f32.gmra.mxu0 %v6545
    %v7697 = vpop.f32.mrf.mxu0
    %v7698 = vadd.f32 %v6537, %v7697
    %v7699 = vpop.f32.mrf.mxu0
    %v7700 = vadd.f32 %v6539, %v7699
    %7701 = vdwg.mxu0
    %7703 = vset.pattern.permute.xlu0 0
    %7704 = vperm.xlu0 %7703, %v5377
    %v7705 = vpop.permute.xlu0 %7704
    %7708 = vset.pattern.permute.xlu0 0
    %7709 = vperm.xlu0 %7708, %v5378
    %v7710 = vpop.permute.xlu0 %7709
    %v7712 = vadd.f32 %v6614, %v7705
    %v7713 = vadd.f32 %v6616, %v7705
    %v7714 = vadd.f32 %v6691, %v7705
    %v7715 = vadd.f32 %v6693, %v7705
    %v7716 = vadd.f32 %v6768, %v7705
    %v7717 = vadd.f32 %v6770, %v7705
    %v7718 = vadd.f32 %v6845, %v7705
    %v7719 = vadd.f32 %v6847, %v7705
    %v7720 = vadd.f32 %v6922, %v7705
    %v7721 = vadd.f32 %v6924, %v7705
    %v7722 = vadd.f32 %v6999, %v7705
    %v7723 = vadd.f32 %v7001, %v7705
    %v7724 = vadd.f32 %v7076, %v7705
    %v7725 = vadd.f32 %v7078, %v7705
    %v7726 = vadd.f32 %v7153, %v7705
    %v7727 = vadd.f32 %v7155, %v7705
    %v7728 = vadd.f32 %v7230, %v7705
    %v7729 = vadd.f32 %v7232, %v7705
    %v7730 = vadd.f32 %v7307, %v7705
    %v7731 = vadd.f32 %v7309, %v7705
    %v7732 = vadd.f32 %v7384, %v7705
    %v7733 = vadd.f32 %v7386, %v7705
    %v7734 = vadd.f32 %v7461, %v7705
    %v7735 = vadd.f32 %v7463, %v7705
    %v7736 = vadd.f32 %v7538, %v7705
    %v7737 = vadd.f32 %v7540, %v7705
    %v7738 = vadd.f32 %v7615, %v7705
    %v7739 = vadd.f32 %v7617, %v7705
    %v7740 = vadd.f32 %v7692, %v7705
    %v7741 = vadd.f32 %v7694, %v7705
    %v7742 = vadd.f32 %v6620, %v7710
    %v7743 = vadd.f32 %v6622, %v7710
    %v7744 = vadd.f32 %v6697, %v7710
    %v7745 = vadd.f32 %v6699, %v7710
    %v7746 = vadd.f32 %v6774, %v7710
    %v7747 = vadd.f32 %v6776, %v7710
    %v7748 = vadd.f32 %v6851, %v7710
    %v7749 = vadd.f32 %v6853, %v7710
    %v7750 = vadd.f32 %v6928, %v7710
    %v7751 = vadd.f32 %v6930, %v7710
    %v7752 = vadd.f32 %v7005, %v7710
    %v7753 = vadd.f32 %v7007, %v7710
    %v7754 = vadd.f32 %v7082, %v7710
    %v7755 = vadd.f32 %v7084, %v7710
    %v7756 = vadd.f32 %v7159, %v7710
    %v7757 = vadd.f32 %v7161, %v7710
    %v7758 = vadd.f32 %v7236, %v7710
    %v7759 = vadd.f32 %v7238, %v7710
    %v7760 = vadd.f32 %v7313, %v7710
    %v7761 = vadd.f32 %v7315, %v7710
    %v7762 = vadd.f32 %v7390, %v7710
    %v7763 = vadd.f32 %v7392, %v7710
    %v7764 = vadd.f32 %v7467, %v7710
    %v7765 = vadd.f32 %v7469, %v7710
    %v7766 = vadd.f32 %v7544, %v7710
    %v7767 = vadd.f32 %v7546, %v7710
    %v7768 = vadd.f32 %v7621, %v7710
    %v7769 = vadd.f32 %v7623, %v7710
    %v7770 = vadd.f32 %v7698, %v7710
    %v7771 = vadd.f32 %v7700, %v7710
    %v7772 = vmax.f32 %v7712, 0.0
    %v7773 = vmax.f32 %v7713, 0.0
    %v7774 = vmax.f32 %v7714, 0.0
    %v7775 = vmax.f32 %v7715, 0.0
    %v7776 = vmax.f32 %v7716, 0.0
    %v7777 = vmax.f32 %v7717, 0.0
    %v7778 = vmax.f32 %v7718, 0.0
    %v7779 = vmax.f32 %v7719, 0.0
    %v7780 = vmax.f32 %v7720, 0.0
    %v7781 = vmax.f32 %v7721, 0.0
    %v7782 = vmax.f32 %v7722, 0.0
    %v7783 = vmax.f32 %v7723, 0.0
    %v7784 = vmax.f32 %v7724, 0.0
    %v7785 = vmax.f32 %v7725, 0.0
    %v7786 = vmax.f32 %v7726, 0.0
    %v7787 = vmax.f32 %v7727, 0.0
    %v7788 = vmax.f32 %v7728, 0.0
    %v7789 = vmax.f32 %v7729, 0.0
    %v7790 = vmax.f32 %v7730, 0.0
    %v7791 = vmax.f32 %v7731, 0.0
    %v7792 = vmax.f32 %v7732, 0.0
    %v7793 = vmax.f32 %v7733, 0.0
    %v7794 = vmax.f32 %v7734, 0.0
    %v7795 = vmax.f32 %v7735, 0.0
    %v7796 = vmax.f32 %v7736, 0.0
    %v7797 = vmax.f32 %v7737, 0.0
    %v7798 = vmax.f32 %v7738, 0.0
    %v7799 = vmax.f32 %v7739, 0.0
    %v7800 = vmax.f32 %v7740, 0.0
    %v7801 = vmax.f32 %v7741, 0.0
    %v7802 = vmax.f32 %v7742, 0.0
    %v7803 = vmax.f32 %v7743, 0.0
    %v7804 = vmax.f32 %v7744, 0.0
    %v7805 = vmax.f32 %v7745, 0.0
    %v7806 = vmax.f32 %v7746, 0.0
    %v7807 = vmax.f32 %v7747, 0.0
    %v7808 = vmax.f32 %v7748, 0.0
    %v7809 = vmax.f32 %v7749, 0.0
    %v7810 = vmax.f32 %v7750, 0.0
    %v7811 = vmax.f32 %v7751, 0.0
    %v7812 = vmax.f32 %v7752, 0.0
    %v7813 = vmax.f32 %v7753, 0.0
    %v7814 = vmax.f32 %v7754, 0.0
    %v7815 = vmax.f32 %v7755, 0.0
    %v7816 = vmax.f32 %v7756, 0.0
    %v7817 = vmax.f32 %v7757, 0.0
    %v7818 = vmax.f32 %v7758, 0.0
    %v7819 = vmax.f32 %v7759, 0.0
    %v7820 = vmax.f32 %v7760, 0.0
    %v7821 = vmax.f32 %v7761, 0.0
    %v7822 = vmax.f32 %v7762, 0.0
    %v7823 = vmax.f32 %v7763, 0.0
    %v7824 = vmax.f32 %v7764, 0.0
    %v7825 = vmax.f32 %v7765, 0.0
    %v7826 = vmax.f32 %v7766, 0.0
    %v7827 = vmax.f32 %v7767, 0.0
    %v7828 = vmax.f32 %v7768, 0.0
    %v7829 = vmax.f32 %v7769, 0.0
    %v7830 = vmax.f32 %v7770, 0.0
    %v7831 = vmax.f32 %v7771, 0.0
    %v7832 = vadd.f32 %v7772, %v7773
    %v7833 = vadd.f32 %v7802, %v7803
    %v7834 = vadd.f32 %v7774, %v7775
    %v7835 = vadd.f32 %v7804, %v7805
    %v7836 = vadd.f32 %v7776, %v7777
    %v7837 = vadd.f32 %v7806, %v7807
    %v7838 = vadd.f32 %v7778, %v7779
    %v7839 = vadd.f32 %v7808, %v7809
    %v7840 = vadd.f32 %v7780, %v7781
    %v7841 = vadd.f32 %v7810, %v7811
    %v7842 = vadd.f32 %v7782, %v7783
    %v7843 = vadd.f32 %v7812, %v7813
    %v7844 = vadd.f32 %v7784, %v7785
    %v7845 = vadd.f32 %v7814, %v7815
    %v7846 = vadd.f32 %v7786, %v7787
    %v7847 = vadd.f32 %v7816, %v7817
    %v7848 = vadd.f32 %v7788, %v7789
    %v7849 = vadd.f32 %v7818, %v7819
    %v7850 = vadd.f32 %v7790, %v7791
    %v7851 = vadd.f32 %v7820, %v7821
    %v7852 = vadd.f32 %v7792, %v7793
    %v7853 = vadd.f32 %v7822, %v7823
    %v7854 = vadd.f32 %v7794, %v7795
    %v7855 = vadd.f32 %v7824, %v7825
    %v7856 = vadd.f32 %v7796, %v7797
    %v7857 = vadd.f32 %v7826, %v7827
    %v7858 = vadd.f32 %v7798, %v7799
    %v7859 = vadd.f32 %v7828, %v7829
    %v7860 = vadd.f32 %v7800, %v7801
    %v7861 = vadd.f32 %v7830, %v7831
    %v7862 = vld [vmem:[#allocation5 + $0x60] sm:$0xff]
    %v7863 = vld [vmem:[#allocation5 + $0x68] sm:$0xff]
    %v7864 = vld [vmem:[#allocation5 + $0x70] sm:$0xff]
    %v7866 = vsel %vm5379, %v7863, 0
    %7868 = vmatprep.subr.mxu0 0.0
    %7869 = vmatpush1.msra.mxu0 0.0
    %7870 = vmatprep.subr.mxu0 0.0
    %7871 = vmatpush1.msra.mxu0 0.0
    %7872 = vmatprep.subr.mxu0 0.0
    %7873 = vmatpush1.msra.mxu0 0.0
    %7874 = vmatprep.subr.mxu0 0.0
    %7875 = vmatpush1.msra.mxu0 0.0
    %7876 = vmatprep.subr.mxu0 0.0
    %7877 = vmatpush1.msra.mxu0 0.0
    %7878 = vmatprep.subr.mxu0 0.0
    %7879 = vmatpush1.msra.mxu0 0.0
    %7880 = vmatprep.subr.mxu0 0.0
    %7881 = vmatpush1.msra.mxu0 0.0
    %7882 = vmatprep.subr.mxu0 0.0
    %7883 = vmatpush1.msra.mxu0 0.0
    %7884 = vmatprep.subr.mxu0 0.0
    %7885 = vmatpush1.msra.mxu0 0.0
    %7886 = vmatprep.subr.mxu0 0.0
    %7887 = vmatpush1.msra.mxu0 0.0
    %7888 = vmatprep.subr.mxu0 0.0
    %7889 = vmatpush1.msra.mxu0 0.0
    %7890 = vmatprep.subr.mxu0 0.0
    %7891 = vmatpush1.msra.mxu0 0.0
    %7892 = vmatprep.subr.mxu0 0.0
    %7893 = vmatpush1.msra.mxu0 0.0
    %7894 = vmatprep.subr.mxu0 0.0
    %7895 = vmatpush1.msra.mxu0 0.0
    %7896 = vmatprep.subr.mxu0 %v7837
    %7897 = vmatpush1.msra.mxu0 %v7835
    %7898 = vmatprep.subr.mxu0 %v7836
    %7899 = vmatpush1.msra.mxu0 %v7834
    %7900 = vmatprep.subr.mxu0 0.0
    %7901 = vmatpush2.msra.mxu0 0.0
    %7902 = vmatprep.subr.mxu0 0.0
    %7903 = vmatpush2.msra.mxu0 0.0
    %7904 = vmatprep.subr.mxu0 0.0
    %7905 = vmatpush2.msra.mxu0 0.0
    %7906 = vmatprep.subr.mxu0 0.0
    %7907 = vmatpush2.msra.mxu0 0.0
    %7908 = vmatprep.subr.mxu0 0.0
    %7909 = vmatpush2.msra.mxu0 0.0
    %7910 = vmatprep.subr.mxu0 0.0
    %7911 = vmatpush2.msra.mxu0 0.0
    %7912 = vmatprep.subr.mxu0 0.0
    %7913 = vmatpush2.msra.mxu0 0.0
    %7914 = vmatprep.subr.mxu0 0.0
    %7915 = vmatpush2.msra.mxu0 0.0
    %7916 = vmatprep.subr.mxu0 0.0
    %7917 = vmatpush2.msra.mxu0 0.0
    %7918 = vmatprep.subr.mxu0 0.0
    %7919 = vmatpush2.msra.mxu0 0.0
    %7920 = vmatprep.subr.mxu0 0.0
    %7921 = vmatpush2.msra.mxu0 0.0
    %7922 = vmatprep.subr.mxu0 0.0
    %7923 = vmatpush2.msra.mxu0 0.0
    %7924 = vmatprep.subr.mxu0 0.0
    %7925 = vmatpush2.msra.mxu0 0.0
    %7926 = vmatprep.subr.mxu0 0.0
    %7927 = vmatpush2.msra.mxu0 0.0
    %7928 = vmatprep.subr.mxu0 0.0
    %7929 = vmatpush2.msra.mxu0 0.0
    %7930 = vmatprep.subr.mxu0 0.0
    %7931 = vmatpush2.msra.mxu0 0.0
    %7932 = vmatprep.mubr.f32.mxu0 0.0
    %7933 = vmatmul.mubr.f32.gmra.mxu0 %v7866
    %v7934 = vpop.f32.mrf.mxu0
    %v7935 = vadd.f32 0.0, %v7934
    %v7936 = vpop.f32.mrf.mxu0
    %v7937 = vadd.f32 0.0, %v7936
    %7938 = vdwg.mxu0
    %7939 = vmatprep.subr.mxu0 0.0
    %7940 = vmatpush1.msra.mxu0 0.0
    %7941 = vmatprep.subr.mxu0 0.0
    %7942 = vmatpush1.msra.mxu0 0.0
    %7943 = vmatprep.subr.mxu0 0.0
    %7944 = vmatpush1.msra.mxu0 0.0
    %7945 = vmatprep.subr.mxu0 0.0
    %7946 = vmatpush1.msra.mxu0 0.0
    %7947 = vmatprep.subr.mxu0 0.0
    %7948 = vmatpush1.msra.mxu0 0.0
    %7949 = vmatprep.subr.mxu0 0.0
    %7950 = vmatpush1.msra.mxu0 0.0
    %7951 = vmatprep.subr.mxu0 0.0
    %7952 = vmatpush1.msra.mxu0 0.0
    %7953 = vmatprep.subr.mxu0 0.0
    %7954 = vmatpush1.msra.mxu0 0.0
    %7955 = vmatprep.subr.mxu0 0.0
    %7956 = vmatpush1.msra.mxu0 0.0
    %7957 = vmatprep.subr.mxu0 0.0
    %7958 = vmatpush1.msra.mxu0 0.0
    %7959 = vmatprep.subr.mxu0 0.0
    %7960 = vmatpush1.msra.mxu0 0.0
    %7961 = vmatprep.subr.mxu0 0.0
    %7962 = vmatpush1.msra.mxu0 0.0
    %7963 = vmatprep.subr.mxu0 0.0
    %7964 = vmatpush1.msra.mxu0 0.0
    %7965 = vmatprep.subr.mxu0 0.0
    %7966 = vmatpush1.msra.mxu0 0.0
    %7967 = vmatprep.subr.mxu0 %v7841
    %7968 = vmatpush1.msra.mxu0 %v7839
    %7969 = vmatprep.subr.mxu0 %v7840
    %7970 = vmatpush1.msra.mxu0 %v7838
    %7971 = vmatprep.subr.mxu0 0.0
    %7972 = vmatpush2.msra.mxu0 0.0
    %7973 = vmatprep.subr.mxu0 0.0
    %7974 = vmatpush2.msra.mxu0 0.0
    %7975 = vmatprep.subr.mxu0 0.0
    %7976 = vmatpush2.msra.mxu0 0.0
    %7977 = vmatprep.subr.mxu0 0.0
    %7978 = vmatpush2.msra.mxu0 0.0
    %7979 = vmatprep.subr.mxu0 0.0
    %7980 = vmatpush2.msra.mxu0 0.0
    %7981 = vmatprep.subr.mxu0 0.0
    %7982 = vmatpush2.msra.mxu0 0.0
    %7983 = vmatprep.subr.mxu0 0.0
    %7984 = vmatpush2.msra.mxu0 0.0
    %7985 = vmatprep.subr.mxu0 0.0
    %7986 = vmatpush2.msra.mxu0 0.0
    %7987 = vmatprep.subr.mxu0 0.0
    %7988 = vmatpush2.msra.mxu0 0.0
    %7989 = vmatprep.subr.mxu0 0.0
    %7990 = vmatpush2.msra.mxu0 0.0
    %7991 = vmatprep.subr.mxu0 0.0
    %7992 = vmatpush2.msra.mxu0 0.0
    %7993 = vmatprep.subr.mxu0 0.0
    %7994 = vmatpush2.msra.mxu0 0.0
    %7995 = vmatprep.subr.mxu0 0.0
    %7996 = vmatpush2.msra.mxu0 0.0
    %7997 = vmatprep.subr.mxu0 0.0
    %7998 = vmatpush2.msra.mxu0 0.0
    %7999 = vmatprep.subr.mxu0 0.0
    %8000 = vmatpush2.msra.mxu0 0.0
    %8001 = vmatprep.subr.mxu0 0.0
    %8002 = vmatpush2.msra.mxu0 0.0
    %8003 = vmatprep.mubr.f32.mxu0 0.0
    %8004 = vmatmul.mubr.f32.gmra.mxu0 %v7866
    %v8005 = vpop.f32.mrf.mxu0
    %v8006 = vadd.f32 0.0, %v8005
    %v8007 = vpop.f32.mrf.mxu0
    %v8008 = vadd.f32 0.0, %v8007
    %8009 = vdwg.mxu0
    %8010 = vmatprep.subr.mxu0 0.0
    %8011 = vmatpush1.msra.mxu0 0.0
    %8012 = vmatprep.subr.mxu0 0.0
    %8013 = vmatpush1.msra.mxu0 0.0
    %8014 = vmatprep.subr.mxu0 0.0
    %8015 = vmatpush1.msra.mxu0 0.0
    %8016 = vmatprep.subr.mxu0 0.0
    %8017 = vmatpush1.msra.mxu0 0.0
    %8018 = vmatprep.subr.mxu0 0.0
    %8019 = vmatpush1.msra.mxu0 0.0
    %8020 = vmatprep.subr.mxu0 0.0
    %8021 = vmatpush1.msra.mxu0 0.0
    %8022 = vmatprep.subr.mxu0 0.0
    %8023 = vmatpush1.msra.mxu0 0.0
    %8024 = vmatprep.subr.mxu0 0.0
    %8025 = vmatpush1.msra.mxu0 0.0
    %8026 = vmatprep.subr.mxu0 0.0
    %8027 = vmatpush1.msra.mxu0 0.0
    %8028 = vmatprep.subr.mxu0 0.0
    %8029 = vmatpush1.msra.mxu0 0.0
    %8030 = vmatprep.subr.mxu0 0.0
    %8031 = vmatpush1.msra.mxu0 0.0
    %8032 = vmatprep.subr.mxu0 0.0
    %8033 = vmatpush1.msra.mxu0 0.0
    %8034 = vmatprep.subr.mxu0 0.0
    %8035 = vmatpush1.msra.mxu0 0.0
    %8036 = vmatprep.subr.mxu0 0.0
    %8037 = vmatpush1.msra.mxu0 0.0
    %8038 = vmatprep.subr.mxu0 %v7845
    %8039 = vmatpush1.msra.mxu0 %v7843
    %8040 = vmatprep.subr.mxu0 %v7844
    %8041 = vmatpush1.msra.mxu0 %v7842
    %8042 = vmatprep.subr.mxu0 0.0
    %8043 = vmatpush2.msra.mxu0 0.0
    %8044 = vmatprep.subr.mxu0 0.0
    %8045 = vmatpush2.msra.mxu0 0.0
    %8046 = vmatprep.subr.mxu0 0.0
    %8047 = vmatpush2.msra.mxu0 0.0
    %8048 = vmatprep.subr.mxu0 0.0
    %8049 = vmatpush2.msra.mxu0 0.0
    %8050 = vmatprep.subr.mxu0 0.0
    %8051 = vmatpush2.msra.mxu0 0.0
    %8052 = vmatprep.subr.mxu0 0.0
    %8053 = vmatpush2.msra.mxu0 0.0
    %8054 = vmatprep.subr.mxu0 0.0
    %8055 = vmatpush2.msra.mxu0 0.0
    %8056 = vmatprep.subr.mxu0 0.0
    %8057 = vmatpush2.msra.mxu0 0.0
    %8058 = vmatprep.subr.mxu0 0.0
    %8059 = vmatpush2.msra.mxu0 0.0
    %8060 = vmatprep.subr.mxu0 0.0
    %8061 = vmatpush2.msra.mxu0 0.0
    %8062 = vmatprep.subr.mxu0 0.0
    %8063 = vmatpush2.msra.mxu0 0.0
    %8064 = vmatprep.subr.mxu0 0.0
    %8065 = vmatpush2.msra.mxu0 0.0
    %8066 = vmatprep.subr.mxu0 0.0
    %8067 = vmatpush2.msra.mxu0 0.0
    %8068 = vmatprep.subr.mxu0 0.0
    %8069 = vmatpush2.msra.mxu0 0.0
    %8070 = vmatprep.subr.mxu0 0.0
    %8071 = vmatpush2.msra.mxu0 0.0
    %8072 = vmatprep.subr.mxu0 0.0
    %8073 = vmatpush2.msra.mxu0 0.0
    %8074 = vmatprep.mubr.f32.mxu0 0.0
    %8075 = vmatmul.mubr.f32.gmra.mxu0 %v7866
    %v8076 = vpop.f32.mrf.mxu0
    %v8077 = vadd.f32 0.0, %v8076
    %v8078 = vpop.f32.mrf.mxu0
    %v8079 = vadd.f32 0.0, %v8078
    %8080 = vdwg.mxu0
    %8081 = vmatprep.subr.mxu0 0.0
    %8082 = vmatpush1.msra.mxu0 0.0
    %8083 = vmatprep.subr.mxu0 0.0
    %8084 = vmatpush1.msra.mxu0 0.0
    %8085 = vmatprep.subr.mxu0 0.0
    %8086 = vmatpush1.msra.mxu0 0.0
    %8087 = vmatprep.subr.mxu0 0.0
    %8088 = vmatpush1.msra.mxu0 0.0
    %8089 = vmatprep.subr.mxu0 0.0
    %8090 = vmatpush1.msra.mxu0 0.0
    %8091 = vmatprep.subr.mxu0 0.0
    %8092 = vmatpush1.msra.mxu0 0.0
    %8093 = vmatprep.subr.mxu0 0.0
    %8094 = vmatpush1.msra.mxu0 0.0
    %8095 = vmatprep.subr.mxu0 0.0
    %8096 = vmatpush1.msra.mxu0 0.0
    %8097 = vmatprep.subr.mxu0 0.0
    %8098 = vmatpush1.msra.mxu0 0.0
    %8099 = vmatprep.subr.mxu0 0.0
    %8100 = vmatpush1.msra.mxu0 0.0
    %8101 = vmatprep.subr.mxu0 0.0
    %8102 = vmatpush1.msra.mxu0 0.0
    %8103 = vmatprep.subr.mxu0 0.0
    %8104 = vmatpush1.msra.mxu0 0.0
    %8105 = vmatprep.subr.mxu0 0.0
    %8106 = vmatpush1.msra.mxu0 0.0
    %8107 = vmatprep.subr.mxu0 0.0
    %8108 = vmatpush1.msra.mxu0 0.0
    %8109 = vmatprep.subr.mxu0 %v7849
    %8110 = vmatpush1.msra.mxu0 %v7847
    %8111 = vmatprep.subr.mxu0 %v7848
    %8112 = vmatpush1.msra.mxu0 %v7846
    %8113 = vmatprep.subr.mxu0 0.0
    %8114 = vmatpush2.msra.mxu0 0.0
    %8115 = vmatprep.subr.mxu0 0.0
    %8116 = vmatpush2.msra.mxu0 0.0
    %8117 = vmatprep.subr.mxu0 0.0
    %8118 = vmatpush2.msra.mxu0 0.0
    %8119 = vmatprep.subr.mxu0 0.0
    %8120 = vmatpush2.msra.mxu0 0.0
    %8121 = vmatprep.subr.mxu0 0.0
    %8122 = vmatpush2.msra.mxu0 0.0
    %8123 = vmatprep.subr.mxu0 0.0
    %8124 = vmatpush2.msra.mxu0 0.0
    %8125 = vmatprep.subr.mxu0 0.0
    %8126 = vmatpush2.msra.mxu0 0.0
    %8127 = vmatprep.subr.mxu0 0.0
    %8128 = vmatpush2.msra.mxu0 0.0
    %8129 = vmatprep.subr.mxu0 0.0
    %8130 = vmatpush2.msra.mxu0 0.0
    %8131 = vmatprep.subr.mxu0 0.0
    %8132 = vmatpush2.msra.mxu0 0.0
    %8133 = vmatprep.subr.mxu0 0.0
    %8134 = vmatpush2.msra.mxu0 0.0
    %8135 = vmatprep.subr.mxu0 0.0
    %8136 = vmatpush2.msra.mxu0 0.0
    %8137 = vmatprep.subr.mxu0 0.0
    %8138 = vmatpush2.msra.mxu0 0.0
    %8139 = vmatprep.subr.mxu0 0.0
    %8140 = vmatpush2.msra.mxu0 0.0
    %8141 = vmatprep.subr.mxu0 0.0
    %8142 = vmatpush2.msra.mxu0 0.0
    %8143 = vmatprep.subr.mxu0 0.0
    %8144 = vmatpush2.msra.mxu0 0.0
    %8145 = vmatprep.mubr.f32.mxu0 0.0
    %8146 = vmatmul.mubr.f32.gmra.mxu0 %v7866
    %v8147 = vpop.f32.mrf.mxu0
    %v8148 = vadd.f32 0.0, %v8147
    %v8149 = vpop.f32.mrf.mxu0
    %v8150 = vadd.f32 0.0, %v8149
    %8151 = vdwg.mxu0
    %8152 = vmatprep.subr.mxu0 0.0
    %8153 = vmatpush1.msra.mxu0 0.0
    %8154 = vmatprep.subr.mxu0 0.0
    %8155 = vmatpush1.msra.mxu0 0.0
    %8156 = vmatprep.subr.mxu0 0.0
    %8157 = vmatpush1.msra.mxu0 0.0
    %8158 = vmatprep.subr.mxu0 0.0
    %8159 = vmatpush1.msra.mxu0 0.0
    %8160 = vmatprep.subr.mxu0 0.0
    %8161 = vmatpush1.msra.mxu0 0.0
    %8162 = vmatprep.subr.mxu0 0.0
    %8163 = vmatpush1.msra.mxu0 0.0
    %8164 = vmatprep.subr.mxu0 0.0
    %8165 = vmatpush1.msra.mxu0 0.0
    %8166 = vmatprep.subr.mxu0 0.0
    %8167 = vmatpush1.msra.mxu0 0.0
    %8168 = vmatprep.subr.mxu0 0.0
    %8169 = vmatpush1.msra.mxu0 0.0
    %8170 = vmatprep.subr.mxu0 0.0
    %8171 = vmatpush1.msra.mxu0 0.0
    %8172 = vmatprep.subr.mxu0 0.0
    %8173 = vmatpush1.msra.mxu0 0.0
    %8174 = vmatprep.subr.mxu0 0.0
    %8175 = vmatpush1.msra.mxu0 0.0
    %8176 = vmatprep.subr.mxu0 0.0
    %8177 = vmatpush1.msra.mxu0 0.0
    %8178 = vmatprep.subr.mxu0 0.0
    %8179 = vmatpush1.msra.mxu0 0.0
    %8180 = vmatprep.subr.mxu0 %v7853
    %8181 = vmatpush1.msra.mxu0 %v7851
    %8182 = vmatprep.subr.mxu0 %v7852
    %8183 = vmatpush1.msra.mxu0 %v7850
    %8184 = vmatprep.subr.mxu0 0.0
    %8185 = vmatpush2.msra.mxu0 0.0
    %8186 = vmatprep.subr.mxu0 0.0
    %8187 = vmatpush2.msra.mxu0 0.0
    %8188 = vmatprep.subr.mxu0 0.0
    %8189 = vmatpush2.msra.mxu0 0.0
    %8190 = vmatprep.subr.mxu0 0.0
    %8191 = vmatpush2.msra.mxu0 0.0
    %8192 = vmatprep.subr.mxu0 0.0
    %8193 = vmatpush2.msra.mxu0 0.0
    %8194 = vmatprep.subr.mxu0 0.0
    %8195 = vmatpush2.msra.mxu0 0.0
    %8196 = vmatprep.subr.mxu0 0.0
    %8197 = vmatpush2.msra.mxu0 0.0
    %8198 = vmatprep.subr.mxu0 0.0
    %8199 = vmatpush2.msra.mxu0 0.0
    %8200 = vmatprep.subr.mxu0 0.0
    %8201 = vmatpush2.msra.mxu0 0.0
    %8202 = vmatprep.subr.mxu0 0.0
    %8203 = vmatpush2.msra.mxu0 0.0
    %8204 = vmatprep.subr.mxu0 0.0
    %8205 = vmatpush2.msra.mxu0 0.0
    %8206 = vmatprep.subr.mxu0 0.0
    %8207 = vmatpush2.msra.mxu0 0.0
    %8208 = vmatprep.subr.mxu0 0.0
    %8209 = vmatpush2.msra.mxu0 0.0
    %8210 = vmatprep.subr.mxu0 0.0
    %8211 = vmatpush2.msra.mxu0 0.0
    %8212 = vmatprep.subr.mxu0 0.0
    %8213 = vmatpush2.msra.mxu0 0.0
    %8214 = vmatprep.subr.mxu0 0.0
    %8215 = vmatpush2.msra.mxu0 0.0
    %8216 = vmatprep.mubr.f32.mxu0 0.0
    %8217 = vmatmul.mubr.f32.gmra.mxu0 %v7866
    %v8218 = vpop.f32.mrf.mxu0
    %v8219 = vadd.f32 0.0, %v8218
    %v8220 = vpop.f32.mrf.mxu0
    %v8221 = vadd.f32 0.0, %v8220
    %8222 = vdwg.mxu0
    %8223 = vmatprep.subr.mxu0 0.0
    %8224 = vmatpush1.msra.mxu0 0.0
    %8225 = vmatprep.subr.mxu0 0.0
    %8226 = vmatpush1.msra.mxu0 0.0
    %8227 = vmatprep.subr.mxu0 0.0
    %8228 = vmatpush1.msra.mxu0 0.0
    %8229 = vmatprep.subr.mxu0 0.0
    %8230 = vmatpush1.msra.mxu0 0.0
    %8231 = vmatprep.subr.mxu0 0.0
    %8232 = vmatpush1.msra.mxu0 0.0
    %8233 = vmatprep.subr.mxu0 0.0
    %8234 = vmatpush1.msra.mxu0 0.0
    %8235 = vmatprep.subr.mxu0 0.0
    %8236 = vmatpush1.msra.mxu0 0.0
    %8237 = vmatprep.subr.mxu0 0.0
    %8238 = vmatpush1.msra.mxu0 0.0
    %8239 = vmatprep.subr.mxu0 0.0
    %8240 = vmatpush1.msra.mxu0 0.0
    %8241 = vmatprep.subr.mxu0 0.0
    %8242 = vmatpush1.msra.mxu0 0.0
    %8243 = vmatprep.subr.mxu0 0.0
    %8244 = vmatpush1.msra.mxu0 0.0
    %8245 = vmatprep.subr.mxu0 0.0
    %8246 = vmatpush1.msra.mxu0 0.0
    %8247 = vmatprep.subr.mxu0 0.0
    %8248 = vmatpush1.msra.mxu0 0.0
    %8249 = vmatprep.subr.mxu0 0.0
    %8250 = vmatpush1.msra.mxu0 0.0
    %8251 = vmatprep.subr.mxu0 %v7857
    %8252 = vmatpush1.msra.mxu0 %v7855
    %8253 = vmatprep.subr.mxu0 %v7856
    %8254 = vmatpush1.msra.mxu0 %v7854
    %8255 = vmatprep.subr.mxu0 0.0
    %8256 = vmatpush2.msra.mxu0 0.0
    %8257 = vmatprep.subr.mxu0 0.0
    %8258 = vmatpush2.msra.mxu0 0.0
    %8259 = vmatprep.subr.mxu0 0.0
    %8260 = vmatpush2.msra.mxu0 0.0
    %8261 = vmatprep.subr.mxu0 0.0
    %8262 = vmatpush2.msra.mxu0 0.0
    %8263 = vmatprep.subr.mxu0 0.0
    %8264 = vmatpush2.msra.mxu0 0.0
    %8265 = vmatprep.subr.mxu0 0.0
    %8266 = vmatpush2.msra.mxu0 0.0
    %8267 = vmatprep.subr.mxu0 0.0
    %8268 = vmatpush2.msra.mxu0 0.0
    %8269 = vmatprep.subr.mxu0 0.0
    %8270 = vmatpush2.msra.mxu0 0.0
    %8271 = vmatprep.subr.mxu0 0.0
    %8272 = vmatpush2.msra.mxu0 0.0
    %8273 = vmatprep.subr.mxu0 0.0
    %8274 = vmatpush2.msra.mxu0 0.0
    %8275 = vmatprep.subr.mxu0 0.0
    %8276 = vmatpush2.msra.mxu0 0.0
    %8277 = vmatprep.subr.mxu0 0.0
    %8278 = vmatpush2.msra.mxu0 0.0
    %8279 = vmatprep.subr.mxu0 0.0
    %8280 = vmatpush2.msra.mxu0 0.0
    %8281 = vmatprep.subr.mxu0 0.0
    %8282 = vmatpush2.msra.mxu0 0.0
    %8283 = vmatprep.subr.mxu0 0.0
    %8284 = vmatpush2.msra.mxu0 0.0
    %8285 = vmatprep.subr.mxu0 0.0
    %8286 = vmatpush2.msra.mxu0 0.0
    %8287 = vmatprep.mubr.f32.mxu0 0.0
    %8288 = vmatmul.mubr.f32.gmra.mxu0 %v7866
    %v8289 = vpop.f32.mrf.mxu0
    %v8290 = vadd.f32 0.0, %v8289
    %v8291 = vpop.f32.mrf.mxu0
    %v8292 = vadd.f32 0.0, %v8291
    %8293 = vdwg.mxu0
    %8294 = vmatprep.subr.mxu0 0.0
    %8295 = vmatpush1.msra.mxu0 0.0
    %8296 = vmatprep.subr.mxu0 0.0
    %8297 = vmatpush1.msra.mxu0 0.0
    %8298 = vmatprep.subr.mxu0 0.0
    %8299 = vmatpush1.msra.mxu0 0.0
    %8300 = vmatprep.subr.mxu0 0.0
    %8301 = vmatpush1.msra.mxu0 0.0
    %8302 = vmatprep.subr.mxu0 0.0
    %8303 = vmatpush1.msra.mxu0 0.0
    %8304 = vmatprep.subr.mxu0 0.0
    %8305 = vmatpush1.msra.mxu0 0.0
    %8306 = vmatprep.subr.mxu0 0.0
    %8307 = vmatpush1.msra.mxu0 0.0
    %8308 = vmatprep.subr.mxu0 0.0
    %8309 = vmatpush1.msra.mxu0 0.0
    %8310 = vmatprep.subr.mxu0 0.0
    %8311 = vmatpush1.msra.mxu0 0.0
    %8312 = vmatprep.subr.mxu0 0.0
    %8313 = vmatpush1.msra.mxu0 0.0
    %8314 = vmatprep.subr.mxu0 0.0
    %8315 = vmatpush1.msra.mxu0 0.0
    %8316 = vmatprep.subr.mxu0 0.0
    %8317 = vmatpush1.msra.mxu0 0.0
    %8318 = vmatprep.subr.mxu0 0.0
    %8319 = vmatpush1.msra.mxu0 0.0
    %8320 = vmatprep.subr.mxu0 0.0
    %8321 = vmatpush1.msra.mxu0 0.0
    %8322 = vmatprep.subr.mxu0 %v7861
    %8323 = vmatpush1.msra.mxu0 %v7859
    %8324 = vmatprep.subr.mxu0 %v7860
    %8325 = vmatpush1.msra.mxu0 %v7858
    %8326 = vmatprep.subr.mxu0 0.0
    %8327 = vmatpush2.msra.mxu0 0.0
    %8328 = vmatprep.subr.mxu0 0.0
    %8329 = vmatpush2.msra.mxu0 0.0
    %8330 = vmatprep.subr.mxu0 0.0
    %8331 = vmatpush2.msra.mxu0 0.0
    %8332 = vmatprep.subr.mxu0 0.0
    %8333 = vmatpush2.msra.mxu0 0.0
    %8334 = vmatprep.subr.mxu0 0.0
    %8335 = vmatpush2.msra.mxu0 0.0
    %8336 = vmatprep.subr.mxu0 0.0
    %8337 = vmatpush2.msra.mxu0 0.0
    %8338 = vmatprep.subr.mxu0 0.0
    %8339 = vmatpush2.msra.mxu0 0.0
    %8340 = vmatprep.subr.mxu0 0.0
    %8341 = vmatpush2.msra.mxu0 0.0
    %8342 = vmatprep.subr.mxu0 0.0
    %8343 = vmatpush2.msra.mxu0 0.0
    %8344 = vmatprep.subr.mxu0 0.0
    %8345 = vmatpush2.msra.mxu0 0.0
    %8346 = vmatprep.subr.mxu0 0.0
    %8347 = vmatpush2.msra.mxu0 0.0
    %8348 = vmatprep.subr.mxu0 0.0
    %8349 = vmatpush2.msra.mxu0 0.0
    %8350 = vmatprep.subr.mxu0 0.0
    %8351 = vmatpush2.msra.mxu0 0.0
    %8352 = vmatprep.subr.mxu0 0.0
    %8353 = vmatpush2.msra.mxu0 0.0
    %8354 = vmatprep.subr.mxu0 0.0
    %8355 = vmatpush2.msra.mxu0 0.0
    %8356 = vmatprep.subr.mxu0 0.0
    %8357 = vmatpush2.msra.mxu0 0.0
    %8358 = vmatprep.mubr.f32.mxu0 0.0
    %8359 = vmatmul.mubr.f32.gmra.mxu0 %v7866
    %v8360 = vpop.f32.mrf.mxu0
    %v8361 = vadd.f32 0.0, %v8360
    %v8362 = vpop.f32.mrf.mxu0
    %v8363 = vadd.f32 0.0, %v8362
    %8364 = vdwg.mxu0
    %v8366 = vsel %vm5379, %v7862, 0
    %8368 = vmatprep.subr.mxu0 0.0
    %8369 = vmatpush1.msra.mxu0 0.0
    %8370 = vmatprep.subr.mxu0 0.0
    %8371 = vmatpush1.msra.mxu0 0.0
    %8372 = vmatprep.subr.mxu0 0.0
    %8373 = vmatpush1.msra.mxu0 0.0
    %8374 = vmatprep.subr.mxu0 0.0
    %8375 = vmatpush1.msra.mxu0 0.0
    %8376 = vmatprep.subr.mxu0 0.0
    %8377 = vmatpush1.msra.mxu0 0.0
    %8378 = vmatprep.subr.mxu0 0.0
    %8379 = vmatpush1.msra.mxu0 0.0
    %8380 = vmatprep.subr.mxu0 0.0
    %8381 = vmatpush1.msra.mxu0 0.0
    %8382 = vmatprep.subr.mxu0 0.0
    %8383 = vmatpush1.msra.mxu0 0.0
    %8384 = vmatprep.subr.mxu0 0.0
    %8385 = vmatpush1.msra.mxu0 0.0
    %8386 = vmatprep.subr.mxu0 0.0
    %8387 = vmatpush1.msra.mxu0 0.0
    %8388 = vmatprep.subr.mxu0 0.0
    %8389 = vmatpush1.msra.mxu0 0.0
    %8390 = vmatprep.subr.mxu0 0.0
    %8391 = vmatpush1.msra.mxu0 0.0
    %8392 = vmatprep.subr.mxu0 0.0
    %8393 = vmatpush1.msra.mxu0 0.0
    %8394 = vmatprep.subr.mxu0 0.0
    %8395 = vmatpush1.msra.mxu0 0.0
    %8396 = vmatprep.subr.mxu0 %v7835
    %8397 = vmatpush1.msra.mxu0 %v7833
    %8398 = vmatprep.subr.mxu0 %v7834
    %8399 = vmatpush1.msra.mxu0 %v7832
    %8400 = vmatprep.subr.mxu0 0.0
    %8401 = vmatpush2.msra.mxu0 0.0
    %8402 = vmatprep.subr.mxu0 0.0
    %8403 = vmatpush2.msra.mxu0 0.0
    %8404 = vmatprep.subr.mxu0 0.0
    %8405 = vmatpush2.msra.mxu0 0.0
    %8406 = vmatprep.subr.mxu0 0.0
    %8407 = vmatpush2.msra.mxu0 0.0
    %8408 = vmatprep.subr.mxu0 0.0
    %8409 = vmatpush2.msra.mxu0 0.0
    %8410 = vmatprep.subr.mxu0 0.0
    %8411 = vmatpush2.msra.mxu0 0.0
    %8412 = vmatprep.subr.mxu0 0.0
    %8413 = vmatpush2.msra.mxu0 0.0
    %8414 = vmatprep.subr.mxu0 0.0
    %8415 = vmatpush2.msra.mxu0 0.0
    %8416 = vmatprep.subr.mxu0 0.0
    %8417 = vmatpush2.msra.mxu0 0.0
    %8418 = vmatprep.subr.mxu0 0.0
    %8419 = vmatpush2.msra.mxu0 0.0
    %8420 = vmatprep.subr.mxu0 0.0
    %8421 = vmatpush2.msra.mxu0 0.0
    %8422 = vmatprep.subr.mxu0 0.0
    %8423 = vmatpush2.msra.mxu0 0.0
    %8424 = vmatprep.subr.mxu0 0.0
    %8425 = vmatpush2.msra.mxu0 0.0
    %8426 = vmatprep.subr.mxu0 0.0
    %8427 = vmatpush2.msra.mxu0 0.0
    %8428 = vmatprep.subr.mxu0 0.0
    %8429 = vmatpush2.msra.mxu0 0.0
    %8430 = vmatprep.subr.mxu0 0.0
    %8431 = vmatpush2.msra.mxu0 0.0
    %8432 = vmatprep.mubr.f32.mxu0 0.0
    %8433 = vmatmul.mubr.f32.gmra.mxu0 %v8366
    %v8434 = vpop.f32.mrf.mxu0
    %v8435 = vadd.f32 %v7935, %v8434
    %v8436 = vpop.f32.mrf.mxu0
    %v8437 = vadd.f32 %v7937, %v8436
    %8438 = vdwg.mxu0
    %8439 = vmatprep.subr.mxu0 0.0
    %8440 = vmatpush1.msra.mxu0 0.0
    %8441 = vmatprep.subr.mxu0 0.0
    %8442 = vmatpush1.msra.mxu0 0.0
    %8443 = vmatprep.subr.mxu0 0.0
    %8444 = vmatpush1.msra.mxu0 0.0
    %8445 = vmatprep.subr.mxu0 0.0
    %8446 = vmatpush1.msra.mxu0 0.0
    %8447 = vmatprep.subr.mxu0 0.0
    %8448 = vmatpush1.msra.mxu0 0.0
    %8449 = vmatprep.subr.mxu0 0.0
    %8450 = vmatpush1.msra.mxu0 0.0
    %8451 = vmatprep.subr.mxu0 0.0
    %8452 = vmatpush1.msra.mxu0 0.0
    %8453 = vmatprep.subr.mxu0 0.0
    %8454 = vmatpush1.msra.mxu0 0.0
    %8455 = vmatprep.subr.mxu0 0.0
    %8456 = vmatpush1.msra.mxu0 0.0
    %8457 = vmatprep.subr.mxu0 0.0
    %8458 = vmatpush1.msra.mxu0 0.0
    %8459 = vmatprep.subr.mxu0 0.0
    %8460 = vmatpush1.msra.mxu0 0.0
    %8461 = vmatprep.subr.mxu0 0.0
    %8462 = vmatpush1.msra.mxu0 0.0
    %8463 = vmatprep.subr.mxu0 0.0
    %8464 = vmatpush1.msra.mxu0 0.0
    %8465 = vmatprep.subr.mxu0 0.0
    %8466 = vmatpush1.msra.mxu0 0.0
    %8467 = vmatprep.subr.mxu0 %v7839
    %8468 = vmatpush1.msra.mxu0 %v7837
    %8469 = vmatprep.subr.mxu0 %v7838
    %8470 = vmatpush1.msra.mxu0 %v7836
    %8471 = vmatprep.subr.mxu0 0.0
    %8472 = vmatpush2.msra.mxu0 0.0
    %8473 = vmatprep.subr.mxu0 0.0
    %8474 = vmatpush2.msra.mxu0 0.0
    %8475 = vmatprep.subr.mxu0 0.0
    %8476 = vmatpush2.msra.mxu0 0.0
    %8477 = vmatprep.subr.mxu0 0.0
    %8478 = vmatpush2.msra.mxu0 0.0
    %8479 = vmatprep.subr.mxu0 0.0
    %8480 = vmatpush2.msra.mxu0 0.0
    %8481 = vmatprep.subr.mxu0 0.0
    %8482 = vmatpush2.msra.mxu0 0.0
    %8483 = vmatprep.subr.mxu0 0.0
    %8484 = vmatpush2.msra.mxu0 0.0
    %8485 = vmatprep.subr.mxu0 0.0
    %8486 = vmatpush2.msra.mxu0 0.0
    %8487 = vmatprep.subr.mxu0 0.0
    %8488 = vmatpush2.msra.mxu0 0.0
    %8489 = vmatprep.subr.mxu0 0.0
    %8490 = vmatpush2.msra.mxu0 0.0
    %8491 = vmatprep.subr.mxu0 0.0
    %8492 = vmatpush2.msra.mxu0 0.0
    %8493 = vmatprep.subr.mxu0 0.0
    %8494 = vmatpush2.msra.mxu0 0.0
    %8495 = vmatprep.subr.mxu0 0.0
    %8496 = vmatpush2.msra.mxu0 0.0
    %8497 = vmatprep.subr.mxu0 0.0
    %8498 = vmatpush2.msra.mxu0 0.0
    %8499 = vmatprep.subr.mxu0 0.0
    %8500 = vmatpush2.msra.mxu0 0.0
    %8501 = vmatprep.subr.mxu0 0.0
    %8502 = vmatpush2.msra.mxu0 0.0
    %8503 = vmatprep.mubr.f32.mxu0 0.0
    %8504 = vmatmul.mubr.f32.gmra.mxu0 %v8366
    %v8505 = vpop.f32.mrf.mxu0
    %v8506 = vadd.f32 %v8006, %v8505
    %v8507 = vpop.f32.mrf.mxu0
    %v8508 = vadd.f32 %v8008, %v8507
    %8509 = vdwg.mxu0
    %8510 = vmatprep.subr.mxu0 0.0
    %8511 = vmatpush1.msra.mxu0 0.0
    %8512 = vmatprep.subr.mxu0 0.0
    %8513 = vmatpush1.msra.mxu0 0.0
    %8514 = vmatprep.subr.mxu0 0.0
    %8515 = vmatpush1.msra.mxu0 0.0
    %8516 = vmatprep.subr.mxu0 0.0
    %8517 = vmatpush1.msra.mxu0 0.0
    %8518 = vmatprep.subr.mxu0 0.0
    %8519 = vmatpush1.msra.mxu0 0.0
    %8520 = vmatprep.subr.mxu0 0.0
    %8521 = vmatpush1.msra.mxu0 0.0
    %8522 = vmatprep.subr.mxu0 0.0
    %8523 = vmatpush1.msra.mxu0 0.0
    %8524 = vmatprep.subr.mxu0 0.0
    %8525 = vmatpush1.msra.mxu0 0.0
    %8526 = vmatprep.subr.mxu0 0.0
    %8527 = vmatpush1.msra.mxu0 0.0
    %8528 = vmatprep.subr.mxu0 0.0
    %8529 = vmatpush1.msra.mxu0 0.0
    %8530 = vmatprep.subr.mxu0 0.0
    %8531 = vmatpush1.msra.mxu0 0.0
    %8532 = vmatprep.subr.mxu0 0.0
    %8533 = vmatpush1.msra.mxu0 0.0
    %8534 = vmatprep.subr.mxu0 0.0
    %8535 = vmatpush1.msra.mxu0 0.0
    %8536 = vmatprep.subr.mxu0 0.0
    %8537 = vmatpush1.msra.mxu0 0.0
    %8538 = vmatprep.subr.mxu0 %v7843
    %8539 = vmatpush1.msra.mxu0 %v7841
    %8540 = vmatprep.subr.mxu0 %v7842
    %8541 = vmatpush1.msra.mxu0 %v7840
    %8542 = vmatprep.subr.mxu0 0.0
    %8543 = vmatpush2.msra.mxu0 0.0
    %8544 = vmatprep.subr.mxu0 0.0
    %8545 = vmatpush2.msra.mxu0 0.0
    %8546 = vmatprep.subr.mxu0 0.0
    %8547 = vmatpush2.msra.mxu0 0.0
    %8548 = vmatprep.subr.mxu0 0.0
    %8549 = vmatpush2.msra.mxu0 0.0
    %8550 = vmatprep.subr.mxu0 0.0
    %8551 = vmatpush2.msra.mxu0 0.0
    %8552 = vmatprep.subr.mxu0 0.0
    %8553 = vmatpush2.msra.mxu0 0.0
    %8554 = vmatprep.subr.mxu0 0.0
    %8555 = vmatpush2.msra.mxu0 0.0
    %8556 = vmatprep.subr.mxu0 0.0
    %8557 = vmatpush2.msra.mxu0 0.0
    %8558 = vmatprep.subr.mxu0 0.0
    %8559 = vmatpush2.msra.mxu0 0.0
    %8560 = vmatprep.subr.mxu0 0.0
    %8561 = vmatpush2.msra.mxu0 0.0
    %8562 = vmatprep.subr.mxu0 0.0
    %8563 = vmatpush2.msra.mxu0 0.0
    %8564 = vmatprep.subr.mxu0 0.0
    %8565 = vmatpush2.msra.mxu0 0.0
    %8566 = vmatprep.subr.mxu0 0.0
    %8567 = vmatpush2.msra.mxu0 0.0
    %8568 = vmatprep.subr.mxu0 0.0
    %8569 = vmatpush2.msra.mxu0 0.0
    %8570 = vmatprep.subr.mxu0 0.0
    %8571 = vmatpush2.msra.mxu0 0.0
    %8572 = vmatprep.subr.mxu0 0.0
    %8573 = vmatpush2.msra.mxu0 0.0
    %8574 = vmatprep.mubr.f32.mxu0 0.0
    %8575 = vmatmul.mubr.f32.gmra.mxu0 %v8366
    %v8576 = vpop.f32.mrf.mxu0
    %v8577 = vadd.f32 %v8077, %v8576
    %v8578 = vpop.f32.mrf.mxu0
    %v8579 = vadd.f32 %v8079, %v8578
    %8580 = vdwg.mxu0
    %8581 = vmatprep.subr.mxu0 0.0
    %8582 = vmatpush1.msra.mxu0 0.0
    %8583 = vmatprep.subr.mxu0 0.0
    %8584 = vmatpush1.msra.mxu0 0.0
    %8585 = vmatprep.subr.mxu0 0.0
    %8586 = vmatpush1.msra.mxu0 0.0
    %8587 = vmatprep.subr.mxu0 0.0
    %8588 = vmatpush1.msra.mxu0 0.0
    %8589 = vmatprep.subr.mxu0 0.0
    %8590 = vmatpush1.msra.mxu0 0.0
    %8591 = vmatprep.subr.mxu0 0.0
    %8592 = vmatpush1.msra.mxu0 0.0
    %8593 = vmatprep.subr.mxu0 0.0
    %8594 = vmatpush1.msra.mxu0 0.0
    %8595 = vmatprep.subr.mxu0 0.0
    %8596 = vmatpush1.msra.mxu0 0.0
    %8597 = vmatprep.subr.mxu0 0.0
    %8598 = vmatpush1.msra.mxu0 0.0
    %8599 = vmatprep.subr.mxu0 0.0
    %8600 = vmatpush1.msra.mxu0 0.0
    %8601 = vmatprep.subr.mxu0 0.0
    %8602 = vmatpush1.msra.mxu0 0.0
    %8603 = vmatprep.subr.mxu0 0.0
    %8604 = vmatpush1.msra.mxu0 0.0
    %8605 = vmatprep.subr.mxu0 0.0
    %8606 = vmatpush1.msra.mxu0 0.0
    %8607 = vmatprep.subr.mxu0 0.0
    %8608 = vmatpush1.msra.mxu0 0.0
    %8609 = vmatprep.subr.mxu0 %v7847
    %8610 = vmatpush1.msra.mxu0 %v7845
    %8611 = vmatprep.subr.mxu0 %v7846
    %8612 = vmatpush1.msra.mxu0 %v7844
    %8613 = vmatprep.subr.mxu0 0.0
    %8614 = vmatpush2.msra.mxu0 0.0
    %8615 = vmatprep.subr.mxu0 0.0
    %8616 = vmatpush2.msra.mxu0 0.0
    %8617 = vmatprep.subr.mxu0 0.0
    %8618 = vmatpush2.msra.mxu0 0.0
    %8619 = vmatprep.subr.mxu0 0.0
    %8620 = vmatpush2.msra.mxu0 0.0
    %8621 = vmatprep.subr.mxu0 0.0
    %8622 = vmatpush2.msra.mxu0 0.0
    %8623 = vmatprep.subr.mxu0 0.0
    %8624 = vmatpush2.msra.mxu0 0.0
    %8625 = vmatprep.subr.mxu0 0.0
    %8626 = vmatpush2.msra.mxu0 0.0
    %8627 = vmatprep.subr.mxu0 0.0
    %8628 = vmatpush2.msra.mxu0 0.0
    %8629 = vmatprep.subr.mxu0 0.0
    %8630 = vmatpush2.msra.mxu0 0.0
    %8631 = vmatprep.subr.mxu0 0.0
    %8632 = vmatpush2.msra.mxu0 0.0
    %8633 = vmatprep.subr.mxu0 0.0
    %8634 = vmatpush2.msra.mxu0 0.0
    %8635 = vmatprep.subr.mxu0 0.0
    %8636 = vmatpush2.msra.mxu0 0.0
    %8637 = vmatprep.subr.mxu0 0.0
    %8638 = vmatpush2.msra.mxu0 0.0
    %8639 = vmatprep.subr.mxu0 0.0
    %8640 = vmatpush2.msra.mxu0 0.0
    %8641 = vmatprep.subr.mxu0 0.0
    %8642 = vmatpush2.msra.mxu0 0.0
    %8643 = vmatprep.subr.mxu0 0.0
    %8644 = vmatpush2.msra.mxu0 0.0
    %8645 = vmatprep.mubr.f32.mxu0 0.0
    %8646 = vmatmul.mubr.f32.gmra.mxu0 %v8366
    %v8647 = vpop.f32.mrf.mxu0
    %v8648 = vadd.f32 %v8148, %v8647
    %v8649 = vpop.f32.mrf.mxu0
    %v8650 = vadd.f32 %v8150, %v8649
    %8651 = vdwg.mxu0
    %8652 = vmatprep.subr.mxu0 0.0
    %8653 = vmatpush1.msra.mxu0 0.0
    %8654 = vmatprep.subr.mxu0 0.0
    %8655 = vmatpush1.msra.mxu0 0.0
    %8656 = vmatprep.subr.mxu0 0.0
    %8657 = vmatpush1.msra.mxu0 0.0
    %8658 = vmatprep.subr.mxu0 0.0
    %8659 = vmatpush1.msra.mxu0 0.0
    %8660 = vmatprep.subr.mxu0 0.0
    %8661 = vmatpush1.msra.mxu0 0.0
    %8662 = vmatprep.subr.mxu0 0.0
    %8663 = vmatpush1.msra.mxu0 0.0
    %8664 = vmatprep.subr.mxu0 0.0
    %8665 = vmatpush1.msra.mxu0 0.0
    %8666 = vmatprep.subr.mxu0 0.0
    %8667 = vmatpush1.msra.mxu0 0.0
    %8668 = vmatprep.subr.mxu0 0.0
    %8669 = vmatpush1.msra.mxu0 0.0
    %8670 = vmatprep.subr.mxu0 0.0
    %8671 = vmatpush1.msra.mxu0 0.0
    %8672 = vmatprep.subr.mxu0 0.0
    %8673 = vmatpush1.msra.mxu0 0.0
    %8674 = vmatprep.subr.mxu0 0.0
    %8675 = vmatpush1.msra.mxu0 0.0
    %8676 = vmatprep.subr.mxu0 0.0
    %8677 = vmatpush1.msra.mxu0 0.0
    %8678 = vmatprep.subr.mxu0 0.0
    %8679 = vmatpush1.msra.mxu0 0.0
    %8680 = vmatprep.subr.mxu0 %v7851
    %8681 = vmatpush1.msra.mxu0 %v7849
    %8682 = vmatprep.subr.mxu0 %v7850
    %8683 = vmatpush1.msra.mxu0 %v7848
    %8684 = vmatprep.subr.mxu0 0.0
    %8685 = vmatpush2.msra.mxu0 0.0
    %8686 = vmatprep.subr.mxu0 0.0
    %8687 = vmatpush2.msra.mxu0 0.0
    %8688 = vmatprep.subr.mxu0 0.0
    %8689 = vmatpush2.msra.mxu0 0.0
    %8690 = vmatprep.subr.mxu0 0.0
    %8691 = vmatpush2.msra.mxu0 0.0
    %8692 = vmatprep.subr.mxu0 0.0
    %8693 = vmatpush2.msra.mxu0 0.0
    %8694 = vmatprep.subr.mxu0 0.0
    %8695 = vmatpush2.msra.mxu0 0.0
    %8696 = vmatprep.subr.mxu0 0.0
    %8697 = vmatpush2.msra.mxu0 0.0
    %8698 = vmatprep.subr.mxu0 0.0
    %8699 = vmatpush2.msra.mxu0 0.0
    %8700 = vmatprep.subr.mxu0 0.0
    %8701 = vmatpush2.msra.mxu0 0.0
    %8702 = vmatprep.subr.mxu0 0.0
    %8703 = vmatpush2.msra.mxu0 0.0
    %8704 = vmatprep.subr.mxu0 0.0
    %8705 = vmatpush2.msra.mxu0 0.0
    %8706 = vmatprep.subr.mxu0 0.0
    %8707 = vmatpush2.msra.mxu0 0.0
    %8708 = vmatprep.subr.mxu0 0.0
    %8709 = vmatpush2.msra.mxu0 0.0
    %8710 = vmatprep.subr.mxu0 0.0
    %8711 = vmatpush2.msra.mxu0 0.0
    %8712 = vmatprep.subr.mxu0 0.0
    %8713 = vmatpush2.msra.mxu0 0.0
    %8714 = vmatprep.subr.mxu0 0.0
    %8715 = vmatpush2.msra.mxu0 0.0
    %8716 = vmatprep.mubr.f32.mxu0 0.0
    %8717 = vmatmul.mubr.f32.gmra.mxu0 %v8366
    %v8718 = vpop.f32.mrf.mxu0
    %v8719 = vadd.f32 %v8219, %v8718
    %v8720 = vpop.f32.mrf.mxu0
    %v8721 = vadd.f32 %v8221, %v8720
    %8722 = vdwg.mxu0
    %8723 = vmatprep.subr.mxu0 0.0
    %8724 = vmatpush1.msra.mxu0 0.0
    %8725 = vmatprep.subr.mxu0 0.0
    %8726 = vmatpush1.msra.mxu0 0.0
    %8727 = vmatprep.subr.mxu0 0.0
    %8728 = vmatpush1.msra.mxu0 0.0
    %8729 = vmatprep.subr.mxu0 0.0
    %8730 = vmatpush1.msra.mxu0 0.0
    %8731 = vmatprep.subr.mxu0 0.0
    %8732 = vmatpush1.msra.mxu0 0.0
    %8733 = vmatprep.subr.mxu0 0.0
    %8734 = vmatpush1.msra.mxu0 0.0
    %8735 = vmatprep.subr.mxu0 0.0
    %8736 = vmatpush1.msra.mxu0 0.0
    %8737 = vmatprep.subr.mxu0 0.0
    %8738 = vmatpush1.msra.mxu0 0.0
    %8739 = vmatprep.subr.mxu0 0.0
    %8740 = vmatpush1.msra.mxu0 0.0
    %8741 = vmatprep.subr.mxu0 0.0
    %8742 = vmatpush1.msra.mxu0 0.0
    %8743 = vmatprep.subr.mxu0 0.0
    %8744 = vmatpush1.msra.mxu0 0.0
    %8745 = vmatprep.subr.mxu0 0.0
    %8746 = vmatpush1.msra.mxu0 0.0
    %8747 = vmatprep.subr.mxu0 0.0
    %8748 = vmatpush1.msra.mxu0 0.0
    %8749 = vmatprep.subr.mxu0 0.0
    %8750 = vmatpush1.msra.mxu0 0.0
    %8751 = vmatprep.subr.mxu0 %v7855
    %8752 = vmatpush1.msra.mxu0 %v7853
    %8753 = vmatprep.subr.mxu0 %v7854
    %8754 = vmatpush1.msra.mxu0 %v7852
    %8755 = vmatprep.subr.mxu0 0.0
    %8756 = vmatpush2.msra.mxu0 0.0
    %8757 = vmatprep.subr.mxu0 0.0
    %8758 = vmatpush2.msra.mxu0 0.0
    %8759 = vmatprep.subr.mxu0 0.0
    %8760 = vmatpush2.msra.mxu0 0.0
    %8761 = vmatprep.subr.mxu0 0.0
    %8762 = vmatpush2.msra.mxu0 0.0
    %8763 = vmatprep.subr.mxu0 0.0
    %8764 = vmatpush2.msra.mxu0 0.0
    %8765 = vmatprep.subr.mxu0 0.0
    %8766 = vmatpush2.msra.mxu0 0.0
    %8767 = vmatprep.subr.mxu0 0.0
    %8768 = vmatpush2.msra.mxu0 0.0
    %8769 = vmatprep.subr.mxu0 0.0
    %8770 = vmatpush2.msra.mxu0 0.0
    %8771 = vmatprep.subr.mxu0 0.0
    %8772 = vmatpush2.msra.mxu0 0.0
    %8773 = vmatprep.subr.mxu0 0.0
    %8774 = vmatpush2.msra.mxu0 0.0
    %8775 = vmatprep.subr.mxu0 0.0
    %8776 = vmatpush2.msra.mxu0 0.0
    %8777 = vmatprep.subr.mxu0 0.0
    %8778 = vmatpush2.msra.mxu0 0.0
    %8779 = vmatprep.subr.mxu0 0.0
    %8780 = vmatpush2.msra.mxu0 0.0
    %8781 = vmatprep.subr.mxu0 0.0
    %8782 = vmatpush2.msra.mxu0 0.0
    %8783 = vmatprep.subr.mxu0 0.0
    %8784 = vmatpush2.msra.mxu0 0.0
    %8785 = vmatprep.subr.mxu0 0.0
    %8786 = vmatpush2.msra.mxu0 0.0
    %8787 = vmatprep.mubr.f32.mxu0 0.0
    %8788 = vmatmul.mubr.f32.gmra.mxu0 %v8366
    %v8789 = vpop.f32.mrf.mxu0
    %v8790 = vadd.f32 %v8290, %v8789
    %v8791 = vpop.f32.mrf.mxu0
    %v8792 = vadd.f32 %v8292, %v8791
    %8793 = vdwg.mxu0
    %8794 = vmatprep.subr.mxu0 0.0
    %8795 = vmatpush1.msra.mxu0 0.0
    %8796 = vmatprep.subr.mxu0 0.0
    %8797 = vmatpush1.msra.mxu0 0.0
    %8798 = vmatprep.subr.mxu0 0.0
    %8799 = vmatpush1.msra.mxu0 0.0
    %8800 = vmatprep.subr.mxu0 0.0
    %8801 = vmatpush1.msra.mxu0 0.0
    %8802 = vmatprep.subr.mxu0 0.0
    %8803 = vmatpush1.msra.mxu0 0.0
    %8804 = vmatprep.subr.mxu0 0.0
    %8805 = vmatpush1.msra.mxu0 0.0
    %8806 = vmatprep.subr.mxu0 0.0
    %8807 = vmatpush1.msra.mxu0 0.0
    %8808 = vmatprep.subr.mxu0 0.0
    %8809 = vmatpush1.msra.mxu0 0.0
    %8810 = vmatprep.subr.mxu0 0.0
    %8811 = vmatpush1.msra.mxu0 0.0
    %8812 = vmatprep.subr.mxu0 0.0
    %8813 = vmatpush1.msra.mxu0 0.0
    %8814 = vmatprep.subr.mxu0 0.0
    %8815 = vmatpush1.msra.mxu0 0.0
    %8816 = vmatprep.subr.mxu0 0.0
    %8817 = vmatpush1.msra.mxu0 0.0
    %8818 = vmatprep.subr.mxu0 0.0
    %8819 = vmatpush1.msra.mxu0 0.0
    %8820 = vmatprep.subr.mxu0 0.0
    %8821 = vmatpush1.msra.mxu0 0.0
    %8822 = vmatprep.subr.mxu0 %v7859
    %8823 = vmatpush1.msra.mxu0 %v7857
    %8824 = vmatprep.subr.mxu0 %v7858
    %8825 = vmatpush1.msra.mxu0 %v7856
    %8826 = vmatprep.subr.mxu0 0.0
    %8827 = vmatpush2.msra.mxu0 0.0
    %8828 = vmatprep.subr.mxu0 0.0
    %8829 = vmatpush2.msra.mxu0 0.0
    %8830 = vmatprep.subr.mxu0 0.0
    %8831 = vmatpush2.msra.mxu0 0.0
    %8832 = vmatprep.subr.mxu0 0.0
    %8833 = vmatpush2.msra.mxu0 0.0
    %8834 = vmatprep.subr.mxu0 0.0
    %8835 = vmatpush2.msra.mxu0 0.0
    %8836 = vmatprep.subr.mxu0 0.0
    %8837 = vmatpush2.msra.mxu0 0.0
    %8838 = vmatprep.subr.mxu0 0.0
    %8839 = vmatpush2.msra.mxu0 0.0
    %8840 = vmatprep.subr.mxu0 0.0
    %8841 = vmatpush2.msra.mxu0 0.0
    %8842 = vmatprep.subr.mxu0 0.0
    %8843 = vmatpush2.msra.mxu0 0.0
    %8844 = vmatprep.subr.mxu0 0.0
    %8845 = vmatpush2.msra.mxu0 0.0
    %8846 = vmatprep.subr.mxu0 0.0
    %8847 = vmatpush2.msra.mxu0 0.0
    %8848 = vmatprep.subr.mxu0 0.0
    %8849 = vmatpush2.msra.mxu0 0.0
    %8850 = vmatprep.subr.mxu0 0.0
    %8851 = vmatpush2.msra.mxu0 0.0
    %8852 = vmatprep.subr.mxu0 0.0
    %8853 = vmatpush2.msra.mxu0 0.0
    %8854 = vmatprep.subr.mxu0 0.0
    %8855 = vmatpush2.msra.mxu0 0.0
    %8856 = vmatprep.subr.mxu0 0.0
    %8857 = vmatpush2.msra.mxu0 0.0
    %8858 = vmatprep.mubr.f32.mxu0 0.0
    %8859 = vmatmul.mubr.f32.gmra.mxu0 %v8366
    %v8860 = vpop.f32.mrf.mxu0
    %v8861 = vadd.f32 %v8361, %v8860
    %v8862 = vpop.f32.mrf.mxu0
    %v8863 = vadd.f32 %v8363, %v8862
    %8864 = vdwg.mxu0
    %8866 = vset.pattern.permute.xlu0 0
    %8867 = vperm.xlu0 %8866, %v7864
    %v8868 = vpop.permute.xlu0 %8867
    %v8870 = vadd.f32 %v8435, %v8868
    %v8871 = vadd.f32 %v8437, %v8868
    %v8872 = vadd.f32 %v8506, %v8868
    %v8873 = vadd.f32 %v8508, %v8868
    %v8874 = vadd.f32 %v8577, %v8868
    %v8875 = vadd.f32 %v8579, %v8868
    %v8876 = vadd.f32 %v8648, %v8868
    %v8877 = vadd.f32 %v8650, %v8868
    %v8878 = vadd.f32 %v8719, %v8868
    %v8879 = vadd.f32 %v8721, %v8868
    %v8880 = vadd.f32 %v8790, %v8868
    %v8881 = vadd.f32 %v8792, %v8868
    %v8882 = vadd.f32 %v8861, %v8868
    %v8883 = vadd.f32 %v8863, %v8868
    %v8884 = vmax.f32 %v8870, 0.0
    %v8885 = vmax.f32 %v8871, 0.0
    %v8886 = vmax.f32 %v8872, 0.0
    %v8887 = vmax.f32 %v8873, 0.0
    %v8888 = vmax.f32 %v8874, 0.0
    %v8889 = vmax.f32 %v8875, 0.0
    %v8890 = vmax.f32 %v8876, 0.0
    %v8891 = vmax.f32 %v8877, 0.0
    %v8892 = vmax.f32 %v8878, 0.0
    %v8893 = vmax.f32 %v8879, 0.0
    %v8894 = vmax.f32 %v8880, 0.0
    %v8895 = vmax.f32 %v8881, 0.0
    %v8896 = vmax.f32 %v8882, 0.0
    %v8897 = vmax.f32 %v8883, 0.0
    %v8898 = vadd.f32 %v8884, %v8885
    %v8899 = vadd.f32 %v8886, %v8887
    %v8900 = vadd.f32 %v8888, %v8889
    %v8901 = vadd.f32 %v8890, %v8891
    %v8902 = vadd.f32 %v8892, %v8893
    %v8903 = vadd.f32 %v8894, %v8895
    %v8904 = vadd.f32 %v8896, %v8897
    %v8905 = vld [vmem:[#allocation5 + $0x78] sm:$0xff]
    %v8906 = vld [vmem:[#allocation5 + $0x80] sm:$0xff]
    %v8907 = vld [vmem:[#allocation5 + $0x88] sm:$0xff]
    %vm8908 = vcmask 64512
    %v8910 = vsel %vm8908, %v8906, 0
    %8912 = vmatprep.subr.mxu0 0.0
    %8913 = vmatpush1.msra.mxu0 0.0
    %8914 = vmatprep.subr.mxu0 0.0
    %8915 = vmatpush1.msra.mxu0 0.0
    %8916 = vmatprep.subr.mxu0 0.0
    %8917 = vmatpush1.msra.mxu0 0.0
    %8918 = vmatprep.subr.mxu0 0.0
    %8919 = vmatpush1.msra.mxu0 0.0
    %8920 = vmatprep.subr.mxu0 0.0
    %8921 = vmatpush1.msra.mxu0 0.0
    %8922 = vmatprep.subr.mxu0 0.0
    %8923 = vmatpush1.msra.mxu0 0.0
    %8924 = vmatprep.subr.mxu0 0.0
    %8925 = vmatpush1.msra.mxu0 0.0
    %8926 = vmatprep.subr.mxu0 0.0
    %8927 = vmatpush1.msra.mxu0 0.0
    %8928 = vmatprep.subr.mxu0 0.0
    %8929 = vmatpush1.msra.mxu0 0.0
    %8930 = vmatprep.subr.mxu0 0.0
    %8931 = vmatpush1.msra.mxu0 0.0
    %8932 = vmatprep.subr.mxu0 0.0
    %8933 = vmatpush1.msra.mxu0 0.0
    %8934 = vmatprep.subr.mxu0 0.0
    %8935 = vmatpush1.msra.mxu0 0.0
    %8936 = vmatprep.subr.mxu0 0.0
    %8937 = vmatpush1.msra.mxu0 0.0
    %8938 = vmatprep.subr.mxu0 0.0
    %8939 = vmatpush1.msra.mxu0 0.0
    %8940 = vmatprep.subr.mxu0 0.0
    %8941 = vmatpush1.msra.mxu0 0.0
    %8942 = vmatprep.subr.mxu0 %v8900
    %8943 = vmatpush1.msra.mxu0 %v8899
    %8944 = vmatprep.subr.mxu0 0.0
    %8945 = vmatpush2.msra.mxu0 0.0
    %8946 = vmatprep.subr.mxu0 0.0
    %8947 = vmatpush2.msra.mxu0 0.0
    %8948 = vmatprep.subr.mxu0 0.0
    %8949 = vmatpush2.msra.mxu0 0.0
    %8950 = vmatprep.subr.mxu0 0.0
    %8951 = vmatpush2.msra.mxu0 0.0
    %8952 = vmatprep.subr.mxu0 0.0
    %8953 = vmatpush2.msra.mxu0 0.0
    %8954 = vmatprep.subr.mxu0 0.0
    %8955 = vmatpush2.msra.mxu0 0.0
    %8956 = vmatprep.subr.mxu0 0.0
    %8957 = vmatpush2.msra.mxu0 0.0
    %8958 = vmatprep.subr.mxu0 0.0
    %8959 = vmatpush2.msra.mxu0 0.0
    %8960 = vmatprep.subr.mxu0 0.0
    %8961 = vmatpush2.msra.mxu0 0.0
    %8962 = vmatprep.subr.mxu0 0.0
    %8963 = vmatpush2.msra.mxu0 0.0
    %8964 = vmatprep.subr.mxu0 0.0
    %8965 = vmatpush2.msra.mxu0 0.0
    %8966 = vmatprep.subr.mxu0 0.0
    %8967 = vmatpush2.msra.mxu0 0.0
    %8968 = vmatprep.subr.mxu0 0.0
    %8969 = vmatpush2.msra.mxu0 0.0
    %8970 = vmatprep.subr.mxu0 0.0
    %8971 = vmatpush2.msra.mxu0 0.0
    %8972 = vmatprep.subr.mxu0 0.0
    %8973 = vmatpush2.msra.mxu0 0.0
    %8974 = vmatprep.subr.mxu0 0.0
    %8975 = vmatpush2.msra.mxu0 0.0
    %8976 = vmatprep.mubr.f32.mxu0 0.0
    %8977 = vmatmul.mubr.f32.gmra.mxu0 %v8910
    %v8978 = vpop.f32.mrf.mxu0
    %v8979 = vadd.f32 0.0, %v8978
    %v8980 = vpop.f32.mrf.mxu0
    %v8981 = vadd.f32 0.0, %v8980
    %8982 = vdwg.mxu0
    %8983 = vmatprep.subr.mxu0 0.0
    %8984 = vmatpush1.msra.mxu0 0.0
    %8985 = vmatprep.subr.mxu0 0.0
    %8986 = vmatpush1.msra.mxu0 0.0
    %8987 = vmatprep.subr.mxu0 0.0
    %8988 = vmatpush1.msra.mxu0 0.0
    %8989 = vmatprep.subr.mxu0 0.0
    %8990 = vmatpush1.msra.mxu0 0.0
    %8991 = vmatprep.subr.mxu0 0.0
    %8992 = vmatpush1.msra.mxu0 0.0
    %8993 = vmatprep.subr.mxu0 0.0
    %8994 = vmatpush1.msra.mxu0 0.0
    %8995 = vmatprep.subr.mxu0 0.0
    %8996 = vmatpush1.msra.mxu0 0.0
    %8997 = vmatprep.subr.mxu0 0.0
    %8998 = vmatpush1.msra.mxu0 0.0
    %8999 = vmatprep.subr.mxu0 0.0
    %9000 = vmatpush1.msra.mxu0 0.0
    %9001 = vmatprep.subr.mxu0 0.0
    %9002 = vmatpush1.msra.mxu0 0.0
    %9003 = vmatprep.subr.mxu0 0.0
    %9004 = vmatpush1.msra.mxu0 0.0
    %9005 = vmatprep.subr.mxu0 0.0
    %9006 = vmatpush1.msra.mxu0 0.0
    %9007 = vmatprep.subr.mxu0 0.0
    %9008 = vmatpush1.msra.mxu0 0.0
    %9009 = vmatprep.subr.mxu0 0.0
    %9010 = vmatpush1.msra.mxu0 0.0
    %9011 = vmatprep.subr.mxu0 0.0
    %9012 = vmatpush1.msra.mxu0 0.0
    %9013 = vmatprep.subr.mxu0 %v8902
    %9014 = vmatpush1.msra.mxu0 %v8901
    %9015 = vmatprep.subr.mxu0 0.0
    %9016 = vmatpush2.msra.mxu0 0.0
    %9017 = vmatprep.subr.mxu0 0.0
    %9018 = vmatpush2.msra.mxu0 0.0
    %9019 = vmatprep.subr.mxu0 0.0
    %9020 = vmatpush2.msra.mxu0 0.0
    %9021 = vmatprep.subr.mxu0 0.0
    %9022 = vmatpush2.msra.mxu0 0.0
    %9023 = vmatprep.subr.mxu0 0.0
    %9024 = vmatpush2.msra.mxu0 0.0
    %9025 = vmatprep.subr.mxu0 0.0
    %9026 = vmatpush2.msra.mxu0 0.0
    %9027 = vmatprep.subr.mxu0 0.0
    %9028 = vmatpush2.msra.mxu0 0.0
    %9029 = vmatprep.subr.mxu0 0.0
    %9030 = vmatpush2.msra.mxu0 0.0
    %9031 = vmatprep.subr.mxu0 0.0
    %9032 = vmatpush2.msra.mxu0 0.0
    %9033 = vmatprep.subr.mxu0 0.0
    %9034 = vmatpush2.msra.mxu0 0.0
    %9035 = vmatprep.subr.mxu0 0.0
    %9036 = vmatpush2.msra.mxu0 0.0
    %9037 = vmatprep.subr.mxu0 0.0
    %9038 = vmatpush2.msra.mxu0 0.0
    %9039 = vmatprep.subr.mxu0 0.0
    %9040 = vmatpush2.msra.mxu0 0.0
    %9041 = vmatprep.subr.mxu0 0.0
    %9042 = vmatpush2.msra.mxu0 0.0
    %9043 = vmatprep.subr.mxu0 0.0
    %9044 = vmatpush2.msra.mxu0 0.0
    %9045 = vmatprep.subr.mxu0 0.0
    %9046 = vmatpush2.msra.mxu0 0.0
    %9047 = vmatprep.mubr.f32.mxu0 0.0
    %9048 = vmatmul.mubr.f32.gmra.mxu0 %v8910
    %v9049 = vpop.f32.mrf.mxu0
    %v9050 = vadd.f32 0.0, %v9049
    %v9051 = vpop.f32.mrf.mxu0
    %v9052 = vadd.f32 0.0, %v9051
    %9053 = vdwg.mxu0
    %9054 = vmatprep.subr.mxu0 0.0
    %9055 = vmatpush1.msra.mxu0 0.0
    %9056 = vmatprep.subr.mxu0 0.0
    %9057 = vmatpush1.msra.mxu0 0.0
    %9058 = vmatprep.subr.mxu0 0.0
    %9059 = vmatpush1.msra.mxu0 0.0
    %9060 = vmatprep.subr.mxu0 0.0
    %9061 = vmatpush1.msra.mxu0 0.0
    %9062 = vmatprep.subr.mxu0 0.0
    %9063 = vmatpush1.msra.mxu0 0.0
    %9064 = vmatprep.subr.mxu0 0.0
    %9065 = vmatpush1.msra.mxu0 0.0
    %9066 = vmatprep.subr.mxu0 0.0
    %9067 = vmatpush1.msra.mxu0 0.0
    %9068 = vmatprep.subr.mxu0 0.0
    %9069 = vmatpush1.msra.mxu0 0.0
    %9070 = vmatprep.subr.mxu0 0.0
    %9071 = vmatpush1.msra.mxu0 0.0
    %9072 = vmatprep.subr.mxu0 0.0
    %9073 = vmatpush1.msra.mxu0 0.0
    %9074 = vmatprep.subr.mxu0 0.0
    %9075 = vmatpush1.msra.mxu0 0.0
    %9076 = vmatprep.subr.mxu0 0.0
    %9077 = vmatpush1.msra.mxu0 0.0
    %9078 = vmatprep.subr.mxu0 0.0
    %9079 = vmatpush1.msra.mxu0 0.0
    %9080 = vmatprep.subr.mxu0 0.0
    %9081 = vmatpush1.msra.mxu0 0.0
    %9082 = vmatprep.subr.mxu0 0.0
    %9083 = vmatpush1.msra.mxu0 0.0
    %9084 = vmatprep.subr.mxu0 %v8904
    %9085 = vmatpush1.msra.mxu0 %v8903
    %9086 = vmatprep.subr.mxu0 0.0
    %9087 = vmatpush2.msra.mxu0 0.0
    %9088 = vmatprep.subr.mxu0 0.0
    %9089 = vmatpush2.msra.mxu0 0.0
    %9090 = vmatprep.subr.mxu0 0.0
    %9091 = vmatpush2.msra.mxu0 0.0
    %9092 = vmatprep.subr.mxu0 0.0
    %9093 = vmatpush2.msra.mxu0 0.0
    %9094 = vmatprep.subr.mxu0 0.0
    %9095 = vmatpush2.msra.mxu0 0.0
    %9096 = vmatprep.subr.mxu0 0.0
    %9097 = vmatpush2.msra.mxu0 0.0
    %9098 = vmatprep.subr.mxu0 0.0
    %9099 = vmatpush2.msra.mxu0 0.0
    %9100 = vmatprep.subr.mxu0 0.0
    %9101 = vmatpush2.msra.mxu0 0.0
    %9102 = vmatprep.subr.mxu0 0.0
    %9103 = vmatpush2.msra.mxu0 0.0
    %9104 = vmatprep.subr.mxu0 0.0
    %9105 = vmatpush2.msra.mxu0 0.0
    %9106 = vmatprep.subr.mxu0 0.0
    %9107 = vmatpush2.msra.mxu0 0.0
    %9108 = vmatprep.subr.mxu0 0.0
    %9109 = vmatpush2.msra.mxu0 0.0
    %9110 = vmatprep.subr.mxu0 0.0
    %9111 = vmatpush2.msra.mxu0 0.0
    %9112 = vmatprep.subr.mxu0 0.0
    %9113 = vmatpush2.msra.mxu0 0.0
    %9114 = vmatprep.subr.mxu0 0.0
    %9115 = vmatpush2.msra.mxu0 0.0
    %9116 = vmatprep.subr.mxu0 0.0
    %9117 = vmatpush2.msra.mxu0 0.0
    %9118 = vmatprep.mubr.f32.mxu0 0.0
    %9119 = vmatmul.mubr.f32.gmra.mxu0 %v8910
    %v9120 = vpop.f32.mrf.mxu0
    %v9121 = vadd.f32 0.0, %v9120
    %v9122 = vpop.f32.mrf.mxu0
    %v9123 = vadd.f32 0.0, %v9122
    %9124 = vdwg.mxu0
    %v9126 = vsel %vm8908, %v8905, 0
    %9128 = vmatprep.subr.mxu0 0.0
    %9129 = vmatpush1.msra.mxu0 0.0
    %9130 = vmatprep.subr.mxu0 0.0
    %9131 = vmatpush1.msra.mxu0 0.0
    %9132 = vmatprep.subr.mxu0 0.0
    %9133 = vmatpush1.msra.mxu0 0.0
    %9134 = vmatprep.subr.mxu0 0.0
    %9135 = vmatpush1.msra.mxu0 0.0
    %9136 = vmatprep.subr.mxu0 0.0
    %9137 = vmatpush1.msra.mxu0 0.0
    %9138 = vmatprep.subr.mxu0 0.0
    %9139 = vmatpush1.msra.mxu0 0.0
    %9140 = vmatprep.subr.mxu0 0.0
    %9141 = vmatpush1.msra.mxu0 0.0
    %9142 = vmatprep.subr.mxu0 0.0
    %9143 = vmatpush1.msra.mxu0 0.0
    %9144 = vmatprep.subr.mxu0 0.0
    %9145 = vmatpush1.msra.mxu0 0.0
    %9146 = vmatprep.subr.mxu0 0.0
    %9147 = vmatpush1.msra.mxu0 0.0
    %9148 = vmatprep.subr.mxu0 0.0
    %9149 = vmatpush1.msra.mxu0 0.0
    %9150 = vmatprep.subr.mxu0 0.0
    %9151 = vmatpush1.msra.mxu0 0.0
    %9152 = vmatprep.subr.mxu0 0.0
    %9153 = vmatpush1.msra.mxu0 0.0
    %9154 = vmatprep.subr.mxu0 0.0
    %9155 = vmatpush1.msra.mxu0 0.0
    %9156 = vmatprep.subr.mxu0 0.0
    %9157 = vmatpush1.msra.mxu0 0.0
    %9158 = vmatprep.subr.mxu0 %v8899
    %9159 = vmatpush1.msra.mxu0 %v8898
    %9160 = vmatprep.subr.mxu0 0.0
    %9161 = vmatpush2.msra.mxu0 0.0
    %9162 = vmatprep.subr.mxu0 0.0
    %9163 = vmatpush2.msra.mxu0 0.0
    %9164 = vmatprep.subr.mxu0 0.0
    %9165 = vmatpush2.msra.mxu0 0.0
    %9166 = vmatprep.subr.mxu0 0.0
    %9167 = vmatpush2.msra.mxu0 0.0
    %9168 = vmatprep.subr.mxu0 0.0
    %9169 = vmatpush2.msra.mxu0 0.0
    %9170 = vmatprep.subr.mxu0 0.0
    %9171 = vmatpush2.msra.mxu0 0.0
    %9172 = vmatprep.subr.mxu0 0.0
    %9173 = vmatpush2.msra.mxu0 0.0
    %9174 = vmatprep.subr.mxu0 0.0
    %9175 = vmatpush2.msra.mxu0 0.0
    %9176 = vmatprep.subr.mxu0 0.0
    %9177 = vmatpush2.msra.mxu0 0.0
    %9178 = vmatprep.subr.mxu0 0.0
    %9179 = vmatpush2.msra.mxu0 0.0
    %9180 = vmatprep.subr.mxu0 0.0
    %9181 = vmatpush2.msra.mxu0 0.0
    %9182 = vmatprep.subr.mxu0 0.0
    %9183 = vmatpush2.msra.mxu0 0.0
    %9184 = vmatprep.subr.mxu0 0.0
    %9185 = vmatpush2.msra.mxu0 0.0
    %9186 = vmatprep.subr.mxu0 0.0
    %9187 = vmatpush2.msra.mxu0 0.0
    %9188 = vmatprep.subr.mxu0 0.0
    %9189 = vmatpush2.msra.mxu0 0.0
    %9190 = vmatprep.subr.mxu0 0.0
    %9191 = vmatpush2.msra.mxu0 0.0
    %9192 = vmatprep.mubr.f32.mxu0 0.0
    %9193 = vmatmul.mubr.f32.gmra.mxu0 %v9126
    %v9194 = vpop.f32.mrf.mxu0
    %v9195 = vadd.f32 %v8979, %v9194
    %v9196 = vpop.f32.mrf.mxu0
    %v9197 = vadd.f32 %v8981, %v9196
    %9198 = vdwg.mxu0
    %9199 = vmatprep.subr.mxu0 0.0
    %9200 = vmatpush1.msra.mxu0 0.0
    %9201 = vmatprep.subr.mxu0 0.0
    %9202 = vmatpush1.msra.mxu0 0.0
    %9203 = vmatprep.subr.mxu0 0.0
    %9204 = vmatpush1.msra.mxu0 0.0
    %9205 = vmatprep.subr.mxu0 0.0
    %9206 = vmatpush1.msra.mxu0 0.0
    %9207 = vmatprep.subr.mxu0 0.0
    %9208 = vmatpush1.msra.mxu0 0.0
    %9209 = vmatprep.subr.mxu0 0.0
    %9210 = vmatpush1.msra.mxu0 0.0
    %9211 = vmatprep.subr.mxu0 0.0
    %9212 = vmatpush1.msra.mxu0 0.0
    %9213 = vmatprep.subr.mxu0 0.0
    %9214 = vmatpush1.msra.mxu0 0.0
    %9215 = vmatprep.subr.mxu0 0.0
    %9216 = vmatpush1.msra.mxu0 0.0
    %9217 = vmatprep.subr.mxu0 0.0
    %9218 = vmatpush1.msra.mxu0 0.0
    %9219 = vmatprep.subr.mxu0 0.0
    %9220 = vmatpush1.msra.mxu0 0.0
    %9221 = vmatprep.subr.mxu0 0.0
    %9222 = vmatpush1.msra.mxu0 0.0
    %9223 = vmatprep.subr.mxu0 0.0
    %9224 = vmatpush1.msra.mxu0 0.0
    %9225 = vmatprep.subr.mxu0 0.0
    %9226 = vmatpush1.msra.mxu0 0.0
    %9227 = vmatprep.subr.mxu0 0.0
    %9228 = vmatpush1.msra.mxu0 0.0
    %9229 = vmatprep.subr.mxu0 %v8901
    %9230 = vmatpush1.msra.mxu0 %v8900
    %9231 = vmatprep.subr.mxu0 0.0
    %9232 = vmatpush2.msra.mxu0 0.0
    %9233 = vmatprep.subr.mxu0 0.0
    %9234 = vmatpush2.msra.mxu0 0.0
    %9235 = vmatprep.subr.mxu0 0.0
    %9236 = vmatpush2.msra.mxu0 0.0
    %9237 = vmatprep.subr.mxu0 0.0
    %9238 = vmatpush2.msra.mxu0 0.0
    %9239 = vmatprep.subr.mxu0 0.0
    %9240 = vmatpush2.msra.mxu0 0.0
    %9241 = vmatprep.subr.mxu0 0.0
    %9242 = vmatpush2.msra.mxu0 0.0
    %9243 = vmatprep.subr.mxu0 0.0
    %9244 = vmatpush2.msra.mxu0 0.0
    %9245 = vmatprep.subr.mxu0 0.0
    %9246 = vmatpush2.msra.mxu0 0.0
    %9247 = vmatprep.subr.mxu0 0.0
    %9248 = vmatpush2.msra.mxu0 0.0
    %9249 = vmatprep.subr.mxu0 0.0
    %9250 = vmatpush2.msra.mxu0 0.0
    %9251 = vmatprep.subr.mxu0 0.0
    %9252 = vmatpush2.msra.mxu0 0.0
    %9253 = vmatprep.subr.mxu0 0.0
    %9254 = vmatpush2.msra.mxu0 0.0
    %9255 = vmatprep.subr.mxu0 0.0
    %9256 = vmatpush2.msra.mxu0 0.0
    %9257 = vmatprep.subr.mxu0 0.0
    %9258 = vmatpush2.msra.mxu0 0.0
    %9259 = vmatprep.subr.mxu0 0.0
    %9260 = vmatpush2.msra.mxu0 0.0
    %9261 = vmatprep.subr.mxu0 0.0
    %9262 = vmatpush2.msra.mxu0 0.0
    %9263 = vmatprep.mubr.f32.mxu0 0.0
    %9264 = vmatmul.mubr.f32.gmra.mxu0 %v9126
    %v9265 = vpop.f32.mrf.mxu0
    %v9266 = vadd.f32 %v9050, %v9265
    %v9267 = vpop.f32.mrf.mxu0
    %v9268 = vadd.f32 %v9052, %v9267
    %9269 = vdwg.mxu0
    %9270 = vmatprep.subr.mxu0 0.0
    %9271 = vmatpush1.msra.mxu0 0.0
    %9272 = vmatprep.subr.mxu0 0.0
    %9273 = vmatpush1.msra.mxu0 0.0
    %9274 = vmatprep.subr.mxu0 0.0
    %9275 = vmatpush1.msra.mxu0 0.0
    %9276 = vmatprep.subr.mxu0 0.0
    %9277 = vmatpush1.msra.mxu0 0.0
    %9278 = vmatprep.subr.mxu0 0.0
    %9279 = vmatpush1.msra.mxu0 0.0
    %9280 = vmatprep.subr.mxu0 0.0
    %9281 = vmatpush1.msra.mxu0 0.0
    %9282 = vmatprep.subr.mxu0 0.0
    %9283 = vmatpush1.msra.mxu0 0.0
    %9284 = vmatprep.subr.mxu0 0.0
    %9285 = vmatpush1.msra.mxu0 0.0
    %9286 = vmatprep.subr.mxu0 0.0
    %9287 = vmatpush1.msra.mxu0 0.0
    %9288 = vmatprep.subr.mxu0 0.0
    %9289 = vmatpush1.msra.mxu0 0.0
    %9290 = vmatprep.subr.mxu0 0.0
    %9291 = vmatpush1.msra.mxu0 0.0
    %9292 = vmatprep.subr.mxu0 0.0
    %9293 = vmatpush1.msra.mxu0 0.0
    %9294 = vmatprep.subr.mxu0 0.0
    %9295 = vmatpush1.msra.mxu0 0.0
    %9296 = vmatprep.subr.mxu0 0.0
    %9297 = vmatpush1.msra.mxu0 0.0
    %9298 = vmatprep.subr.mxu0 0.0
    %9299 = vmatpush1.msra.mxu0 0.0
    %9300 = vmatprep.subr.mxu0 %v8903
    %9301 = vmatpush1.msra.mxu0 %v8902
    %9302 = vmatprep.subr.mxu0 0.0
    %9303 = vmatpush2.msra.mxu0 0.0
    %9304 = vmatprep.subr.mxu0 0.0
    %9305 = vmatpush2.msra.mxu0 0.0
    %9306 = vmatprep.subr.mxu0 0.0
    %9307 = vmatpush2.msra.mxu0 0.0
    %9308 = vmatprep.subr.mxu0 0.0
    %9309 = vmatpush2.msra.mxu0 0.0
    %9310 = vmatprep.subr.mxu0 0.0
    %9311 = vmatpush2.msra.mxu0 0.0
    %9312 = vmatprep.subr.mxu0 0.0
    %9313 = vmatpush2.msra.mxu0 0.0
    %9314 = vmatprep.subr.mxu0 0.0
    %9315 = vmatpush2.msra.mxu0 0.0
    %9316 = vmatprep.subr.mxu0 0.0
    %9317 = vmatpush2.msra.mxu0 0.0
    %9318 = vmatprep.subr.mxu0 0.0
    %9319 = vmatpush2.msra.mxu0 0.0
    %9320 = vmatprep.subr.mxu0 0.0
    %9321 = vmatpush2.msra.mxu0 0.0
    %9322 = vmatprep.subr.mxu0 0.0
    %9323 = vmatpush2.msra.mxu0 0.0
    %9324 = vmatprep.subr.mxu0 0.0
    %9325 = vmatpush2.msra.mxu0 0.0
    %9326 = vmatprep.subr.mxu0 0.0
    %9327 = vmatpush2.msra.mxu0 0.0
    %9328 = vmatprep.subr.mxu0 0.0
    %9329 = vmatpush2.msra.mxu0 0.0
    %9330 = vmatprep.subr.mxu0 0.0
    %9331 = vmatpush2.msra.mxu0 0.0
    %9332 = vmatprep.subr.mxu0 0.0
    %9333 = vmatpush2.msra.mxu0 0.0
    %9334 = vmatprep.mubr.f32.mxu0 0.0
    %9335 = vmatmul.mubr.f32.gmra.mxu0 %v9126
    %v9336 = vpop.f32.mrf.mxu0
    %v9337 = vadd.f32 %v9121, %v9336
    %v9338 = vpop.f32.mrf.mxu0
    %v9339 = vadd.f32 %v9123, %v9338
    %9340 = vdwg.mxu0
    %9342 = vset.pattern.permute.xlu0 0
    %9343 = vperm.xlu0 %9342, %v8907
    %v9344 = vpop.permute.xlu0 %9343
    %v9346 = vadd.f32 %v9195, %v9344
    %v9347 = vadd.f32 %v9197, %v9344
    %v9348 = vadd.f32 %v9266, %v9344
    %v9349 = vadd.f32 %v9268, %v9344
    %v9350 = vadd.f32 %v9337, %v9344
    %v9351 = vadd.f32 %v9339, %v9344
    %v9352 = vmax.f32 %v9346, 0.0
    %v9353 = vmax.f32 %v9347, 0.0
    %v9354 = vmax.f32 %v9348, 0.0
    %v9355 = vmax.f32 %v9349, 0.0
    %v9356 = vmax.f32 %v9350, 0.0
    %v9357 = vmax.f32 %v9351, 0.0
    %v9358 = vadd.f32 %v9352, %v9353
    %v9359 = vadd.f32 %v9354, %v9355
    %v9360 = vadd.f32 %v9356, %v9357
    %v9361 = vld [vmem:[#allocation5 + $0x90] sm:$0xff]
    %v9362 = vld [vmem:[#allocation5 + $0x98] sm:$0xff]
    %v9363 = vld [vmem:[#allocation5 + $0xa0] sm:$0xff]
    %v9365 = vsel %vm8908, %v9362, 0
    %9367 = vmatprep.subr.mxu0 0.0
    %9368 = vmatpush1.msra.mxu0 0.0
    %9369 = vmatprep.subr.mxu0 0.0
    %9370 = vmatpush1.msra.mxu0 0.0
    %9371 = vmatprep.subr.mxu0 0.0
    %9372 = vmatpush1.msra.mxu0 0.0
    %9373 = vmatprep.subr.mxu0 0.0
    %9374 = vmatpush1.msra.mxu0 0.0
    %9375 = vmatprep.subr.mxu0 0.0
    %9376 = vmatpush1.msra.mxu0 0.0
    %9377 = vmatprep.subr.mxu0 0.0
    %9378 = vmatpush1.msra.mxu0 0.0
    %9379 = vmatprep.subr.mxu0 0.0
    %9380 = vmatpush1.msra.mxu0 0.0
    %9381 = vmatprep.subr.mxu0 0.0
    %9382 = vmatpush1.msra.mxu0 0.0
    %9383 = vmatprep.subr.mxu0 0.0
    %9384 = vmatpush1.msra.mxu0 0.0
    %9385 = vmatprep.subr.mxu0 0.0
    %9386 = vmatpush1.msra.mxu0 0.0
    %9387 = vmatprep.subr.mxu0 0.0
    %9388 = vmatpush1.msra.mxu0 0.0
    %9389 = vmatprep.subr.mxu0 0.0
    %9390 = vmatpush1.msra.mxu0 0.0
    %9391 = vmatprep.subr.mxu0 0.0
    %9392 = vmatpush1.msra.mxu0 0.0
    %9393 = vmatprep.subr.mxu0 0.0
    %9394 = vmatpush1.msra.mxu0 0.0
    %9395 = vmatprep.subr.mxu0 0.0
    %9396 = vmatpush1.msra.mxu0 0.0
    %9397 = vmatprep.subr.mxu0 %v9360
    %9398 = vmatpush1.msra.mxu0 %v9359
    %9399 = vmatprep.subr.mxu0 0.0
    %9400 = vmatpush2.msra.mxu0 0.0
    %9401 = vmatprep.subr.mxu0 0.0
    %9402 = vmatpush2.msra.mxu0 0.0
    %9403 = vmatprep.subr.mxu0 0.0
    %9404 = vmatpush2.msra.mxu0 0.0
    %9405 = vmatprep.subr.mxu0 0.0
    %9406 = vmatpush2.msra.mxu0 0.0
    %9407 = vmatprep.subr.mxu0 0.0
    %9408 = vmatpush2.msra.mxu0 0.0
    %9409 = vmatprep.subr.mxu0 0.0
    %9410 = vmatpush2.msra.mxu0 0.0
    %9411 = vmatprep.subr.mxu0 0.0
    %9412 = vmatpush2.msra.mxu0 0.0
    %9413 = vmatprep.subr.mxu0 0.0
    %9414 = vmatpush2.msra.mxu0 0.0
    %9415 = vmatprep.subr.mxu0 0.0
    %9416 = vmatpush2.msra.mxu0 0.0
    %9417 = vmatprep.subr.mxu0 0.0
    %9418 = vmatpush2.msra.mxu0 0.0
    %9419 = vmatprep.subr.mxu0 0.0
    %9420 = vmatpush2.msra.mxu0 0.0
    %9421 = vmatprep.subr.mxu0 0.0
    %9422 = vmatpush2.msra.mxu0 0.0
    %9423 = vmatprep.subr.mxu0 0.0
    %9424 = vmatpush2.msra.mxu0 0.0
    %9425 = vmatprep.subr.mxu0 0.0
    %9426 = vmatpush2.msra.mxu0 0.0
    %9427 = vmatprep.subr.mxu0 0.0
    %9428 = vmatpush2.msra.mxu0 0.0
    %9429 = vmatprep.subr.mxu0 0.0
    %9430 = vmatpush2.msra.mxu0 0.0
    %9431 = vmatprep.mubr.f32.mxu0 0.0
    %9432 = vmatmul.mubr.f32.gmra.mxu0 %v9365
    %v9433 = vpop.f32.mrf.mxu0
    %v9434 = vadd.f32 0.0, %v9433
    %v9435 = vpop.f32.mrf.mxu0
    %v9436 = vadd.f32 0.0, %v9435
    %9437 = vdwg.mxu0
    %v9439 = vsel %vm8908, %v9361, 0
    %9441 = vmatprep.subr.mxu0 0.0
    %9442 = vmatpush1.msra.mxu0 0.0
    %9443 = vmatprep.subr.mxu0 0.0
    %9444 = vmatpush1.msra.mxu0 0.0
    %9445 = vmatprep.subr.mxu0 0.0
    %9446 = vmatpush1.msra.mxu0 0.0
    %9447 = vmatprep.subr.mxu0 0.0
    %9448 = vmatpush1.msra.mxu0 0.0
    %9449 = vmatprep.subr.mxu0 0.0
    %9450 = vmatpush1.msra.mxu0 0.0
    %9451 = vmatprep.subr.mxu0 0.0
    %9452 = vmatpush1.msra.mxu0 0.0
    %9453 = vmatprep.subr.mxu0 0.0
    %9454 = vmatpush1.msra.mxu0 0.0
    %9455 = vmatprep.subr.mxu0 0.0
    %9456 = vmatpush1.msra.mxu0 0.0
    %9457 = vmatprep.subr.mxu0 0.0
    %9458 = vmatpush1.msra.mxu0 0.0
    %9459 = vmatprep.subr.mxu0 0.0
    %9460 = vmatpush1.msra.mxu0 0.0
    %9461 = vmatprep.subr.mxu0 0.0
    %9462 = vmatpush1.msra.mxu0 0.0
    %9463 = vmatprep.subr.mxu0 0.0
    %9464 = vmatpush1.msra.mxu0 0.0
    %9465 = vmatprep.subr.mxu0 0.0
    %9466 = vmatpush1.msra.mxu0 0.0
    %9467 = vmatprep.subr.mxu0 0.0
    %9468 = vmatpush1.msra.mxu0 0.0
    %9469 = vmatprep.subr.mxu0 0.0
    %9470 = vmatpush1.msra.mxu0 0.0
    %9471 = vmatprep.subr.mxu0 %v9359
    %9472 = vmatpush1.msra.mxu0 %v9358
    %9473 = vmatprep.subr.mxu0 0.0
    %9474 = vmatpush2.msra.mxu0 0.0
    %9475 = vmatprep.subr.mxu0 0.0
    %9476 = vmatpush2.msra.mxu0 0.0
    %9477 = vmatprep.subr.mxu0 0.0
    %9478 = vmatpush2.msra.mxu0 0.0
    %9479 = vmatprep.subr.mxu0 0.0
    %9480 = vmatpush2.msra.mxu0 0.0
    %9481 = vmatprep.subr.mxu0 0.0
    %9482 = vmatpush2.msra.mxu0 0.0
    %9483 = vmatprep.subr.mxu0 0.0
    %9484 = vmatpush2.msra.mxu0 0.0
    %9485 = vmatprep.subr.mxu0 0.0
    %9486 = vmatpush2.msra.mxu0 0.0
    %9487 = vmatprep.subr.mxu0 0.0
    %9488 = vmatpush2.msra.mxu0 0.0
    %9489 = vmatprep.subr.mxu0 0.0
    %9490 = vmatpush2.msra.mxu0 0.0
    %9491 = vmatprep.subr.mxu0 0.0
    %9492 = vmatpush2.msra.mxu0 0.0
    %9493 = vmatprep.subr.mxu0 0.0
    %9494 = vmatpush2.msra.mxu0 0.0
    %9495 = vmatprep.subr.mxu0 0.0
    %9496 = vmatpush2.msra.mxu0 0.0
    %9497 = vmatprep.subr.mxu0 0.0
    %9498 = vmatpush2.msra.mxu0 0.0
    %9499 = vmatprep.subr.mxu0 0.0
    %9500 = vmatpush2.msra.mxu0 0.0
    %9501 = vmatprep.subr.mxu0 0.0
    %9502 = vmatpush2.msra.mxu0 0.0
    %9503 = vmatprep.subr.mxu0 0.0
    %9504 = vmatpush2.msra.mxu0 0.0
    %9505 = vmatprep.mubr.f32.mxu0 0.0
    %9506 = vmatmul.mubr.f32.gmra.mxu0 %v9439
    %v9507 = vpop.f32.mrf.mxu0
    %v9508 = vadd.f32 %v9434, %v9507
    %v9509 = vpop.f32.mrf.mxu0
    %v9510 = vadd.f32 %v9436, %v9509
    %9511 = vdwg.mxu0
    %9513 = vset.pattern.permute.xlu0 0
    %9514 = vperm.xlu0 %9513, %v9363
    %v9515 = vpop.permute.xlu0 %9514
    %v9517 = vadd.f32 %v9508, %v9515
    %v9518 = vadd.f32 %v9510, %v9515
    %v9519 = vmax.f32 %v9517, 0.0
    %v9520 = vmax.f32 %v9518, 0.0
    %v9521 = vadd.f32 %v9519, %v9520
    %v9522 = vld [vmem:[#allocation5 + $0xa8] sm:$0xff]
    %v9523 = vld [vmem:[#allocation5 + $0xb0] sm:$0xff]
    %9525 = vset.pattern.permute.xlu0 0
    %9526 = vperm.xlu0 %9525, %v9523
    %v9527 = vpop.permute.xlu0 %9526
    %v9530 = vsel %vm8908, %v9522, 0
    %9532 = vmatprep.subr.mxu0 0.0
    %9533 = vmatpush1.msra.mxu0 0.0
    %9534 = vmatprep.subr.mxu0 0.0
    %9535 = vmatpush1.msra.mxu0 0.0
    %9536 = vmatprep.subr.mxu0 0.0
    %9537 = vmatpush1.msra.mxu0 0.0
    %9538 = vmatprep.subr.mxu0 0.0
    %9539 = vmatpush1.msra.mxu0 0.0
    %9540 = vmatprep.subr.mxu0 0.0
    %9541 = vmatpush1.msra.mxu0 0.0
    %9542 = vmatprep.subr.mxu0 0.0
    %9543 = vmatpush1.msra.mxu0 0.0
    %9544 = vmatprep.subr.mxu0 0.0
    %9545 = vmatpush1.msra.mxu0 0.0
    %9546 = vmatprep.subr.mxu0 0.0
    %9547 = vmatpush1.msra.mxu0 0.0
    %9548 = vmatprep.subr.mxu0 0.0
    %9549 = vmatpush1.msra.mxu0 0.0
    %9550 = vmatprep.subr.mxu0 0.0
    %9551 = vmatpush1.msra.mxu0 0.0
    %9552 = vmatprep.subr.mxu0 0.0
    %9553 = vmatpush1.msra.mxu0 0.0
    %9554 = vmatprep.subr.mxu0 0.0
    %9555 = vmatpush1.msra.mxu0 0.0
    %9556 = vmatprep.subr.mxu0 0.0
    %9557 = vmatpush1.msra.mxu0 0.0
    %9558 = vmatprep.subr.mxu0 0.0
    %9559 = vmatpush1.msra.mxu0 0.0
    %9560 = vmatprep.subr.mxu0 0.0
    %9561 = vmatpush1.msra.mxu0 0.0
    %9562 = vmatprep.subr.mxu0 0.0
    %9563 = vmatpush1.msra.mxu0 %v9521
    %9564 = vmatprep.subr.mxu0 0.0
    %9565 = vmatpush2.msra.mxu0 0.0
    %9566 = vmatprep.subr.mxu0 0.0
    %9567 = vmatpush2.msra.mxu0 0.0
    %9568 = vmatprep.subr.mxu0 0.0
    %9569 = vmatpush2.msra.mxu0 0.0
    %9570 = vmatprep.subr.mxu0 0.0
    %9571 = vmatpush2.msra.mxu0 0.0
    %9572 = vmatprep.subr.mxu0 0.0
    %9573 = vmatpush2.msra.mxu0 0.0
    %9574 = vmatprep.subr.mxu0 0.0
    %9575 = vmatpush2.msra.mxu0 0.0
    %9576 = vmatprep.subr.mxu0 0.0
    %9577 = vmatpush2.msra.mxu0 0.0
    %9578 = vmatprep.subr.mxu0 0.0
    %9579 = vmatpush2.msra.mxu0 0.0
    %9580 = vmatprep.subr.mxu0 0.0
    %9581 = vmatpush2.msra.mxu0 0.0
    %9582 = vmatprep.subr.mxu0 0.0
    %9583 = vmatpush2.msra.mxu0 0.0
    %9584 = vmatprep.subr.mxu0 0.0
    %9585 = vmatpush2.msra.mxu0 0.0
    %9586 = vmatprep.subr.mxu0 0.0
    %9587 = vmatpush2.msra.mxu0 0.0
    %9588 = vmatprep.subr.mxu0 0.0
    %9589 = vmatpush2.msra.mxu0 0.0
    %9590 = vmatprep.subr.mxu0 0.0
    %9591 = vmatpush2.msra.mxu0 0.0
    %9592 = vmatprep.subr.mxu0 0.0
    %9593 = vmatpush2.msra.mxu0 0.0
    %9594 = vmatprep.subr.mxu0 0.0
    %9595 = vmatpush2.msra.mxu0 0.0
    %9596 = vmatprep.mubr.f32.mxu0 0.0
    %9597 = vmatmul.mubr.f32.gmra.mxu0 %v9530
    %v9598 = vpop.f32.mrf.mxu0
    %v9599 = vadd.f32 %v9527, %v9598
    %v9600 = vpop.f32.mrf.mxu0
    %9601 = vdwg.mxu0
    %v9602 = vmax.f32 %v9599, 0.0
    %v9603 = vld [vmem:[#allocation5 + $0xb8] sm:$0xff]
    %v9604 = vld [vmem:[#allocation5 + $0xc0] sm:$0xff]
    %9606 = vset.pattern.permute.xlu0 0
    %9607 = vperm.xlu0 %9606, %v9604
    %v9608 = vpop.permute.xlu0 %9607
    %v9611 = vsel %vm8908, %v9603, 0
    %9613 = vmatprep.subr.mxu0 0.0
    %9614 = vmatpush1.msra.mxu0 0.0
    %9615 = vmatprep.subr.mxu0 0.0
    %9616 = vmatpush1.msra.mxu0 0.0
    %9617 = vmatprep.subr.mxu0 0.0
    %9618 = vmatpush1.msra.mxu0 0.0
    %9619 = vmatprep.subr.mxu0 0.0
    %9620 = vmatpush1.msra.mxu0 0.0
    %9621 = vmatprep.subr.mxu0 0.0
    %9622 = vmatpush1.msra.mxu0 0.0
    %9623 = vmatprep.subr.mxu0 0.0
    %9624 = vmatpush1.msra.mxu0 0.0
    %9625 = vmatprep.subr.mxu0 0.0
    %9626 = vmatpush1.msra.mxu0 0.0
    %9627 = vmatprep.subr.mxu0 0.0
    %9628 = vmatpush1.msra.mxu0 0.0
    %9629 = vmatprep.subr.mxu0 0.0
    %9630 = vmatpush1.msra.mxu0 0.0
    %9631 = vmatprep.subr.mxu0 0.0
    %9632 = vmatpush1.msra.mxu0 0.0
    %9633 = vmatprep.subr.mxu0 0.0
    %9634 = vmatpush1.msra.mxu0 0.0
    %9635 = vmatprep.subr.mxu0 0.0
    %9636 = vmatpush1.msra.mxu0 0.0
    %9637 = vmatprep.subr.mxu0 0.0
    %9638 = vmatpush1.msra.mxu0 0.0
    %9639 = vmatprep.subr.mxu0 0.0
    %9640 = vmatpush1.msra.mxu0 0.0
    %9641 = vmatprep.subr.mxu0 0.0
    %9642 = vmatpush1.msra.mxu0 0.0
    %9643 = vmatprep.subr.mxu0 0.0
    %9644 = vmatpush1.msra.mxu0 %v9602
    %9645 = vmatprep.subr.mxu0 0.0
    %9646 = vmatpush2.msra.mxu0 0.0
    %9647 = vmatprep.subr.mxu0 0.0
    %9648 = vmatpush2.msra.mxu0 0.0
    %9649 = vmatprep.subr.mxu0 0.0
    %9650 = vmatpush2.msra.mxu0 0.0
    %9651 = vmatprep.subr.mxu0 0.0
    %9652 = vmatpush2.msra.mxu0 0.0
    %9653 = vmatprep.subr.mxu0 0.0
    %9654 = vmatpush2.msra.mxu0 0.0
    %9655 = vmatprep.subr.mxu0 0.0
    %9656 = vmatpush2.msra.mxu0 0.0
    %9657 = vmatprep.subr.mxu0 0.0
    %9658 = vmatpush2.msra.mxu0 0.0
    %9659 = vmatprep.subr.mxu0 0.0
    %9660 = vmatpush2.msra.mxu0 0.0
    %9661 = vmatprep.subr.mxu0 0.0
    %9662 = vmatpush2.msra.mxu0 0.0
    %9663 = vmatprep.subr.mxu0 0.0
    %9664 = vmatpush2.msra.mxu0 0.0
    %9665 = vmatprep.subr.mxu0 0.0
    %9666 = vmatpush2.msra.mxu0 0.0
    %9667 = vmatprep.subr.mxu0 0.0
    %9668 = vmatpush2.msra.mxu0 0.0
    %9669 = vmatprep.subr.mxu0 0.0
    %9670 = vmatpush2.msra.mxu0 0.0
    %9671 = vmatprep.subr.mxu0 0.0
    %9672 = vmatpush2.msra.mxu0 0.0
    %9673 = vmatprep.subr.mxu0 0.0
    %9674 = vmatpush2.msra.mxu0 0.0
    %9675 = vmatprep.subr.mxu0 0.0
    %9676 = vmatpush2.msra.mxu0 0.0
    %9677 = vmatprep.mubr.f32.mxu0 0.0
    %9678 = vmatmul.mubr.f32.gmra.mxu0 %v9611
    %v9679 = vpop.f32.mrf.mxu0
    %v9680 = vadd.f32 %v9608, %v9679
    %v9681 = vpop.f32.mrf.mxu0
    %9682 = vdwg.mxu0
    %v9683 = vmax.f32 %v9680, 0.0
    %v9684 = vld [vmem:[#allocation5 + $0xc8] sm:$0x1f]
    %v9685 = vld [vmem:[#allocation5 + $0xd0] sm:$0x1f]
    %9687 = vset.pattern.permute.xlu0 0
    %9688 = vperm.xlu0 %9687, %v9685
    %v9689 = vpop.permute.xlu0 %9688
    %v9692 = vsel %vm8908, %v9684, 0
    %9694 = vmatprep.subr.mxu0 0.0
    %9695 = vmatpush1.msra.mxu0 0.0
    %9696 = vmatprep.subr.mxu0 0.0
    %9697 = vmatpush1.msra.mxu0 0.0
    %9698 = vmatprep.subr.mxu0 0.0
    %9699 = vmatpush1.msra.mxu0 0.0
    %9700 = vmatprep.subr.mxu0 0.0
    %9701 = vmatpush1.msra.mxu0 0.0
    %9702 = vmatprep.subr.mxu0 0.0
    %9703 = vmatpush1.msra.mxu0 0.0
    %9704 = vmatprep.subr.mxu0 0.0
    %9705 = vmatpush1.msra.mxu0 0.0
    %9706 = vmatprep.subr.mxu0 0.0
    %9707 = vmatpush1.msra.mxu0 0.0
    %9708 = vmatprep.subr.mxu0 0.0
    %9709 = vmatpush1.msra.mxu0 0.0
    %9710 = vmatprep.subr.mxu0 0.0
    %9711 = vmatpush1.msra.mxu0 0.0
    %9712 = vmatprep.subr.mxu0 0.0
    %9713 = vmatpush1.msra.mxu0 0.0
    %9714 = vmatprep.subr.mxu0 0.0
    %9715 = vmatpush1.msra.mxu0 0.0
    %9716 = vmatprep.subr.mxu0 0.0
    %9717 = vmatpush1.msra.mxu0 0.0
    %9718 = vmatprep.subr.mxu0 0.0
    %9719 = vmatpush1.msra.mxu0 0.0
    %9720 = vmatprep.subr.mxu0 0.0
    %9721 = vmatpush1.msra.mxu0 0.0
    %9722 = vmatprep.subr.mxu0 0.0
    %9723 = vmatpush1.msra.mxu0 0.0
    %9724 = vmatprep.subr.mxu0 0.0
    %9725 = vmatpush1.msra.mxu0 %v9683
    %9726 = vmatprep.subr.mxu0 0.0
    %9727 = vmatpush2.msra.mxu0 0.0
    %9728 = vmatprep.subr.mxu0 0.0
    %9729 = vmatpush2.msra.mxu0 0.0
    %9730 = vmatprep.subr.mxu0 0.0
    %9731 = vmatpush2.msra.mxu0 0.0
    %9732 = vmatprep.subr.mxu0 0.0
    %9733 = vmatpush2.msra.mxu0 0.0
    %9734 = vmatprep.subr.mxu0 0.0
    %9735 = vmatpush2.msra.mxu0 0.0
    %9736 = vmatprep.subr.mxu0 0.0
    %9737 = vmatpush2.msra.mxu0 0.0
    %9738 = vmatprep.subr.mxu0 0.0
    %9739 = vmatpush2.msra.mxu0 0.0
    %9740 = vmatprep.subr.mxu0 0.0
    %9741 = vmatpush2.msra.mxu0 0.0
    %9742 = vmatprep.subr.mxu0 0.0
    %9743 = vmatpush2.msra.mxu0 0.0
    %9744 = vmatprep.subr.mxu0 0.0
    %9745 = vmatpush2.msra.mxu0 0.0
    %9746 = vmatprep.subr.mxu0 0.0
    %9747 = vmatpush2.msra.mxu0 0.0
    %9748 = vmatprep.subr.mxu0 0.0
    %9749 = vmatpush2.msra.mxu0 0.0
    %9750 = vmatprep.subr.mxu0 0.0
    %9751 = vmatpush2.msra.mxu0 0.0
    %9752 = vmatprep.subr.mxu0 0.0
    %9753 = vmatpush2.msra.mxu0 0.0
    %9754 = vmatprep.subr.mxu0 0.0
    %9755 = vmatpush2.msra.mxu0 0.0
    %9756 = vmatprep.subr.mxu0 0.0
    %9757 = vmatpush2.msra.mxu0 0.0
    %9758 = vmatprep.mubr.f32.mxu0 0.0
    %9759 = vmatmul.mubr.f32.gmra.mxu0 %v9692
    %v9760 = vpop.f32.mrf.mxu0
    %v9761 = vadd.f32 %v9689, %v9760
    %v9762 = vpop.f32.mrf.mxu0
    %9763 = vdwg.mxu0
    %9764 = vst [vmem:[#allocation7] sm:$0x1f] %v9761
    // Predicated region
    $region18: #{tpu_custom_call.1} parent=1 // pred_check
      _
    $region19: #{tpu_custom_call.1} parent=1 // pred_check_branch
      %9766 = sbr.rel (0) target = $region21
    $region20: #{tpu_custom_call.1} parent=1 // pred_region
      %s9768 = ssub.s32 128, 128
      %9769 = vsyncadd [#allocation4], %s9768
      %s9771 = sshll.u32 [#allocation7], 4
      %s9772 = int_to_ptr.vmem [resolvable:$true] %s9771
      %9774 = dma.vmem_to_hbm [thread:$0]  %s9772, 128, %s2, [#allocation4]
    $region21: #{tpu_custom_call.1} parent=1 // pred_fallthru
      _
    // Predicated region
    $region22: #{tpu_custom_call.1} parent=1 // pred_check
      _
    $region23: #{tpu_custom_call.1} parent=1 // pred_check_branch
      %9776 = sbr.rel (0) target = $region25
    $region24: #{tpu_custom_call.1} parent=1 // pred_region
      %9777 = dma.done [#allocation4], 128
    $region25: #{tpu_custom_call.1} parent=1 // pred_fallthru
      _
    %9778 = vsyncpa [#allocation3], 1
    %9779 = vsyncpa [#allocation6], 1
    %9780 = vsyncpa [#allocation4], 1

</llo_original>
